<compile_context>
chip_gen: v7x
topology: tpu7x:2x2x1
jax: 0.10.0
libtpu: 0.0.40
codegen_flags: <defaults>
</compile_context>

<pallas_src>
import functools

import jax
import jax.numpy as jnp
from jax import lax
from jax.experimental import pallas as pl
from jax.experimental.pallas import tpu as pltpu


def _attn_kernel(x_ref, wqkv_ref, wout_ref, o_ref, kv_ref, oheads_ref, *,
                 heads, dim_head, n_valid, tq):
    """One (batch, q-tile) step of spatial self-attention in 'b c (h w)' layout.

    x_ref:      (c, n_pad)        full (padded) sequence for this batch element
    wqkv_ref:   (3*inner, c)      [Q(scaled) | K | V] projection, transposed
    wout_ref:   (c, inner)        output projection, transposed
    o_ref:      (c, tq)           output tile (lane-dense store)
    kv_ref:     (2*inner, n_pad)  VMEM scratch: K|V for this batch element
    oheads_ref: (inner, tq)       VMEM scratch: per-head attention outputs
    """
    inner = heads * dim_head
    n_pad = x_ref.shape[1]
    qt = pl.program_id(1)

    # --- K/V projection for the whole (padded) sequence, once per batch elem.
    @pl.when(qt == 0)
    def _():
        kv = lax.dot_general(
            wqkv_ref[inner:3 * inner, :], x_ref[...],
            (((1,), (0,)), ((), ())),
            preferred_element_type=jnp.float32)            # (2*inner, n_pad)
        kv_ref[...] = kv.astype(kv_ref.dtype)

    # --- Query tile: slice the already-resident full-x block (no 2nd x DMA).
    q_start = pl.multiple_of(qt * tq, 128)
    x_tile = x_ref[:, pl.ds(q_start, tq)]                  # (c, tq)

    q_all = lax.dot_general(
        wqkv_ref[0:inner, :], x_tile,
        (((1,), (0,)), ((), ())),
        preferred_element_type=jnp.float32)                # (inner, tq), scale folded

    # --- Per-head attention.  Each iteration is self-contained and ends in a
    #     scratch store, so the (tq, n_pad) f32 score/prob slabs are dead at
    #     the iteration boundary (heads is small; loop is statically unrolled).
    for h in range(heads):
        r = h * dim_head
        # Token-major Q_h (tq, d): small explicit transpose (total over all
        # heads == one full-Q transpose per tile, hoisted work-wise).
        q_h = jnp.transpose(q_all[r:r + dim_head, :]).astype(kv_ref.dtype)
        k_h = kv_ref[r:r + dim_head, :]                    # (d, n_pad)
        v_h = kv_ref[inner + r:inner + r + dim_head, :]    # (d, n_pad)

        # scores S = Q_h K_h  -> (tq, n_pad); standard MXU contraction.
        s = lax.dot_general(q_h, k_h, (((1,), (0,)), ((), ())),
                            preferred_element_type=jnp.float32)
        if n_pad != n_valid:                               # static branch
            key_idx = lax.broadcasted_iota(jnp.int32, s.shape, 1)
            s = jnp.where(key_idx < n_valid, s, jnp.float32(-1e30))
        s = s - jnp.max(s, axis=-1, keepdims=True)
        p = jnp.exp(s)
        p = p * pl.reciprocal(jnp.sum(p, axis=-1, keepdims=True), approx=True)

        # O_h = V_h P^T -> (d, tq)  (contract the shared n axis; trans_b form).
        o_h = lax.dot_general(v_h, p.astype(v_h.dtype),
                              (((1,), (1,)), ((), ())),
                              preferred_element_type=jnp.float32)
        oheads_ref[r:r + dim_head, :] = o_h.astype(oheads_ref.dtype)

    # --- Single output-projection GEMM, contraction depth = inner.
    out = lax.dot_general(wout_ref[...], oheads_ref[...],
                          (((1,), (0,)), ((), ())),
                          preferred_element_type=jnp.float32)   # (c, tq)
    o_ref[...] = out.astype(o_ref.dtype)


def einops_to_and_from_attention(x, w_qkv, w_out, *, heads, dim_head,
                                 use_bf16_mxu=True):
    """EinopsToAndFrom('b c h w', 'b (h w) c', Attention) forward."""
    b, c, hh, ww = x.shape
    n = hh * ww
    inner = heads * dim_head
    assert w_qkv.shape == (c, 3 * inner) and w_out.shape == (inner, c)

    # bf16 MXU feeds for f32 inputs; accumulation stays f32 inside the kernel.
    cdt = jnp.bfloat16 if (use_bf16_mxu and x.dtype == jnp.float32) else x.dtype
    sub = 16 if cdt == jnp.bfloat16 else 8
    assert dim_head % sub == 0, (
        f"dim_head must be a multiple of {sub} for {cdt} sublane tiling")

    # Pad n to a multiple of 128: lane-dense stores + (8,128)-aligned blocks.
    n_pad = ((n + 127) // 128) * 128

    # 'b c h w -> b c (h w)' is a pure reshape; n stays in the lane dim.
    x_cn = x.reshape(b, c, n).astype(cdt)
    if n_pad != n:
        x_cn = jnp.pad(x_cn, ((0, 0), (0, 0), (0, n_pad - n)))

    # One-time weight glue (host/XLA side): transpose QKV so kernel matmuls
    # contract naturally, fold 1/sqrt(d) into the Q rows, transpose w_out.
    scale = dim_head ** -0.5
    w_qkv_t = jnp.asarray(w_qkv, jnp.float32).T                    # (3*inner, c)
    w_qkv_t = jnp.concatenate([w_qkv_t[:inner] * scale, w_qkv_t[inner:]],
                              axis=0).astype(cdt)
    w_out_ci = jnp.asarray(w_out, jnp.float32).T.astype(cdt)       # (c, inner)

    csz = jnp.dtype(cdt).itemsize
    osz = jnp.dtype(x.dtype).itemsize

    # Per-generation VMEM budget (v7x: 64 MiB physical; v5e/v6e: 128 MiB).
    try:
        vmem_cap = int(pltpu.get_tpu_info().vmem_capacity_bytes)
    except Exception:
        vmem_cap = 64 * 1024 * 1024        # conservative (v7x-sized) fallback
    budget = int(vmem_cap * 0.85)

    def footprint(t):
        return (2 * inner * n_pad * csz                     # K/V scratch
                + inner * t * csz                           # per-head out scratch
                + 2 * c * n_pad * csz                       # x block (double buf)
                + 2 * c * t * osz                           # out block (double buf)
                + (3 * inner * c + c * inner) * csz         # weights (single buf)
                + 4 * (inner * t + 2 * t * n_pad            # live f32 temps
                       + c * t + 2 * dim_head * n_pad + dim_head * t))

    cands = sorted({t for t in (128, 256, 384, 512, n_pad)
                    if t <= min(n_pad, 512) and n_pad % t == 0}, reverse=True)
    tq = next((t for t in cands if footprint(t) <= budget // 2), cands[-1])
    nqt = n_pad // tq
    vmem_limit = int(min(budget, max(32 * 1024 * 1024, 2 * footprint(tq))))

    flops = (2 * b * n_pad * c * 3 * inner                  # QKV projection
             + 4 * b * heads * n_pad * n_pad * dim_head     # QK^T and PV
             + 2 * b * n_pad * inner * c)                   # output projection
    transcendentals = b * heads * n_pad * n_pad             # exp
    bytes_accessed = (b * c * n_pad * csz                   # x read once
                      + (3 * inner * c + c * inner) * csz   # weights
                      + b * c * n_pad * osz)                # output write
    cost = pl.CostEstimate(flops=int(flops),
                           transcendentals=int(transcendentals),
                           bytes_accessed=int(bytes_accessed))

    kernel = functools.partial(_attn_kernel, heads=heads, dim_head=dim_head,
                               n_valid=n, tq=tq)

    def build(single_buffer_weights):
        wmode = ({"pipeline_mode": pl.Buffered(1)}
                 if single_buffer_weights else {})
        return pl.pallas_call(
            kernel,
            out_shape=jax.ShapeDtypeStruct((b, c, n_pad), x.dtype),
            grid_spec=pltpu.PrefetchScalarGridSpec(
                num_scalar_prefetch=0,
                grid=(b, nqt),
                in_specs=[
                    pl.BlockSpec((None, c, n_pad), lambda bi, qi: (bi, 0, 0)),
                    pl.BlockSpec((3 * inner, c), lambda bi, qi: (0, 0), **wmode),
                    pl.BlockSpec((c, inner), lambda bi, qi: (0, 0), **wmode),
                ],
                out_specs=pl.BlockSpec((None, c, tq), lambda bi, qi: (bi, 0, qi)),
                scratch_shapes=[pltpu.VMEM((2 * inner, n_pad), cdt),
                                pltpu.VMEM((inner, tq), cdt)],
            ),
            compiler_params=pltpu.CompilerParams(
                dimension_semantics=("parallel", "arbitrary"),
                vmem_limit_bytes=vmem_limit),
            cost_estimate=cost,
        )

    try:
        out_cn = build(True)(x_cn, w_qkv_t, w_out_ci)
    except Exception:
        # pipeline_mode=pl.Buffered(1) not accepted on this jax version:
        # rebuild with default (double-buffered) weight blocks.
        out_cn = build(False)(x_cn, w_qkv_t, w_out_ci)

    if n_pad != n:
        out_cn = out_cn[:, :, :n]
    # 'b c (h w) -> b c h w' is a pure reshape.
    return out_cn.reshape(b, c, hh, ww)


def _reference(x, w_qkv, w_out, *, heads, dim_head):
    """Plain-JAX reference mirroring the PyTorch semantics (f32, exact softmax)."""
    b, c, h, w = x.shape
    n = h * w
    inner = heads * dim_head
    xs = jnp.transpose(x, (0, 2, 3, 1)).reshape(b, n, c)
    qkv = xs @ w_qkv
    q, k, v = jnp.split(qkv, 3, axis=-1)

    def split_heads(t):
        return t.reshape(b, n, heads, dim_head).transpose(0, 2, 1, 3)

    q, k, v = map(split_heads, (q, k, v))
    s = jnp.einsum('bhid,bhjd->bhij', q, k) * (dim_head ** -0.5)
    p = jax.nn.softmax(s, axis=-1)
    o = jnp.einsum('bhij,bhjd->bhid', p, v)
    o = o.transpose(0, 2, 1, 3).reshape(b, n, inner) @ w_out
    return o.reshape(b, h, w, c).transpose(0, 3, 1, 2)


if __name__ == "__main__":
    B, C, H, W = 2, 64, 16, 16
    HEADS, DIM_HEAD = 4, 32
    INNER = HEADS * DIM_HEAD

    key = jax.random.PRNGKey(0)
    kx, kq, ko = jax.random.split(key, 3)
    x = jax.random.normal(kx, (B, C, H, W), dtype=jnp.float32)
    w_qkv = jax.random.normal(kq, (C, 3 * INNER), dtype=jnp.float32) * (C ** -0.5)
    w_out = jax.random.normal(ko, (INNER, C), dtype=jnp.float32) * (INNER ** -0.5)

    out = einops_to_and_from_attention(x, w_qkv, w_out,
                                       heads=HEADS, dim_head=DIM_HEAD)
    out = jax.block_until_ready(out)

    ref = _reference(x, w_qkv, w_out, heads=HEADS, dim_head=DIM_HEAD)
    assert out.shape == x.shape and out.dtype == x.dtype

    # Kernel feeds the MXU with bf16 (f32 accumulation) and uses the EUP
    # approximate reciprocal in the softmax, so tolerances are relaxed
    # relative to the exact f32 reference.
    abs_err = float(jnp.max(jnp.abs(out - ref)))
    rel_err = float(jnp.linalg.norm(out - ref) / (jnp.linalg.norm(ref) + 1e-12))
    assert rel_err < 2e-2 and abs_err < 1.5e-1, f"rel={rel_err} abs={abs_err}"

    print("KERNEL_OK")
</pallas_src>

<mosaic_0001>
module attributes {stable_mosaic.version = 11 : i64} {
  func.func @_attn_kernel(%arg0: i32, %arg1: i32, %arg2: memref<1x64x256xbf16, #tpu.memory_space<vmem>>, %arg3: memref<384x64xbf16, #tpu.memory_space<vmem>>, %arg4: memref<64x128xbf16, #tpu.memory_space<vmem>>, %arg5: memref<1x64x256xf32, #tpu.memory_space<vmem>>, %arg6: memref<256x256xbf16, #tpu.memory_space<vmem>>, %arg7: memref<128x256xbf16, #tpu.memory_space<vmem>>) attributes {dimension_semantics = [#tpu.dimension_semantics<parallel>, #tpu.dimension_semantics<arbitrary>], iteration_bounds = array<i64: 2, 1>, scalar_prefetch = 0 : i64, scratch_operands = 2 : i64, tpu.core_type = #tpu.core_type<tc>, window_params = [{transform_indices = @transform_0, window_bounds = array<i64: 1, 64, 256>}, {pipeline_mode = #tpu.pipeline_mode<synchronous>, transform_indices = @transform_1, window_bounds = array<i64: 384, 64>}, {pipeline_mode = #tpu.pipeline_mode<synchronous>, transform_indices = @transform_2, window_bounds = array<i64: 64, 128>}, {transform_indices = @transform_3, window_bounds = array<i64: 1, 64, 256>}]} {
    %c0_i32 = arith.constant 0 : i32
    %0 = arith.cmpi eq, %arg1, %c0_i32 : i32
    %1 = arith.extui %0 : i1 to i32
    %c0_i32_0 = arith.constant 0 : i32
    %2 = arith.cmpi ne, %1, %c0_i32_0 : i32
    scf.if %2 {
      %c128_45 = arith.constant 128 : index
      %c0_46 = arith.constant 0 : index
      %96 = vector.load %arg3[%c128_45, %c0_46] : memref<384x64xbf16, #tpu.memory_space<vmem>>, vector<256x64xbf16>
      %c0_47 = arith.constant 0 : index
      %c0_48 = arith.constant 0 : index
      %c0_49 = arith.constant 0 : index
      %97 = vector.load %arg2[%c0_47, %c0_48, %c0_49] : memref<1x64x256xbf16, #tpu.memory_space<vmem>>, vector<1x64x256xbf16>
      %98 = vector.shape_cast %97 : vector<1x64x256xbf16> to vector<64x256xbf16>
      %cst_50 = arith.constant dense<0.000000e+00> : vector<256x256xf32>
      %99 = tpu.matmul %96, %98, %cst_50 {dimension_numbers = #tpu.dot_dimension_numbers<[1], [0], [0], [1], [0, 0, 1, 1], [], []>} : vector<256x64xbf16>, vector<64x256xbf16>, vector<256x256xf32> -> vector<256x256xf32>
      %100 = arith.truncf %99 : vector<256x256xf32> to vector<256x256xbf16>
      %c0_51 = arith.constant 0 : index
      %c0_52 = arith.constant 0 : index
      %101 = vector.load %arg6[%c0_51, %c0_52] : memref<256x256xbf16, #tpu.memory_space<vmem>>, vector<256x256xbf16>
      tpu.vector_store %arg6[%c0_51, %c0_52], %100 {strides = array<i32>} : memref<256x256xbf16, #tpu.memory_space<vmem>>, vector<256x256xbf16>,
    } else {
    }
    %c256_i32 = arith.constant 256 : i32
    %3 = arith.muli %arg1, %c256_i32 : i32
    %4 = tpu.assume_multiple %3, 128 : i32
    %c0 = arith.constant 0 : index
    %c0_1 = arith.constant 0 : index
    %5 = arith.index_cast %4 : i32 to index
    %6 = vector.load %arg2[%c0, %c0_1, %5] : memref<1x64x256xbf16, #tpu.memory_space<vmem>>, vector<1x64x256xbf16>
    %7 = vector.shape_cast %6 : vector<1x64x256xbf16> to vector<64x256xbf16>
    %c0_2 = arith.constant 0 : index
    %c0_3 = arith.constant 0 : index
    %8 = vector.load %arg3[%c0_2, %c0_3] : memref<384x64xbf16, #tpu.memory_space<vmem>>, vector<128x64xbf16>
    %cst = arith.constant dense<0.000000e+00> : vector<128x256xf32>
    %9 = tpu.matmul %8, %7, %cst {dimension_numbers = #tpu.dot_dimension_numbers<[1], [0], [0], [1], [0, 0, 1, 1], [], []>} : vector<128x64xbf16>, vector<64x256xbf16>, vector<128x256xf32> -> vector<128x256xf32>
    %10 = vector.extract_strided_slice %9 {offsets = [0, 0], sizes = [32, 256], strides = [1, 1]} : vector<128x256xf32> to vector<32x256xf32>
    %11 = tpu.transpose %10, [1, 0] : vector<32x256xf32> -> vector<256x32xf32>
    %12 = arith.truncf %11 : vector<256x32xf32> to vector<256x32xbf16>
    %c0_4 = arith.constant 0 : index
    %c0_5 = arith.constant 0 : index
    %13 = vector.load %arg6[%c0_4, %c0_5] : memref<256x256xbf16, #tpu.memory_space<vmem>>, vector<32x256xbf16>
    %c128 = arith.constant 128 : index
    %c0_6 = arith.constant 0 : index
    %14 = vector.load %arg6[%c128, %c0_6] : memref<256x256xbf16, #tpu.memory_space<vmem>>, vector<32x256xbf16>
    %cst_7 = arith.constant dense<0.000000e+00> : vector<256x256xf32>
    %15 = tpu.matmul %12, %13, %cst_7 {dimension_numbers = #tpu.dot_dimension_numbers<[1], [0], [0], [1], [0, 0, 1, 1], [], []>} : vector<256x32xbf16>, vector<32x256xbf16>, vector<256x256xf32> -> vector<256x256xf32>
    %cst_8 = arith.constant dense<0xFF800000> : vector<256xf32>
    %16 = vector.multi_reduction <maximumf>, %15, %cst_8 [1] : vector<256x256xf32> to vector<256xf32>
    %17 = vector.shape_cast %16 : vector<256xf32> to vector<256x1xf32>
    %18 = vector.broadcast %17 : vector<256x1xf32> to vector<256x256xf32>
    %19 = arith.subf %15, %18 : vector<256x256xf32>
    %20 = math.exp %19 : vector<256x256xf32>
    %cst_9 = arith.constant dense<0.000000e+00> : vector<256xf32>
    %21 = vector.multi_reduction <add>, %20, %cst_9 [1] : vector<256x256xf32> to vector<256xf32>
    %22 = vector.shape_cast %21 : vector<256xf32> to vector<256x1xf32>
    %23 = tpu.reciprocal %22 {approx = true} : vector<256x1xf32> -> vector<256x1xf32>
    %24 = vector.broadcast %23 : vector<256x1xf32> to vector<256x256xf32>
    %25 = arith.mulf %20, %24 : vector<256x256xf32>
    %26 = arith.truncf %25 : vector<256x256xf32> to vector<256x256xbf16>
    %cst_10 = arith.constant dense<0.000000e+00> : vector<32x256xf32>
    %27 = tpu.matmul %14, %26, %cst_10 {dimension_numbers = #tpu.dot_dimension_numbers<[1], [1], [0], [0], [0, 0, 1, 0], [], []>} : vector<32x256xbf16>, vector<256x256xbf16>, vector<32x256xf32> -> vector<32x256xf32>
    %28 = arith.truncf %27 : vector<32x256xf32> to vector<32x256xbf16>
    %c0_11 = arith.constant 0 : index
    %c0_12 = arith.constant 0 : index
    %29 = vector.load %arg7[%c0_11, %c0_12] : memref<128x256xbf16, #tpu.memory_space<vmem>>, vector<32x256xbf16>
    tpu.vector_store %arg7[%c0_11, %c0_12], %28 {strides = array<i32>} : memref<128x256xbf16, #tpu.memory_space<vmem>>, vector<32x256xbf16>,
    %30 = vector.extract_strided_slice %9 {offsets = [32, 0], sizes = [32, 256], strides = [1, 1]} : vector<128x256xf32> to vector<32x256xf32>
    %31 = tpu.transpose %30, [1, 0] : vector<32x256xf32> -> vector<256x32xf32>
    %32 = arith.truncf %31 : vector<256x32xf32> to vector<256x32xbf16>
    %c32 = arith.constant 32 : index
    %c0_13 = arith.constant 0 : index
    %33 = vector.load %arg6[%c32, %c0_13] : memref<256x256xbf16, #tpu.memory_space<vmem>>, vector<32x256xbf16>
    %c160 = arith.constant 160 : index
    %c0_14 = arith.constant 0 : index
    %34 = vector.load %arg6[%c160, %c0_14] : memref<256x256xbf16, #tpu.memory_space<vmem>>, vector<32x256xbf16>
    %cst_15 = arith.constant dense<0.000000e+00> : vector<256x256xf32>
    %35 = tpu.matmul %32, %33, %cst_15 {dimension_numbers = #tpu.dot_dimension_numbers<[1], [0], [0], [1], [0, 0, 1, 1], [], []>} : vector<256x32xbf16>, vector<32x256xbf16>, vector<256x256xf32> -> vector<256x256xf32>
    %cst_16 = arith.constant dense<0xFF800000> : vector<256xf32>
    %36 = vector.multi_reduction <maximumf>, %35, %cst_16 [1] : vector<256x256xf32> to vector<256xf32>
    %37 = vector.shape_cast %36 : vector<256xf32> to vector<256x1xf32>
    %38 = vector.broadcast %37 : vector<256x1xf32> to vector<256x256xf32>
    %39 = arith.subf %35, %38 : vector<256x256xf32>
    %40 = math.exp %39 : vector<256x256xf32>
    %cst_17 = arith.constant dense<0.000000e+00> : vector<256xf32>
    %41 = vector.multi_reduction <add>, %40, %cst_17 [1] : vector<256x256xf32> to vector<256xf32>
    %42 = vector.shape_cast %41 : vector<256xf32> to vector<256x1xf32>
    %43 = tpu.reciprocal %42 {approx = true} : vector<256x1xf32> -> vector<256x1xf32>
    %44 = vector.broadcast %43 : vector<256x1xf32> to vector<256x256xf32>
    %45 = arith.mulf %40, %44 : vector<256x256xf32>
    %46 = arith.truncf %45 : vector<256x256xf32> to vector<256x256xbf16>
    %cst_18 = arith.constant dense<0.000000e+00> : vector<32x256xf32>
    %47 = tpu.matmul %34, %46, %cst_18 {dimension_numbers = #tpu.dot_dimension_numbers<[1], [1], [0], [0], [0, 0, 1, 0], [], []>} : vector<32x256xbf16>, vector<256x256xbf16>, vector<32x256xf32> -> vector<32x256xf32>
    %48 = arith.truncf %47 : vector<32x256xf32> to vector<32x256xbf16>
    %c32_19 = arith.constant 32 : index
    %c0_20 = arith.constant 0 : index
    %49 = vector.load %arg7[%c32_19, %c0_20] : memref<128x256xbf16, #tpu.memory_space<vmem>>, vector<32x256xbf16>
    tpu.vector_store %arg7[%c32_19, %c0_20], %48 {strides = array<i32>} : memref<128x256xbf16, #tpu.memory_space<vmem>>, vector<32x256xbf16>,
    %50 = vector.extract_strided_slice %9 {offsets = [64, 0], sizes = [32, 256], strides = [1, 1]} : vector<128x256xf32> to vector<32x256xf32>
    %51 = tpu.transpose %50, [1, 0] : vector<32x256xf32> -> vector<256x32xf32>
    %52 = arith.truncf %51 : vector<256x32xf32> to vector<256x32xbf16>
    %c64 = arith.constant 64 : index
    %c0_21 = arith.constant 0 : index
    %53 = vector.load %arg6[%c64, %c0_21] : memref<256x256xbf16, #tpu.memory_space<vmem>>, vector<32x256xbf16>
    %c192 = arith.constant 192 : index
    %c0_22 = arith.constant 0 : index
    %54 = vector.load %arg6[%c192, %c0_22] : memref<256x256xbf16, #tpu.memory_space<vmem>>, vector<32x256xbf16>
    %cst_23 = arith.constant dense<0.000000e+00> : vector<256x256xf32>
    %55 = tpu.matmul %52, %53, %cst_23 {dimension_numbers = #tpu.dot_dimension_numbers<[1], [0], [0], [1], [0, 0, 1, 1], [], []>} : vector<256x32xbf16>, vector<32x256xbf16>, vector<256x256xf32> -> vector<256x256xf32>
    %cst_24 = arith.constant dense<0xFF800000> : vector<256xf32>
    %56 = vector.multi_reduction <maximumf>, %55, %cst_24 [1] : vector<256x256xf32> to vector<256xf32>
    %57 = vector.shape_cast %56 : vector<256xf32> to vector<256x1xf32>
    %58 = vector.broadcast %57 : vector<256x1xf32> to vector<256x256xf32>
    %59 = arith.subf %55, %58 : vector<256x256xf32>
    %60 = math.exp %59 : vector<256x256xf32>
    %cst_25 = arith.constant dense<0.000000e+00> : vector<256xf32>
    %61 = vector.multi_reduction <add>, %60, %cst_25 [1] : vector<256x256xf32> to vector<256xf32>
    %62 = vector.shape_cast %61 : vector<256xf32> to vector<256x1xf32>
    %63 = tpu.reciprocal %62 {approx = true} : vector<256x1xf32> -> vector<256x1xf32>
    %64 = vector.broadcast %63 : vector<256x1xf32> to vector<256x256xf32>
    %65 = arith.mulf %60, %64 : vector<256x256xf32>
    %66 = arith.truncf %65 : vector<256x256xf32> to vector<256x256xbf16>
    %cst_26 = arith.constant dense<0.000000e+00> : vector<32x256xf32>
    %67 = tpu.matmul %54, %66, %cst_26 {dimension_numbers = #tpu.dot_dimension_numbers<[1], [1], [0], [0], [0, 0, 1, 0], [], []>} : vector<32x256xbf16>, vector<256x256xbf16>, vector<32x256xf32> -> vector<32x256xf32>
    %68 = arith.truncf %67 : vector<32x256xf32> to vector<32x256xbf16>
    %c64_27 = arith.constant 64 : index
    %c0_28 = arith.constant 0 : index
    %69 = vector.load %arg7[%c64_27, %c0_28] : memref<128x256xbf16, #tpu.memory_space<vmem>>, vector<32x256xbf16>
    tpu.vector_store %arg7[%c64_27, %c0_28], %68 {strides = array<i32>} : memref<128x256xbf16, #tpu.memory_space<vmem>>, vector<32x256xbf16>,
    %70 = vector.extract_strided_slice %9 {offsets = [96, 0], sizes = [32, 256], strides = [1, 1]} : vector<128x256xf32> to vector<32x256xf32>
    %71 = tpu.transpose %70, [1, 0] : vector<32x256xf32> -> vector<256x32xf32>
    %72 = arith.truncf %71 : vector<256x32xf32> to vector<256x32xbf16>
    %c96 = arith.constant 96 : index
    %c0_29 = arith.constant 0 : index
    %73 = vector.load %arg6[%c96, %c0_29] : memref<256x256xbf16, #tpu.memory_space<vmem>>, vector<32x256xbf16>
    %c224 = arith.constant 224 : index
    %c0_30 = arith.constant 0 : index
    %74 = vector.load %arg6[%c224, %c0_30] : memref<256x256xbf16, #tpu.memory_space<vmem>>, vector<32x256xbf16>
    %cst_31 = arith.constant dense<0.000000e+00> : vector<256x256xf32>
    %75 = tpu.matmul %72, %73, %cst_31 {dimension_numbers = #tpu.dot_dimension_numbers<[1], [0], [0], [1], [0, 0, 1, 1], [], []>} : vector<256x32xbf16>, vector<32x256xbf16>, vector<256x256xf32> -> vector<256x256xf32>
    %cst_32 = arith.constant dense<0xFF800000> : vector<256xf32>
    %76 = vector.multi_reduction <maximumf>, %75, %cst_32 [1] : vector<256x256xf32> to vector<256xf32>
    %77 = vector.shape_cast %76 : vector<256xf32> to vector<256x1xf32>
    %78 = vector.broadcast %77 : vector<256x1xf32> to vector<256x256xf32>
    %79 = arith.subf %75, %78 : vector<256x256xf32>
    %80 = math.exp %79 : vector<256x256xf32>
    %cst_33 = arith.constant dense<0.000000e+00> : vector<256xf32>
    %81 = vector.multi_reduction <add>, %80, %cst_33 [1] : vector<256x256xf32> to vector<256xf32>
    %82 = vector.shape_cast %81 : vector<256xf32> to vector<256x1xf32>
    %83 = tpu.reciprocal %82 {approx = true} : vector<256x1xf32> -> vector<256x1xf32>
    %84 = vector.broadcast %83 : vector<256x1xf32> to vector<256x256xf32>
    %85 = arith.mulf %80, %84 : vector<256x256xf32>
    %86 = arith.truncf %85 : vector<256x256xf32> to vector<256x256xbf16>
    %cst_34 = arith.constant dense<0.000000e+00> : vector<32x256xf32>
    %87 = tpu.matmul %74, %86, %cst_34 {dimension_numbers = #tpu.dot_dimension_numbers<[1], [1], [0], [0], [0, 0, 1, 0], [], []>} : vector<32x256xbf16>, vector<256x256xbf16>, vector<32x256xf32> -> vector<32x256xf32>
    %88 = arith.truncf %87 : vector<32x256xf32> to vector<32x256xbf16>
    %c96_35 = arith.constant 96 : index
    %c0_36 = arith.constant 0 : index
    %89 = vector.load %arg7[%c96_35, %c0_36] : memref<128x256xbf16, #tpu.memory_space<vmem>>, vector<32x256xbf16>
    tpu.vector_store %arg7[%c96_35, %c0_36], %88 {strides = array<i32>} : memref<128x256xbf16, #tpu.memory_space<vmem>>, vector<32x256xbf16>,
    %c0_37 = arith.constant 0 : index
    %c0_38 = arith.constant 0 : index
    %90 = vector.load %arg4[%c0_37, %c0_38] : memref<64x128xbf16, #tpu.memory_space<vmem>>, vector<64x128xbf16>
    %c0_39 = arith.constant 0 : index
    %c0_40 = arith.constant 0 : index
    %91 = vector.load %arg7[%c0_39, %c0_40] : memref<128x256xbf16, #tpu.memory_space<vmem>>, vector<128x256xbf16>
    %cst_41 = arith.constant dense<0.000000e+00> : vector<64x256xf32>
    %92 = tpu.matmul %90, %91, %cst_41 {dimension_numbers = #tpu.dot_dimension_numbers<[1], [0], [0], [1], [0, 0, 1, 1], [], []>} : vector<64x128xbf16>, vector<128x256xbf16>, vector<64x256xf32> -> vector<64x256xf32>
    %c0_42 = arith.constant 0 : index
    %c0_43 = arith.constant 0 : index
    %c0_44 = arith.constant 0 : index
    %93 = vector.load %arg5[%c0_42, %c0_43, %c0_44] : memref<1x64x256xf32, #tpu.memory_space<vmem>>, vector<1x64x256xf32>
    %94 = vector.shape_cast %93 : vector<1x64x256xf32> to vector<64x256xf32>
    %95 = vector.shape_cast %92 : vector<64x256xf32> to vector<1x64x256xf32>
    tpu.vector_store %arg5[%c0_42, %c0_43, %c0_44], %95 {strides = array<i32>} : memref<1x64x256xf32, #tpu.memory_space<vmem>>, vector<1x64x256xf32>,
    return
  }
  func.func @transform_0(%arg0: i32, %arg1: i32) -> (i32, i32, i32) {
    %c0_i32 = arith.constant 0 : i32
    %c0_i32_0 = arith.constant 0 : i32
    %c0_i32_1 = arith.constant 0 : i32
    return %arg0, %c0_i32, %c0_i32_0 : i32, i32, i32
  }
  func.func @transform_1(%arg0: i32, %arg1: i32) -> (i32, i32) {
    %c0_i32 = arith.constant 0 : i32
    %c0_i32_0 = arith.constant 0 : i32
    %c0_i32_1 = arith.constant 0 : i32
    return %c0_i32, %c0_i32_0 : i32, i32
  }
  func.func @transform_2(%arg0: i32, %arg1: i32) -> (i32, i32) {
    %c0_i32 = arith.constant 0 : i32
    %c0_i32_0 = arith.constant 0 : i32
    %c0_i32_1 = arith.constant 0 : i32
    return %c0_i32, %c0_i32_0 : i32, i32
  }
  func.func @transform_3(%arg0: i32, %arg1: i32) -> (i32, i32, i32) {
    %c0_i32 = arith.constant 0 : i32
    %c0_i32_0 = arith.constant 0 : i32
    return %arg0, %c0_i32, %arg1 : i32, i32, i32
  }
}

module attributes {stable_mosaic.version = 11 : i64} {
  func.func @_attn_kernel(%arg0: i32, %arg1: i32, %arg2: memref<1x64x256xbf16, #tpu.memory_space<vmem>>, %arg3: memref<384x64xbf16, #tpu.memory_space<vmem>>, %arg4: memref<64x128xbf16, #tpu.memory_space<vmem>>, %arg5: memref<1x64x256xf32, #tpu.memory_space<vmem>>, %arg6: memref<256x256xbf16, #tpu.memory_space<vmem>>, %arg7: memref<128x256xbf16, #tpu.memory_space<vmem>>) attributes {dimension_semantics = [#tpu.dimension_semantics<parallel>, #tpu.dimension_semantics<arbitrary>], iteration_bounds = array<i64: 2, 1>, scalar_prefetch = 0 : i64, scratch_operands = 2 : i64, tpu.core_type = #tpu.core_type<tc>, window_params = [{transform_indices = @transform_0, window_bounds = array<i64: 1, 64, 256>}, {pipeline_mode = #tpu.pipeline_mode<synchronous>, transform_indices = @transform_1, window_bounds = array<i64: 384, 64>}, {pipeline_mode = #tpu.pipeline_mode<synchronous>, transform_indices = @transform_2, window_bounds = array<i64: 64, 128>}, {transform_indices = @transform_3, window_bounds = array<i64: 1, 64, 256>}]} {
    %c0_i32 = arith.constant 0 : i32
    %0 = arith.cmpi eq, %arg1, %c0_i32 : i32
    %1 = arith.extui %0 : i1 to i32
    %c0_i32_0 = arith.constant 0 : i32
    %2 = arith.cmpi ne, %1, %c0_i32_0 : i32
    scf.if %2 {
      %c128_45 = arith.constant 128 : index
      %c0_46 = arith.constant 0 : index
      %96 = vector.load %arg3[%c128_45, %c0_46] : memref<384x64xbf16, #tpu.memory_space<vmem>>, vector<256x64xbf16>
      %c0_47 = arith.constant 0 : index
      %c0_48 = arith.constant 0 : index
      %c0_49 = arith.constant 0 : index
      %97 = vector.load %arg2[%c0_47, %c0_48, %c0_49] : memref<1x64x256xbf16, #tpu.memory_space<vmem>>, vector<1x64x256xbf16>
      %98 = vector.shape_cast %97 : vector<1x64x256xbf16> to vector<64x256xbf16>
      %cst_50 = arith.constant dense<0.000000e+00> : vector<256x256xf32>
      %99 = tpu.matmul %96, %98, %cst_50 {dimension_numbers = #tpu.dot_dimension_numbers<[1], [0], [0], [1], [0, 0, 1, 1], [], []>} : vector<256x64xbf16>, vector<64x256xbf16>, vector<256x256xf32> -> vector<256x256xf32>
      %100 = arith.truncf %99 : vector<256x256xf32> to vector<256x256xbf16>
      %c0_51 = arith.constant 0 : index
      %c0_52 = arith.constant 0 : index
      %101 = vector.load %arg6[%c0_51, %c0_52] : memref<256x256xbf16, #tpu.memory_space<vmem>>, vector<256x256xbf16>
      tpu.vector_store %arg6[%c0_51, %c0_52], %100 {strides = array<i32>} : memref<256x256xbf16, #tpu.memory_space<vmem>>, vector<256x256xbf16>,
    } else {
    }
    %c256_i32 = arith.constant 256 : i32
    %3 = arith.muli %arg1, %c256_i32 : i32
    %4 = tpu.assume_multiple %3, 128 : i32
    %c0 = arith.constant 0 : index
    %c0_1 = arith.constant 0 : index
    %5 = arith.index_cast %4 : i32 to index
    %6 = vector.load %arg2[%c0, %c0_1, %5] : memref<1x64x256xbf16, #tpu.memory_space<vmem>>, vector<1x64x256xbf16>
    %7 = vector.shape_cast %6 : vector<1x64x256xbf16> to vector<64x256xbf16>
    %c0_2 = arith.constant 0 : index
    %c0_3 = arith.constant 0 : index
    %8 = vector.load %arg3[%c0_2, %c0_3] : memref<384x64xbf16, #tpu.memory_space<vmem>>, vector<128x64xbf16>
    %cst = arith.constant dense<0.000000e+00> : vector<128x256xf32>
    %9 = tpu.matmul %8, %7, %cst {dimension_numbers = #tpu.dot_dimension_numbers<[1], [0], [0], [1], [0, 0, 1, 1], [], []>} : vector<128x64xbf16>, vector<64x256xbf16>, vector<128x256xf32> -> vector<128x256xf32>
    %10 = vector.extract_strided_slice %9 {offsets = [0, 0], sizes = [32, 256], strides = [1, 1]} : vector<128x256xf32> to vector<32x256xf32>
    %11 = tpu.transpose %10, [1, 0] : vector<32x256xf32> -> vector<256x32xf32>
    %12 = arith.truncf %11 : vector<256x32xf32> to vector<256x32xbf16>
    %c0_4 = arith.constant 0 : index
    %c0_5 = arith.constant 0 : index
    %13 = vector.load %arg6[%c0_4, %c0_5] : memref<256x256xbf16, #tpu.memory_space<vmem>>, vector<32x256xbf16>
    %c128 = arith.constant 128 : index
    %c0_6 = arith.constant 0 : index
    %14 = vector.load %arg6[%c128, %c0_6] : memref<256x256xbf16, #tpu.memory_space<vmem>>, vector<32x256xbf16>
    %cst_7 = arith.constant dense<0.000000e+00> : vector<256x256xf32>
    %15 = tpu.matmul %12, %13, %cst_7 {dimension_numbers = #tpu.dot_dimension_numbers<[1], [0], [0], [1], [0, 0, 1, 1], [], []>} : vector<256x32xbf16>, vector<32x256xbf16>, vector<256x256xf32> -> vector<256x256xf32>
    %cst_8 = arith.constant dense<0xFF800000> : vector<256xf32>
    %16 = vector.multi_reduction <maximumf>, %15, %cst_8 [1] : vector<256x256xf32> to vector<256xf32>
    %17 = vector.shape_cast %16 : vector<256xf32> to vector<256x1xf32>
    %18 = vector.broadcast %17 : vector<256x1xf32> to vector<256x256xf32>
    %19 = arith.subf %15, %18 : vector<256x256xf32>
    %20 = math.exp %19 : vector<256x256xf32>
    %cst_9 = arith.constant dense<0.000000e+00> : vector<256xf32>
    %21 = vector.multi_reduction <add>, %20, %cst_9 [1] : vector<256x256xf32> to vector<256xf32>
    %22 = vector.shape_cast %21 : vector<256xf32> to vector<256x1xf32>
    %23 = tpu.reciprocal %22 {approx = true} : vector<256x1xf32> -> vector<256x1xf32>
    %24 = vector.broadcast %23 : vector<256x1xf32> to vector<256x256xf32>
    %25 = arith.mulf %20, %24 : vector<256x256xf32>
    %26 = arith.truncf %25 : vector<256x256xf32> to vector<256x256xbf16>
    %cst_10 = arith.constant dense<0.000000e+00> : vector<32x256xf32>
    %27 = tpu.matmul %14, %26, %cst_10 {dimension_numbers = #tpu.dot_dimension_numbers<[1], [1], [0], [0], [0, 0, 1, 0], [], []>} : vector<32x256xbf16>, vector<256x256xbf16>, vector<32x256xf32> -> vector<32x256xf32>
    %28 = arith.truncf %27 : vector<32x256xf32> to vector<32x256xbf16>
    %c0_11 = arith.constant 0 : index
    %c0_12 = arith.constant 0 : index
    %29 = vector.load %arg7[%c0_11, %c0_12] : memref<128x256xbf16, #tpu.memory_space<vmem>>, vector<32x256xbf16>
    tpu.vector_store %arg7[%c0_11, %c0_12], %28 {strides = array<i32>} : memref<128x256xbf16, #tpu.memory_space<vmem>>, vector<32x256xbf16>,
    %30 = vector.extract_strided_slice %9 {offsets = [32, 0], sizes = [32, 256], strides = [1, 1]} : vector<128x256xf32> to vector<32x256xf32>
    %31 = tpu.transpose %30, [1, 0] : vector<32x256xf32> -> vector<256x32xf32>
    %32 = arith.truncf %31 : vector<256x32xf32> to vector<256x32xbf16>
    %c32 = arith.constant 32 : index
    %c0_13 = arith.constant 0 : index
    %33 = vector.load %arg6[%c32, %c0_13] : memref<256x256xbf16, #tpu.memory_space<vmem>>, vector<32x256xbf16>
    %c160 = arith.constant 160 : index
    %c0_14 = arith.constant 0 : index
    %34 = vector.load %arg6[%c160, %c0_14] : memref<256x256xbf16, #tpu.memory_space<vmem>>, vector<32x256xbf16>
    %cst_15 = arith.constant dense<0.000000e+00> : vector<256x256xf32>
    %35 = tpu.matmul %32, %33, %cst_15 {dimension_numbers = #tpu.dot_dimension_numbers<[1], [0], [0], [1], [0, 0, 1, 1], [], []>} : vector<256x32xbf16>, vector<32x256xbf16>, vector<256x256xf32> -> vector<256x256xf32>
    %cst_16 = arith.constant dense<0xFF800000> : vector<256xf32>
    %36 = vector.multi_reduction <maximumf>, %35, %cst_16 [1] : vector<256x256xf32> to vector<256xf32>
    %37 = vector.shape_cast %36 : vector<256xf32> to vector<256x1xf32>
    %38 = vector.broadcast %37 : vector<256x1xf32> to vector<256x256xf32>
    %39 = arith.subf %35, %38 : vector<256x256xf32>
    %40 = math.exp %39 : vector<256x256xf32>
    %cst_17 = arith.constant dense<0.000000e+00> : vector<256xf32>
    %41 = vector.multi_reduction <add>, %40, %cst_17 [1] : vector<256x256xf32> to vector<256xf32>
    %42 = vector.shape_cast %41 : vector<256xf32> to vector<256x1xf32>
    %43 = tpu.reciprocal %42 {approx = true} : vector<256x1xf32> -> vector<256x1xf32>
    %44 = vector.broadcast %43 : vector<256x1xf32> to vector<256x256xf32>
    %45 = arith.mulf %40, %44 : vector<256x256xf32>
    %46 = arith.truncf %45 : vector<256x256xf32> to vector<256x256xbf16>
    %cst_18 = arith.constant dense<0.000000e+00> : vector<32x256xf32>
    %47 = tpu.matmul %34, %46, %cst_18 {dimension_numbers = #tpu.dot_dimension_numbers<[1], [1], [0], [0], [0, 0, 1, 0], [], []>} : vector<32x256xbf16>, vector<256x256xbf16>, vector<32x256xf32> -> vector<32x256xf32>
    %48 = arith.truncf %47 : vector<32x256xf32> to vector<32x256xbf16>
    %c32_19 = arith.constant 32 : index
    %c0_20 = arith.constant 0 : index
    %49 = vector.load %arg7[%c32_19, %c0_20] : memref<128x256xbf16, #tpu.memory_space<vmem>>, vector<32x256xbf16>
    tpu.vector_store %arg7[%c32_19, %c0_20], %48 {strides = array<i32>} : memref<128x256xbf16, #tpu.memory_space<vmem>>, vector<32x256xbf16>,
    %50 = vector.extract_strided_slice %9 {offsets = [64, 0], sizes = [32, 256], strides = [1, 1]} : vector<128x256xf32> to vector<32x256xf32>
    %51 = tpu.transpose %50, [1, 0] : vector<32x256xf32> -> vector<256x32xf32>
    %52 = arith.truncf %51 : vector<256x32xf32> to vector<256x32xbf16>
    %c64 = arith.constant 64 : index
    %c0_21 = arith.constant 0 : index
    %53 = vector.load %arg6[%c64, %c0_21] : memref<256x256xbf16, #tpu.memory_space<vmem>>, vector<32x256xbf16>
    %c192 = arith.constant 192 : index
    %c0_22 = arith.constant 0 : index
    %54 = vector.load %arg6[%c192, %c0_22] : memref<256x256xbf16, #tpu.memory_space<vmem>>, vector<32x256xbf16>
    %cst_23 = arith.constant dense<0.000000e+00> : vector<256x256xf32>
    %55 = tpu.matmul %52, %53, %cst_23 {dimension_numbers = #tpu.dot_dimension_numbers<[1], [0], [0], [1], [0, 0, 1, 1], [], []>} : vector<256x32xbf16>, vector<32x256xbf16>, vector<256x256xf32> -> vector<256x256xf32>
    %cst_24 = arith.constant dense<0xFF800000> : vector<256xf32>
    %56 = vector.multi_reduction <maximumf>, %55, %cst_24 [1] : vector<256x256xf32> to vector<256xf32>
    %57 = vector.shape_cast %56 : vector<256xf32> to vector<256x1xf32>
    %58 = vector.broadcast %57 : vector<256x1xf32> to vector<256x256xf32>
    %59 = arith.subf %55, %58 : vector<256x256xf32>
    %60 = math.exp %59 : vector<256x256xf32>
    %cst_25 = arith.constant dense<0.000000e+00> : vector<256xf32>
    %61 = vector.multi_reduction <add>, %60, %cst_25 [1] : vector<256x256xf32> to vector<256xf32>
    %62 = vector.shape_cast %61 : vector<256xf32> to vector<256x1xf32>
    %63 = tpu.reciprocal %62 {approx = true} : vector<256x1xf32> -> vector<256x1xf32>
    %64 = vector.broadcast %63 : vector<256x1xf32> to vector<256x256xf32>
    %65 = arith.mulf %60, %64 : vector<256x256xf32>
    %66 = arith.truncf %65 : vector<256x256xf32> to vector<256x256xbf16>
    %cst_26 = arith.constant dense<0.000000e+00> : vector<32x256xf32>
    %67 = tpu.matmul %54, %66, %cst_26 {dimension_numbers = #tpu.dot_dimension_numbers<[1], [1], [0], [0], [0, 0, 1, 0], [], []>} : vector<32x256xbf16>, vector<256x256xbf16>, vector<32x256xf32> -> vector<32x256xf32>
    %68 = arith.truncf %67 : vector<32x256xf32> to vector<32x256xbf16>
    %c64_27 = arith.constant 64 : index
    %c0_28 = arith.constant 0 : index
    %69 = vector.load %arg7[%c64_27, %c0_28] : memref<128x256xbf16, #tpu.memory_space<vmem>>, vector<32x256xbf16>
    tpu.vector_store %arg7[%c64_27, %c0_28], %68 {strides = array<i32>} : memref<128x256xbf16, #tpu.memory_space<vmem>>, vector<32x256xbf16>,
    %70 = vector.extract_strided_slice %9 {offsets = [96, 0], sizes = [32, 256], strides = [1, 1]} : vector<128x256xf32> to vector<32x256xf32>
    %71 = tpu.transpose %70, [1, 0] : vector<32x256xf32> -> vector<256x32xf32>
    %72 = arith.truncf %71 : vector<256x32xf32> to vector<256x32xbf16>
    %c96 = arith.constant 96 : index
    %c0_29 = arith.constant 0 : index
    %73 = vector.load %arg6[%c96, %c0_29] : memref<256x256xbf16, #tpu.memory_space<vmem>>, vector<32x256xbf16>
    %c224 = arith.constant 224 : index
    %c0_30 = arith.constant 0 : index
    %74 = vector.load %arg6[%c224, %c0_30] : memref<256x256xbf16, #tpu.memory_space<vmem>>, vector<32x256xbf16>
    %cst_31 = arith.constant dense<0.000000e+00> : vector<256x256xf32>
    %75 = tpu.matmul %72, %73, %cst_31 {dimension_numbers = #tpu.dot_dimension_numbers<[1], [0], [0], [1], [0, 0, 1, 1], [], []>} : vector<256x32xbf16>, vector<32x256xbf16>, vector<256x256xf32> -> vector<256x256xf32>
    %cst_32 = arith.constant dense<0xFF800000> : vector<256xf32>
    %76 = vector.multi_reduction <maximumf>, %75, %cst_32 [1] : vector<256x256xf32> to vector<256xf32>
    %77 = vector.shape_cast %76 : vector<256xf32> to vector<256x1xf32>
    %78 = vector.broadcast %77 : vector<256x1xf32> to vector<256x256xf32>
    %79 = arith.subf %75, %78 : vector<256x256xf32>
    %80 = math.exp %79 : vector<256x256xf32>
    %cst_33 = arith.constant dense<0.000000e+00> : vector<256xf32>
    %81 = vector.multi_reduction <add>, %80, %cst_33 [1] : vector<256x256xf32> to vector<256xf32>
    %82 = vector.shape_cast %81 : vector<256xf32> to vector<256x1xf32>
    %83 = tpu.reciprocal %82 {approx = true} : vector<256x1xf32> -> vector<256x1xf32>
    %84 = vector.broadcast %83 : vector<256x1xf32> to vector<256x256xf32>
    %85 = arith.mulf %80, %84 : vector<256x256xf32>
    %86 = arith.truncf %85 : vector<256x256xf32> to vector<256x256xbf16>
    %cst_34 = arith.constant dense<0.000000e+00> : vector<32x256xf32>
    %87 = tpu.matmul %74, %86, %cst_34 {dimension_numbers = #tpu.dot_dimension_numbers<[1], [1], [0], [0], [0, 0, 1, 0], [], []>} : vector<32x256xbf16>, vector<256x256xbf16>, vector<32x256xf32> -> vector<32x256xf32>
    %88 = arith.truncf %87 : vector<32x256xf32> to vector<32x256xbf16>
    %c96_35 = arith.constant 96 : index
    %c0_36 = arith.constant 0 : index
    %89 = vector.load %arg7[%c96_35, %c0_36] : memref<128x256xbf16, #tpu.memory_space<vmem>>, vector<32x256xbf16>
    tpu.vector_store %arg7[%c96_35, %c0_36], %88 {strides = array<i32>} : memref<128x256xbf16, #tpu.memory_space<vmem>>, vector<32x256xbf16>,
    %c0_37 = arith.constant 0 : index
    %c0_38 = arith.constant 0 : index
    %90 = vector.load %arg4[%c0_37, %c0_38] : memref<64x128xbf16, #tpu.memory_space<vmem>>, vector<64x128xbf16>
    %c0_39 = arith.constant 0 : index
    %c0_40 = arith.constant 0 : index
    %91 = vector.load %arg7[%c0_39, %c0_40] : memref<128x256xbf16, #tpu.memory_space<vmem>>, vector<128x256xbf16>
    %cst_41 = arith.constant dense<0.000000e+00> : vector<64x256xf32>
    %92 = tpu.matmul %90, %91, %cst_41 {dimension_numbers = #tpu.dot_dimension_numbers<[1], [0], [0], [1], [0, 0, 1, 1], [], []>} : vector<64x128xbf16>, vector<128x256xbf16>, vector<64x256xf32> -> vector<64x256xf32>
    %c0_42 = arith.constant 0 : index
    %c0_43 = arith.constant 0 : index
    %c0_44 = arith.constant 0 : index
    %93 = vector.load %arg5[%c0_42, %c0_43, %c0_44] : memref<1x64x256xf32, #tpu.memory_space<vmem>>, vector<1x64x256xf32>
    %94 = vector.shape_cast %93 : vector<1x64x256xf32> to vector<64x256xf32>
    %95 = vector.shape_cast %92 : vector<64x256xf32> to vector<1x64x256xf32>
    tpu.vector_store %arg5[%c0_42, %c0_43, %c0_44], %95 {strides = array<i32>} : memref<1x64x256xf32, #tpu.memory_space<vmem>>, vector<1x64x256xf32>,
    return
  }
  func.func @transform_0(%arg0: i32, %arg1: i32) -> (i32, i32, i32) {
    %c0_i32 = arith.constant 0 : i32
    %c0_i32_0 = arith.constant 0 : i32
    %c0_i32_1 = arith.constant 0 : i32
    return %arg0, %c0_i32, %c0_i32_0 : i32, i32, i32
  }
  func.func @transform_1(%arg0: i32, %arg1: i32) -> (i32, i32) {
    %c0_i32 = arith.constant 0 : i32
    %c0_i32_0 = arith.constant 0 : i32
    %c0_i32_1 = arith.constant 0 : i32
    return %c0_i32, %c0_i32_0 : i32, i32
  }
  func.func @transform_2(%arg0: i32, %arg1: i32) -> (i32, i32) {
    %c0_i32 = arith.constant 0 : i32
    %c0_i32_0 = arith.constant 0 : i32
    %c0_i32_1 = arith.constant 0 : i32
    return %c0_i32, %c0_i32_0 : i32, i32
  }
  func.func @transform_3(%arg0: i32, %arg1: i32) -> (i32, i32, i32) {
    %c0_i32 = arith.constant 0 : i32
    %c0_i32_0 = arith.constant 0 : i32
    return %arg0, %c0_i32, %arg1 : i32, i32, i32
  }
}

</mosaic_0001>

<llo_original>
// kernel: tpu_custom_call.1
$region0: #{tpu_custom_call.1}
  #allocation0 [shape = 'u32[]', space=smem, size = 0x4, offset = 0x4, fixed_abs, tag = 'smem constant byte address 0x4 - core index']
  #allocation1 [shape = 'u32[144,128]{1,0:T(1,128)}', space=vmem, size = 0x12000, scoped, tag = 'internal scratch']
  #allocation2 [shape = 'bf16[256,256]{1,0:T(16,128)(2,1)}', space=vmem, size = 0x20000, scoped, tag = 'scratch operand']
  #allocation3 [shape = 'bf16[128,256]{1,0:T(16,128)(2,1)}', space=vmem, size = 0x10000, scoped, tag = 'scratch operand']
  %s0 = inlined_call_operand.vmem [shape: bf16[2,64,256], index: 0, kind: input, shape index: {}]
  %s1 = inlined_call_operand.vmem [shape: bf16[384,64], index: 1, kind: input, shape index: {}]
  %s2 = inlined_call_operand.vmem [shape: bf16[64,128], index: 2, kind: input, shape index: {}]
  %s3 = inlined_call_operand.hbm [shape: f32[2,64,256], index: 3, kind: output, shape index: {}]
  %s4 = sld [smem:[#allocation0]]
  $region49: #{tpu_custom_call.1} parent=0
    _
  %s6 = ssub.s32 1, %s4
  %s7 = scalar_select 0, %s6, %s4
  $region1: #{tpu_custom_call.1} parent=0
    #allocation4 [shape = 'u8[131072]{0}', space=vmem, size = 0x20000, scoped, tag = 'output window, operand 0']
    #allocation5 [shape = 's32[2]{0}', space=sflag, size = 0x8, scoped, tag = 'scoped memory for tpu_custom_call.1']
    %8 = vsyncpa [#allocation5], 0
    %s9 = scalar_lea.sflag [#allocation5], 1
    %10 = vsyncpa %s9, 0
    loop: start=0, step=1, limit=4
    $region2: #{tpu_custom_call.1} parent=1 // loop_pre_header
      _
    $region3: #{tpu_custom_call.1} parent=1 // loop_header
      %s12 = sphi 0, %s16
      %p13 = scmp.ge.s32.totalorder %s12, 4
      %s19 = sphi 0, %s31
      %s20 = sphi 0, %s27
      %s21 = sphi 0, %s19
      %s22 = sphi 0, %s20
      %s23 = sphi 0, %s21
      %s24 = sphi 0, %s22
      %s34 = sphi 0, %s36
      %s37 = sphi 0, %s34
      %s38 = sphi 0, %s37
      %s54 = sphi 0, %s38
      %s58 = sphi 0, %s58
      %s60 = sphi 0, %s58
      %s61 = sphi 0, %s60
      %s75 = sphi 0, %s61
      %s79 = sphi 0, %s79
      %s81 = sphi 0, %s79
      %s82 = sphi 0, %s81
      %s96 = sphi 0, %s82
      %s104 = sphi 0, %s106
      %s107 = sphi 0, %s104
      %s108 = sphi 0, %s107
      %s124 = sphi 0, %s108
    $region4: #{tpu_custom_call.1} parent=1 // loop_header_branch
      %15 = sbr.rel (%p13) target = $region8
    $region5: #{tpu_custom_call.1} parent=1 // loop_body
      %s17 = ssub.s32 %s12, 1
      %s18 = ssub.s32 %s12, 2
      %s25 = sadd.s32 1, %s20
      %p26 = scmp.ge.s32.totalorder %s25, 1
      %s27 = scalar_select %p26, 0, %s25
      %s28 = sadd.s32 1, %s19
      %s29 = scalar_select %p26, %s28, %s19
      %p30 = scmp.ge.s32.totalorder %s29, 2
      %s31 = scalar_select %p30, 0, %s29
      %s32 = ssub.s32 %s19, %s31
      %p33 = scmp.eq.s32.totalorder %s32, 0
      %s35 = sadd.s32 %s34, 1
      %s36 = scalar_select %p33, %s34, %s35
      %p39 = pneg %p33
      %p40 = scmp.eq.s32.totalorder %s12, 1
      %p41 = por %p39, %p40
      %p42 = scmp.ne.s32.totalorder %s34, %s37
      %p43 = scmp.eq.s32.totalorder %s12, 0
      %p44 = por %p42, %p43
      %p45 = scmp.ne.s32.totalorder %s34, %s37
      %p46 = scmp.eq.s32.totalorder %s17, 1
      %p47 = por %p45, %p46
      %p48 = scmp.ne.s32.totalorder %s37, %s38
      %p49 = scmp.eq.s32.totalorder %s17, 0
      %p50 = por %p48, %p49
      %p51 = scmp.ne.s32.totalorder %s37, %s38
      %p52 = scmp.eq.s32.totalorder %s18, 1
      %p53 = por %p51, %p52
      %p55 = scmp.ne.s32.totalorder %s38, %s54
      %p56 = scmp.eq.s32.totalorder %s18, 0
      %p57 = por %p55, %p56
      %s59 = sadd.s32 %s58, 1
      %p62 = scmp.eq.s32.totalorder %s12, 1
      %p63 = scmp.ne.s32.totalorder %s58, %s60
      %p64 = scmp.eq.s32.totalorder %s12, 0
      %p65 = por %p63, %p64
      %p66 = scmp.ne.s32.totalorder %s58, %s60
      %p67 = scmp.eq.s32.totalorder %s17, 1
      %p68 = por %p66, %p67
      %p69 = scmp.ne.s32.totalorder %s60, %s61
      %p70 = scmp.eq.s32.totalorder %s17, 0
      %p71 = por %p69, %p70
      %p72 = scmp.ne.s32.totalorder %s60, %s61
      %p73 = scmp.eq.s32.totalorder %s18, 1
      %p74 = por %p72, %p73
      %p76 = scmp.ne.s32.totalorder %s61, %s75
      %p77 = scmp.eq.s32.totalorder %s18, 0
      %p78 = por %p76, %p77
      %s80 = sadd.s32 %s79, 1
      %p83 = scmp.eq.s32.totalorder %s12, 1
      %p84 = scmp.ne.s32.totalorder %s79, %s81
      %p85 = scmp.eq.s32.totalorder %s12, 0
      %p86 = por %p84, %p85
      %p87 = scmp.ne.s32.totalorder %s79, %s81
      %p88 = scmp.eq.s32.totalorder %s17, 1
      %p89 = por %p87, %p88
      %p90 = scmp.ne.s32.totalorder %s81, %s82
      %p91 = scmp.eq.s32.totalorder %s17, 0
      %p92 = por %p90, %p91
      %p93 = scmp.ne.s32.totalorder %s81, %s82
      %p94 = scmp.eq.s32.totalorder %s18, 1
      %p95 = por %p93, %p94
      %p97 = scmp.ne.s32.totalorder %s82, %s96
      %p98 = scmp.eq.s32.totalorder %s18, 0
      %p99 = por %p97, %p98
      %s100 = ssub.s32 %s19, %s31
      %s101 = ssub.s32 %s20, %s27
      %s102 = sor.u32 %s100, %s101
      %p103 = scmp.eq.s32.totalorder %s102, 0
      %s105 = sadd.s32 %s104, 1
      %s106 = scalar_select %p103, %s104, %s105
      %p109 = pneg %p103
      %p110 = scmp.eq.s32.totalorder %s12, 1
      %p111 = por %p109, %p110
      %p112 = scmp.ne.s32.totalorder %s104, %s107
      %p113 = scmp.eq.s32.totalorder %s12, 0
      %p114 = por %p112, %p113
      %p115 = scmp.ne.s32.totalorder %s104, %s107
      %p116 = scmp.eq.s32.totalorder %s17, 1
      %p117 = por %p115, %p116
      %p118 = scmp.ne.s32.totalorder %s107, %s108
      %p119 = scmp.eq.s32.totalorder %s17, 0
      %p120 = por %p118, %p119
      %p121 = scmp.ne.s32.totalorder %s107, %s108
      %p122 = scmp.eq.s32.totalorder %s18, 1
      %p123 = por %p121, %p122
      %p125 = scmp.ne.s32.totalorder %s108, %s124
      %p126 = scmp.eq.s32.totalorder %s18, 0
      %p127 = por %p125, %p126
      %p128 = scmp.le.s32.totalorder 1, %s12
      %p129 = scmp.lt.s32.totalorder %s12, 3
      %p130 = pnand %p128, %p129
      %p131 = pneg %p130
      // Predicated region
      $region9: #{tpu_custom_call.1} parent=5 // pred_check
        _
      $region10: #{tpu_custom_call.1} parent=5 // pred_check_branch
        %133 = sbr.rel (%p130) target = $region12
      $region11: #{tpu_custom_call.1} parent=5 // pred_region
        %s134 = ssub.s32 %s12, 1
        // Predicated region
        $region13: #{tpu_custom_call.1} parent=11 // pred_check
          %p135 = pneg %p71
        $region14: #{tpu_custom_call.1} parent=11 // pred_check_branch
          %137 = sbr.rel (%p135) target = $region16
        $region15: #{tpu_custom_call.1} parent=11 // pred_region
          _
        $region16: #{tpu_custom_call.1} parent=11 // pred_fallthru
          _
        // Predicated region
        $region17: #{tpu_custom_call.1} parent=11 // pred_check
          %p138 = pneg %p92
        $region18: #{tpu_custom_call.1} parent=11 // pred_check_branch
          %140 = sbr.rel (%p138) target = $region20
        $region19: #{tpu_custom_call.1} parent=11 // pred_region
          _
        $region20: #{tpu_custom_call.1} parent=11 // pred_fallthru
          _
      $region12: #{tpu_custom_call.1} parent=5 // pred_fallthru
        _
      %p141 = scmp.lt.s32.totalorder %s12, 2
      // Predicated region
      $region21: #{tpu_custom_call.1} parent=5 // pred_check
        %p142 = pneg %p141
      $region22: #{tpu_custom_call.1} parent=5 // pred_check_branch
        %144 = sbr.rel (%p142) target = $region24
      $region23: #{tpu_custom_call.1} parent=5 // pred_region
        // Predicated region
        $region25: #{tpu_custom_call.1} parent=23 // pred_check
          %p145 = pneg %p44
        $region26: #{tpu_custom_call.1} parent=23 // pred_check_branch
          %147 = sbr.rel (%p145) target = $region28
        $region27: #{tpu_custom_call.1} parent=23 // pred_region
          %p148 = scmp.lt.s32.totalorder %s19, 1
          %s149 = scalar_select %p148, %s19, 1
          %s150 = smul.addr %s149, 16
          %s151 = smul.addr %s150, 4
          %s152 = scalar_lea.vmem %s0, %s151
        $region28: #{tpu_custom_call.1} parent=23 // pred_fallthru
          _
      $region24: #{tpu_custom_call.1} parent=5 // pred_fallthru
        _
      %p153 = scmp.le.s32.totalorder 1, %s12
      %p154 = scmp.lt.s32.totalorder %s12, 3
      %p155 = pnand %p153, %p154
      %p156 = pneg %p155
      // Predicated region
      $region29: #{tpu_custom_call.1} parent=5 // pred_check
        _
      $region30: #{tpu_custom_call.1} parent=5 // pred_check_branch
        %158 = sbr.rel (%p155) target = $region32
      $region31: #{tpu_custom_call.1} parent=5 // pred_region
        %s159 = ssub.s32 %s12, 1
        %p160 = scmp.lt.s32.totalorder %s21, 1
        %s161 = scalar_select %p160, %s21, 1
        %s162 = smul.addr %s161, 16
        %s163 = smul.addr %s162, 4
        %s164 = scalar_lea.vmem %s0, %s163
        %p165 = pneg %p50
        %p166 = pneg %p47
        %p167 = pneg %p71
        %p168 = pneg %p68
        %p169 = pneg %p92
        %p170 = pneg %p89
        %p171 = pneg %p120
        %p172 = pneg %p117
        %s173 = sand.u32 %s107, 1
        %s174 = scalar_lea.sflag [#allocation5], %s173
        %s175 = sand.u32 %s107, 1
        %s176 = smul.addr %s175, 128
        %s177 = scalar_lea.vmem [#allocation4], %s176
        %p178 = scmp.lt.s32.totalorder %s21, 1
        %s179 = scalar_select %p178, %s21, 1
        %s180 = smul.addr %s179, 16
        %s181 = smul.addr %s180, 4
        %s182 = scalar_lea.vmem %s0, %s181
        %s183 = smul.u32 2, %s22
        %p185 = scmp.eq.s32.totalorder %s22, 0
        // Predicated region
        $region33: #{tpu_custom_call.1} parent=31 // pred_check
          %p186 = pneg %p185
        $region34: #{tpu_custom_call.1} parent=31 // pred_check_branch
          %188 = sbr.rel (%p186) target = $region36
        $region35: #{tpu_custom_call.1} parent=31 // pred_region
          %v189 = vld [vmem:[%s1 + $0x40] sm:$0xf]
          %v190 = vld [vmem:[%s1 + $0x44] sm:$0xf]
          %v191 = vld [vmem:[%s1 + $0x48] sm:$0xf]
          %v192 = vld [vmem:[%s1 + $0x4c] sm:$0xf]
          %v193 = vld [vmem:[%s1 + $0x50] sm:$0xf]
          %v194 = vld [vmem:[%s1 + $0x54] sm:$0xf]
          %v195 = vld [vmem:[%s1 + $0x58] sm:$0xf]
          %v196 = vld [vmem:[%s1 + $0x5c] sm:$0xf]
          %v197 = vld [vmem:[%s1 + $0x60] sm:$0xf]
          %v198 = vld [vmem:[%s1 + $0x64] sm:$0xf]
          %v199 = vld [vmem:[%s1 + $0x68] sm:$0xf]
          %v200 = vld [vmem:[%s1 + $0x6c] sm:$0xf]
          %v201 = vld [vmem:[%s1 + $0x70] sm:$0xf]
          %v202 = vld [vmem:[%s1 + $0x74] sm:$0xf]
          %v203 = vld [vmem:[%s1 + $0x78] sm:$0xf]
          %v204 = vld [vmem:[%s1 + $0x7c] sm:$0xf]
          %v205 = vld [vmem:[%s1 + $0x80] sm:$0xf]
          %v206 = vld [vmem:[%s1 + $0x84] sm:$0xf]
          %v207 = vld [vmem:[%s1 + $0x88] sm:$0xf]
          %v208 = vld [vmem:[%s1 + $0x8c] sm:$0xf]
          %v209 = vld [vmem:[%s1 + $0x90] sm:$0xf]
          %v210 = vld [vmem:[%s1 + $0x94] sm:$0xf]
          %v211 = vld [vmem:[%s1 + $0x98] sm:$0xf]
          %v212 = vld [vmem:[%s1 + $0x9c] sm:$0xf]
          %v213 = vld [vmem:[%s1 + $0xa0] sm:$0xf]
          %v214 = vld [vmem:[%s1 + $0xa4] sm:$0xf]
          %v215 = vld [vmem:[%s1 + $0xa8] sm:$0xf]
          %v216 = vld [vmem:[%s1 + $0xac] sm:$0xf]
          %v217 = vld [vmem:[%s1 + $0xb0] sm:$0xf]
          %v218 = vld [vmem:[%s1 + $0xb4] sm:$0xf]
          %v219 = vld [vmem:[%s1 + $0xb8] sm:$0xf]
          %v220 = vld [vmem:[%s1 + $0xbc] sm:$0xf]
          %v221 = vld [vmem:[%s182] sm:$0xff]
          %v222 = vld [vmem:[%s182 + $0x8] sm:$0xff]
          %v223 = vld [vmem:[%s182 + $0x10] sm:$0xff]
          %v224 = vld [vmem:[%s182 + $0x18] sm:$0xff]
          %v225 = vld [vmem:[%s182 + $0x20] sm:$0xff]
          %v226 = vld [vmem:[%s182 + $0x28] sm:$0xff]
          %v227 = vld [vmem:[%s182 + $0x30] sm:$0xff]
          %v228 = vld [vmem:[%s182 + $0x38] sm:$0xff]
          %v261 = vunpack.c.l.b16 %v189
          %v262 = vunpack.c.l.b16 %v190
          %v263 = vunpack.c.l.b16 %v191
          %v264 = vunpack.c.l.b16 %v192
          %v265 = vunpack.c.l.b16 %v193
          %v266 = vunpack.c.l.b16 %v194
          %v267 = vunpack.c.l.b16 %v195
          %v268 = vunpack.c.l.b16 %v196
          %v269 = vunpack.c.l.b16 %v197
          %v270 = vunpack.c.l.b16 %v198
          %v271 = vunpack.c.l.b16 %v199
          %v272 = vunpack.c.l.b16 %v200
          %v273 = vunpack.c.l.b16 %v201
          %v274 = vunpack.c.l.b16 %v202
          %v275 = vunpack.c.l.b16 %v203
          %v276 = vunpack.c.l.b16 %v204
          %v277 = vunpack.c.l.b16 %v205
          %v278 = vunpack.c.l.b16 %v206
          %v279 = vunpack.c.l.b16 %v207
          %v280 = vunpack.c.l.b16 %v208
          %v281 = vunpack.c.l.b16 %v209
          %v282 = vunpack.c.l.b16 %v210
          %v283 = vunpack.c.l.b16 %v211
          %v284 = vunpack.c.l.b16 %v212
          %v285 = vunpack.c.l.b16 %v213
          %v286 = vunpack.c.l.b16 %v214
          %v287 = vunpack.c.l.b16 %v215
          %v288 = vunpack.c.l.b16 %v216
          %v289 = vunpack.c.l.b16 %v217
          %v290 = vunpack.c.l.b16 %v218
          %v291 = vunpack.c.l.b16 %v219
          %v292 = vunpack.c.l.b16 %v220
          %v293 = vpack.c.b16 %v262, %v261
          %v294 = vpack.c.b16 %v264, %v263
          %v295 = vpack.c.b16 %v266, %v265
          %v296 = vpack.c.b16 %v268, %v267
          %v297 = vpack.c.b16 %v270, %v269
          %v298 = vpack.c.b16 %v272, %v271
          %v299 = vpack.c.b16 %v274, %v273
          %v300 = vpack.c.b16 %v276, %v275
          %v301 = vpack.c.b16 %v278, %v277
          %v302 = vpack.c.b16 %v280, %v279
          %v303 = vpack.c.b16 %v282, %v281
          %v304 = vpack.c.b16 %v284, %v283
          %v305 = vpack.c.b16 %v286, %v285
          %v306 = vpack.c.b16 %v288, %v287
          %v307 = vpack.c.b16 %v290, %v289
          %v308 = vpack.c.b16 %v292, %v291
          %v317 = vunpack.c.l.b16 %v221
          %v318 = vunpack.c.h.b16 %v221
          %v319 = vunpack.c.l.b16 %v222
          %v320 = vunpack.c.h.b16 %v222
          %v321 = vunpack.c.l.b16 %v223
          %v322 = vunpack.c.h.b16 %v223
          %v323 = vunpack.c.l.b16 %v224
          %v324 = vunpack.c.h.b16 %v224
          %v325 = vunpack.c.l.b16 %v225
          %v326 = vunpack.c.h.b16 %v225
          %v327 = vunpack.c.l.b16 %v226
          %v328 = vunpack.c.h.b16 %v226
          %v329 = vunpack.c.l.b16 %v227
          %v330 = vunpack.c.h.b16 %v227
          %v331 = vunpack.c.l.b16 %v228
          %v332 = vunpack.c.h.b16 %v228
          %v333 = vpack.c.b16 %v319, %v317
          %v334 = vpack.c.b16 %v320, %v318
          %v335 = vpack.c.b16 %v323, %v321
          %v336 = vpack.c.b16 %v324, %v322
          %v337 = vpack.c.b16 %v327, %v325
          %v338 = vpack.c.b16 %v328, %v326
          %v339 = vpack.c.b16 %v331, %v329
          %v340 = vpack.c.b16 %v332, %v330
          %vm349 = vcmask 523264
          %v351 = vsel %vm349, %v293, 0
          %v354 = vsel %vm349, %v294, 0
          %v357 = vsel %vm349, %v295, 0
          %v360 = vsel %vm349, %v296, 0
          %v363 = vsel %vm349, %v297, 0
          %v366 = vsel %vm349, %v298, 0
          %v369 = vsel %vm349, %v299, 0
          %v372 = vsel %vm349, %v300, 0
          %v375 = vsel %vm349, %v301, 0
          %v378 = vsel %vm349, %v302, 0
          %v381 = vsel %vm349, %v303, 0
          %v384 = vsel %vm349, %v304, 0
          %v387 = vsel %vm349, %v305, 0
          %v390 = vsel %vm349, %v306, 0
          %v393 = vsel %vm349, %v307, 0
          %v396 = vsel %vm349, %v308, 0
          %398 = vmatprep.subr.bf16.mxu0 %v334
          %399 = vmatpush1.bf16.msra.mxu0 %v333
          %400 = vmatprep.subr.bf16.mxu0 %v336
          %401 = vmatpush1.bf16.msra.mxu0 %v335
          %402 = vmatprep.subr.bf16.mxu0 %v338
          %403 = vmatpush1.bf16.msra.mxu0 %v337
          %404 = vmatprep.subr.bf16.mxu0 %v340
          %405 = vmatpush1.bf16.msra.mxu0 %v339
          %406 = vmatprep.subr.bf16.mxu0 0
          %407 = vmatpush1.bf16.msra.mxu0 0
          %408 = vmatprep.subr.bf16.mxu0 0
          %409 = vmatpush1.bf16.msra.mxu0 0
          %410 = vmatprep.subr.bf16.mxu0 0
          %411 = vmatpush1.bf16.msra.mxu0 0
          %412 = vmatprep.subr.bf16.mxu0 0
          %413 = vmatpush1.bf16.msra.mxu0 0
          %414 = vmatprep.subr.bf16.mxu0 0
          %415 = vmatpush1.bf16.msra.mxu0 0
          %416 = vmatprep.subr.bf16.mxu0 0
          %417 = vmatpush1.bf16.msra.mxu0 0
          %418 = vmatprep.subr.bf16.mxu0 0
          %419 = vmatpush1.bf16.msra.mxu0 0
          %420 = vmatprep.subr.bf16.mxu0 0
          %421 = vmatpush1.bf16.msra.mxu0 0
          %422 = vmatprep.subr.bf16.mxu0 0
          %423 = vmatpush1.bf16.msra.mxu0 0
          %424 = vmatprep.subr.bf16.mxu0 0
          %425 = vmatpush1.bf16.msra.mxu0 0
          %426 = vmatprep.subr.bf16.mxu0 0
          %427 = vmatpush1.bf16.msra.mxu0 0
          %428 = vmatprep.subr.bf16.mxu0 0
          %429 = vmatpush1.bf16.msra.mxu0 0
          %430 = vmatprep.mubr.bf16.mxu0 0
          %431 = vmatmul.mubr.bf16.gmra.mrb[0].mxu0 %v351
          %v432 = vpop.f32.mrb[0].mxu0
          %v433 = vadd.f32 0.0, %v432
          %v434 = vpop.f32.mrb[0].mxu0
          %v435 = vadd.f32 0.0, %v434
          %v436 = vpop.f32.mrb[0].mxu0
          %v437 = vadd.f32 0.0, %v436
          %v438 = vpop.f32.mrb[0].mxu0
          %v439 = vadd.f32 0.0, %v438
          %440 = vmatprep.mubr.bf16.mxu0 0
          %441 = vmatmul.mubr.bf16.gmra.mrb[0].mxu0 %v354
          %v442 = vpop.f32.mrb[0].mxu0
          %v443 = vadd.f32 0.0, %v442
          %v444 = vpop.f32.mrb[0].mxu0
          %v445 = vadd.f32 0.0, %v444
          %v446 = vpop.f32.mrb[0].mxu0
          %v447 = vadd.f32 0.0, %v446
          %v448 = vpop.f32.mrb[0].mxu0
          %v449 = vadd.f32 0.0, %v448
          %450 = vmatprep.mubr.bf16.mxu0 0
          %451 = vmatmul.mubr.bf16.gmra.mrb[0].mxu0 %v357
          %v452 = vpop.f32.mrb[0].mxu0
          %v453 = vadd.f32 0.0, %v452
          %v454 = vpop.f32.mrb[0].mxu0
          %v455 = vadd.f32 0.0, %v454
          %v456 = vpop.f32.mrb[0].mxu0
          %v457 = vadd.f32 0.0, %v456
          %v458 = vpop.f32.mrb[0].mxu0
          %v459 = vadd.f32 0.0, %v458
          %460 = vmatprep.mubr.bf16.mxu0 0
          %461 = vmatmul.mubr.bf16.gmra.mrb[0].mxu0 %v360
          %v462 = vpop.f32.mrb[0].mxu0
          %v463 = vadd.f32 0.0, %v462
          %v464 = vpop.f32.mrb[0].mxu0
          %v465 = vadd.f32 0.0, %v464
          %v466 = vpop.f32.mrb[0].mxu0
          %v467 = vadd.f32 0.0, %v466
          %v468 = vpop.f32.mrb[0].mxu0
          %v469 = vadd.f32 0.0, %v468
          %470 = vmatprep.mubr.bf16.mxu0 0
          %471 = vmatmul.mubr.bf16.gmra.mrb[0].mxu0 %v363
          %v472 = vpop.f32.mrb[0].mxu0
          %v473 = vadd.f32 0.0, %v472
          %v474 = vpop.f32.mrb[0].mxu0
          %v475 = vadd.f32 0.0, %v474
          %v476 = vpop.f32.mrb[0].mxu0
          %v477 = vadd.f32 0.0, %v476
          %v478 = vpop.f32.mrb[0].mxu0
          %v479 = vadd.f32 0.0, %v478
          %480 = vmatprep.mubr.bf16.mxu0 0
          %481 = vmatmul.mubr.bf16.gmra.mrb[0].mxu0 %v366
          %v482 = vpop.f32.mrb[0].mxu0
          %v483 = vadd.f32 0.0, %v482
          %v484 = vpop.f32.mrb[0].mxu0
          %v485 = vadd.f32 0.0, %v484
          %v486 = vpop.f32.mrb[0].mxu0
          %v487 = vadd.f32 0.0, %v486
          %v488 = vpop.f32.mrb[0].mxu0
          %v489 = vadd.f32 0.0, %v488
          %490 = vmatprep.mubr.bf16.mxu0 0
          %491 = vmatmul.mubr.bf16.gmra.mrb[0].mxu0 %v369
          %v492 = vpop.f32.mrb[0].mxu0
          %v493 = vadd.f32 0.0, %v492
          %v494 = vpop.f32.mrb[0].mxu0
          %v495 = vadd.f32 0.0, %v494
          %v496 = vpop.f32.mrb[0].mxu0
          %v497 = vadd.f32 0.0, %v496
          %v498 = vpop.f32.mrb[0].mxu0
          %v499 = vadd.f32 0.0, %v498
          %500 = vmatprep.mubr.bf16.mxu0 0
          %501 = vmatmul.mubr.bf16.gmra.mrb[0].mxu0 %v372
          %v502 = vpop.f32.mrb[0].mxu0
          %v503 = vadd.f32 0.0, %v502
          %v504 = vpop.f32.mrb[0].mxu0
          %v505 = vadd.f32 0.0, %v504
          %v506 = vpop.f32.mrb[0].mxu0
          %v507 = vadd.f32 0.0, %v506
          %v508 = vpop.f32.mrb[0].mxu0
          %v509 = vadd.f32 0.0, %v508
          %510 = vmatprep.mubr.bf16.mxu0 0
          %511 = vmatmul.mubr.bf16.gmra.mrb[0].mxu0 %v375
          %v512 = vpop.f32.mrb[0].mxu0
          %v513 = vadd.f32 0.0, %v512
          %v514 = vpop.f32.mrb[0].mxu0
          %v515 = vadd.f32 0.0, %v514
          %v516 = vpop.f32.mrb[0].mxu0
          %v517 = vadd.f32 0.0, %v516
          %v518 = vpop.f32.mrb[0].mxu0
          %v519 = vadd.f32 0.0, %v518
          %520 = vmatprep.mubr.bf16.mxu0 0
          %521 = vmatmul.mubr.bf16.gmra.mrb[0].mxu0 %v378
          %v522 = vpop.f32.mrb[0].mxu0
          %v523 = vadd.f32 0.0, %v522
          %v524 = vpop.f32.mrb[0].mxu0
          %v525 = vadd.f32 0.0, %v524
          %v526 = vpop.f32.mrb[0].mxu0
          %v527 = vadd.f32 0.0, %v526
          %v528 = vpop.f32.mrb[0].mxu0
          %v529 = vadd.f32 0.0, %v528
          %530 = vmatprep.mubr.bf16.mxu0 0
          %531 = vmatmul.mubr.bf16.gmra.mrb[0].mxu0 %v381
          %v532 = vpop.f32.mrb[0].mxu0
          %v533 = vadd.f32 0.0, %v532
          %v534 = vpop.f32.mrb[0].mxu0
          %v535 = vadd.f32 0.0, %v534
          %v536 = vpop.f32.mrb[0].mxu0
          %v537 = vadd.f32 0.0, %v536
          %v538 = vpop.f32.mrb[0].mxu0
          %v539 = vadd.f32 0.0, %v538
          %540 = vmatprep.mubr.bf16.mxu0 0
          %541 = vmatmul.mubr.bf16.gmra.mrb[0].mxu0 %v384
          %v542 = vpop.f32.mrb[0].mxu0
          %v543 = vadd.f32 0.0, %v542
          %v544 = vpop.f32.mrb[0].mxu0
          %v545 = vadd.f32 0.0, %v544
          %v546 = vpop.f32.mrb[0].mxu0
          %v547 = vadd.f32 0.0, %v546
          %v548 = vpop.f32.mrb[0].mxu0
          %v549 = vadd.f32 0.0, %v548
          %550 = vmatprep.mubr.bf16.mxu0 0
          %551 = vmatmul.mubr.bf16.gmra.mrb[0].mxu0 %v387
          %v552 = vpop.f32.mrb[0].mxu0
          %v553 = vadd.f32 0.0, %v552
          %v554 = vpop.f32.mrb[0].mxu0
          %v555 = vadd.f32 0.0, %v554
          %v556 = vpop.f32.mrb[0].mxu0
          %v557 = vadd.f32 0.0, %v556
          %v558 = vpop.f32.mrb[0].mxu0
          %v559 = vadd.f32 0.0, %v558
          %560 = vmatprep.mubr.bf16.mxu0 0
          %561 = vmatmul.mubr.bf16.gmra.mrb[0].mxu0 %v390
          %v562 = vpop.f32.mrb[0].mxu0
          %v563 = vadd.f32 0.0, %v562
          %v564 = vpop.f32.mrb[0].mxu0
          %v565 = vadd.f32 0.0, %v564
          %v566 = vpop.f32.mrb[0].mxu0
          %v567 = vadd.f32 0.0, %v566
          %v568 = vpop.f32.mrb[0].mxu0
          %v569 = vadd.f32 0.0, %v568
          %570 = vmatprep.mubr.bf16.mxu0 0
          %571 = vmatmul.mubr.bf16.gmra.mrb[0].mxu0 %v393
          %v572 = vpop.f32.mrb[0].mxu0
          %v573 = vadd.f32 0.0, %v572
          %v574 = vpop.f32.mrb[0].mxu0
          %v575 = vadd.f32 0.0, %v574
          %v576 = vpop.f32.mrb[0].mxu0
          %v577 = vadd.f32 0.0, %v576
          %v578 = vpop.f32.mrb[0].mxu0
          %v579 = vadd.f32 0.0, %v578
          %580 = vmatprep.mubr.bf16.mxu0 0
          %581 = vmatmul.mubr.bf16.gmra.mrb[0].mxu0 %v396
          %v582 = vpop.f32.mrb[0].mxu0
          %v583 = vadd.f32 0.0, %v582
          %v584 = vpop.f32.mrb[0].mxu0
          %v585 = vadd.f32 0.0, %v584
          %v586 = vpop.f32.mrb[0].mxu0
          %v587 = vadd.f32 0.0, %v586
          %v588 = vpop.f32.mrb[0].mxu0
          %v589 = vadd.f32 0.0, %v588
          %590 = vdwg.mxu0
          %v591 = vpack.c.bf16 %v437, %v433
          %v592 = vpack.c.bf16 %v439, %v435
          %v593 = vpack.c.bf16 %v447, %v443
          %v594 = vpack.c.bf16 %v449, %v445
          %v595 = vpack.c.bf16 %v457, %v453
          %v596 = vpack.c.bf16 %v459, %v455
          %v597 = vpack.c.bf16 %v467, %v463
          %v598 = vpack.c.bf16 %v469, %v465
          %v599 = vpack.c.bf16 %v477, %v473
          %v600 = vpack.c.bf16 %v479, %v475
          %v601 = vpack.c.bf16 %v487, %v483
          %v602 = vpack.c.bf16 %v489, %v485
          %v603 = vpack.c.bf16 %v497, %v493
          %v604 = vpack.c.bf16 %v499, %v495
          %v605 = vpack.c.bf16 %v507, %v503
          %v606 = vpack.c.bf16 %v509, %v505
          %v607 = vpack.c.bf16 %v517, %v513
          %v608 = vpack.c.bf16 %v519, %v515
          %v609 = vpack.c.bf16 %v527, %v523
          %v610 = vpack.c.bf16 %v529, %v525
          %v611 = vpack.c.bf16 %v537, %v533
          %v612 = vpack.c.bf16 %v539, %v535
          %v613 = vpack.c.bf16 %v547, %v543
          %v614 = vpack.c.bf16 %v549, %v545
          %v615 = vpack.c.bf16 %v557, %v553
          %v616 = vpack.c.bf16 %v559, %v555
          %v617 = vpack.c.bf16 %v567, %v563
          %v618 = vpack.c.bf16 %v569, %v565
          %v619 = vpack.c.bf16 %v577, %v573
          %v620 = vpack.c.bf16 %v579, %v575
          %v621 = vpack.c.bf16 %v587, %v583
          %v622 = vpack.c.bf16 %v589, %v585
          %623 = vst [vmem:[#allocation2] sm:$0xff] %v591
          %624 = vst [vmem:[#allocation2 + $0x8] sm:$0xff] %v592
          %625 = vst [vmem:[#allocation2 + $0x10] sm:$0xff] %v593
          %626 = vst [vmem:[#allocation2 + $0x18] sm:$0xff] %v594
          %627 = vst [vmem:[#allocation2 + $0x20] sm:$0xff] %v595
          %628 = vst [vmem:[#allocation2 + $0x28] sm:$0xff] %v596
          %629 = vst [vmem:[#allocation2 + $0x30] sm:$0xff] %v597
          %630 = vst [vmem:[#allocation2 + $0x38] sm:$0xff] %v598
          %631 = vst [vmem:[#allocation2 + $0x40] sm:$0xff] %v599
          %632 = vst [vmem:[#allocation2 + $0x48] sm:$0xff] %v600
          %633 = vst [vmem:[#allocation2 + $0x50] sm:$0xff] %v601
          %634 = vst [vmem:[#allocation2 + $0x58] sm:$0xff] %v602
          %635 = vst [vmem:[#allocation2 + $0x60] sm:$0xff] %v603
          %636 = vst [vmem:[#allocation2 + $0x68] sm:$0xff] %v604
          %637 = vst [vmem:[#allocation2 + $0x70] sm:$0xff] %v605
          %638 = vst [vmem:[#allocation2 + $0x78] sm:$0xff] %v606
          %639 = vst [vmem:[#allocation2 + $0x80] sm:$0xff] %v607
          %640 = vst [vmem:[#allocation2 + $0x88] sm:$0xff] %v608
          %641 = vst [vmem:[#allocation2 + $0x90] sm:$0xff] %v609
          %642 = vst [vmem:[#allocation2 + $0x98] sm:$0xff] %v610
          %643 = vst [vmem:[#allocation2 + $0xa0] sm:$0xff] %v611
          %644 = vst [vmem:[#allocation2 + $0xa8] sm:$0xff] %v612
          %645 = vst [vmem:[#allocation2 + $0xb0] sm:$0xff] %v613
          %646 = vst [vmem:[#allocation2 + $0xb8] sm:$0xff] %v614
          %647 = vst [vmem:[#allocation2 + $0xc0] sm:$0xff] %v615
          %648 = vst [vmem:[#allocation2 + $0xc8] sm:$0xff] %v616
          %649 = vst [vmem:[#allocation2 + $0xd0] sm:$0xff] %v617
          %650 = vst [vmem:[#allocation2 + $0xd8] sm:$0xff] %v618
          %651 = vst [vmem:[#allocation2 + $0xe0] sm:$0xff] %v619
          %652 = vst [vmem:[#allocation2 + $0xe8] sm:$0xff] %v620
          %653 = vst [vmem:[#allocation2 + $0xf0] sm:$0xff] %v621
          %654 = vst [vmem:[#allocation2 + $0xf8] sm:$0xff] %v622
        $region36: #{tpu_custom_call.1} parent=31 // pred_fallthru
          _
        %s655 = smul.u32 %s22, 256
        %s656 = sshra.s32 %s655, 7
        %s657 = sand.u32 %s655, 127
        %s658 = smul.addr %s656, 4
        %s659 = scalar_lea.vmem %s182, %s658
        %v660 = vld [vmem:[%s659] sm:$0xff]
        %v661 = vld [vmem:[%s659 + $0x8] sm:$0xff]
        %v662 = vld [vmem:[%s659 + $0x10] sm:$0xff]
        %v663 = vld [vmem:[%s659 + $0x18] sm:$0xff]
        %v664 = vld [vmem:[%s659 + $0x20] sm:$0xff]
        %v665 = vld [vmem:[%s659 + $0x28] sm:$0xff]
        %v666 = vld [vmem:[%s659 + $0x30] sm:$0xff]
        %v667 = vld [vmem:[%s659 + $0x38] sm:$0xff]
        %v668 = vld [vmem:[%s1] sm:$0xf]
        %v669 = vld [vmem:[%s1 + $0x4] sm:$0xf]
        %v670 = vld [vmem:[%s1 + $0x8] sm:$0xf]
        %v671 = vld [vmem:[%s1 + $0xc] sm:$0xf]
        %v672 = vld [vmem:[%s1 + $0x10] sm:$0xf]
        %v673 = vld [vmem:[%s1 + $0x14] sm:$0xf]
        %v674 = vld [vmem:[%s1 + $0x18] sm:$0xf]
        %v675 = vld [vmem:[%s1 + $0x1c] sm:$0xf]
        %v676 = vld [vmem:[%s1 + $0x20] sm:$0xf]
        %v677 = vld [vmem:[%s1 + $0x24] sm:$0xf]
        %v678 = vld [vmem:[%s1 + $0x28] sm:$0xf]
        %v679 = vld [vmem:[%s1 + $0x2c] sm:$0xf]
        %v680 = vld [vmem:[%s1 + $0x30] sm:$0xf]
        %v681 = vld [vmem:[%s1 + $0x34] sm:$0xf]
        %v682 = vld [vmem:[%s1 + $0x38] sm:$0xf]
        %v683 = vld [vmem:[%s1 + $0x3c] sm:$0xf]
        %v700 = vunpack.c.l.b16 %v668
        %v701 = vunpack.c.l.b16 %v669
        %v702 = vunpack.c.l.b16 %v670
        %v703 = vunpack.c.l.b16 %v671
        %v704 = vunpack.c.l.b16 %v672
        %v705 = vunpack.c.l.b16 %v673
        %v706 = vunpack.c.l.b16 %v674
        %v707 = vunpack.c.l.b16 %v675
        %v708 = vunpack.c.l.b16 %v676
        %v709 = vunpack.c.l.b16 %v677
        %v710 = vunpack.c.l.b16 %v678
        %v711 = vunpack.c.l.b16 %v679
        %v712 = vunpack.c.l.b16 %v680
        %v713 = vunpack.c.l.b16 %v681
        %v714 = vunpack.c.l.b16 %v682
        %v715 = vunpack.c.l.b16 %v683
        %v716 = vpack.c.b16 %v701, %v700
        %v717 = vpack.c.b16 %v703, %v702
        %v718 = vpack.c.b16 %v705, %v704
        %v719 = vpack.c.b16 %v707, %v706
        %v720 = vpack.c.b16 %v709, %v708
        %v721 = vpack.c.b16 %v711, %v710
        %v722 = vpack.c.b16 %v713, %v712
        %v723 = vpack.c.b16 %v715, %v714
        %v732 = vunpack.c.l.b16 %v660
        %v733 = vunpack.c.h.b16 %v660
        %v734 = vunpack.c.l.b16 %v661
        %v735 = vunpack.c.h.b16 %v661
        %v736 = vunpack.c.l.b16 %v662
        %v737 = vunpack.c.h.b16 %v662
        %v738 = vunpack.c.l.b16 %v663
        %v739 = vunpack.c.h.b16 %v663
        %v740 = vunpack.c.l.b16 %v664
        %v741 = vunpack.c.h.b16 %v664
        %v742 = vunpack.c.l.b16 %v665
        %v743 = vunpack.c.h.b16 %v665
        %v744 = vunpack.c.l.b16 %v666
        %v745 = vunpack.c.h.b16 %v666
        %v746 = vunpack.c.l.b16 %v667
        %v747 = vunpack.c.h.b16 %v667
        %v748 = vpack.c.b16 %v734, %v732
        %v749 = vpack.c.b16 %v735, %v733
        %v750 = vpack.c.b16 %v738, %v736
        %v751 = vpack.c.b16 %v739, %v737
        %v752 = vpack.c.b16 %v742, %v740
        %v753 = vpack.c.b16 %v743, %v741
        %v754 = vpack.c.b16 %v746, %v744
        %v755 = vpack.c.b16 %v747, %v745
        %vm764 = vcmask 523264
        %v766 = vsel %vm764, %v716, 0
        %v769 = vsel %vm764, %v717, 0
        %v772 = vsel %vm764, %v718, 0
        %v775 = vsel %vm764, %v719, 0
        %v778 = vsel %vm764, %v720, 0
        %v781 = vsel %vm764, %v721, 0
        %v784 = vsel %vm764, %v722, 0
        %v787 = vsel %vm764, %v723, 0
        %789 = vmatprep.subr.bf16.mxu0 %v749
        %790 = vmatpush1.bf16.msra.mxu0 %v748
        %791 = vmatprep.subr.bf16.mxu0 %v751
        %792 = vmatpush1.bf16.msra.mxu0 %v750
        %793 = vmatprep.subr.bf16.mxu0 %v753
        %794 = vmatpush1.bf16.msra.mxu0 %v752
        %795 = vmatprep.subr.bf16.mxu0 %v755
        %796 = vmatpush1.bf16.msra.mxu0 %v754
        %797 = vmatprep.subr.bf16.mxu0 0
        %798 = vmatpush1.bf16.msra.mxu0 0
        %799 = vmatprep.subr.bf16.mxu0 0
        %800 = vmatpush1.bf16.msra.mxu0 0
        %801 = vmatprep.subr.bf16.mxu0 0
        %802 = vmatpush1.bf16.msra.mxu0 0
        %803 = vmatprep.subr.bf16.mxu0 0
        %804 = vmatpush1.bf16.msra.mxu0 0
        %805 = vmatprep.subr.bf16.mxu0 0
        %806 = vmatpush1.bf16.msra.mxu0 0
        %807 = vmatprep.subr.bf16.mxu0 0
        %808 = vmatpush1.bf16.msra.mxu0 0
        %809 = vmatprep.subr.bf16.mxu0 0
        %810 = vmatpush1.bf16.msra.mxu0 0
        %811 = vmatprep.subr.bf16.mxu0 0
        %812 = vmatpush1.bf16.msra.mxu0 0
        %813 = vmatprep.subr.bf16.mxu0 0
        %814 = vmatpush1.bf16.msra.mxu0 0
        %815 = vmatprep.subr.bf16.mxu0 0
        %816 = vmatpush1.bf16.msra.mxu0 0
        %817 = vmatprep.subr.bf16.mxu0 0
        %818 = vmatpush1.bf16.msra.mxu0 0
        %819 = vmatprep.subr.bf16.mxu0 0
        %820 = vmatpush1.bf16.msra.mxu0 0
        %821 = vmatprep.mubr.bf16.mxu0 0
        %822 = vmatmul.mubr.bf16.gmra.mrb[0].mxu0 %v766
        %v823 = vpop.f32.mrb[0].mxu0
        %v824 = vadd.f32 0.0, %v823
        %v825 = vpop.f32.mrb[0].mxu0
        %v826 = vadd.f32 0.0, %v825
        %v827 = vpop.f32.mrb[0].mxu0
        %v828 = vadd.f32 0.0, %v827
        %v829 = vpop.f32.mrb[0].mxu0
        %v830 = vadd.f32 0.0, %v829
        %831 = vmatprep.mubr.bf16.mxu0 0
        %832 = vmatmul.mubr.bf16.gmra.mrb[0].mxu0 %v769
        %v833 = vpop.f32.mrb[0].mxu0
        %v834 = vadd.f32 0.0, %v833
        %v835 = vpop.f32.mrb[0].mxu0
        %v836 = vadd.f32 0.0, %v835
        %v837 = vpop.f32.mrb[0].mxu0
        %v838 = vadd.f32 0.0, %v837
        %v839 = vpop.f32.mrb[0].mxu0
        %v840 = vadd.f32 0.0, %v839
        %841 = vmatprep.mubr.bf16.mxu0 0
        %842 = vmatmul.mubr.bf16.gmra.mrb[0].mxu0 %v772
        %v843 = vpop.f32.mrb[0].mxu0
        %v844 = vadd.f32 0.0, %v843
        %v845 = vpop.f32.mrb[0].mxu0
        %v846 = vadd.f32 0.0, %v845
        %v847 = vpop.f32.mrb[0].mxu0
        %v848 = vadd.f32 0.0, %v847
        %v849 = vpop.f32.mrb[0].mxu0
        %v850 = vadd.f32 0.0, %v849
        %851 = vmatprep.mubr.bf16.mxu0 0
        %852 = vmatmul.mubr.bf16.gmra.mrb[0].mxu0 %v775
        %v853 = vpop.f32.mrb[0].mxu0
        %v854 = vadd.f32 0.0, %v853
        %v855 = vpop.f32.mrb[0].mxu0
        %v856 = vadd.f32 0.0, %v855
        %v857 = vpop.f32.mrb[0].mxu0
        %v858 = vadd.f32 0.0, %v857
        %v859 = vpop.f32.mrb[0].mxu0
        %v860 = vadd.f32 0.0, %v859
        %861 = vmatprep.mubr.bf16.mxu0 0
        %862 = vmatmul.mubr.bf16.gmra.mrb[0].mxu0 %v778
        %v863 = vpop.f32.mrb[0].mxu0
        %v864 = vadd.f32 0.0, %v863
        %v865 = vpop.f32.mrb[0].mxu0
        %v866 = vadd.f32 0.0, %v865
        %v867 = vpop.f32.mrb[0].mxu0
        %v868 = vadd.f32 0.0, %v867
        %v869 = vpop.f32.mrb[0].mxu0
        %v870 = vadd.f32 0.0, %v869
        %871 = vmatprep.mubr.bf16.mxu0 0
        %872 = vmatmul.mubr.bf16.gmra.mrb[0].mxu0 %v781
        %v873 = vpop.f32.mrb[0].mxu0
        %v874 = vadd.f32 0.0, %v873
        %v875 = vpop.f32.mrb[0].mxu0
        %v876 = vadd.f32 0.0, %v875
        %v877 = vpop.f32.mrb[0].mxu0
        %v878 = vadd.f32 0.0, %v877
        %v879 = vpop.f32.mrb[0].mxu0
        %v880 = vadd.f32 0.0, %v879
        %881 = vmatprep.mubr.bf16.mxu0 0
        %882 = vmatmul.mubr.bf16.gmra.mrb[0].mxu0 %v784
        %v883 = vpop.f32.mrb[0].mxu0
        %v884 = vadd.f32 0.0, %v883
        %v885 = vpop.f32.mrb[0].mxu0
        %v886 = vadd.f32 0.0, %v885
        %v887 = vpop.f32.mrb[0].mxu0
        %v888 = vadd.f32 0.0, %v887
        %v889 = vpop.f32.mrb[0].mxu0
        %v890 = vadd.f32 0.0, %v889
        %891 = vmatprep.mubr.bf16.mxu0 0
        %892 = vmatmul.mubr.bf16.gmra.mrb[0].mxu0 %v787
        %v893 = vpop.f32.mrb[0].mxu0
        %v894 = vadd.f32 0.0, %v893
        %v895 = vpop.f32.mrb[0].mxu0
        %v896 = vadd.f32 0.0, %v895
        %v897 = vpop.f32.mrb[0].mxu0
        %v898 = vadd.f32 0.0, %v897
        %v899 = vpop.f32.mrb[0].mxu0
        %v900 = vadd.f32 0.0, %v899
        %901 = vdwg.mxu0
        %902 = vxpose.xlu0.b32.start [1/16] %v824, 128
        %903 = vxpose.xlu0.b32.cont [2/16] %v828, 128
        %904 = vxpose.xlu0.b32.cont [3/16] %v834, 128
        %905 = vxpose.xlu0.b32.cont [4/16] %v838, 128
        %906 = vxpose.xlu0.b32.cont [5/16] 0.0, 128
        %907 = vxpose.xlu0.b32.cont [6/16] 0.0, 128
        %908 = vxpose.xlu0.b32.cont [7/16] 0.0, 128
        %909 = vxpose.xlu0.b32.cont [8/16] 0.0, 128
        %910 = vxpose.xlu0.b32.cont [9/16] 0.0, 128
        %911 = vxpose.xlu0.b32.cont [10/16] 0.0, 128
        %912 = vxpose.xlu0.b32.cont [11/16] 0.0, 128
        %913 = vxpose.xlu0.b32.cont [12/16] 0.0, 128
        %914 = vxpose.xlu0.b32.cont [13/16] 0.0, 128
        %915 = vxpose.xlu0.b32.cont [14/16] 0.0, 128
        %916 = vxpose.xlu0.b32.cont [15/16] 0.0, 128
        %917 = vxpose.xlu0.b32.end [16/16] 0.0, 128
        %v918 = vpop.trf.xlu0
        %v919 = vpop.trf.xlu0
        %v920 = vpop.trf.xlu0
        %v921 = vpop.trf.xlu0
        %v922 = vpop.trf.xlu0
        %v923 = vpop.trf.xlu0
        %v924 = vpop.trf.xlu0
        %v925 = vpop.trf.xlu0
        %v926 = vpop.trf.xlu0
        %v927 = vpop.trf.xlu0
        %v928 = vpop.trf.xlu0
        %v929 = vpop.trf.xlu0
        %v930 = vpop.trf.xlu0
        %v931 = vpop.trf.xlu0
        %v932 = vpop.trf.xlu0
        %v933 = vpop.trf.xlu0
        %934 = vxpose.xlu0.b32.start [1/16] %v826, 128
        %935 = vxpose.xlu0.b32.cont [2/16] %v830, 128
        %936 = vxpose.xlu0.b32.cont [3/16] %v836, 128
        %937 = vxpose.xlu0.b32.cont [4/16] %v840, 128
        %938 = vxpose.xlu0.b32.cont [5/16] 0.0, 128
        %939 = vxpose.xlu0.b32.cont [6/16] 0.0, 128
        %940 = vxpose.xlu0.b32.cont [7/16] 0.0, 128
        %941 = vxpose.xlu0.b32.cont [8/16] 0.0, 128
        %942 = vxpose.xlu0.b32.cont [9/16] 0.0, 128
        %943 = vxpose.xlu0.b32.cont [10/16] 0.0, 128
        %944 = vxpose.xlu0.b32.cont [11/16] 0.0, 128
        %945 = vxpose.xlu0.b32.cont [12/16] 0.0, 128
        %946 = vxpose.xlu0.b32.cont [13/16] 0.0, 128
        %947 = vxpose.xlu0.b32.cont [14/16] 0.0, 128
        %948 = vxpose.xlu0.b32.cont [15/16] 0.0, 128
        %949 = vxpose.xlu0.b32.end [16/16] 0.0, 128
        %v950 = vpop.trf.xlu0
        %v951 = vpop.trf.xlu0
        %v952 = vpop.trf.xlu0
        %v953 = vpop.trf.xlu0
        %v954 = vpop.trf.xlu0
        %v955 = vpop.trf.xlu0
        %v956 = vpop.trf.xlu0
        %v957 = vpop.trf.xlu0
        %v958 = vpop.trf.xlu0
        %v959 = vpop.trf.xlu0
        %v960 = vpop.trf.xlu0
        %v961 = vpop.trf.xlu0
        %v962 = vpop.trf.xlu0
        %v963 = vpop.trf.xlu0
        %v964 = vpop.trf.xlu0
        %v965 = vpop.trf.xlu0
        %v966 = vpack.c.bf16 %v919, %v918
        %v967 = vpack.c.bf16 %v921, %v920
        %v968 = vpack.c.bf16 %v923, %v922
        %v969 = vpack.c.bf16 %v925, %v924
        %v970 = vpack.c.bf16 %v927, %v926
        %v971 = vpack.c.bf16 %v929, %v928
        %v972 = vpack.c.bf16 %v931, %v930
        %v973 = vpack.c.bf16 %v933, %v932
        %v974 = vpack.c.bf16 %v951, %v950
        %v975 = vpack.c.bf16 %v953, %v952
        %v976 = vpack.c.bf16 %v955, %v954
        %v977 = vpack.c.bf16 %v957, %v956
        %v978 = vpack.c.bf16 %v959, %v958
        %v979 = vpack.c.bf16 %v961, %v960
        %v980 = vpack.c.bf16 %v963, %v962
        %v981 = vpack.c.bf16 %v965, %v964
        %v982 = vld [vmem:[#allocation2] sm:$0xff]
        %v983 = vld [vmem:[#allocation2 + $0x8] sm:$0xff]
        %v984 = vld [vmem:[#allocation2 + $0x10] sm:$0xff]
        %v985 = vld [vmem:[#allocation2 + $0x18] sm:$0xff]
        %v986 = vld [vmem:[#allocation2 + $0x80] sm:$0xff]
        %v987 = vld [vmem:[#allocation2 + $0x88] sm:$0xff]
        %v988 = vld [vmem:[#allocation2 + $0x90] sm:$0xff]
        %v989 = vld [vmem:[#allocation2 + $0x98] sm:$0xff]
        %vm990 = vcmask 261120
        %v992 = vsel %vm990, %v966, 0
        %v995 = vsel %vm990, %v967, 0
        %v998 = vsel %vm990, %v968, 0
        %v1001 = vsel %vm990, %v969, 0
        %v1004 = vsel %vm990, %v970, 0
        %v1007 = vsel %vm990, %v971, 0
        %v1010 = vsel %vm990, %v972, 0
        %v1013 = vsel %vm990, %v973, 0
        %v1016 = vsel %vm990, %v974, 0
        %v1019 = vsel %vm990, %v975, 0
        %v1022 = vsel %vm990, %v976, 0
        %v1025 = vsel %vm990, %v977, 0
        %v1028 = vsel %vm990, %v978, 0
        %v1031 = vsel %vm990, %v979, 0
        %v1034 = vsel %vm990, %v980, 0
        %v1037 = vsel %vm990, %v981, 0
        %1039 = vmatprep.subr.bf16.mxu0 %v983
        %1040 = vmatpush1.bf16.msra.mxu0 %v982
        %1041 = vmatprep.subr.bf16.mxu0 %v985
        %1042 = vmatpush1.bf16.msra.mxu0 %v984
        %1043 = vmatprep.subr.bf16.mxu0 0
        %1044 = vmatpush1.bf16.msra.mxu0 0
        %1045 = vmatprep.subr.bf16.mxu0 0
        %1046 = vmatpush1.bf16.msra.mxu0 0
        %1047 = vmatprep.subr.bf16.mxu0 0
        %1048 = vmatpush1.bf16.msra.mxu0 0
        %1049 = vmatprep.subr.bf16.mxu0 0
        %1050 = vmatpush1.bf16.msra.mxu0 0
        %1051 = vmatprep.subr.bf16.mxu0 0
        %1052 = vmatpush1.bf16.msra.mxu0 0
        %1053 = vmatprep.subr.bf16.mxu0 0
        %1054 = vmatpush1.bf16.msra.mxu0 0
        %1055 = vmatprep.subr.bf16.mxu0 0
        %1056 = vmatpush1.bf16.msra.mxu0 0
        %1057 = vmatprep.subr.bf16.mxu0 0
        %1058 = vmatpush1.bf16.msra.mxu0 0
        %1059 = vmatprep.subr.bf16.mxu0 0
        %1060 = vmatpush1.bf16.msra.mxu0 0
        %1061 = vmatprep.subr.bf16.mxu0 0
        %1062 = vmatpush1.bf16.msra.mxu0 0
        %1063 = vmatprep.subr.bf16.mxu0 0
        %1064 = vmatpush1.bf16.msra.mxu0 0
        %1065 = vmatprep.subr.bf16.mxu0 0
        %1066 = vmatpush1.bf16.msra.mxu0 0
        %1067 = vmatprep.subr.bf16.mxu0 0
        %1068 = vmatpush1.bf16.msra.mxu0 0
        %1069 = vmatprep.subr.bf16.mxu0 0
        %1070 = vmatpush1.bf16.msra.mxu0 0
        %1071 = vmatprep.mubr.bf16.mxu0 0
        %1072 = vmatmul.mubr.bf16.gmra.mrb[0].mxu0 %v992
        %v1073 = vpop.f32.mrb[0].mxu0
        %v1074 = vadd.f32 0.0, %v1073
        %v1075 = vpop.f32.mrb[0].mxu0
        %v1076 = vadd.f32 0.0, %v1075
        %v1077 = vpop.f32.mrb[0].mxu0
        %v1078 = vadd.f32 0.0, %v1077
        %v1079 = vpop.f32.mrb[0].mxu0
        %v1080 = vadd.f32 0.0, %v1079
        %1081 = vmatprep.mubr.bf16.mxu0 0
        %1082 = vmatmul.mubr.bf16.gmra.mrb[0].mxu0 %v995
        %v1083 = vpop.f32.mrb[0].mxu0
        %v1084 = vadd.f32 0.0, %v1083
        %v1085 = vpop.f32.mrb[0].mxu0
        %v1086 = vadd.f32 0.0, %v1085
        %v1087 = vpop.f32.mrb[0].mxu0
        %v1088 = vadd.f32 0.0, %v1087
        %v1089 = vpop.f32.mrb[0].mxu0
        %v1090 = vadd.f32 0.0, %v1089
        %1091 = vmatprep.mubr.bf16.mxu0 0
        %1092 = vmatmul.mubr.bf16.gmra.mrb[0].mxu0 %v998
        %v1093 = vpop.f32.mrb[0].mxu0
        %v1094 = vadd.f32 0.0, %v1093
        %v1095 = vpop.f32.mrb[0].mxu0
        %v1096 = vadd.f32 0.0, %v1095
        %v1097 = vpop.f32.mrb[0].mxu0
        %v1098 = vadd.f32 0.0, %v1097
        %v1099 = vpop.f32.mrb[0].mxu0
        %v1100 = vadd.f32 0.0, %v1099
        %1101 = vmatprep.mubr.bf16.mxu0 0
        %1102 = vmatmul.mubr.bf16.gmra.mrb[0].mxu0 %v1001
        %v1103 = vpop.f32.mrb[0].mxu0
        %v1104 = vadd.f32 0.0, %v1103
        %v1105 = vpop.f32.mrb[0].mxu0
        %v1106 = vadd.f32 0.0, %v1105
        %v1107 = vpop.f32.mrb[0].mxu0
        %v1108 = vadd.f32 0.0, %v1107
        %v1109 = vpop.f32.mrb[0].mxu0
        %v1110 = vadd.f32 0.0, %v1109
        %1111 = vmatprep.mubr.bf16.mxu0 0
        %1112 = vmatmul.mubr.bf16.gmra.mrb[0].mxu0 %v1004
        %v1113 = vpop.f32.mrb[0].mxu0
        %v1114 = vadd.f32 0.0, %v1113
        %v1115 = vpop.f32.mrb[0].mxu0
        %v1116 = vadd.f32 0.0, %v1115
        %v1117 = vpop.f32.mrb[0].mxu0
        %v1118 = vadd.f32 0.0, %v1117
        %v1119 = vpop.f32.mrb[0].mxu0
        %v1120 = vadd.f32 0.0, %v1119
        %1121 = vmatprep.mubr.bf16.mxu0 0
        %1122 = vmatmul.mubr.bf16.gmra.mrb[0].mxu0 %v1007
        %v1123 = vpop.f32.mrb[0].mxu0
        %v1124 = vadd.f32 0.0, %v1123
        %v1125 = vpop.f32.mrb[0].mxu0
        %v1126 = vadd.f32 0.0, %v1125
        %v1127 = vpop.f32.mrb[0].mxu0
        %v1128 = vadd.f32 0.0, %v1127
        %v1129 = vpop.f32.mrb[0].mxu0
        %v1130 = vadd.f32 0.0, %v1129
        %1131 = vmatprep.mubr.bf16.mxu0 0
        %1132 = vmatmul.mubr.bf16.gmra.mrb[0].mxu0 %v1010
        %v1133 = vpop.f32.mrb[0].mxu0
        %v1134 = vadd.f32 0.0, %v1133
        %v1135 = vpop.f32.mrb[0].mxu0
        %v1136 = vadd.f32 0.0, %v1135
        %v1137 = vpop.f32.mrb[0].mxu0
        %v1138 = vadd.f32 0.0, %v1137
        %v1139 = vpop.f32.mrb[0].mxu0
        %v1140 = vadd.f32 0.0, %v1139
        %1141 = vmatprep.mubr.bf16.mxu0 0
        %1142 = vmatmul.mubr.bf16.gmra.mrb[0].mxu0 %v1013
        %v1143 = vpop.f32.mrb[0].mxu0
        %v1144 = vadd.f32 0.0, %v1143
        %v1145 = vpop.f32.mrb[0].mxu0
        %v1146 = vadd.f32 0.0, %v1145
        %v1147 = vpop.f32.mrb[0].mxu0
        %v1148 = vadd.f32 0.0, %v1147
        %v1149 = vpop.f32.mrb[0].mxu0
        %v1150 = vadd.f32 0.0, %v1149
        %1151 = vmatprep.mubr.bf16.mxu0 0
        %1152 = vmatmul.mubr.bf16.gmra.mrb[0].mxu0 %v1016
        %v1153 = vpop.f32.mrb[0].mxu0
        %v1154 = vadd.f32 0.0, %v1153
        %v1155 = vpop.f32.mrb[0].mxu0
        %v1156 = vadd.f32 0.0, %v1155
        %v1157 = vpop.f32.mrb[0].mxu0
        %v1158 = vadd.f32 0.0, %v1157
        %v1159 = vpop.f32.mrb[0].mxu0
        %v1160 = vadd.f32 0.0, %v1159
        %1161 = vmatprep.mubr.bf16.mxu0 0
        %1162 = vmatmul.mubr.bf16.gmra.mrb[0].mxu0 %v1019
        %v1163 = vpop.f32.mrb[0].mxu0
        %v1164 = vadd.f32 0.0, %v1163
        %v1165 = vpop.f32.mrb[0].mxu0
        %v1166 = vadd.f32 0.0, %v1165
        %v1167 = vpop.f32.mrb[0].mxu0
        %v1168 = vadd.f32 0.0, %v1167
        %v1169 = vpop.f32.mrb[0].mxu0
        %v1170 = vadd.f32 0.0, %v1169
        %1171 = vmatprep.mubr.bf16.mxu0 0
        %1172 = vmatmul.mubr.bf16.gmra.mrb[0].mxu0 %v1022
        %v1173 = vpop.f32.mrb[0].mxu0
        %v1174 = vadd.f32 0.0, %v1173
        %v1175 = vpop.f32.mrb[0].mxu0
        %v1176 = vadd.f32 0.0, %v1175
        %v1177 = vpop.f32.mrb[0].mxu0
        %v1178 = vadd.f32 0.0, %v1177
        %v1179 = vpop.f32.mrb[0].mxu0
        %v1180 = vadd.f32 0.0, %v1179
        %1181 = vmatprep.mubr.bf16.mxu0 0
        %1182 = vmatmul.mubr.bf16.gmra.mrb[0].mxu0 %v1025
        %v1183 = vpop.f32.mrb[0].mxu0
        %v1184 = vadd.f32 0.0, %v1183
        %v1185 = vpop.f32.mrb[0].mxu0
        %v1186 = vadd.f32 0.0, %v1185
        %v1187 = vpop.f32.mrb[0].mxu0
        %v1188 = vadd.f32 0.0, %v1187
        %v1189 = vpop.f32.mrb[0].mxu0
        %v1190 = vadd.f32 0.0, %v1189
        %1191 = vmatprep.mubr.bf16.mxu0 0
        %1192 = vmatmul.mubr.bf16.gmra.mrb[0].mxu0 %v1028
        %v1193 = vpop.f32.mrb[0].mxu0
        %v1194 = vadd.f32 0.0, %v1193
        %v1195 = vpop.f32.mrb[0].mxu0
        %v1196 = vadd.f32 0.0, %v1195
        %v1197 = vpop.f32.mrb[0].mxu0
        %v1198 = vadd.f32 0.0, %v1197
        %v1199 = vpop.f32.mrb[0].mxu0
        %v1200 = vadd.f32 0.0, %v1199
        %1201 = vmatprep.mubr.bf16.mxu0 0
        %1202 = vmatmul.mubr.bf16.gmra.mrb[0].mxu0 %v1031
        %v1203 = vpop.f32.mrb[0].mxu0
        %v1204 = vadd.f32 0.0, %v1203
        %v1205 = vpop.f32.mrb[0].mxu0
        %v1206 = vadd.f32 0.0, %v1205
        %v1207 = vpop.f32.mrb[0].mxu0
        %v1208 = vadd.f32 0.0, %v1207
        %v1209 = vpop.f32.mrb[0].mxu0
        %v1210 = vadd.f32 0.0, %v1209
        %1211 = vmatprep.mubr.bf16.mxu0 0
        %1212 = vmatmul.mubr.bf16.gmra.mrb[0].mxu0 %v1034
        %v1213 = vpop.f32.mrb[0].mxu0
        %v1214 = vadd.f32 0.0, %v1213
        %v1215 = vpop.f32.mrb[0].mxu0
        %v1216 = vadd.f32 0.0, %v1215
        %v1217 = vpop.f32.mrb[0].mxu0
        %v1218 = vadd.f32 0.0, %v1217
        %v1219 = vpop.f32.mrb[0].mxu0
        %v1220 = vadd.f32 0.0, %v1219
        %1221 = vmatprep.mubr.bf16.mxu0 0
        %1222 = vmatmul.mubr.bf16.gmra.mrb[0].mxu0 %v1037
        %v1223 = vpop.f32.mrb[0].mxu0
        %v1224 = vadd.f32 0.0, %v1223
        %v1225 = vpop.f32.mrb[0].mxu0
        %v1226 = vadd.f32 0.0, %v1225
        %v1227 = vpop.f32.mrb[0].mxu0
        %v1228 = vadd.f32 0.0, %v1227
        %v1229 = vpop.f32.mrb[0].mxu0
        %v1230 = vadd.f32 0.0, %v1229
        %1231 = vdwg.mxu0
        %v1232 = vmax.f32 %v1074, %v1076
        %1233 = vmax.xlane.f32.xlu0 %v1232
        %v1234 = vpop.xlane.xlu0 %1233
        %v1235 = vmax.f32 %v1078, %v1080
        %1236 = vmax.xlane.f32.xlu0 %v1235
        %v1237 = vpop.xlane.xlu0 %1236
        %v1238 = vmax.f32 %v1084, %v1086
        %1239 = vmax.xlane.f32.xlu0 %v1238
        %v1240 = vpop.xlane.xlu0 %1239
        %v1241 = vmax.f32 %v1088, %v1090
        %1242 = vmax.xlane.f32.xlu0 %v1241
        %v1243 = vpop.xlane.xlu0 %1242
        %v1244 = vmax.f32 %v1094, %v1096
        %1245 = vmax.xlane.f32.xlu0 %v1244
        %v1246 = vpop.xlane.xlu0 %1245
        %v1247 = vmax.f32 %v1098, %v1100
        %1248 = vmax.xlane.f32.xlu0 %v1247
        %v1249 = vpop.xlane.xlu0 %1248
        %v1250 = vmax.f32 %v1104, %v1106
        %1251 = vmax.xlane.f32.xlu0 %v1250
        %v1252 = vpop.xlane.xlu0 %1251
        %v1253 = vmax.f32 %v1108, %v1110
        %1254 = vmax.xlane.f32.xlu0 %v1253
        %v1255 = vpop.xlane.xlu0 %1254
        %v1256 = vmax.f32 %v1114, %v1116
        %1257 = vmax.xlane.f32.xlu0 %v1256
        %v1258 = vpop.xlane.xlu0 %1257
        %v1259 = vmax.f32 %v1118, %v1120
        %1260 = vmax.xlane.f32.xlu0 %v1259
        %v1261 = vpop.xlane.xlu0 %1260
        %v1262 = vmax.f32 %v1124, %v1126
        %1263 = vmax.xlane.f32.xlu0 %v1262
        %v1264 = vpop.xlane.xlu0 %1263
        %v1265 = vmax.f32 %v1128, %v1130
        %1266 = vmax.xlane.f32.xlu0 %v1265
        %v1267 = vpop.xlane.xlu0 %1266
        %v1268 = vmax.f32 %v1134, %v1136
        %1269 = vmax.xlane.f32.xlu0 %v1268
        %v1270 = vpop.xlane.xlu0 %1269
        %v1271 = vmax.f32 %v1138, %v1140
        %1272 = vmax.xlane.f32.xlu0 %v1271
        %v1273 = vpop.xlane.xlu0 %1272
        %v1274 = vmax.f32 %v1144, %v1146
        %1275 = vmax.xlane.f32.xlu0 %v1274
        %v1276 = vpop.xlane.xlu0 %1275
        %v1277 = vmax.f32 %v1148, %v1150
        %1278 = vmax.xlane.f32.xlu0 %v1277
        %v1279 = vpop.xlane.xlu0 %1278
        %v1280 = vmax.f32 %v1154, %v1156
        %1281 = vmax.xlane.f32.xlu0 %v1280
        %v1282 = vpop.xlane.xlu0 %1281
        %v1283 = vmax.f32 %v1158, %v1160
        %1284 = vmax.xlane.f32.xlu0 %v1283
        %v1285 = vpop.xlane.xlu0 %1284
        %v1286 = vmax.f32 %v1164, %v1166
        %1287 = vmax.xlane.f32.xlu0 %v1286
        %v1288 = vpop.xlane.xlu0 %1287
        %v1289 = vmax.f32 %v1168, %v1170
        %1290 = vmax.xlane.f32.xlu0 %v1289
        %v1291 = vpop.xlane.xlu0 %1290
        %v1292 = vmax.f32 %v1174, %v1176
        %1293 = vmax.xlane.f32.xlu0 %v1292
        %v1294 = vpop.xlane.xlu0 %1293
        %v1295 = vmax.f32 %v1178, %v1180
        %1296 = vmax.xlane.f32.xlu0 %v1295
        %v1297 = vpop.xlane.xlu0 %1296
        %v1298 = vmax.f32 %v1184, %v1186
        %1299 = vmax.xlane.f32.xlu0 %v1298
        %v1300 = vpop.xlane.xlu0 %1299
        %v1301 = vmax.f32 %v1188, %v1190
        %1302 = vmax.xlane.f32.xlu0 %v1301
        %v1303 = vpop.xlane.xlu0 %1302
        %v1304 = vmax.f32 %v1194, %v1196
        %1305 = vmax.xlane.f32.xlu0 %v1304
        %v1306 = vpop.xlane.xlu0 %1305
        %v1307 = vmax.f32 %v1198, %v1200
        %1308 = vmax.xlane.f32.xlu0 %v1307
        %v1309 = vpop.xlane.xlu0 %1308
        %v1310 = vmax.f32 %v1204, %v1206
        %1311 = vmax.xlane.f32.xlu0 %v1310
        %v1312 = vpop.xlane.xlu0 %1311
        %v1313 = vmax.f32 %v1208, %v1210
        %1314 = vmax.xlane.f32.xlu0 %v1313
        %v1315 = vpop.xlane.xlu0 %1314
        %v1316 = vmax.f32 %v1214, %v1216
        %1317 = vmax.xlane.f32.xlu0 %v1316
        %v1318 = vpop.xlane.xlu0 %1317
        %v1319 = vmax.f32 %v1218, %v1220
        %1320 = vmax.xlane.f32.xlu0 %v1319
        %v1321 = vpop.xlane.xlu0 %1320
        %v1322 = vmax.f32 %v1224, %v1226
        %1323 = vmax.xlane.f32.xlu0 %v1322
        %v1324 = vpop.xlane.xlu0 %1323
        %v1325 = vmax.f32 %v1228, %v1230
        %1326 = vmax.xlane.f32.xlu0 %v1325
        %v1327 = vpop.xlane.xlu0 %1326
        %v1328 = vsub.f32 %v1074, %v1234
        %v1329 = vsub.f32 %v1076, %v1234
        %v1330 = vsub.f32 %v1078, %v1237
        %v1331 = vsub.f32 %v1080, %v1237
        %v1332 = vsub.f32 %v1084, %v1240
        %v1333 = vsub.f32 %v1086, %v1240
        %v1334 = vsub.f32 %v1088, %v1243
        %v1335 = vsub.f32 %v1090, %v1243
        %v1336 = vsub.f32 %v1094, %v1246
        %v1337 = vsub.f32 %v1096, %v1246
        %v1338 = vsub.f32 %v1098, %v1249
        %v1339 = vsub.f32 %v1100, %v1249
        %v1340 = vsub.f32 %v1104, %v1252
        %v1341 = vsub.f32 %v1106, %v1252
        %v1342 = vsub.f32 %v1108, %v1255
        %v1343 = vsub.f32 %v1110, %v1255
        %v1344 = vsub.f32 %v1114, %v1258
        %v1345 = vsub.f32 %v1116, %v1258
        %v1346 = vsub.f32 %v1118, %v1261
        %v1347 = vsub.f32 %v1120, %v1261
        %v1348 = vsub.f32 %v1124, %v1264
        %v1349 = vsub.f32 %v1126, %v1264
        %v1350 = vsub.f32 %v1128, %v1267
        %v1351 = vsub.f32 %v1130, %v1267
        %v1352 = vsub.f32 %v1134, %v1270
        %v1353 = vsub.f32 %v1136, %v1270
        %v1354 = vsub.f32 %v1138, %v1273
        %v1355 = vsub.f32 %v1140, %v1273
        %v1356 = vsub.f32 %v1144, %v1276
        %v1357 = vsub.f32 %v1146, %v1276
        %v1358 = vsub.f32 %v1148, %v1279
        %v1359 = vsub.f32 %v1150, %v1279
        %v1360 = vsub.f32 %v1154, %v1282
        %v1361 = vsub.f32 %v1156, %v1282
        %v1362 = vsub.f32 %v1158, %v1285
        %v1363 = vsub.f32 %v1160, %v1285
        %v1364 = vsub.f32 %v1164, %v1288
        %v1365 = vsub.f32 %v1166, %v1288
        %v1366 = vsub.f32 %v1168, %v1291
        %v1367 = vsub.f32 %v1170, %v1291
        %v1368 = vsub.f32 %v1174, %v1294
        %v1369 = vsub.f32 %v1176, %v1294
        %v1370 = vsub.f32 %v1178, %v1297
        %v1371 = vsub.f32 %v1180, %v1297
        %v1372 = vsub.f32 %v1184, %v1300
        %v1373 = vsub.f32 %v1186, %v1300
        %v1374 = vsub.f32 %v1188, %v1303
        %v1375 = vsub.f32 %v1190, %v1303
        %v1376 = vsub.f32 %v1194, %v1306
        %v1377 = vsub.f32 %v1196, %v1306
        %v1378 = vsub.f32 %v1198, %v1309
        %v1379 = vsub.f32 %v1200, %v1309
        %v1380 = vsub.f32 %v1204, %v1312
        %v1381 = vsub.f32 %v1206, %v1312
        %v1382 = vsub.f32 %v1208, %v1315
        %v1383 = vsub.f32 %v1210, %v1315
        %v1384 = vsub.f32 %v1214, %v1318
        %v1385 = vsub.f32 %v1216, %v1318
        %v1386 = vsub.f32 %v1218, %v1321
        %v1387 = vsub.f32 %v1220, %v1321
        %v1388 = vsub.f32 %v1224, %v1324
        %v1389 = vsub.f32 %v1226, %v1324
        %v1390 = vsub.f32 %v1228, %v1327
        %v1391 = vsub.f32 %v1230, %v1327
        %v1392 = vmul.f32 %v1328, 1.442695
        %v1393 = vpow.pop %v1392
        %v1394 = vmul.f32 %v1329, 1.442695
        %v1395 = vpow.pop %v1394
        %v1396 = vmul.f32 %v1330, 1.442695
        %v1397 = vpow.pop %v1396
        %v1398 = vmul.f32 %v1331, 1.442695
        %v1399 = vpow.pop %v1398
        %v1400 = vmul.f32 %v1332, 1.442695
        %v1401 = vpow.pop %v1400
        %v1402 = vmul.f32 %v1333, 1.442695
        %v1403 = vpow.pop %v1402
        %v1404 = vmul.f32 %v1334, 1.442695
        %v1405 = vpow.pop %v1404
        %v1406 = vmul.f32 %v1335, 1.442695
        %v1407 = vpow.pop %v1406
        %v1408 = vmul.f32 %v1336, 1.442695
        %v1409 = vpow.pop %v1408
        %v1410 = vmul.f32 %v1337, 1.442695
        %v1411 = vpow.pop %v1410
        %v1412 = vmul.f32 %v1338, 1.442695
        %v1413 = vpow.pop %v1412
        %v1414 = vmul.f32 %v1339, 1.442695
        %v1415 = vpow.pop %v1414
        %v1416 = vmul.f32 %v1340, 1.442695
        %v1417 = vpow.pop %v1416
        %v1418 = vmul.f32 %v1341, 1.442695
        %v1419 = vpow.pop %v1418
        %v1420 = vmul.f32 %v1342, 1.442695
        %v1421 = vpow.pop %v1420
        %v1422 = vmul.f32 %v1343, 1.442695
        %v1423 = vpow.pop %v1422
        %v1424 = vmul.f32 %v1344, 1.442695
        %v1425 = vpow.pop %v1424
        %v1426 = vmul.f32 %v1345, 1.442695
        %v1427 = vpow.pop %v1426
        %v1428 = vmul.f32 %v1346, 1.442695
        %v1429 = vpow.pop %v1428
        %v1430 = vmul.f32 %v1347, 1.442695
        %v1431 = vpow.pop %v1430
        %v1432 = vmul.f32 %v1348, 1.442695
        %v1433 = vpow.pop %v1432
        %v1434 = vmul.f32 %v1349, 1.442695
        %v1435 = vpow.pop %v1434
        %v1436 = vmul.f32 %v1350, 1.442695
        %v1437 = vpow.pop %v1436
        %v1438 = vmul.f32 %v1351, 1.442695
        %v1439 = vpow.pop %v1438
        %v1440 = vmul.f32 %v1352, 1.442695
        %v1441 = vpow.pop %v1440
        %v1442 = vmul.f32 %v1353, 1.442695
        %v1443 = vpow.pop %v1442
        %v1444 = vmul.f32 %v1354, 1.442695
        %v1445 = vpow.pop %v1444
        %v1446 = vmul.f32 %v1355, 1.442695
        %v1447 = vpow.pop %v1446
        %v1448 = vmul.f32 %v1356, 1.442695
        %v1449 = vpow.pop %v1448
        %v1450 = vmul.f32 %v1357, 1.442695
        %v1451 = vpow.pop %v1450
        %v1452 = vmul.f32 %v1358, 1.442695
        %v1453 = vpow.pop %v1452
        %v1454 = vmul.f32 %v1359, 1.442695
        %v1455 = vpow.pop %v1454
        %v1456 = vmul.f32 %v1360, 1.442695
        %v1457 = vpow.pop %v1456
        %v1458 = vmul.f32 %v1361, 1.442695
        %v1459 = vpow.pop %v1458
        %v1460 = vmul.f32 %v1362, 1.442695
        %v1461 = vpow.pop %v1460
        %v1462 = vmul.f32 %v1363, 1.442695
        %v1463 = vpow.pop %v1462
        %v1464 = vmul.f32 %v1364, 1.442695
        %v1465 = vpow.pop %v1464
        %v1466 = vmul.f32 %v1365, 1.442695
        %v1467 = vpow.pop %v1466
        %v1468 = vmul.f32 %v1366, 1.442695
        %v1469 = vpow.pop %v1468
        %v1470 = vmul.f32 %v1367, 1.442695
        %v1471 = vpow.pop %v1470
        %v1472 = vmul.f32 %v1368, 1.442695
        %v1473 = vpow.pop %v1472
        %v1474 = vmul.f32 %v1369, 1.442695
        %v1475 = vpow.pop %v1474
        %v1476 = vmul.f32 %v1370, 1.442695
        %v1477 = vpow.pop %v1476
        %v1478 = vmul.f32 %v1371, 1.442695
        %v1479 = vpow.pop %v1478
        %v1480 = vmul.f32 %v1372, 1.442695
        %v1481 = vpow.pop %v1480
        %v1482 = vmul.f32 %v1373, 1.442695
        %v1483 = vpow.pop %v1482
        %v1484 = vmul.f32 %v1374, 1.442695
        %v1485 = vpow.pop %v1484
        %v1486 = vmul.f32 %v1375, 1.442695
        %v1487 = vpow.pop %v1486
        %v1488 = vmul.f32 %v1376, 1.442695
        %v1489 = vpow.pop %v1488
        %v1490 = vmul.f32 %v1377, 1.442695
        %v1491 = vpow.pop %v1490
        %v1492 = vmul.f32 %v1378, 1.442695
        %v1493 = vpow.pop %v1492
        %v1494 = vmul.f32 %v1379, 1.442695
        %v1495 = vpow.pop %v1494
        %v1496 = vmul.f32 %v1380, 1.442695
        %v1497 = vpow.pop %v1496
        %v1498 = vmul.f32 %v1381, 1.442695
        %v1499 = vpow.pop %v1498
        %v1500 = vmul.f32 %v1382, 1.442695
        %v1501 = vpow.pop %v1500
        %v1502 = vmul.f32 %v1383, 1.442695
        %v1503 = vpow.pop %v1502
        %v1504 = vmul.f32 %v1384, 1.442695
        %v1505 = vpow.pop %v1504
        %v1506 = vmul.f32 %v1385, 1.442695
        %v1507 = vpow.pop %v1506
        %v1508 = vmul.f32 %v1386, 1.442695
        %v1509 = vpow.pop %v1508
        %v1510 = vmul.f32 %v1387, 1.442695
        %v1511 = vpow.pop %v1510
        %v1512 = vmul.f32 %v1388, 1.442695
        %v1513 = vpow.pop %v1512
        %v1514 = vmul.f32 %v1389, 1.442695
        %v1515 = vpow.pop %v1514
        %v1516 = vmul.f32 %v1390, 1.442695
        %v1517 = vpow.pop %v1516
        %v1518 = vmul.f32 %v1391, 1.442695
        %v1519 = vpow.pop %v1518
        %v1520 = vadd.f32 %v1393, %v1395
        %1521 = vadd.xlane.f32.xlu0 %v1520
        %v1522 = vpop.xlane.xlu0 %1521
        %v1523 = vadd.f32 %v1397, %v1399
        %1524 = vadd.xlane.f32.xlu0 %v1523
        %v1525 = vpop.xlane.xlu0 %1524
        %v1526 = vadd.f32 %v1401, %v1403
        %1527 = vadd.xlane.f32.xlu0 %v1526
        %v1528 = vpop.xlane.xlu0 %1527
        %v1529 = vadd.f32 %v1405, %v1407
        %1530 = vadd.xlane.f32.xlu0 %v1529
        %v1531 = vpop.xlane.xlu0 %1530
        %v1532 = vadd.f32 %v1409, %v1411
        %1533 = vadd.xlane.f32.xlu0 %v1532
        %v1534 = vpop.xlane.xlu0 %1533
        %v1535 = vadd.f32 %v1413, %v1415
        %1536 = vadd.xlane.f32.xlu0 %v1535
        %v1537 = vpop.xlane.xlu0 %1536
        %v1538 = vadd.f32 %v1417, %v1419
        %1539 = vadd.xlane.f32.xlu0 %v1538
        %v1540 = vpop.xlane.xlu0 %1539
        %v1541 = vadd.f32 %v1421, %v1423
        %1542 = vadd.xlane.f32.xlu0 %v1541
        %v1543 = vpop.xlane.xlu0 %1542
        %v1544 = vadd.f32 %v1425, %v1427
        %1545 = vadd.xlane.f32.xlu0 %v1544
        %v1546 = vpop.xlane.xlu0 %1545
        %v1547 = vadd.f32 %v1429, %v1431
        %1548 = vadd.xlane.f32.xlu0 %v1547
        %v1549 = vpop.xlane.xlu0 %1548
        %v1550 = vadd.f32 %v1433, %v1435
        %1551 = vadd.xlane.f32.xlu0 %v1550
        %v1552 = vpop.xlane.xlu0 %1551
        %v1553 = vadd.f32 %v1437, %v1439
        %1554 = vadd.xlane.f32.xlu0 %v1553
        %v1555 = vpop.xlane.xlu0 %1554
        %v1556 = vadd.f32 %v1441, %v1443
        %1557 = vadd.xlane.f32.xlu0 %v1556
        %v1558 = vpop.xlane.xlu0 %1557
        %v1559 = vadd.f32 %v1445, %v1447
        %1560 = vadd.xlane.f32.xlu0 %v1559
        %v1561 = vpop.xlane.xlu0 %1560
        %v1562 = vadd.f32 %v1449, %v1451
        %1563 = vadd.xlane.f32.xlu0 %v1562
        %v1564 = vpop.xlane.xlu0 %1563
        %v1565 = vadd.f32 %v1453, %v1455
        %1566 = vadd.xlane.f32.xlu0 %v1565
        %v1567 = vpop.xlane.xlu0 %1566
        %v1568 = vadd.f32 %v1457, %v1459
        %1569 = vadd.xlane.f32.xlu0 %v1568
        %v1570 = vpop.xlane.xlu0 %1569
        %v1571 = vadd.f32 %v1461, %v1463
        %1572 = vadd.xlane.f32.xlu0 %v1571
        %v1573 = vpop.xlane.xlu0 %1572
        %v1574 = vadd.f32 %v1465, %v1467
        %1575 = vadd.xlane.f32.xlu0 %v1574
        %v1576 = vpop.xlane.xlu0 %1575
        %v1577 = vadd.f32 %v1469, %v1471
        %1578 = vadd.xlane.f32.xlu0 %v1577
        %v1579 = vpop.xlane.xlu0 %1578
        %v1580 = vadd.f32 %v1473, %v1475
        %1581 = vadd.xlane.f32.xlu0 %v1580
        %v1582 = vpop.xlane.xlu0 %1581
        %v1583 = vadd.f32 %v1477, %v1479
        %1584 = vadd.xlane.f32.xlu0 %v1583
        %v1585 = vpop.xlane.xlu0 %1584
        %v1586 = vadd.f32 %v1481, %v1483
        %1587 = vadd.xlane.f32.xlu0 %v1586
        %v1588 = vpop.xlane.xlu0 %1587
        %v1589 = vadd.f32 %v1485, %v1487
        %1590 = vadd.xlane.f32.xlu0 %v1589
        %v1591 = vpop.xlane.xlu0 %1590
        %v1592 = vadd.f32 %v1489, %v1491
        %1593 = vadd.xlane.f32.xlu0 %v1592
        %v1594 = vpop.xlane.xlu0 %1593
        %v1595 = vadd.f32 %v1493, %v1495
        %1596 = vadd.xlane.f32.xlu0 %v1595
        %v1597 = vpop.xlane.xlu0 %1596
        %v1598 = vadd.f32 %v1497, %v1499
        %1599 = vadd.xlane.f32.xlu0 %v1598
        %v1600 = vpop.xlane.xlu0 %1599
        %v1601 = vadd.f32 %v1501, %v1503
        %1602 = vadd.xlane.f32.xlu0 %v1601
        %v1603 = vpop.xlane.xlu0 %1602
        %v1604 = vadd.f32 %v1505, %v1507
        %1605 = vadd.xlane.f32.xlu0 %v1604
        %v1606 = vpop.xlane.xlu0 %1605
        %v1607 = vadd.f32 %v1509, %v1511
        %1608 = vadd.xlane.f32.xlu0 %v1607
        %v1609 = vpop.xlane.xlu0 %1608
        %v1610 = vadd.f32 %v1513, %v1515
        %1611 = vadd.xlane.f32.xlu0 %v1610
        %v1612 = vpop.xlane.xlu0 %1611
        %v1613 = vadd.f32 %v1517, %v1519
        %1614 = vadd.xlane.f32.xlu0 %v1613
        %v1615 = vpop.xlane.xlu0 %1614
        %v1616 = vrcp.pop %v1522
        %v1617 = vrcp.pop %v1525
        %v1618 = vrcp.pop %v1528
        %v1619 = vrcp.pop %v1531
        %v1620 = vrcp.pop %v1534
        %v1621 = vrcp.pop %v1537
        %v1622 = vrcp.pop %v1540
        %v1623 = vrcp.pop %v1543
        %v1624 = vrcp.pop %v1546
        %v1625 = vrcp.pop %v1549
        %v1626 = vrcp.pop %v1552
        %v1627 = vrcp.pop %v1555
        %v1628 = vrcp.pop %v1558
        %v1629 = vrcp.pop %v1561
        %v1630 = vrcp.pop %v1564
        %v1631 = vrcp.pop %v1567
        %v1632 = vrcp.pop %v1570
        %v1633 = vrcp.pop %v1573
        %v1634 = vrcp.pop %v1576
        %v1635 = vrcp.pop %v1579
        %v1636 = vrcp.pop %v1582
        %v1637 = vrcp.pop %v1585
        %v1638 = vrcp.pop %v1588
        %v1639 = vrcp.pop %v1591
        %v1640 = vrcp.pop %v1594
        %v1641 = vrcp.pop %v1597
        %v1642 = vrcp.pop %v1600
        %v1643 = vrcp.pop %v1603
        %v1644 = vrcp.pop %v1606
        %v1645 = vrcp.pop %v1609
        %v1646 = vrcp.pop %v1612
        %v1647 = vrcp.pop %v1615
        %v1648 = vmul.f32 %v1393, %v1616
        %v1649 = vmul.f32 %v1395, %v1616
        %v1650 = vmul.f32 %v1397, %v1617
        %v1651 = vmul.f32 %v1399, %v1617
        %v1652 = vmul.f32 %v1401, %v1618
        %v1653 = vmul.f32 %v1403, %v1618
        %v1654 = vmul.f32 %v1405, %v1619
        %v1655 = vmul.f32 %v1407, %v1619
        %v1656 = vmul.f32 %v1409, %v1620
        %v1657 = vmul.f32 %v1411, %v1620
        %v1658 = vmul.f32 %v1413, %v1621
        %v1659 = vmul.f32 %v1415, %v1621
        %v1660 = vmul.f32 %v1417, %v1622
        %v1661 = vmul.f32 %v1419, %v1622
        %v1662 = vmul.f32 %v1421, %v1623
        %v1663 = vmul.f32 %v1423, %v1623
        %v1664 = vmul.f32 %v1425, %v1624
        %v1665 = vmul.f32 %v1427, %v1624
        %v1666 = vmul.f32 %v1429, %v1625
        %v1667 = vmul.f32 %v1431, %v1625
        %v1668 = vmul.f32 %v1433, %v1626
        %v1669 = vmul.f32 %v1435, %v1626
        %v1670 = vmul.f32 %v1437, %v1627
        %v1671 = vmul.f32 %v1439, %v1627
        %v1672 = vmul.f32 %v1441, %v1628
        %v1673 = vmul.f32 %v1443, %v1628
        %v1674 = vmul.f32 %v1445, %v1629
        %v1675 = vmul.f32 %v1447, %v1629
        %v1676 = vmul.f32 %v1449, %v1630
        %v1677 = vmul.f32 %v1451, %v1630
        %v1678 = vmul.f32 %v1453, %v1631
        %v1679 = vmul.f32 %v1455, %v1631
        %v1680 = vmul.f32 %v1457, %v1632
        %v1681 = vmul.f32 %v1459, %v1632
        %v1682 = vmul.f32 %v1461, %v1633
        %v1683 = vmul.f32 %v1463, %v1633
        %v1684 = vmul.f32 %v1465, %v1634
        %v1685 = vmul.f32 %v1467, %v1634
        %v1686 = vmul.f32 %v1469, %v1635
        %v1687 = vmul.f32 %v1471, %v1635
        %v1688 = vmul.f32 %v1473, %v1636
        %v1689 = vmul.f32 %v1475, %v1636
        %v1690 = vmul.f32 %v1477, %v1637
        %v1691 = vmul.f32 %v1479, %v1637
        %v1692 = vmul.f32 %v1481, %v1638
        %v1693 = vmul.f32 %v1483, %v1638
        %v1694 = vmul.f32 %v1485, %v1639
        %v1695 = vmul.f32 %v1487, %v1639
        %v1696 = vmul.f32 %v1489, %v1640
        %v1697 = vmul.f32 %v1491, %v1640
        %v1698 = vmul.f32 %v1493, %v1641
        %v1699 = vmul.f32 %v1495, %v1641
        %v1700 = vmul.f32 %v1497, %v1642
        %v1701 = vmul.f32 %v1499, %v1642
        %v1702 = vmul.f32 %v1501, %v1643
        %v1703 = vmul.f32 %v1503, %v1643
        %v1704 = vmul.f32 %v1505, %v1644
        %v1705 = vmul.f32 %v1507, %v1644
        %v1706 = vmul.f32 %v1509, %v1645
        %v1707 = vmul.f32 %v1511, %v1645
        %v1708 = vmul.f32 %v1513, %v1646
        %v1709 = vmul.f32 %v1515, %v1646
        %v1710 = vmul.f32 %v1517, %v1647
        %v1711 = vmul.f32 %v1519, %v1647
        %v1712 = vpack.c.bf16 %v1650, %v1648
        %v1713 = vpack.c.bf16 %v1651, %v1649
        %v1714 = vpack.c.bf16 %v1654, %v1652
        %v1715 = vpack.c.bf16 %v1655, %v1653
        %v1716 = vpack.c.bf16 %v1658, %v1656
        %v1717 = vpack.c.bf16 %v1659, %v1657
        %v1718 = vpack.c.bf16 %v1662, %v1660
        %v1719 = vpack.c.bf16 %v1663, %v1661
        %v1720 = vpack.c.bf16 %v1666, %v1664
        %v1721 = vpack.c.bf16 %v1667, %v1665
        %v1722 = vpack.c.bf16 %v1670, %v1668
        %v1723 = vpack.c.bf16 %v1671, %v1669
        %v1724 = vpack.c.bf16 %v1674, %v1672
        %v1725 = vpack.c.bf16 %v1675, %v1673
        %v1726 = vpack.c.bf16 %v1678, %v1676
        %v1727 = vpack.c.bf16 %v1679, %v1677
        %v1728 = vpack.c.bf16 %v1682, %v1680
        %v1729 = vpack.c.bf16 %v1683, %v1681
        %v1730 = vpack.c.bf16 %v1686, %v1684
        %v1731 = vpack.c.bf16 %v1687, %v1685
        %v1732 = vpack.c.bf16 %v1690, %v1688
        %v1733 = vpack.c.bf16 %v1691, %v1689
        %v1734 = vpack.c.bf16 %v1694, %v1692
        %v1735 = vpack.c.bf16 %v1695, %v1693
        %v1736 = vpack.c.bf16 %v1698, %v1696
        %v1737 = vpack.c.bf16 %v1699, %v1697
        %v1738 = vpack.c.bf16 %v1702, %v1700
        %v1739 = vpack.c.bf16 %v1703, %v1701
        %v1740 = vpack.c.bf16 %v1706, %v1704
        %v1741 = vpack.c.bf16 %v1707, %v1705
        %v1742 = vpack.c.bf16 %v1710, %v1708
        %v1743 = vpack.c.bf16 %v1711, %v1709
        %1744 = vmatprep.subr.bf16.mxu0 %v1713
        %1745 = vmatpush1.bf16.xpose.msra.mxu0 %v1712
        %1746 = vmatprep.subr.bf16.mxu0 %v1715
        %1747 = vmatpush1.bf16.xpose.msra.mxu0 %v1714
        %1748 = vmatprep.subr.bf16.mxu0 %v1717
        %1749 = vmatpush1.bf16.xpose.msra.mxu0 %v1716
        %1750 = vmatprep.subr.bf16.mxu0 %v1719
        %1751 = vmatpush1.bf16.xpose.msra.mxu0 %v1718
        %1752 = vmatprep.subr.bf16.mxu0 %v1721
        %1753 = vmatpush1.bf16.xpose.msra.mxu0 %v1720
        %1754 = vmatprep.subr.bf16.mxu0 %v1723
        %1755 = vmatpush1.bf16.xpose.msra.mxu0 %v1722
        %1756 = vmatprep.subr.bf16.mxu0 %v1725
        %1757 = vmatpush1.bf16.xpose.msra.mxu0 %v1724
        %1758 = vmatprep.subr.bf16.mxu0 %v1727
        %1759 = vmatpush1.bf16.xpose.msra.mxu0 %v1726
        %1760 = vmatprep.subr.bf16.mxu0 %v1729
        %1761 = vmatpush1.bf16.xpose.msra.mxu0 %v1728
        %1762 = vmatprep.subr.bf16.mxu0 %v1731
        %1763 = vmatpush1.bf16.xpose.msra.mxu0 %v1730
        %1764 = vmatprep.subr.bf16.mxu0 %v1733
        %1765 = vmatpush1.bf16.xpose.msra.mxu0 %v1732
        %1766 = vmatprep.subr.bf16.mxu0 %v1735
        %1767 = vmatpush1.bf16.xpose.msra.mxu0 %v1734
        %1768 = vmatprep.subr.bf16.mxu0 %v1737
        %1769 = vmatpush1.bf16.xpose.msra.mxu0 %v1736
        %1770 = vmatprep.subr.bf16.mxu0 %v1739
        %1771 = vmatpush1.bf16.xpose.msra.mxu0 %v1738
        %1772 = vmatprep.subr.bf16.mxu0 %v1741
        %1773 = vmatpush1.bf16.xpose.msra.mxu0 %v1740
        %1774 = vmatprep.subr.bf16.mxu0 %v1743
        %1775 = vmatpush1.bf16.xpose.msra.mxu0 %v1742
        %1776 = vmatprep.mubr.bf16.mxu0 %v987
        %1777 = vmatmul.mubr.bf16.gmra.mrb[0].mxu0 %v986
        %v1778 = vpop.f32.mrb[0].mxu0
        %v1779 = vadd.f32 0.0, %v1778
        %v1780 = vpop.f32.mrb[0].mxu0
        %v1781 = vadd.f32 0.0, %v1780
        %v1782 = vpop.f32.mrb[0].mxu0
        %v1783 = vadd.f32 0.0, %v1782
        %v1784 = vpop.f32.mrb[0].mxu0
        %v1785 = vadd.f32 0.0, %v1784
        %1786 = vmatprep.mubr.bf16.mxu0 %v989
        %1787 = vmatmul.mubr.bf16.gmra.mrb[0].mxu0 %v988
        %v1788 = vpop.f32.mrb[0].mxu0
        %v1789 = vadd.f32 0.0, %v1788
        %v1790 = vpop.f32.mrb[0].mxu0
        %v1791 = vadd.f32 0.0, %v1790
        %v1792 = vpop.f32.mrb[0].mxu0
        %v1793 = vadd.f32 0.0, %v1792
        %v1794 = vpop.f32.mrb[0].mxu0
        %v1795 = vadd.f32 0.0, %v1794
        %1796 = vdwg.mxu0
        %v1797 = vpack.c.bf16 %v1783, %v1779
        %v1798 = vpack.c.bf16 %v1785, %v1781
        %v1799 = vpack.c.bf16 %v1793, %v1789
        %v1800 = vpack.c.bf16 %v1795, %v1791
        %1801 = vst [vmem:[#allocation3] sm:$0xff] %v1797
        %1802 = vst [vmem:[#allocation3 + $0x8] sm:$0xff] %v1798
        %1803 = vst [vmem:[#allocation3 + $0x10] sm:$0xff] %v1799
        %1804 = vst [vmem:[#allocation3 + $0x18] sm:$0xff] %v1800
        %1805 = vxpose.xlu0.b32.start [1/16] %v844, 128
        %1806 = vxpose.xlu0.b32.cont [2/16] %v848, 128
        %1807 = vxpose.xlu0.b32.cont [3/16] %v854, 128
        %1808 = vxpose.xlu0.b32.cont [4/16] %v858, 128
        %1809 = vxpose.xlu0.b32.cont [5/16] 0.0, 128
        %1810 = vxpose.xlu0.b32.cont [6/16] 0.0, 128
        %1811 = vxpose.xlu0.b32.cont [7/16] 0.0, 128
        %1812 = vxpose.xlu0.b32.cont [8/16] 0.0, 128
        %1813 = vxpose.xlu0.b32.cont [9/16] 0.0, 128
        %1814 = vxpose.xlu0.b32.cont [10/16] 0.0, 128
        %1815 = vxpose.xlu0.b32.cont [11/16] 0.0, 128
        %1816 = vxpose.xlu0.b32.cont [12/16] 0.0, 128
        %1817 = vxpose.xlu0.b32.cont [13/16] 0.0, 128
        %1818 = vxpose.xlu0.b32.cont [14/16] 0.0, 128
        %1819 = vxpose.xlu0.b32.cont [15/16] 0.0, 128
        %1820 = vxpose.xlu0.b32.end [16/16] 0.0, 128
        %v1821 = vpop.trf.xlu0
        %v1822 = vpop.trf.xlu0
        %v1823 = vpop.trf.xlu0
        %v1824 = vpop.trf.xlu0
        %v1825 = vpop.trf.xlu0
        %v1826 = vpop.trf.xlu0
        %v1827 = vpop.trf.xlu0
        %v1828 = vpop.trf.xlu0
        %v1829 = vpop.trf.xlu0
        %v1830 = vpop.trf.xlu0
        %v1831 = vpop.trf.xlu0
        %v1832 = vpop.trf.xlu0
        %v1833 = vpop.trf.xlu0
        %v1834 = vpop.trf.xlu0
        %v1835 = vpop.trf.xlu0
        %v1836 = vpop.trf.xlu0
        %1837 = vxpose.xlu0.b32.start [1/16] %v846, 128
        %1838 = vxpose.xlu0.b32.cont [2/16] %v850, 128
        %1839 = vxpose.xlu0.b32.cont [3/16] %v856, 128
        %1840 = vxpose.xlu0.b32.cont [4/16] %v860, 128
        %1841 = vxpose.xlu0.b32.cont [5/16] 0.0, 128
        %1842 = vxpose.xlu0.b32.cont [6/16] 0.0, 128
        %1843 = vxpose.xlu0.b32.cont [7/16] 0.0, 128
        %1844 = vxpose.xlu0.b32.cont [8/16] 0.0, 128
        %1845 = vxpose.xlu0.b32.cont [9/16] 0.0, 128
        %1846 = vxpose.xlu0.b32.cont [10/16] 0.0, 128
        %1847 = vxpose.xlu0.b32.cont [11/16] 0.0, 128
        %1848 = vxpose.xlu0.b32.cont [12/16] 0.0, 128
        %1849 = vxpose.xlu0.b32.cont [13/16] 0.0, 128
        %1850 = vxpose.xlu0.b32.cont [14/16] 0.0, 128
        %1851 = vxpose.xlu0.b32.cont [15/16] 0.0, 128
        %1852 = vxpose.xlu0.b32.end [16/16] 0.0, 128
        %v1853 = vpop.trf.xlu0
        %v1854 = vpop.trf.xlu0
        %v1855 = vpop.trf.xlu0
        %v1856 = vpop.trf.xlu0
        %v1857 = vpop.trf.xlu0
        %v1858 = vpop.trf.xlu0
        %v1859 = vpop.trf.xlu0
        %v1860 = vpop.trf.xlu0
        %v1861 = vpop.trf.xlu0
        %v1862 = vpop.trf.xlu0
        %v1863 = vpop.trf.xlu0
        %v1864 = vpop.trf.xlu0
        %v1865 = vpop.trf.xlu0
        %v1866 = vpop.trf.xlu0
        %v1867 = vpop.trf.xlu0
        %v1868 = vpop.trf.xlu0
        %v1869 = vpack.c.bf16 %v1822, %v1821
        %v1870 = vpack.c.bf16 %v1824, %v1823
        %v1871 = vpack.c.bf16 %v1826, %v1825
        %v1872 = vpack.c.bf16 %v1828, %v1827
        %v1873 = vpack.c.bf16 %v1830, %v1829
        %v1874 = vpack.c.bf16 %v1832, %v1831
        %v1875 = vpack.c.bf16 %v1834, %v1833
        %v1876 = vpack.c.bf16 %v1836, %v1835
        %v1877 = vpack.c.bf16 %v1854, %v1853
        %v1878 = vpack.c.bf16 %v1856, %v1855
        %v1879 = vpack.c.bf16 %v1858, %v1857
        %v1880 = vpack.c.bf16 %v1860, %v1859
        %v1881 = vpack.c.bf16 %v1862, %v1861
        %v1882 = vpack.c.bf16 %v1864, %v1863
        %v1883 = vpack.c.bf16 %v1866, %v1865
        %v1884 = vpack.c.bf16 %v1868, %v1867
        %v1885 = vld [vmem:[#allocation2 + $0x20] sm:$0xff]
        %v1886 = vld [vmem:[#allocation2 + $0x28] sm:$0xff]
        %v1887 = vld [vmem:[#allocation2 + $0x30] sm:$0xff]
        %v1888 = vld [vmem:[#allocation2 + $0x38] sm:$0xff]
        %v1889 = vld [vmem:[#allocation2 + $0xa0] sm:$0xff]
        %v1890 = vld [vmem:[#allocation2 + $0xa8] sm:$0xff]
        %v1891 = vld [vmem:[#allocation2 + $0xb0] sm:$0xff]
        %v1892 = vld [vmem:[#allocation2 + $0xb8] sm:$0xff]
        %v1894 = vsel %vm990, %v1869, 0
        %v1897 = vsel %vm990, %v1870, 0
        %v1900 = vsel %vm990, %v1871, 0
        %v1903 = vsel %vm990, %v1872, 0
        %v1906 = vsel %vm990, %v1873, 0
        %v1909 = vsel %vm990, %v1874, 0
        %v1912 = vsel %vm990, %v1875, 0
        %v1915 = vsel %vm990, %v1876, 0
        %v1918 = vsel %vm990, %v1877, 0
        %v1921 = vsel %vm990, %v1878, 0
        %v1924 = vsel %vm990, %v1879, 0
        %v1927 = vsel %vm990, %v1880, 0
        %v1930 = vsel %vm990, %v1881, 0
        %v1933 = vsel %vm990, %v1882, 0
        %v1936 = vsel %vm990, %v1883, 0
        %v1939 = vsel %vm990, %v1884, 0
        %1941 = vmatprep.subr.bf16.mxu0 %v1886
        %1942 = vmatpush1.bf16.msra.mxu0 %v1885
        %1943 = vmatprep.subr.bf16.mxu0 %v1888
        %1944 = vmatpush1.bf16.msra.mxu0 %v1887
        %1945 = vmatprep.subr.bf16.mxu0 0
        %1946 = vmatpush1.bf16.msra.mxu0 0
        %1947 = vmatprep.subr.bf16.mxu0 0
        %1948 = vmatpush1.bf16.msra.mxu0 0
        %1949 = vmatprep.subr.bf16.mxu0 0
        %1950 = vmatpush1.bf16.msra.mxu0 0
        %1951 = vmatprep.subr.bf16.mxu0 0
        %1952 = vmatpush1.bf16.msra.mxu0 0
        %1953 = vmatprep.subr.bf16.mxu0 0
        %1954 = vmatpush1.bf16.msra.mxu0 0
        %1955 = vmatprep.subr.bf16.mxu0 0
        %1956 = vmatpush1.bf16.msra.mxu0 0
        %1957 = vmatprep.subr.bf16.mxu0 0
        %1958 = vmatpush1.bf16.msra.mxu0 0
        %1959 = vmatprep.subr.bf16.mxu0 0
        %1960 = vmatpush1.bf16.msra.mxu0 0
        %1961 = vmatprep.subr.bf16.mxu0 0
        %1962 = vmatpush1.bf16.msra.mxu0 0
        %1963 = vmatprep.subr.bf16.mxu0 0
        %1964 = vmatpush1.bf16.msra.mxu0 0
        %1965 = vmatprep.subr.bf16.mxu0 0
        %1966 = vmatpush1.bf16.msra.mxu0 0
        %1967 = vmatprep.subr.bf16.mxu0 0
        %1968 = vmatpush1.bf16.msra.mxu0 0
        %1969 = vmatprep.subr.bf16.mxu0 0
        %1970 = vmatpush1.bf16.msra.mxu0 0
        %1971 = vmatprep.subr.bf16.mxu0 0
        %1972 = vmatpush1.bf16.msra.mxu0 0
        %1973 = vmatprep.mubr.bf16.mxu0 0
        %1974 = vmatmul.mubr.bf16.gmra.mrb[0].mxu0 %v1894
        %v1975 = vpop.f32.mrb[0].mxu0
        %v1976 = vadd.f32 0.0, %v1975
        %v1977 = vpop.f32.mrb[0].mxu0
        %v1978 = vadd.f32 0.0, %v1977
        %v1979 = vpop.f32.mrb[0].mxu0
        %v1980 = vadd.f32 0.0, %v1979
        %v1981 = vpop.f32.mrb[0].mxu0
        %v1982 = vadd.f32 0.0, %v1981
        %1983 = vmatprep.mubr.bf16.mxu0 0
        %1984 = vmatmul.mubr.bf16.gmra.mrb[0].mxu0 %v1897
        %v1985 = vpop.f32.mrb[0].mxu0
        %v1986 = vadd.f32 0.0, %v1985
        %v1987 = vpop.f32.mrb[0].mxu0
        %v1988 = vadd.f32 0.0, %v1987
        %v1989 = vpop.f32.mrb[0].mxu0
        %v1990 = vadd.f32 0.0, %v1989
        %v1991 = vpop.f32.mrb[0].mxu0
        %v1992 = vadd.f32 0.0, %v1991
        %1993 = vmatprep.mubr.bf16.mxu0 0
        %1994 = vmatmul.mubr.bf16.gmra.mrb[0].mxu0 %v1900
        %v1995 = vpop.f32.mrb[0].mxu0
        %v1996 = vadd.f32 0.0, %v1995
        %v1997 = vpop.f32.mrb[0].mxu0
        %v1998 = vadd.f32 0.0, %v1997
        %v1999 = vpop.f32.mrb[0].mxu0
        %v2000 = vadd.f32 0.0, %v1999
        %v2001 = vpop.f32.mrb[0].mxu0
        %v2002 = vadd.f32 0.0, %v2001
        %2003 = vmatprep.mubr.bf16.mxu0 0
        %2004 = vmatmul.mubr.bf16.gmra.mrb[0].mxu0 %v1903
        %v2005 = vpop.f32.mrb[0].mxu0
        %v2006 = vadd.f32 0.0, %v2005
        %v2007 = vpop.f32.mrb[0].mxu0
        %v2008 = vadd.f32 0.0, %v2007
        %v2009 = vpop.f32.mrb[0].mxu0
        %v2010 = vadd.f32 0.0, %v2009
        %v2011 = vpop.f32.mrb[0].mxu0
        %v2012 = vadd.f32 0.0, %v2011
        %2013 = vmatprep.mubr.bf16.mxu0 0
        %2014 = vmatmul.mubr.bf16.gmra.mrb[0].mxu0 %v1906
        %v2015 = vpop.f32.mrb[0].mxu0
        %v2016 = vadd.f32 0.0, %v2015
        %v2017 = vpop.f32.mrb[0].mxu0
        %v2018 = vadd.f32 0.0, %v2017
        %v2019 = vpop.f32.mrb[0].mxu0
        %v2020 = vadd.f32 0.0, %v2019
        %v2021 = vpop.f32.mrb[0].mxu0
        %v2022 = vadd.f32 0.0, %v2021
        %2023 = vmatprep.mubr.bf16.mxu0 0
        %2024 = vmatmul.mubr.bf16.gmra.mrb[0].mxu0 %v1909
        %v2025 = vpop.f32.mrb[0].mxu0
        %v2026 = vadd.f32 0.0, %v2025
        %v2027 = vpop.f32.mrb[0].mxu0
        %v2028 = vadd.f32 0.0, %v2027
        %v2029 = vpop.f32.mrb[0].mxu0
        %v2030 = vadd.f32 0.0, %v2029
        %v2031 = vpop.f32.mrb[0].mxu0
        %v2032 = vadd.f32 0.0, %v2031
        %2033 = vmatprep.mubr.bf16.mxu0 0
        %2034 = vmatmul.mubr.bf16.gmra.mrb[0].mxu0 %v1912
        %v2035 = vpop.f32.mrb[0].mxu0
        %v2036 = vadd.f32 0.0, %v2035
        %v2037 = vpop.f32.mrb[0].mxu0
        %v2038 = vadd.f32 0.0, %v2037
        %v2039 = vpop.f32.mrb[0].mxu0
        %v2040 = vadd.f32 0.0, %v2039
        %v2041 = vpop.f32.mrb[0].mxu0
        %v2042 = vadd.f32 0.0, %v2041
        %2043 = vmatprep.mubr.bf16.mxu0 0
        %2044 = vmatmul.mubr.bf16.gmra.mrb[0].mxu0 %v1915
        %v2045 = vpop.f32.mrb[0].mxu0
        %v2046 = vadd.f32 0.0, %v2045
        %v2047 = vpop.f32.mrb[0].mxu0
        %v2048 = vadd.f32 0.0, %v2047
        %v2049 = vpop.f32.mrb[0].mxu0
        %v2050 = vadd.f32 0.0, %v2049
        %v2051 = vpop.f32.mrb[0].mxu0
        %v2052 = vadd.f32 0.0, %v2051
        %2053 = vmatprep.mubr.bf16.mxu0 0
        %2054 = vmatmul.mubr.bf16.gmra.mrb[0].mxu0 %v1918
        %v2055 = vpop.f32.mrb[0].mxu0
        %v2056 = vadd.f32 0.0, %v2055
        %v2057 = vpop.f32.mrb[0].mxu0
        %v2058 = vadd.f32 0.0, %v2057
        %v2059 = vpop.f32.mrb[0].mxu0
        %v2060 = vadd.f32 0.0, %v2059
        %v2061 = vpop.f32.mrb[0].mxu0
        %v2062 = vadd.f32 0.0, %v2061
        %2063 = vmatprep.mubr.bf16.mxu0 0
        %2064 = vmatmul.mubr.bf16.gmra.mrb[0].mxu0 %v1921
        %v2065 = vpop.f32.mrb[0].mxu0
        %v2066 = vadd.f32 0.0, %v2065
        %v2067 = vpop.f32.mrb[0].mxu0
        %v2068 = vadd.f32 0.0, %v2067
        %v2069 = vpop.f32.mrb[0].mxu0
        %v2070 = vadd.f32 0.0, %v2069
        %v2071 = vpop.f32.mrb[0].mxu0
        %v2072 = vadd.f32 0.0, %v2071
        %2073 = vmatprep.mubr.bf16.mxu0 0
        %2074 = vmatmul.mubr.bf16.gmra.mrb[0].mxu0 %v1924
        %v2075 = vpop.f32.mrb[0].mxu0
        %v2076 = vadd.f32 0.0, %v2075
        %v2077 = vpop.f32.mrb[0].mxu0
        %v2078 = vadd.f32 0.0, %v2077
        %v2079 = vpop.f32.mrb[0].mxu0
        %v2080 = vadd.f32 0.0, %v2079
        %v2081 = vpop.f32.mrb[0].mxu0
        %v2082 = vadd.f32 0.0, %v2081
        %2083 = vmatprep.mubr.bf16.mxu0 0
        %2084 = vmatmul.mubr.bf16.gmra.mrb[0].mxu0 %v1927
        %v2085 = vpop.f32.mrb[0].mxu0
        %v2086 = vadd.f32 0.0, %v2085
        %v2087 = vpop.f32.mrb[0].mxu0
        %v2088 = vadd.f32 0.0, %v2087
        %v2089 = vpop.f32.mrb[0].mxu0
        %v2090 = vadd.f32 0.0, %v2089
        %v2091 = vpop.f32.mrb[0].mxu0
        %v2092 = vadd.f32 0.0, %v2091
        %2093 = vmatprep.mubr.bf16.mxu0 0
        %2094 = vmatmul.mubr.bf16.gmra.mrb[0].mxu0 %v1930
        %v2095 = vpop.f32.mrb[0].mxu0
        %v2096 = vadd.f32 0.0, %v2095
        %v2097 = vpop.f32.mrb[0].mxu0
        %v2098 = vadd.f32 0.0, %v2097
        %v2099 = vpop.f32.mrb[0].mxu0
        %v2100 = vadd.f32 0.0, %v2099
        %v2101 = vpop.f32.mrb[0].mxu0
        %v2102 = vadd.f32 0.0, %v2101
        %2103 = vmatprep.mubr.bf16.mxu0 0
        %2104 = vmatmul.mubr.bf16.gmra.mrb[0].mxu0 %v1933
        %v2105 = vpop.f32.mrb[0].mxu0
        %v2106 = vadd.f32 0.0, %v2105
        %v2107 = vpop.f32.mrb[0].mxu0
        %v2108 = vadd.f32 0.0, %v2107
        %v2109 = vpop.f32.mrb[0].mxu0
        %v2110 = vadd.f32 0.0, %v2109
        %v2111 = vpop.f32.mrb[0].mxu0
        %v2112 = vadd.f32 0.0, %v2111
        %2113 = vmatprep.mubr.bf16.mxu0 0
        %2114 = vmatmul.mubr.bf16.gmra.mrb[0].mxu0 %v1936
        %v2115 = vpop.f32.mrb[0].mxu0
        %v2116 = vadd.f32 0.0, %v2115
        %v2117 = vpop.f32.mrb[0].mxu0
        %v2118 = vadd.f32 0.0, %v2117
        %v2119 = vpop.f32.mrb[0].mxu0
        %v2120 = vadd.f32 0.0, %v2119
        %v2121 = vpop.f32.mrb[0].mxu0
        %v2122 = vadd.f32 0.0, %v2121
        %2123 = vmatprep.mubr.bf16.mxu0 0
        %2124 = vmatmul.mubr.bf16.gmra.mrb[0].mxu0 %v1939
        %v2125 = vpop.f32.mrb[0].mxu0
        %v2126 = vadd.f32 0.0, %v2125
        %v2127 = vpop.f32.mrb[0].mxu0
        %v2128 = vadd.f32 0.0, %v2127
        %v2129 = vpop.f32.mrb[0].mxu0
        %v2130 = vadd.f32 0.0, %v2129
        %v2131 = vpop.f32.mrb[0].mxu0
        %v2132 = vadd.f32 0.0, %v2131
        %2133 = vdwg.mxu0
        %v2134 = vmax.f32 %v1976, %v1978
        %2135 = vmax.xlane.f32.xlu0 %v2134
        %v2136 = vpop.xlane.xlu0 %2135
        %v2137 = vmax.f32 %v1980, %v1982
        %2138 = vmax.xlane.f32.xlu0 %v2137
        %v2139 = vpop.xlane.xlu0 %2138
        %v2140 = vmax.f32 %v1986, %v1988
        %2141 = vmax.xlane.f32.xlu0 %v2140
        %v2142 = vpop.xlane.xlu0 %2141
        %v2143 = vmax.f32 %v1990, %v1992
        %2144 = vmax.xlane.f32.xlu0 %v2143
        %v2145 = vpop.xlane.xlu0 %2144
        %v2146 = vmax.f32 %v1996, %v1998
        %2147 = vmax.xlane.f32.xlu0 %v2146
        %v2148 = vpop.xlane.xlu0 %2147
        %v2149 = vmax.f32 %v2000, %v2002
        %2150 = vmax.xlane.f32.xlu0 %v2149
        %v2151 = vpop.xlane.xlu0 %2150
        %v2152 = vmax.f32 %v2006, %v2008
        %2153 = vmax.xlane.f32.xlu0 %v2152
        %v2154 = vpop.xlane.xlu0 %2153
        %v2155 = vmax.f32 %v2010, %v2012
        %2156 = vmax.xlane.f32.xlu0 %v2155
        %v2157 = vpop.xlane.xlu0 %2156
        %v2158 = vmax.f32 %v2016, %v2018
        %2159 = vmax.xlane.f32.xlu0 %v2158
        %v2160 = vpop.xlane.xlu0 %2159
        %v2161 = vmax.f32 %v2020, %v2022
        %2162 = vmax.xlane.f32.xlu0 %v2161
        %v2163 = vpop.xlane.xlu0 %2162
        %v2164 = vmax.f32 %v2026, %v2028
        %2165 = vmax.xlane.f32.xlu0 %v2164
        %v2166 = vpop.xlane.xlu0 %2165
        %v2167 = vmax.f32 %v2030, %v2032
        %2168 = vmax.xlane.f32.xlu0 %v2167
        %v2169 = vpop.xlane.xlu0 %2168
        %v2170 = vmax.f32 %v2036, %v2038
        %2171 = vmax.xlane.f32.xlu0 %v2170
        %v2172 = vpop.xlane.xlu0 %2171
        %v2173 = vmax.f32 %v2040, %v2042
        %2174 = vmax.xlane.f32.xlu0 %v2173
        %v2175 = vpop.xlane.xlu0 %2174
        %v2176 = vmax.f32 %v2046, %v2048
        %2177 = vmax.xlane.f32.xlu0 %v2176
        %v2178 = vpop.xlane.xlu0 %2177
        %v2179 = vmax.f32 %v2050, %v2052
        %2180 = vmax.xlane.f32.xlu0 %v2179
        %v2181 = vpop.xlane.xlu0 %2180
        %v2182 = vmax.f32 %v2056, %v2058
        %2183 = vmax.xlane.f32.xlu0 %v2182
        %v2184 = vpop.xlane.xlu0 %2183
        %v2185 = vmax.f32 %v2060, %v2062
        %2186 = vmax.xlane.f32.xlu0 %v2185
        %v2187 = vpop.xlane.xlu0 %2186
        %v2188 = vmax.f32 %v2066, %v2068
        %2189 = vmax.xlane.f32.xlu0 %v2188
        %v2190 = vpop.xlane.xlu0 %2189
        %v2191 = vmax.f32 %v2070, %v2072
        %2192 = vmax.xlane.f32.xlu0 %v2191
        %v2193 = vpop.xlane.xlu0 %2192
        %v2194 = vmax.f32 %v2076, %v2078
        %2195 = vmax.xlane.f32.xlu0 %v2194
        %v2196 = vpop.xlane.xlu0 %2195
        %v2197 = vmax.f32 %v2080, %v2082
        %2198 = vmax.xlane.f32.xlu0 %v2197
        %v2199 = vpop.xlane.xlu0 %2198
        %v2200 = vmax.f32 %v2086, %v2088
        %2201 = vmax.xlane.f32.xlu0 %v2200
        %v2202 = vpop.xlane.xlu0 %2201
        %v2203 = vmax.f32 %v2090, %v2092
        %2204 = vmax.xlane.f32.xlu0 %v2203
        %v2205 = vpop.xlane.xlu0 %2204
        %v2206 = vmax.f32 %v2096, %v2098
        %2207 = vmax.xlane.f32.xlu0 %v2206
        %v2208 = vpop.xlane.xlu0 %2207
        %v2209 = vmax.f32 %v2100, %v2102
        %2210 = vmax.xlane.f32.xlu0 %v2209
        %v2211 = vpop.xlane.xlu0 %2210
        %v2212 = vmax.f32 %v2106, %v2108
        %2213 = vmax.xlane.f32.xlu0 %v2212
        %v2214 = vpop.xlane.xlu0 %2213
        %v2215 = vmax.f32 %v2110, %v2112
        %2216 = vmax.xlane.f32.xlu0 %v2215
        %v2217 = vpop.xlane.xlu0 %2216
        %v2218 = vmax.f32 %v2116, %v2118
        %2219 = vmax.xlane.f32.xlu0 %v2218
        %v2220 = vpop.xlane.xlu0 %2219
        %v2221 = vmax.f32 %v2120, %v2122
        %2222 = vmax.xlane.f32.xlu0 %v2221
        %v2223 = vpop.xlane.xlu0 %2222
        %v2224 = vmax.f32 %v2126, %v2128
        %2225 = vmax.xlane.f32.xlu0 %v2224
        %v2226 = vpop.xlane.xlu0 %2225
        %v2227 = vmax.f32 %v2130, %v2132
        %2228 = vmax.xlane.f32.xlu0 %v2227
        %v2229 = vpop.xlane.xlu0 %2228
        %v2230 = vsub.f32 %v1976, %v2136
        %v2231 = vsub.f32 %v1978, %v2136
        %v2232 = vsub.f32 %v1980, %v2139
        %v2233 = vsub.f32 %v1982, %v2139
        %v2234 = vsub.f32 %v1986, %v2142
        %v2235 = vsub.f32 %v1988, %v2142
        %v2236 = vsub.f32 %v1990, %v2145
        %v2237 = vsub.f32 %v1992, %v2145
        %v2238 = vsub.f32 %v1996, %v2148
        %v2239 = vsub.f32 %v1998, %v2148
        %v2240 = vsub.f32 %v2000, %v2151
        %v2241 = vsub.f32 %v2002, %v2151
        %v2242 = vsub.f32 %v2006, %v2154
        %v2243 = vsub.f32 %v2008, %v2154
        %v2244 = vsub.f32 %v2010, %v2157
        %v2245 = vsub.f32 %v2012, %v2157
        %v2246 = vsub.f32 %v2016, %v2160
        %v2247 = vsub.f32 %v2018, %v2160
        %v2248 = vsub.f32 %v2020, %v2163
        %v2249 = vsub.f32 %v2022, %v2163
        %v2250 = vsub.f32 %v2026, %v2166
        %v2251 = vsub.f32 %v2028, %v2166
        %v2252 = vsub.f32 %v2030, %v2169
        %v2253 = vsub.f32 %v2032, %v2169
        %v2254 = vsub.f32 %v2036, %v2172
        %v2255 = vsub.f32 %v2038, %v2172
        %v2256 = vsub.f32 %v2040, %v2175
        %v2257 = vsub.f32 %v2042, %v2175
        %v2258 = vsub.f32 %v2046, %v2178
        %v2259 = vsub.f32 %v2048, %v2178
        %v2260 = vsub.f32 %v2050, %v2181
        %v2261 = vsub.f32 %v2052, %v2181
        %v2262 = vsub.f32 %v2056, %v2184
        %v2263 = vsub.f32 %v2058, %v2184
        %v2264 = vsub.f32 %v2060, %v2187
        %v2265 = vsub.f32 %v2062, %v2187
        %v2266 = vsub.f32 %v2066, %v2190
        %v2267 = vsub.f32 %v2068, %v2190
        %v2268 = vsub.f32 %v2070, %v2193
        %v2269 = vsub.f32 %v2072, %v2193
        %v2270 = vsub.f32 %v2076, %v2196
        %v2271 = vsub.f32 %v2078, %v2196
        %v2272 = vsub.f32 %v2080, %v2199
        %v2273 = vsub.f32 %v2082, %v2199
        %v2274 = vsub.f32 %v2086, %v2202
        %v2275 = vsub.f32 %v2088, %v2202
        %v2276 = vsub.f32 %v2090, %v2205
        %v2277 = vsub.f32 %v2092, %v2205
        %v2278 = vsub.f32 %v2096, %v2208
        %v2279 = vsub.f32 %v2098, %v2208
        %v2280 = vsub.f32 %v2100, %v2211
        %v2281 = vsub.f32 %v2102, %v2211
        %v2282 = vsub.f32 %v2106, %v2214
        %v2283 = vsub.f32 %v2108, %v2214
        %v2284 = vsub.f32 %v2110, %v2217
        %v2285 = vsub.f32 %v2112, %v2217
        %v2286 = vsub.f32 %v2116, %v2220
        %v2287 = vsub.f32 %v2118, %v2220
        %v2288 = vsub.f32 %v2120, %v2223
        %v2289 = vsub.f32 %v2122, %v2223
        %v2290 = vsub.f32 %v2126, %v2226
        %v2291 = vsub.f32 %v2128, %v2226
        %v2292 = vsub.f32 %v2130, %v2229
        %v2293 = vsub.f32 %v2132, %v2229
        %v2294 = vmul.f32 %v2230, 1.442695
        %v2295 = vpow.pop %v2294
        %v2296 = vmul.f32 %v2231, 1.442695
        %v2297 = vpow.pop %v2296
        %v2298 = vmul.f32 %v2232, 1.442695
        %v2299 = vpow.pop %v2298
        %v2300 = vmul.f32 %v2233, 1.442695
        %v2301 = vpow.pop %v2300
        %v2302 = vmul.f32 %v2234, 1.442695
        %v2303 = vpow.pop %v2302
        %v2304 = vmul.f32 %v2235, 1.442695
        %v2305 = vpow.pop %v2304
        %v2306 = vmul.f32 %v2236, 1.442695
        %v2307 = vpow.pop %v2306
        %v2308 = vmul.f32 %v2237, 1.442695
        %v2309 = vpow.pop %v2308
        %v2310 = vmul.f32 %v2238, 1.442695
        %v2311 = vpow.pop %v2310
        %v2312 = vmul.f32 %v2239, 1.442695
        %v2313 = vpow.pop %v2312
        %v2314 = vmul.f32 %v2240, 1.442695
        %v2315 = vpow.pop %v2314
        %v2316 = vmul.f32 %v2241, 1.442695
        %v2317 = vpow.pop %v2316
        %v2318 = vmul.f32 %v2242, 1.442695
        %v2319 = vpow.pop %v2318
        %v2320 = vmul.f32 %v2243, 1.442695
        %v2321 = vpow.pop %v2320
        %v2322 = vmul.f32 %v2244, 1.442695
        %v2323 = vpow.pop %v2322
        %v2324 = vmul.f32 %v2245, 1.442695
        %v2325 = vpow.pop %v2324
        %v2326 = vmul.f32 %v2246, 1.442695
        %v2327 = vpow.pop %v2326
        %v2328 = vmul.f32 %v2247, 1.442695
        %v2329 = vpow.pop %v2328
        %v2330 = vmul.f32 %v2248, 1.442695
        %v2331 = vpow.pop %v2330
        %v2332 = vmul.f32 %v2249, 1.442695
        %v2333 = vpow.pop %v2332
        %v2334 = vmul.f32 %v2250, 1.442695
        %v2335 = vpow.pop %v2334
        %v2336 = vmul.f32 %v2251, 1.442695
        %v2337 = vpow.pop %v2336
        %v2338 = vmul.f32 %v2252, 1.442695
        %v2339 = vpow.pop %v2338
        %v2340 = vmul.f32 %v2253, 1.442695
        %v2341 = vpow.pop %v2340
        %v2342 = vmul.f32 %v2254, 1.442695
        %v2343 = vpow.pop %v2342
        %v2344 = vmul.f32 %v2255, 1.442695
        %v2345 = vpow.pop %v2344
        %v2346 = vmul.f32 %v2256, 1.442695
        %v2347 = vpow.pop %v2346
        %v2348 = vmul.f32 %v2257, 1.442695
        %v2349 = vpow.pop %v2348
        %v2350 = vmul.f32 %v2258, 1.442695
        %v2351 = vpow.pop %v2350
        %v2352 = vmul.f32 %v2259, 1.442695
        %v2353 = vpow.pop %v2352
        %v2354 = vmul.f32 %v2260, 1.442695
        %v2355 = vpow.pop %v2354
        %v2356 = vmul.f32 %v2261, 1.442695
        %v2357 = vpow.pop %v2356
        %v2358 = vmul.f32 %v2262, 1.442695
        %v2359 = vpow.pop %v2358
        %v2360 = vmul.f32 %v2263, 1.442695
        %v2361 = vpow.pop %v2360
        %v2362 = vmul.f32 %v2264, 1.442695
        %v2363 = vpow.pop %v2362
        %v2364 = vmul.f32 %v2265, 1.442695
        %v2365 = vpow.pop %v2364
        %v2366 = vmul.f32 %v2266, 1.442695
        %v2367 = vpow.pop %v2366
        %v2368 = vmul.f32 %v2267, 1.442695
        %v2369 = vpow.pop %v2368
        %v2370 = vmul.f32 %v2268, 1.442695
        %v2371 = vpow.pop %v2370
        %v2372 = vmul.f32 %v2269, 1.442695
        %v2373 = vpow.pop %v2372
        %v2374 = vmul.f32 %v2270, 1.442695
        %v2375 = vpow.pop %v2374
        %v2376 = vmul.f32 %v2271, 1.442695
        %v2377 = vpow.pop %v2376
        %v2378 = vmul.f32 %v2272, 1.442695
        %v2379 = vpow.pop %v2378
        %v2380 = vmul.f32 %v2273, 1.442695
        %v2381 = vpow.pop %v2380
        %v2382 = vmul.f32 %v2274, 1.442695
        %v2383 = vpow.pop %v2382
        %v2384 = vmul.f32 %v2275, 1.442695
        %v2385 = vpow.pop %v2384
        %v2386 = vmul.f32 %v2276, 1.442695
        %v2387 = vpow.pop %v2386
        %v2388 = vmul.f32 %v2277, 1.442695
        %v2389 = vpow.pop %v2388
        %v2390 = vmul.f32 %v2278, 1.442695
        %v2391 = vpow.pop %v2390
        %v2392 = vmul.f32 %v2279, 1.442695
        %v2393 = vpow.pop %v2392
        %v2394 = vmul.f32 %v2280, 1.442695
        %v2395 = vpow.pop %v2394
        %v2396 = vmul.f32 %v2281, 1.442695
        %v2397 = vpow.pop %v2396
        %v2398 = vmul.f32 %v2282, 1.442695
        %v2399 = vpow.pop %v2398
        %v2400 = vmul.f32 %v2283, 1.442695
        %v2401 = vpow.pop %v2400
        %v2402 = vmul.f32 %v2284, 1.442695
        %v2403 = vpow.pop %v2402
        %v2404 = vmul.f32 %v2285, 1.442695
        %v2405 = vpow.pop %v2404
        %v2406 = vmul.f32 %v2286, 1.442695
        %v2407 = vpow.pop %v2406
        %v2408 = vmul.f32 %v2287, 1.442695
        %v2409 = vpow.pop %v2408
        %v2410 = vmul.f32 %v2288, 1.442695
        %v2411 = vpow.pop %v2410
        %v2412 = vmul.f32 %v2289, 1.442695
        %v2413 = vpow.pop %v2412
        %v2414 = vmul.f32 %v2290, 1.442695
        %v2415 = vpow.pop %v2414
        %v2416 = vmul.f32 %v2291, 1.442695
        %v2417 = vpow.pop %v2416
        %v2418 = vmul.f32 %v2292, 1.442695
        %v2419 = vpow.pop %v2418
        %v2420 = vmul.f32 %v2293, 1.442695
        %v2421 = vpow.pop %v2420
        %v2422 = vadd.f32 %v2295, %v2297
        %2423 = vadd.xlane.f32.xlu0 %v2422
        %v2424 = vpop.xlane.xlu0 %2423
        %v2425 = vadd.f32 %v2299, %v2301
        %2426 = vadd.xlane.f32.xlu0 %v2425
        %v2427 = vpop.xlane.xlu0 %2426
        %v2428 = vadd.f32 %v2303, %v2305
        %2429 = vadd.xlane.f32.xlu0 %v2428
        %v2430 = vpop.xlane.xlu0 %2429
        %v2431 = vadd.f32 %v2307, %v2309
        %2432 = vadd.xlane.f32.xlu0 %v2431
        %v2433 = vpop.xlane.xlu0 %2432
        %v2434 = vadd.f32 %v2311, %v2313
        %2435 = vadd.xlane.f32.xlu0 %v2434
        %v2436 = vpop.xlane.xlu0 %2435
        %v2437 = vadd.f32 %v2315, %v2317
        %2438 = vadd.xlane.f32.xlu0 %v2437
        %v2439 = vpop.xlane.xlu0 %2438
        %v2440 = vadd.f32 %v2319, %v2321
        %2441 = vadd.xlane.f32.xlu0 %v2440
        %v2442 = vpop.xlane.xlu0 %2441
        %v2443 = vadd.f32 %v2323, %v2325
        %2444 = vadd.xlane.f32.xlu0 %v2443
        %v2445 = vpop.xlane.xlu0 %2444
        %v2446 = vadd.f32 %v2327, %v2329
        %2447 = vadd.xlane.f32.xlu0 %v2446
        %v2448 = vpop.xlane.xlu0 %2447
        %v2449 = vadd.f32 %v2331, %v2333
        %2450 = vadd.xlane.f32.xlu0 %v2449
        %v2451 = vpop.xlane.xlu0 %2450
        %v2452 = vadd.f32 %v2335, %v2337
        %2453 = vadd.xlane.f32.xlu0 %v2452
        %v2454 = vpop.xlane.xlu0 %2453
        %v2455 = vadd.f32 %v2339, %v2341
        %2456 = vadd.xlane.f32.xlu0 %v2455
        %v2457 = vpop.xlane.xlu0 %2456
        %v2458 = vadd.f32 %v2343, %v2345
        %2459 = vadd.xlane.f32.xlu0 %v2458
        %v2460 = vpop.xlane.xlu0 %2459
        %v2461 = vadd.f32 %v2347, %v2349
        %2462 = vadd.xlane.f32.xlu0 %v2461
        %v2463 = vpop.xlane.xlu0 %2462
        %v2464 = vadd.f32 %v2351, %v2353
        %2465 = vadd.xlane.f32.xlu0 %v2464
        %v2466 = vpop.xlane.xlu0 %2465
        %v2467 = vadd.f32 %v2355, %v2357
        %2468 = vadd.xlane.f32.xlu0 %v2467
        %v2469 = vpop.xlane.xlu0 %2468
        %v2470 = vadd.f32 %v2359, %v2361
        %2471 = vadd.xlane.f32.xlu0 %v2470
        %v2472 = vpop.xlane.xlu0 %2471
        %v2473 = vadd.f32 %v2363, %v2365
        %2474 = vadd.xlane.f32.xlu0 %v2473
        %v2475 = vpop.xlane.xlu0 %2474
        %v2476 = vadd.f32 %v2367, %v2369
        %2477 = vadd.xlane.f32.xlu0 %v2476
        %v2478 = vpop.xlane.xlu0 %2477
        %v2479 = vadd.f32 %v2371, %v2373
        %2480 = vadd.xlane.f32.xlu0 %v2479
        %v2481 = vpop.xlane.xlu0 %2480
        %v2482 = vadd.f32 %v2375, %v2377
        %2483 = vadd.xlane.f32.xlu0 %v2482
        %v2484 = vpop.xlane.xlu0 %2483
        %v2485 = vadd.f32 %v2379, %v2381
        %2486 = vadd.xlane.f32.xlu0 %v2485
        %v2487 = vpop.xlane.xlu0 %2486
        %v2488 = vadd.f32 %v2383, %v2385
        %2489 = vadd.xlane.f32.xlu0 %v2488
        %v2490 = vpop.xlane.xlu0 %2489
        %v2491 = vadd.f32 %v2387, %v2389
        %2492 = vadd.xlane.f32.xlu0 %v2491
        %v2493 = vpop.xlane.xlu0 %2492
        %v2494 = vadd.f32 %v2391, %v2393
        %2495 = vadd.xlane.f32.xlu0 %v2494
        %v2496 = vpop.xlane.xlu0 %2495
        %v2497 = vadd.f32 %v2395, %v2397
        %2498 = vadd.xlane.f32.xlu0 %v2497
        %v2499 = vpop.xlane.xlu0 %2498
        %v2500 = vadd.f32 %v2399, %v2401
        %2501 = vadd.xlane.f32.xlu0 %v2500
        %v2502 = vpop.xlane.xlu0 %2501
        %v2503 = vadd.f32 %v2403, %v2405
        %2504 = vadd.xlane.f32.xlu0 %v2503
        %v2505 = vpop.xlane.xlu0 %2504
        %v2506 = vadd.f32 %v2407, %v2409
        %2507 = vadd.xlane.f32.xlu0 %v2506
        %v2508 = vpop.xlane.xlu0 %2507
        %v2509 = vadd.f32 %v2411, %v2413
        %2510 = vadd.xlane.f32.xlu0 %v2509
        %v2511 = vpop.xlane.xlu0 %2510
        %v2512 = vadd.f32 %v2415, %v2417
        %2513 = vadd.xlane.f32.xlu0 %v2512
        %v2514 = vpop.xlane.xlu0 %2513
        %v2515 = vadd.f32 %v2419, %v2421
        %2516 = vadd.xlane.f32.xlu0 %v2515
        %v2517 = vpop.xlane.xlu0 %2516
        %v2518 = vrcp.pop %v2424
        %v2519 = vrcp.pop %v2427
        %v2520 = vrcp.pop %v2430
        %v2521 = vrcp.pop %v2433
        %v2522 = vrcp.pop %v2436
        %v2523 = vrcp.pop %v2439
        %v2524 = vrcp.pop %v2442
        %v2525 = vrcp.pop %v2445
        %v2526 = vrcp.pop %v2448
        %v2527 = vrcp.pop %v2451
        %v2528 = vrcp.pop %v2454
        %v2529 = vrcp.pop %v2457
        %v2530 = vrcp.pop %v2460
        %v2531 = vrcp.pop %v2463
        %v2532 = vrcp.pop %v2466
        %v2533 = vrcp.pop %v2469
        %v2534 = vrcp.pop %v2472
        %v2535 = vrcp.pop %v2475
        %v2536 = vrcp.pop %v2478
        %v2537 = vrcp.pop %v2481
        %v2538 = vrcp.pop %v2484
        %v2539 = vrcp.pop %v2487
        %v2540 = vrcp.pop %v2490
        %v2541 = vrcp.pop %v2493
        %v2542 = vrcp.pop %v2496
        %v2543 = vrcp.pop %v2499
        %v2544 = vrcp.pop %v2502
        %v2545 = vrcp.pop %v2505
        %v2546 = vrcp.pop %v2508
        %v2547 = vrcp.pop %v2511
        %v2548 = vrcp.pop %v2514
        %v2549 = vrcp.pop %v2517
        %v2550 = vmul.f32 %v2295, %v2518
        %v2551 = vmul.f32 %v2297, %v2518
        %v2552 = vmul.f32 %v2299, %v2519
        %v2553 = vmul.f32 %v2301, %v2519
        %v2554 = vmul.f32 %v2303, %v2520
        %v2555 = vmul.f32 %v2305, %v2520
        %v2556 = vmul.f32 %v2307, %v2521
        %v2557 = vmul.f32 %v2309, %v2521
        %v2558 = vmul.f32 %v2311, %v2522
        %v2559 = vmul.f32 %v2313, %v2522
        %v2560 = vmul.f32 %v2315, %v2523
        %v2561 = vmul.f32 %v2317, %v2523
        %v2562 = vmul.f32 %v2319, %v2524
        %v2563 = vmul.f32 %v2321, %v2524
        %v2564 = vmul.f32 %v2323, %v2525
        %v2565 = vmul.f32 %v2325, %v2525
        %v2566 = vmul.f32 %v2327, %v2526
        %v2567 = vmul.f32 %v2329, %v2526
        %v2568 = vmul.f32 %v2331, %v2527
        %v2569 = vmul.f32 %v2333, %v2527
        %v2570 = vmul.f32 %v2335, %v2528
        %v2571 = vmul.f32 %v2337, %v2528
        %v2572 = vmul.f32 %v2339, %v2529
        %v2573 = vmul.f32 %v2341, %v2529
        %v2574 = vmul.f32 %v2343, %v2530
        %v2575 = vmul.f32 %v2345, %v2530
        %v2576 = vmul.f32 %v2347, %v2531
        %v2577 = vmul.f32 %v2349, %v2531
        %v2578 = vmul.f32 %v2351, %v2532
        %v2579 = vmul.f32 %v2353, %v2532
        %v2580 = vmul.f32 %v2355, %v2533
        %v2581 = vmul.f32 %v2357, %v2533
        %v2582 = vmul.f32 %v2359, %v2534
        %v2583 = vmul.f32 %v2361, %v2534
        %v2584 = vmul.f32 %v2363, %v2535
        %v2585 = vmul.f32 %v2365, %v2535
        %v2586 = vmul.f32 %v2367, %v2536
        %v2587 = vmul.f32 %v2369, %v2536
        %v2588 = vmul.f32 %v2371, %v2537
        %v2589 = vmul.f32 %v2373, %v2537
        %v2590 = vmul.f32 %v2375, %v2538
        %v2591 = vmul.f32 %v2377, %v2538
        %v2592 = vmul.f32 %v2379, %v2539
        %v2593 = vmul.f32 %v2381, %v2539
        %v2594 = vmul.f32 %v2383, %v2540
        %v2595 = vmul.f32 %v2385, %v2540
        %v2596 = vmul.f32 %v2387, %v2541
        %v2597 = vmul.f32 %v2389, %v2541
        %v2598 = vmul.f32 %v2391, %v2542
        %v2599 = vmul.f32 %v2393, %v2542
        %v2600 = vmul.f32 %v2395, %v2543
        %v2601 = vmul.f32 %v2397, %v2543
        %v2602 = vmul.f32 %v2399, %v2544
        %v2603 = vmul.f32 %v2401, %v2544
        %v2604 = vmul.f32 %v2403, %v2545
        %v2605 = vmul.f32 %v2405, %v2545
        %v2606 = vmul.f32 %v2407, %v2546
        %v2607 = vmul.f32 %v2409, %v2546
        %v2608 = vmul.f32 %v2411, %v2547
        %v2609 = vmul.f32 %v2413, %v2547
        %v2610 = vmul.f32 %v2415, %v2548
        %v2611 = vmul.f32 %v2417, %v2548
        %v2612 = vmul.f32 %v2419, %v2549
        %v2613 = vmul.f32 %v2421, %v2549
        %v2614 = vpack.c.bf16 %v2552, %v2550
        %v2615 = vpack.c.bf16 %v2553, %v2551
        %v2616 = vpack.c.bf16 %v2556, %v2554
        %v2617 = vpack.c.bf16 %v2557, %v2555
        %v2618 = vpack.c.bf16 %v2560, %v2558
        %v2619 = vpack.c.bf16 %v2561, %v2559
        %v2620 = vpack.c.bf16 %v2564, %v2562
        %v2621 = vpack.c.bf16 %v2565, %v2563
        %v2622 = vpack.c.bf16 %v2568, %v2566
        %v2623 = vpack.c.bf16 %v2569, %v2567
        %v2624 = vpack.c.bf16 %v2572, %v2570
        %v2625 = vpack.c.bf16 %v2573, %v2571
        %v2626 = vpack.c.bf16 %v2576, %v2574
        %v2627 = vpack.c.bf16 %v2577, %v2575
        %v2628 = vpack.c.bf16 %v2580, %v2578
        %v2629 = vpack.c.bf16 %v2581, %v2579
        %v2630 = vpack.c.bf16 %v2584, %v2582
        %v2631 = vpack.c.bf16 %v2585, %v2583
        %v2632 = vpack.c.bf16 %v2588, %v2586
        %v2633 = vpack.c.bf16 %v2589, %v2587
        %v2634 = vpack.c.bf16 %v2592, %v2590
        %v2635 = vpack.c.bf16 %v2593, %v2591
        %v2636 = vpack.c.bf16 %v2596, %v2594
        %v2637 = vpack.c.bf16 %v2597, %v2595
        %v2638 = vpack.c.bf16 %v2600, %v2598
        %v2639 = vpack.c.bf16 %v2601, %v2599
        %v2640 = vpack.c.bf16 %v2604, %v2602
        %v2641 = vpack.c.bf16 %v2605, %v2603
        %v2642 = vpack.c.bf16 %v2608, %v2606
        %v2643 = vpack.c.bf16 %v2609, %v2607
        %v2644 = vpack.c.bf16 %v2612, %v2610
        %v2645 = vpack.c.bf16 %v2613, %v2611
        %2646 = vmatprep.subr.bf16.mxu0 %v2615
        %2647 = vmatpush1.bf16.xpose.msra.mxu0 %v2614
        %2648 = vmatprep.subr.bf16.mxu0 %v2617
        %2649 = vmatpush1.bf16.xpose.msra.mxu0 %v2616
        %2650 = vmatprep.subr.bf16.mxu0 %v2619
        %2651 = vmatpush1.bf16.xpose.msra.mxu0 %v2618
        %2652 = vmatprep.subr.bf16.mxu0 %v2621
        %2653 = vmatpush1.bf16.xpose.msra.mxu0 %v2620
        %2654 = vmatprep.subr.bf16.mxu0 %v2623
        %2655 = vmatpush1.bf16.xpose.msra.mxu0 %v2622
        %2656 = vmatprep.subr.bf16.mxu0 %v2625
        %2657 = vmatpush1.bf16.xpose.msra.mxu0 %v2624
        %2658 = vmatprep.subr.bf16.mxu0 %v2627
        %2659 = vmatpush1.bf16.xpose.msra.mxu0 %v2626
        %2660 = vmatprep.subr.bf16.mxu0 %v2629
        %2661 = vmatpush1.bf16.xpose.msra.mxu0 %v2628
        %2662 = vmatprep.subr.bf16.mxu0 %v2631
        %2663 = vmatpush1.bf16.xpose.msra.mxu0 %v2630
        %2664 = vmatprep.subr.bf16.mxu0 %v2633
        %2665 = vmatpush1.bf16.xpose.msra.mxu0 %v2632
        %2666 = vmatprep.subr.bf16.mxu0 %v2635
        %2667 = vmatpush1.bf16.xpose.msra.mxu0 %v2634
        %2668 = vmatprep.subr.bf16.mxu0 %v2637
        %2669 = vmatpush1.bf16.xpose.msra.mxu0 %v2636
        %2670 = vmatprep.subr.bf16.mxu0 %v2639
        %2671 = vmatpush1.bf16.xpose.msra.mxu0 %v2638
        %2672 = vmatprep.subr.bf16.mxu0 %v2641
        %2673 = vmatpush1.bf16.xpose.msra.mxu0 %v2640
        %2674 = vmatprep.subr.bf16.mxu0 %v2643
        %2675 = vmatpush1.bf16.xpose.msra.mxu0 %v2642
        %2676 = vmatprep.subr.bf16.mxu0 %v2645
        %2677 = vmatpush1.bf16.xpose.msra.mxu0 %v2644
        %2678 = vmatprep.mubr.bf16.mxu0 %v1890
        %2679 = vmatmul.mubr.bf16.gmra.mrb[0].mxu0 %v1889
        %v2680 = vpop.f32.mrb[0].mxu0
        %v2681 = vadd.f32 0.0, %v2680
        %v2682 = vpop.f32.mrb[0].mxu0
        %v2683 = vadd.f32 0.0, %v2682
        %v2684 = vpop.f32.mrb[0].mxu0
        %v2685 = vadd.f32 0.0, %v2684
        %v2686 = vpop.f32.mrb[0].mxu0
        %v2687 = vadd.f32 0.0, %v2686
        %2688 = vmatprep.mubr.bf16.mxu0 %v1892
        %2689 = vmatmul.mubr.bf16.gmra.mrb[0].mxu0 %v1891
        %v2690 = vpop.f32.mrb[0].mxu0
        %v2691 = vadd.f32 0.0, %v2690
        %v2692 = vpop.f32.mrb[0].mxu0
        %v2693 = vadd.f32 0.0, %v2692
        %v2694 = vpop.f32.mrb[0].mxu0
        %v2695 = vadd.f32 0.0, %v2694
        %v2696 = vpop.f32.mrb[0].mxu0
        %v2697 = vadd.f32 0.0, %v2696
        %2698 = vdwg.mxu0
        %v2699 = vpack.c.bf16 %v2685, %v2681
        %v2700 = vpack.c.bf16 %v2687, %v2683
        %v2701 = vpack.c.bf16 %v2695, %v2691
        %v2702 = vpack.c.bf16 %v2697, %v2693
        %2703 = vst [vmem:[#allocation3 + $0x20] sm:$0xff] %v2699
        %2704 = vst [vmem:[#allocation3 + $0x28] sm:$0xff] %v2700
        %2705 = vst [vmem:[#allocation3 + $0x30] sm:$0xff] %v2701
        %2706 = vst [vmem:[#allocation3 + $0x38] sm:$0xff] %v2702
        %2707 = vxpose.xlu0.b32.start [1/16] %v864, 128
        %2708 = vxpose.xlu0.b32.cont [2/16] %v868, 128
        %2709 = vxpose.xlu0.b32.cont [3/16] %v874, 128
        %2710 = vxpose.xlu0.b32.cont [4/16] %v878, 128
        %2711 = vxpose.xlu0.b32.cont [5/16] 0.0, 128
        %2712 = vxpose.xlu0.b32.cont [6/16] 0.0, 128
        %2713 = vxpose.xlu0.b32.cont [7/16] 0.0, 128
        %2714 = vxpose.xlu0.b32.cont [8/16] 0.0, 128
        %2715 = vxpose.xlu0.b32.cont [9/16] 0.0, 128
        %2716 = vxpose.xlu0.b32.cont [10/16] 0.0, 128
        %2717 = vxpose.xlu0.b32.cont [11/16] 0.0, 128
        %2718 = vxpose.xlu0.b32.cont [12/16] 0.0, 128
        %2719 = vxpose.xlu0.b32.cont [13/16] 0.0, 128
        %2720 = vxpose.xlu0.b32.cont [14/16] 0.0, 128
        %2721 = vxpose.xlu0.b32.cont [15/16] 0.0, 128
        %2722 = vxpose.xlu0.b32.end [16/16] 0.0, 128
        %v2723 = vpop.trf.xlu0
        %v2724 = vpop.trf.xlu0
        %v2725 = vpop.trf.xlu0
        %v2726 = vpop.trf.xlu0
        %v2727 = vpop.trf.xlu0
        %v2728 = vpop.trf.xlu0
        %v2729 = vpop.trf.xlu0
        %v2730 = vpop.trf.xlu0
        %v2731 = vpop.trf.xlu0
        %v2732 = vpop.trf.xlu0
        %v2733 = vpop.trf.xlu0
        %v2734 = vpop.trf.xlu0
        %v2735 = vpop.trf.xlu0
        %v2736 = vpop.trf.xlu0
        %v2737 = vpop.trf.xlu0
        %v2738 = vpop.trf.xlu0
        %2739 = vxpose.xlu0.b32.start [1/16] %v866, 128
        %2740 = vxpose.xlu0.b32.cont [2/16] %v870, 128
        %2741 = vxpose.xlu0.b32.cont [3/16] %v876, 128
        %2742 = vxpose.xlu0.b32.cont [4/16] %v880, 128
        %2743 = vxpose.xlu0.b32.cont [5/16] 0.0, 128
        %2744 = vxpose.xlu0.b32.cont [6/16] 0.0, 128
        %2745 = vxpose.xlu0.b32.cont [7/16] 0.0, 128
        %2746 = vxpose.xlu0.b32.cont [8/16] 0.0, 128
        %2747 = vxpose.xlu0.b32.cont [9/16] 0.0, 128
        %2748 = vxpose.xlu0.b32.cont [10/16] 0.0, 128
        %2749 = vxpose.xlu0.b32.cont [11/16] 0.0, 128
        %2750 = vxpose.xlu0.b32.cont [12/16] 0.0, 128
        %2751 = vxpose.xlu0.b32.cont [13/16] 0.0, 128
        %2752 = vxpose.xlu0.b32.cont [14/16] 0.0, 128
        %2753 = vxpose.xlu0.b32.cont [15/16] 0.0, 128
        %2754 = vxpose.xlu0.b32.end [16/16] 0.0, 128
        %v2755 = vpop.trf.xlu0
        %v2756 = vpop.trf.xlu0
        %v2757 = vpop.trf.xlu0
        %v2758 = vpop.trf.xlu0
        %v2759 = vpop.trf.xlu0
        %v2760 = vpop.trf.xlu0
        %v2761 = vpop.trf.xlu0
        %v2762 = vpop.trf.xlu0
        %v2763 = vpop.trf.xlu0
        %v2764 = vpop.trf.xlu0
        %v2765 = vpop.trf.xlu0
        %v2766 = vpop.trf.xlu0
        %v2767 = vpop.trf.xlu0
        %v2768 = vpop.trf.xlu0
        %v2769 = vpop.trf.xlu0
        %v2770 = vpop.trf.xlu0
        %v2771 = vpack.c.bf16 %v2724, %v2723
        %v2772 = vpack.c.bf16 %v2726, %v2725
        %v2773 = vpack.c.bf16 %v2728, %v2727
        %v2774 = vpack.c.bf16 %v2730, %v2729
        %v2775 = vpack.c.bf16 %v2732, %v2731
        %v2776 = vpack.c.bf16 %v2734, %v2733
        %v2777 = vpack.c.bf16 %v2736, %v2735
        %v2778 = vpack.c.bf16 %v2738, %v2737
        %v2779 = vpack.c.bf16 %v2756, %v2755
        %v2780 = vpack.c.bf16 %v2758, %v2757
        %v2781 = vpack.c.bf16 %v2760, %v2759
        %v2782 = vpack.c.bf16 %v2762, %v2761
        %v2783 = vpack.c.bf16 %v2764, %v2763
        %v2784 = vpack.c.bf16 %v2766, %v2765
        %v2785 = vpack.c.bf16 %v2768, %v2767
        %v2786 = vpack.c.bf16 %v2770, %v2769
        %v2787 = vld [vmem:[#allocation2 + $0x40] sm:$0xff]
        %v2788 = vld [vmem:[#allocation2 + $0x48] sm:$0xff]
        %v2789 = vld [vmem:[#allocation2 + $0x50] sm:$0xff]
        %v2790 = vld [vmem:[#allocation2 + $0x58] sm:$0xff]
        %v2791 = vld [vmem:[#allocation2 + $0xc0] sm:$0xff]
        %v2792 = vld [vmem:[#allocation2 + $0xc8] sm:$0xff]
        %v2793 = vld [vmem:[#allocation2 + $0xd0] sm:$0xff]
        %v2794 = vld [vmem:[#allocation2 + $0xd8] sm:$0xff]
        %v2796 = vsel %vm990, %v2771, 0
        %v2799 = vsel %vm990, %v2772, 0
        %v2802 = vsel %vm990, %v2773, 0
        %v2805 = vsel %vm990, %v2774, 0
        %v2808 = vsel %vm990, %v2775, 0
        %v2811 = vsel %vm990, %v2776, 0
        %v2814 = vsel %vm990, %v2777, 0
        %v2817 = vsel %vm990, %v2778, 0
        %v2820 = vsel %vm990, %v2779, 0
        %v2823 = vsel %vm990, %v2780, 0
        %v2826 = vsel %vm990, %v2781, 0
        %v2829 = vsel %vm990, %v2782, 0
        %v2832 = vsel %vm990, %v2783, 0
        %v2835 = vsel %vm990, %v2784, 0
        %v2838 = vsel %vm990, %v2785, 0
        %v2841 = vsel %vm990, %v2786, 0
        %2843 = vmatprep.subr.bf16.mxu0 %v2788
        %2844 = vmatpush1.bf16.msra.mxu0 %v2787
        %2845 = vmatprep.subr.bf16.mxu0 %v2790
        %2846 = vmatpush1.bf16.msra.mxu0 %v2789
        %2847 = vmatprep.subr.bf16.mxu0 0
        %2848 = vmatpush1.bf16.msra.mxu0 0
        %2849 = vmatprep.subr.bf16.mxu0 0
        %2850 = vmatpush1.bf16.msra.mxu0 0
        %2851 = vmatprep.subr.bf16.mxu0 0
        %2852 = vmatpush1.bf16.msra.mxu0 0
        %2853 = vmatprep.subr.bf16.mxu0 0
        %2854 = vmatpush1.bf16.msra.mxu0 0
        %2855 = vmatprep.subr.bf16.mxu0 0
        %2856 = vmatpush1.bf16.msra.mxu0 0
        %2857 = vmatprep.subr.bf16.mxu0 0
        %2858 = vmatpush1.bf16.msra.mxu0 0
        %2859 = vmatprep.subr.bf16.mxu0 0
        %2860 = vmatpush1.bf16.msra.mxu0 0
        %2861 = vmatprep.subr.bf16.mxu0 0
        %2862 = vmatpush1.bf16.msra.mxu0 0
        %2863 = vmatprep.subr.bf16.mxu0 0
        %2864 = vmatpush1.bf16.msra.mxu0 0
        %2865 = vmatprep.subr.bf16.mxu0 0
        %2866 = vmatpush1.bf16.msra.mxu0 0
        %2867 = vmatprep.subr.bf16.mxu0 0
        %2868 = vmatpush1.bf16.msra.mxu0 0
        %2869 = vmatprep.subr.bf16.mxu0 0
        %2870 = vmatpush1.bf16.msra.mxu0 0
        %2871 = vmatprep.subr.bf16.mxu0 0
        %2872 = vmatpush1.bf16.msra.mxu0 0
        %2873 = vmatprep.subr.bf16.mxu0 0
        %2874 = vmatpush1.bf16.msra.mxu0 0
        %2875 = vmatprep.mubr.bf16.mxu0 0
        %2876 = vmatmul.mubr.bf16.gmra.mrb[0].mxu0 %v2796
        %v2877 = vpop.f32.mrb[0].mxu0
        %v2878 = vadd.f32 0.0, %v2877
        %v2879 = vpop.f32.mrb[0].mxu0
        %v2880 = vadd.f32 0.0, %v2879
        %v2881 = vpop.f32.mrb[0].mxu0
        %v2882 = vadd.f32 0.0, %v2881
        %v2883 = vpop.f32.mrb[0].mxu0
        %v2884 = vadd.f32 0.0, %v2883
        %2885 = vmatprep.mubr.bf16.mxu0 0
        %2886 = vmatmul.mubr.bf16.gmra.mrb[0].mxu0 %v2799
        %v2887 = vpop.f32.mrb[0].mxu0
        %v2888 = vadd.f32 0.0, %v2887
        %v2889 = vpop.f32.mrb[0].mxu0
        %v2890 = vadd.f32 0.0, %v2889
        %v2891 = vpop.f32.mrb[0].mxu0
        %v2892 = vadd.f32 0.0, %v2891
        %v2893 = vpop.f32.mrb[0].mxu0
        %v2894 = vadd.f32 0.0, %v2893
        %2895 = vmatprep.mubr.bf16.mxu0 0
        %2896 = vmatmul.mubr.bf16.gmra.mrb[0].mxu0 %v2802
        %v2897 = vpop.f32.mrb[0].mxu0
        %v2898 = vadd.f32 0.0, %v2897
        %v2899 = vpop.f32.mrb[0].mxu0
        %v2900 = vadd.f32 0.0, %v2899
        %v2901 = vpop.f32.mrb[0].mxu0
        %v2902 = vadd.f32 0.0, %v2901
        %v2903 = vpop.f32.mrb[0].mxu0
        %v2904 = vadd.f32 0.0, %v2903
        %2905 = vmatprep.mubr.bf16.mxu0 0
        %2906 = vmatmul.mubr.bf16.gmra.mrb[0].mxu0 %v2805
        %v2907 = vpop.f32.mrb[0].mxu0
        %v2908 = vadd.f32 0.0, %v2907
        %v2909 = vpop.f32.mrb[0].mxu0
        %v2910 = vadd.f32 0.0, %v2909
        %v2911 = vpop.f32.mrb[0].mxu0
        %v2912 = vadd.f32 0.0, %v2911
        %v2913 = vpop.f32.mrb[0].mxu0
        %v2914 = vadd.f32 0.0, %v2913
        %2915 = vmatprep.mubr.bf16.mxu0 0
        %2916 = vmatmul.mubr.bf16.gmra.mrb[0].mxu0 %v2808
        %v2917 = vpop.f32.mrb[0].mxu0
        %v2918 = vadd.f32 0.0, %v2917
        %v2919 = vpop.f32.mrb[0].mxu0
        %v2920 = vadd.f32 0.0, %v2919
        %v2921 = vpop.f32.mrb[0].mxu0
        %v2922 = vadd.f32 0.0, %v2921
        %v2923 = vpop.f32.mrb[0].mxu0
        %v2924 = vadd.f32 0.0, %v2923
        %2925 = vmatprep.mubr.bf16.mxu0 0
        %2926 = vmatmul.mubr.bf16.gmra.mrb[0].mxu0 %v2811
        %v2927 = vpop.f32.mrb[0].mxu0
        %v2928 = vadd.f32 0.0, %v2927
        %v2929 = vpop.f32.mrb[0].mxu0
        %v2930 = vadd.f32 0.0, %v2929
        %v2931 = vpop.f32.mrb[0].mxu0
        %v2932 = vadd.f32 0.0, %v2931
        %v2933 = vpop.f32.mrb[0].mxu0
        %v2934 = vadd.f32 0.0, %v2933
        %2935 = vmatprep.mubr.bf16.mxu0 0
        %2936 = vmatmul.mubr.bf16.gmra.mrb[0].mxu0 %v2814
        %v2937 = vpop.f32.mrb[0].mxu0
        %v2938 = vadd.f32 0.0, %v2937
        %v2939 = vpop.f32.mrb[0].mxu0
        %v2940 = vadd.f32 0.0, %v2939
        %v2941 = vpop.f32.mrb[0].mxu0
        %v2942 = vadd.f32 0.0, %v2941
        %v2943 = vpop.f32.mrb[0].mxu0
        %v2944 = vadd.f32 0.0, %v2943
        %2945 = vmatprep.mubr.bf16.mxu0 0
        %2946 = vmatmul.mubr.bf16.gmra.mrb[0].mxu0 %v2817
        %v2947 = vpop.f32.mrb[0].mxu0
        %v2948 = vadd.f32 0.0, %v2947
        %v2949 = vpop.f32.mrb[0].mxu0
        %v2950 = vadd.f32 0.0, %v2949
        %v2951 = vpop.f32.mrb[0].mxu0
        %v2952 = vadd.f32 0.0, %v2951
        %v2953 = vpop.f32.mrb[0].mxu0
        %v2954 = vadd.f32 0.0, %v2953
        %2955 = vmatprep.mubr.bf16.mxu0 0
        %2956 = vmatmul.mubr.bf16.gmra.mrb[0].mxu0 %v2820
        %v2957 = vpop.f32.mrb[0].mxu0
        %v2958 = vadd.f32 0.0, %v2957
        %v2959 = vpop.f32.mrb[0].mxu0
        %v2960 = vadd.f32 0.0, %v2959
        %v2961 = vpop.f32.mrb[0].mxu0
        %v2962 = vadd.f32 0.0, %v2961
        %v2963 = vpop.f32.mrb[0].mxu0
        %v2964 = vadd.f32 0.0, %v2963
        %2965 = vmatprep.mubr.bf16.mxu0 0
        %2966 = vmatmul.mubr.bf16.gmra.mrb[0].mxu0 %v2823
        %v2967 = vpop.f32.mrb[0].mxu0
        %v2968 = vadd.f32 0.0, %v2967
        %v2969 = vpop.f32.mrb[0].mxu0
        %v2970 = vadd.f32 0.0, %v2969
        %v2971 = vpop.f32.mrb[0].mxu0
        %v2972 = vadd.f32 0.0, %v2971
        %v2973 = vpop.f32.mrb[0].mxu0
        %v2974 = vadd.f32 0.0, %v2973
        %2975 = vmatprep.mubr.bf16.mxu0 0
        %2976 = vmatmul.mubr.bf16.gmra.mrb[0].mxu0 %v2826
        %v2977 = vpop.f32.mrb[0].mxu0
        %v2978 = vadd.f32 0.0, %v2977
        %v2979 = vpop.f32.mrb[0].mxu0
        %v2980 = vadd.f32 0.0, %v2979
        %v2981 = vpop.f32.mrb[0].mxu0
        %v2982 = vadd.f32 0.0, %v2981
        %v2983 = vpop.f32.mrb[0].mxu0
        %v2984 = vadd.f32 0.0, %v2983
        %2985 = vmatprep.mubr.bf16.mxu0 0
        %2986 = vmatmul.mubr.bf16.gmra.mrb[0].mxu0 %v2829
        %v2987 = vpop.f32.mrb[0].mxu0
        %v2988 = vadd.f32 0.0, %v2987
        %v2989 = vpop.f32.mrb[0].mxu0
        %v2990 = vadd.f32 0.0, %v2989
        %v2991 = vpop.f32.mrb[0].mxu0
        %v2992 = vadd.f32 0.0, %v2991
        %v2993 = vpop.f32.mrb[0].mxu0
        %v2994 = vadd.f32 0.0, %v2993
        %2995 = vmatprep.mubr.bf16.mxu0 0
        %2996 = vmatmul.mubr.bf16.gmra.mrb[0].mxu0 %v2832
        %v2997 = vpop.f32.mrb[0].mxu0
        %v2998 = vadd.f32 0.0, %v2997
        %v2999 = vpop.f32.mrb[0].mxu0
        %v3000 = vadd.f32 0.0, %v2999
        %v3001 = vpop.f32.mrb[0].mxu0
        %v3002 = vadd.f32 0.0, %v3001
        %v3003 = vpop.f32.mrb[0].mxu0
        %v3004 = vadd.f32 0.0, %v3003
        %3005 = vmatprep.mubr.bf16.mxu0 0
        %3006 = vmatmul.mubr.bf16.gmra.mrb[0].mxu0 %v2835
        %v3007 = vpop.f32.mrb[0].mxu0
        %v3008 = vadd.f32 0.0, %v3007
        %v3009 = vpop.f32.mrb[0].mxu0
        %v3010 = vadd.f32 0.0, %v3009
        %v3011 = vpop.f32.mrb[0].mxu0
        %v3012 = vadd.f32 0.0, %v3011
        %v3013 = vpop.f32.mrb[0].mxu0
        %v3014 = vadd.f32 0.0, %v3013
        %3015 = vmatprep.mubr.bf16.mxu0 0
        %3016 = vmatmul.mubr.bf16.gmra.mrb[0].mxu0 %v2838
        %v3017 = vpop.f32.mrb[0].mxu0
        %v3018 = vadd.f32 0.0, %v3017
        %v3019 = vpop.f32.mrb[0].mxu0
        %v3020 = vadd.f32 0.0, %v3019
        %v3021 = vpop.f32.mrb[0].mxu0
        %v3022 = vadd.f32 0.0, %v3021
        %v3023 = vpop.f32.mrb[0].mxu0
        %v3024 = vadd.f32 0.0, %v3023
        %3025 = vmatprep.mubr.bf16.mxu0 0
        %3026 = vmatmul.mubr.bf16.gmra.mrb[0].mxu0 %v2841
        %v3027 = vpop.f32.mrb[0].mxu0
        %v3028 = vadd.f32 0.0, %v3027
        %v3029 = vpop.f32.mrb[0].mxu0
        %v3030 = vadd.f32 0.0, %v3029
        %v3031 = vpop.f32.mrb[0].mxu0
        %v3032 = vadd.f32 0.0, %v3031
        %v3033 = vpop.f32.mrb[0].mxu0
        %v3034 = vadd.f32 0.0, %v3033
        %3035 = vdwg.mxu0
        %v3036 = vmax.f32 %v2878, %v2880
        %3037 = vmax.xlane.f32.xlu0 %v3036
        %v3038 = vpop.xlane.xlu0 %3037
        %v3039 = vmax.f32 %v2882, %v2884
        %3040 = vmax.xlane.f32.xlu0 %v3039
        %v3041 = vpop.xlane.xlu0 %3040
        %v3042 = vmax.f32 %v2888, %v2890
        %3043 = vmax.xlane.f32.xlu0 %v3042
        %v3044 = vpop.xlane.xlu0 %3043
        %v3045 = vmax.f32 %v2892, %v2894
        %3046 = vmax.xlane.f32.xlu0 %v3045
        %v3047 = vpop.xlane.xlu0 %3046
        %v3048 = vmax.f32 %v2898, %v2900
        %3049 = vmax.xlane.f32.xlu0 %v3048
        %v3050 = vpop.xlane.xlu0 %3049
        %v3051 = vmax.f32 %v2902, %v2904
        %3052 = vmax.xlane.f32.xlu0 %v3051
        %v3053 = vpop.xlane.xlu0 %3052
        %v3054 = vmax.f32 %v2908, %v2910
        %3055 = vmax.xlane.f32.xlu0 %v3054
        %v3056 = vpop.xlane.xlu0 %3055
        %v3057 = vmax.f32 %v2912, %v2914
        %3058 = vmax.xlane.f32.xlu0 %v3057
        %v3059 = vpop.xlane.xlu0 %3058
        %v3060 = vmax.f32 %v2918, %v2920
        %3061 = vmax.xlane.f32.xlu0 %v3060
        %v3062 = vpop.xlane.xlu0 %3061
        %v3063 = vmax.f32 %v2922, %v2924
        %3064 = vmax.xlane.f32.xlu0 %v3063
        %v3065 = vpop.xlane.xlu0 %3064
        %v3066 = vmax.f32 %v2928, %v2930
        %3067 = vmax.xlane.f32.xlu0 %v3066
        %v3068 = vpop.xlane.xlu0 %3067
        %v3069 = vmax.f32 %v2932, %v2934
        %3070 = vmax.xlane.f32.xlu0 %v3069
        %v3071 = vpop.xlane.xlu0 %3070
        %v3072 = vmax.f32 %v2938, %v2940
        %3073 = vmax.xlane.f32.xlu0 %v3072
        %v3074 = vpop.xlane.xlu0 %3073
        %v3075 = vmax.f32 %v2942, %v2944
        %3076 = vmax.xlane.f32.xlu0 %v3075
        %v3077 = vpop.xlane.xlu0 %3076
        %v3078 = vmax.f32 %v2948, %v2950
        %3079 = vmax.xlane.f32.xlu0 %v3078
        %v3080 = vpop.xlane.xlu0 %3079
        %v3081 = vmax.f32 %v2952, %v2954
        %3082 = vmax.xlane.f32.xlu0 %v3081
        %v3083 = vpop.xlane.xlu0 %3082
        %v3084 = vmax.f32 %v2958, %v2960
        %3085 = vmax.xlane.f32.xlu0 %v3084
        %v3086 = vpop.xlane.xlu0 %3085
        %v3087 = vmax.f32 %v2962, %v2964
        %3088 = vmax.xlane.f32.xlu0 %v3087
        %v3089 = vpop.xlane.xlu0 %3088
        %v3090 = vmax.f32 %v2968, %v2970
        %3091 = vmax.xlane.f32.xlu0 %v3090
        %v3092 = vpop.xlane.xlu0 %3091
        %v3093 = vmax.f32 %v2972, %v2974
        %3094 = vmax.xlane.f32.xlu0 %v3093
        %v3095 = vpop.xlane.xlu0 %3094
        %v3096 = vmax.f32 %v2978, %v2980
        %3097 = vmax.xlane.f32.xlu0 %v3096
        %v3098 = vpop.xlane.xlu0 %3097
        %v3099 = vmax.f32 %v2982, %v2984
        %3100 = vmax.xlane.f32.xlu0 %v3099
        %v3101 = vpop.xlane.xlu0 %3100
        %v3102 = vmax.f32 %v2988, %v2990
        %3103 = vmax.xlane.f32.xlu0 %v3102
        %v3104 = vpop.xlane.xlu0 %3103
        %v3105 = vmax.f32 %v2992, %v2994
        %3106 = vmax.xlane.f32.xlu0 %v3105
        %v3107 = vpop.xlane.xlu0 %3106
        %v3108 = vmax.f32 %v2998, %v3000
        %3109 = vmax.xlane.f32.xlu0 %v3108
        %v3110 = vpop.xlane.xlu0 %3109
        %v3111 = vmax.f32 %v3002, %v3004
        %3112 = vmax.xlane.f32.xlu0 %v3111
        %v3113 = vpop.xlane.xlu0 %3112
        %v3114 = vmax.f32 %v3008, %v3010
        %3115 = vmax.xlane.f32.xlu0 %v3114
        %v3116 = vpop.xlane.xlu0 %3115
        %v3117 = vmax.f32 %v3012, %v3014
        %3118 = vmax.xlane.f32.xlu0 %v3117
        %v3119 = vpop.xlane.xlu0 %3118
        %v3120 = vmax.f32 %v3018, %v3020
        %3121 = vmax.xlane.f32.xlu0 %v3120
        %v3122 = vpop.xlane.xlu0 %3121
        %v3123 = vmax.f32 %v3022, %v3024
        %3124 = vmax.xlane.f32.xlu0 %v3123
        %v3125 = vpop.xlane.xlu0 %3124
        %v3126 = vmax.f32 %v3028, %v3030
        %3127 = vmax.xlane.f32.xlu0 %v3126
        %v3128 = vpop.xlane.xlu0 %3127
        %v3129 = vmax.f32 %v3032, %v3034
        %3130 = vmax.xlane.f32.xlu0 %v3129
        %v3131 = vpop.xlane.xlu0 %3130
        %v3132 = vsub.f32 %v2878, %v3038
        %v3133 = vsub.f32 %v2880, %v3038
        %v3134 = vsub.f32 %v2882, %v3041
        %v3135 = vsub.f32 %v2884, %v3041
        %v3136 = vsub.f32 %v2888, %v3044
        %v3137 = vsub.f32 %v2890, %v3044
        %v3138 = vsub.f32 %v2892, %v3047
        %v3139 = vsub.f32 %v2894, %v3047
        %v3140 = vsub.f32 %v2898, %v3050
        %v3141 = vsub.f32 %v2900, %v3050
        %v3142 = vsub.f32 %v2902, %v3053
        %v3143 = vsub.f32 %v2904, %v3053
        %v3144 = vsub.f32 %v2908, %v3056
        %v3145 = vsub.f32 %v2910, %v3056
        %v3146 = vsub.f32 %v2912, %v3059
        %v3147 = vsub.f32 %v2914, %v3059
        %v3148 = vsub.f32 %v2918, %v3062
        %v3149 = vsub.f32 %v2920, %v3062
        %v3150 = vsub.f32 %v2922, %v3065
        %v3151 = vsub.f32 %v2924, %v3065
        %v3152 = vsub.f32 %v2928, %v3068
        %v3153 = vsub.f32 %v2930, %v3068
        %v3154 = vsub.f32 %v2932, %v3071
        %v3155 = vsub.f32 %v2934, %v3071
        %v3156 = vsub.f32 %v2938, %v3074
        %v3157 = vsub.f32 %v2940, %v3074
        %v3158 = vsub.f32 %v2942, %v3077
        %v3159 = vsub.f32 %v2944, %v3077
        %v3160 = vsub.f32 %v2948, %v3080
        %v3161 = vsub.f32 %v2950, %v3080
        %v3162 = vsub.f32 %v2952, %v3083
        %v3163 = vsub.f32 %v2954, %v3083
        %v3164 = vsub.f32 %v2958, %v3086
        %v3165 = vsub.f32 %v2960, %v3086
        %v3166 = vsub.f32 %v2962, %v3089
        %v3167 = vsub.f32 %v2964, %v3089
        %v3168 = vsub.f32 %v2968, %v3092
        %v3169 = vsub.f32 %v2970, %v3092
        %v3170 = vsub.f32 %v2972, %v3095
        %v3171 = vsub.f32 %v2974, %v3095
        %v3172 = vsub.f32 %v2978, %v3098
        %v3173 = vsub.f32 %v2980, %v3098
        %v3174 = vsub.f32 %v2982, %v3101
        %v3175 = vsub.f32 %v2984, %v3101
        %v3176 = vsub.f32 %v2988, %v3104
        %v3177 = vsub.f32 %v2990, %v3104
        %v3178 = vsub.f32 %v2992, %v3107
        %v3179 = vsub.f32 %v2994, %v3107
        %v3180 = vsub.f32 %v2998, %v3110
        %v3181 = vsub.f32 %v3000, %v3110
        %v3182 = vsub.f32 %v3002, %v3113
        %v3183 = vsub.f32 %v3004, %v3113
        %v3184 = vsub.f32 %v3008, %v3116
        %v3185 = vsub.f32 %v3010, %v3116
        %v3186 = vsub.f32 %v3012, %v3119
        %v3187 = vsub.f32 %v3014, %v3119
        %v3188 = vsub.f32 %v3018, %v3122
        %v3189 = vsub.f32 %v3020, %v3122
        %v3190 = vsub.f32 %v3022, %v3125
        %v3191 = vsub.f32 %v3024, %v3125
        %v3192 = vsub.f32 %v3028, %v3128
        %v3193 = vsub.f32 %v3030, %v3128
        %v3194 = vsub.f32 %v3032, %v3131
        %v3195 = vsub.f32 %v3034, %v3131
        %v3196 = vmul.f32 %v3132, 1.442695
        %v3197 = vpow.pop %v3196
        %v3198 = vmul.f32 %v3133, 1.442695
        %v3199 = vpow.pop %v3198
        %v3200 = vmul.f32 %v3134, 1.442695
        %v3201 = vpow.pop %v3200
        %v3202 = vmul.f32 %v3135, 1.442695
        %v3203 = vpow.pop %v3202
        %v3204 = vmul.f32 %v3136, 1.442695
        %v3205 = vpow.pop %v3204
        %v3206 = vmul.f32 %v3137, 1.442695
        %v3207 = vpow.pop %v3206
        %v3208 = vmul.f32 %v3138, 1.442695
        %v3209 = vpow.pop %v3208
        %v3210 = vmul.f32 %v3139, 1.442695
        %v3211 = vpow.pop %v3210
        %v3212 = vmul.f32 %v3140, 1.442695
        %v3213 = vpow.pop %v3212
        %v3214 = vmul.f32 %v3141, 1.442695
        %v3215 = vpow.pop %v3214
        %v3216 = vmul.f32 %v3142, 1.442695
        %v3217 = vpow.pop %v3216
        %v3218 = vmul.f32 %v3143, 1.442695
        %v3219 = vpow.pop %v3218
        %v3220 = vmul.f32 %v3144, 1.442695
        %v3221 = vpow.pop %v3220
        %v3222 = vmul.f32 %v3145, 1.442695
        %v3223 = vpow.pop %v3222
        %v3224 = vmul.f32 %v3146, 1.442695
        %v3225 = vpow.pop %v3224
        %v3226 = vmul.f32 %v3147, 1.442695
        %v3227 = vpow.pop %v3226
        %v3228 = vmul.f32 %v3148, 1.442695
        %v3229 = vpow.pop %v3228
        %v3230 = vmul.f32 %v3149, 1.442695
        %v3231 = vpow.pop %v3230
        %v3232 = vmul.f32 %v3150, 1.442695
        %v3233 = vpow.pop %v3232
        %v3234 = vmul.f32 %v3151, 1.442695
        %v3235 = vpow.pop %v3234
        %v3236 = vmul.f32 %v3152, 1.442695
        %v3237 = vpow.pop %v3236
        %v3238 = vmul.f32 %v3153, 1.442695
        %v3239 = vpow.pop %v3238
        %v3240 = vmul.f32 %v3154, 1.442695
        %v3241 = vpow.pop %v3240
        %v3242 = vmul.f32 %v3155, 1.442695
        %v3243 = vpow.pop %v3242
        %v3244 = vmul.f32 %v3156, 1.442695
        %v3245 = vpow.pop %v3244
        %v3246 = vmul.f32 %v3157, 1.442695
        %v3247 = vpow.pop %v3246
        %v3248 = vmul.f32 %v3158, 1.442695
        %v3249 = vpow.pop %v3248
        %v3250 = vmul.f32 %v3159, 1.442695
        %v3251 = vpow.pop %v3250
        %v3252 = vmul.f32 %v3160, 1.442695
        %v3253 = vpow.pop %v3252
        %v3254 = vmul.f32 %v3161, 1.442695
        %v3255 = vpow.pop %v3254
        %v3256 = vmul.f32 %v3162, 1.442695
        %v3257 = vpow.pop %v3256
        %v3258 = vmul.f32 %v3163, 1.442695
        %v3259 = vpow.pop %v3258
        %v3260 = vmul.f32 %v3164, 1.442695
        %v3261 = vpow.pop %v3260
        %v3262 = vmul.f32 %v3165, 1.442695
        %v3263 = vpow.pop %v3262
        %v3264 = vmul.f32 %v3166, 1.442695
        %v3265 = vpow.pop %v3264
        %v3266 = vmul.f32 %v3167, 1.442695
        %v3267 = vpow.pop %v3266
        %v3268 = vmul.f32 %v3168, 1.442695
        %v3269 = vpow.pop %v3268
        %v3270 = vmul.f32 %v3169, 1.442695
        %v3271 = vpow.pop %v3270
        %v3272 = vmul.f32 %v3170, 1.442695
        %v3273 = vpow.pop %v3272
        %v3274 = vmul.f32 %v3171, 1.442695
        %v3275 = vpow.pop %v3274
        %v3276 = vmul.f32 %v3172, 1.442695
        %v3277 = vpow.pop %v3276
        %v3278 = vmul.f32 %v3173, 1.442695
        %v3279 = vpow.pop %v3278
        %v3280 = vmul.f32 %v3174, 1.442695
        %v3281 = vpow.pop %v3280
        %v3282 = vmul.f32 %v3175, 1.442695
        %v3283 = vpow.pop %v3282
        %v3284 = vmul.f32 %v3176, 1.442695
        %v3285 = vpow.pop %v3284
        %v3286 = vmul.f32 %v3177, 1.442695
        %v3287 = vpow.pop %v3286
        %v3288 = vmul.f32 %v3178, 1.442695
        %v3289 = vpow.pop %v3288
        %v3290 = vmul.f32 %v3179, 1.442695
        %v3291 = vpow.pop %v3290
        %v3292 = vmul.f32 %v3180, 1.442695
        %v3293 = vpow.pop %v3292
        %v3294 = vmul.f32 %v3181, 1.442695
        %v3295 = vpow.pop %v3294
        %v3296 = vmul.f32 %v3182, 1.442695
        %v3297 = vpow.pop %v3296
        %v3298 = vmul.f32 %v3183, 1.442695
        %v3299 = vpow.pop %v3298
        %v3300 = vmul.f32 %v3184, 1.442695
        %v3301 = vpow.pop %v3300
        %v3302 = vmul.f32 %v3185, 1.442695
        %v3303 = vpow.pop %v3302
        %v3304 = vmul.f32 %v3186, 1.442695
        %v3305 = vpow.pop %v3304
        %v3306 = vmul.f32 %v3187, 1.442695
        %v3307 = vpow.pop %v3306
        %v3308 = vmul.f32 %v3188, 1.442695
        %v3309 = vpow.pop %v3308
        %v3310 = vmul.f32 %v3189, 1.442695
        %v3311 = vpow.pop %v3310
        %v3312 = vmul.f32 %v3190, 1.442695
        %v3313 = vpow.pop %v3312
        %v3314 = vmul.f32 %v3191, 1.442695
        %v3315 = vpow.pop %v3314
        %v3316 = vmul.f32 %v3192, 1.442695
        %v3317 = vpow.pop %v3316
        %v3318 = vmul.f32 %v3193, 1.442695
        %v3319 = vpow.pop %v3318
        %v3320 = vmul.f32 %v3194, 1.442695
        %v3321 = vpow.pop %v3320
        %v3322 = vmul.f32 %v3195, 1.442695
        %v3323 = vpow.pop %v3322
        %v3324 = vadd.f32 %v3197, %v3199
        %3325 = vadd.xlane.f32.xlu0 %v3324
        %v3326 = vpop.xlane.xlu0 %3325
        %v3327 = vadd.f32 %v3201, %v3203
        %3328 = vadd.xlane.f32.xlu0 %v3327
        %v3329 = vpop.xlane.xlu0 %3328
        %v3330 = vadd.f32 %v3205, %v3207
        %3331 = vadd.xlane.f32.xlu0 %v3330
        %v3332 = vpop.xlane.xlu0 %3331
        %v3333 = vadd.f32 %v3209, %v3211
        %3334 = vadd.xlane.f32.xlu0 %v3333
        %v3335 = vpop.xlane.xlu0 %3334
        %v3336 = vadd.f32 %v3213, %v3215
        %3337 = vadd.xlane.f32.xlu0 %v3336
        %v3338 = vpop.xlane.xlu0 %3337
        %v3339 = vadd.f32 %v3217, %v3219
        %3340 = vadd.xlane.f32.xlu0 %v3339
        %v3341 = vpop.xlane.xlu0 %3340
        %v3342 = vadd.f32 %v3221, %v3223
        %3343 = vadd.xlane.f32.xlu0 %v3342
        %v3344 = vpop.xlane.xlu0 %3343
        %v3345 = vadd.f32 %v3225, %v3227
        %3346 = vadd.xlane.f32.xlu0 %v3345
        %v3347 = vpop.xlane.xlu0 %3346
        %v3348 = vadd.f32 %v3229, %v3231
        %3349 = vadd.xlane.f32.xlu0 %v3348
        %v3350 = vpop.xlane.xlu0 %3349
        %v3351 = vadd.f32 %v3233, %v3235
        %3352 = vadd.xlane.f32.xlu0 %v3351
        %v3353 = vpop.xlane.xlu0 %3352
        %v3354 = vadd.f32 %v3237, %v3239
        %3355 = vadd.xlane.f32.xlu0 %v3354
        %v3356 = vpop.xlane.xlu0 %3355
        %v3357 = vadd.f32 %v3241, %v3243
        %3358 = vadd.xlane.f32.xlu0 %v3357
        %v3359 = vpop.xlane.xlu0 %3358
        %v3360 = vadd.f32 %v3245, %v3247
        %3361 = vadd.xlane.f32.xlu0 %v3360
        %v3362 = vpop.xlane.xlu0 %3361
        %v3363 = vadd.f32 %v3249, %v3251
        %3364 = vadd.xlane.f32.xlu0 %v3363
        %v3365 = vpop.xlane.xlu0 %3364
        %v3366 = vadd.f32 %v3253, %v3255
        %3367 = vadd.xlane.f32.xlu0 %v3366
        %v3368 = vpop.xlane.xlu0 %3367
        %v3369 = vadd.f32 %v3257, %v3259
        %3370 = vadd.xlane.f32.xlu0 %v3369
        %v3371 = vpop.xlane.xlu0 %3370
        %v3372 = vadd.f32 %v3261, %v3263
        %3373 = vadd.xlane.f32.xlu0 %v3372
        %v3374 = vpop.xlane.xlu0 %3373
        %v3375 = vadd.f32 %v3265, %v3267
        %3376 = vadd.xlane.f32.xlu0 %v3375
        %v3377 = vpop.xlane.xlu0 %3376
        %v3378 = vadd.f32 %v3269, %v3271
        %3379 = vadd.xlane.f32.xlu0 %v3378
        %v3380 = vpop.xlane.xlu0 %3379
        %v3381 = vadd.f32 %v3273, %v3275
        %3382 = vadd.xlane.f32.xlu0 %v3381
        %v3383 = vpop.xlane.xlu0 %3382
        %v3384 = vadd.f32 %v3277, %v3279
        %3385 = vadd.xlane.f32.xlu0 %v3384
        %v3386 = vpop.xlane.xlu0 %3385
        %v3387 = vadd.f32 %v3281, %v3283
        %3388 = vadd.xlane.f32.xlu0 %v3387
        %v3389 = vpop.xlane.xlu0 %3388
        %v3390 = vadd.f32 %v3285, %v3287
        %3391 = vadd.xlane.f32.xlu0 %v3390
        %v3392 = vpop.xlane.xlu0 %3391
        %v3393 = vadd.f32 %v3289, %v3291
        %3394 = vadd.xlane.f32.xlu0 %v3393
        %v3395 = vpop.xlane.xlu0 %3394
        %v3396 = vadd.f32 %v3293, %v3295
        %3397 = vadd.xlane.f32.xlu0 %v3396
        %v3398 = vpop.xlane.xlu0 %3397
        %v3399 = vadd.f32 %v3297, %v3299
        %3400 = vadd.xlane.f32.xlu0 %v3399
        %v3401 = vpop.xlane.xlu0 %3400
        %v3402 = vadd.f32 %v3301, %v3303
        %3403 = vadd.xlane.f32.xlu0 %v3402
        %v3404 = vpop.xlane.xlu0 %3403
        %v3405 = vadd.f32 %v3305, %v3307
        %3406 = vadd.xlane.f32.xlu0 %v3405
        %v3407 = vpop.xlane.xlu0 %3406
        %v3408 = vadd.f32 %v3309, %v3311
        %3409 = vadd.xlane.f32.xlu0 %v3408
        %v3410 = vpop.xlane.xlu0 %3409
        %v3411 = vadd.f32 %v3313, %v3315
        %3412 = vadd.xlane.f32.xlu0 %v3411
        %v3413 = vpop.xlane.xlu0 %3412
        %v3414 = vadd.f32 %v3317, %v3319
        %3415 = vadd.xlane.f32.xlu0 %v3414
        %v3416 = vpop.xlane.xlu0 %3415
        %v3417 = vadd.f32 %v3321, %v3323
        %3418 = vadd.xlane.f32.xlu0 %v3417
        %v3419 = vpop.xlane.xlu0 %3418
        %v3420 = vrcp.pop %v3326
        %v3421 = vrcp.pop %v3329
        %v3422 = vrcp.pop %v3332
        %v3423 = vrcp.pop %v3335
        %v3424 = vrcp.pop %v3338
        %v3425 = vrcp.pop %v3341
        %v3426 = vrcp.pop %v3344
        %v3427 = vrcp.pop %v3347
        %v3428 = vrcp.pop %v3350
        %v3429 = vrcp.pop %v3353
        %v3430 = vrcp.pop %v3356
        %v3431 = vrcp.pop %v3359
        %v3432 = vrcp.pop %v3362
        %v3433 = vrcp.pop %v3365
        %v3434 = vrcp.pop %v3368
        %v3435 = vrcp.pop %v3371
        %v3436 = vrcp.pop %v3374
        %v3437 = vrcp.pop %v3377
        %v3438 = vrcp.pop %v3380
        %v3439 = vrcp.pop %v3383
        %v3440 = vrcp.pop %v3386
        %v3441 = vrcp.pop %v3389
        %v3442 = vrcp.pop %v3392
        %v3443 = vrcp.pop %v3395
        %v3444 = vrcp.pop %v3398
        %v3445 = vrcp.pop %v3401
        %v3446 = vrcp.pop %v3404
        %v3447 = vrcp.pop %v3407
        %v3448 = vrcp.pop %v3410
        %v3449 = vrcp.pop %v3413
        %v3450 = vrcp.pop %v3416
        %v3451 = vrcp.pop %v3419
        %v3452 = vmul.f32 %v3197, %v3420
        %v3453 = vmul.f32 %v3199, %v3420
        %v3454 = vmul.f32 %v3201, %v3421
        %v3455 = vmul.f32 %v3203, %v3421
        %v3456 = vmul.f32 %v3205, %v3422
        %v3457 = vmul.f32 %v3207, %v3422
        %v3458 = vmul.f32 %v3209, %v3423
        %v3459 = vmul.f32 %v3211, %v3423
        %v3460 = vmul.f32 %v3213, %v3424
        %v3461 = vmul.f32 %v3215, %v3424
        %v3462 = vmul.f32 %v3217, %v3425
        %v3463 = vmul.f32 %v3219, %v3425
        %v3464 = vmul.f32 %v3221, %v3426
        %v3465 = vmul.f32 %v3223, %v3426
        %v3466 = vmul.f32 %v3225, %v3427
        %v3467 = vmul.f32 %v3227, %v3427
        %v3468 = vmul.f32 %v3229, %v3428
        %v3469 = vmul.f32 %v3231, %v3428
        %v3470 = vmul.f32 %v3233, %v3429
        %v3471 = vmul.f32 %v3235, %v3429
        %v3472 = vmul.f32 %v3237, %v3430
        %v3473 = vmul.f32 %v3239, %v3430
        %v3474 = vmul.f32 %v3241, %v3431
        %v3475 = vmul.f32 %v3243, %v3431
        %v3476 = vmul.f32 %v3245, %v3432
        %v3477 = vmul.f32 %v3247, %v3432
        %v3478 = vmul.f32 %v3249, %v3433
        %v3479 = vmul.f32 %v3251, %v3433
        %v3480 = vmul.f32 %v3253, %v3434
        %v3481 = vmul.f32 %v3255, %v3434
        %v3482 = vmul.f32 %v3257, %v3435
        %v3483 = vmul.f32 %v3259, %v3435
        %v3484 = vmul.f32 %v3261, %v3436
        %v3485 = vmul.f32 %v3263, %v3436
        %v3486 = vmul.f32 %v3265, %v3437
        %v3487 = vmul.f32 %v3267, %v3437
        %v3488 = vmul.f32 %v3269, %v3438
        %v3489 = vmul.f32 %v3271, %v3438
        %v3490 = vmul.f32 %v3273, %v3439
        %v3491 = vmul.f32 %v3275, %v3439
        %v3492 = vmul.f32 %v3277, %v3440
        %v3493 = vmul.f32 %v3279, %v3440
        %v3494 = vmul.f32 %v3281, %v3441
        %v3495 = vmul.f32 %v3283, %v3441
        %v3496 = vmul.f32 %v3285, %v3442
        %v3497 = vmul.f32 %v3287, %v3442
        %v3498 = vmul.f32 %v3289, %v3443
        %v3499 = vmul.f32 %v3291, %v3443
        %v3500 = vmul.f32 %v3293, %v3444
        %v3501 = vmul.f32 %v3295, %v3444
        %v3502 = vmul.f32 %v3297, %v3445
        %v3503 = vmul.f32 %v3299, %v3445
        %v3504 = vmul.f32 %v3301, %v3446
        %v3505 = vmul.f32 %v3303, %v3446
        %v3506 = vmul.f32 %v3305, %v3447
        %v3507 = vmul.f32 %v3307, %v3447
        %v3508 = vmul.f32 %v3309, %v3448
        %v3509 = vmul.f32 %v3311, %v3448
        %v3510 = vmul.f32 %v3313, %v3449
        %v3511 = vmul.f32 %v3315, %v3449
        %v3512 = vmul.f32 %v3317, %v3450
        %v3513 = vmul.f32 %v3319, %v3450
        %v3514 = vmul.f32 %v3321, %v3451
        %v3515 = vmul.f32 %v3323, %v3451
        %v3516 = vpack.c.bf16 %v3454, %v3452
        %v3517 = vpack.c.bf16 %v3455, %v3453
        %v3518 = vpack.c.bf16 %v3458, %v3456
        %v3519 = vpack.c.bf16 %v3459, %v3457
        %v3520 = vpack.c.bf16 %v3462, %v3460
        %v3521 = vpack.c.bf16 %v3463, %v3461
        %v3522 = vpack.c.bf16 %v3466, %v3464
        %v3523 = vpack.c.bf16 %v3467, %v3465
        %v3524 = vpack.c.bf16 %v3470, %v3468
        %v3525 = vpack.c.bf16 %v3471, %v3469
        %v3526 = vpack.c.bf16 %v3474, %v3472
        %v3527 = vpack.c.bf16 %v3475, %v3473
        %v3528 = vpack.c.bf16 %v3478, %v3476
        %v3529 = vpack.c.bf16 %v3479, %v3477
        %v3530 = vpack.c.bf16 %v3482, %v3480
        %v3531 = vpack.c.bf16 %v3483, %v3481
        %v3532 = vpack.c.bf16 %v3486, %v3484
        %v3533 = vpack.c.bf16 %v3487, %v3485
        %v3534 = vpack.c.bf16 %v3490, %v3488
        %v3535 = vpack.c.bf16 %v3491, %v3489
        %v3536 = vpack.c.bf16 %v3494, %v3492
        %v3537 = vpack.c.bf16 %v3495, %v3493
        %v3538 = vpack.c.bf16 %v3498, %v3496
        %v3539 = vpack.c.bf16 %v3499, %v3497
        %v3540 = vpack.c.bf16 %v3502, %v3500
        %v3541 = vpack.c.bf16 %v3503, %v3501
        %v3542 = vpack.c.bf16 %v3506, %v3504
        %v3543 = vpack.c.bf16 %v3507, %v3505
        %v3544 = vpack.c.bf16 %v3510, %v3508
        %v3545 = vpack.c.bf16 %v3511, %v3509
        %v3546 = vpack.c.bf16 %v3514, %v3512
        %v3547 = vpack.c.bf16 %v3515, %v3513
        %3548 = vmatprep.subr.bf16.mxu0 %v3517
        %3549 = vmatpush1.bf16.xpose.msra.mxu0 %v3516
        %3550 = vmatprep.subr.bf16.mxu0 %v3519
        %3551 = vmatpush1.bf16.xpose.msra.mxu0 %v3518
        %3552 = vmatprep.subr.bf16.mxu0 %v3521
        %3553 = vmatpush1.bf16.xpose.msra.mxu0 %v3520
        %3554 = vmatprep.subr.bf16.mxu0 %v3523
        %3555 = vmatpush1.bf16.xpose.msra.mxu0 %v3522
        %3556 = vmatprep.subr.bf16.mxu0 %v3525
        %3557 = vmatpush1.bf16.xpose.msra.mxu0 %v3524
        %3558 = vmatprep.subr.bf16.mxu0 %v3527
        %3559 = vmatpush1.bf16.xpose.msra.mxu0 %v3526
        %3560 = vmatprep.subr.bf16.mxu0 %v3529
        %3561 = vmatpush1.bf16.xpose.msra.mxu0 %v3528
        %3562 = vmatprep.subr.bf16.mxu0 %v3531
        %3563 = vmatpush1.bf16.xpose.msra.mxu0 %v3530
        %3564 = vmatprep.subr.bf16.mxu0 %v3533
        %3565 = vmatpush1.bf16.xpose.msra.mxu0 %v3532
        %3566 = vmatprep.subr.bf16.mxu0 %v3535
        %3567 = vmatpush1.bf16.xpose.msra.mxu0 %v3534
        %3568 = vmatprep.subr.bf16.mxu0 %v3537
        %3569 = vmatpush1.bf16.xpose.msra.mxu0 %v3536
        %3570 = vmatprep.subr.bf16.mxu0 %v3539
        %3571 = vmatpush1.bf16.xpose.msra.mxu0 %v3538
        %3572 = vmatprep.subr.bf16.mxu0 %v3541
        %3573 = vmatpush1.bf16.xpose.msra.mxu0 %v3540
        %3574 = vmatprep.subr.bf16.mxu0 %v3543
        %3575 = vmatpush1.bf16.xpose.msra.mxu0 %v3542
        %3576 = vmatprep.subr.bf16.mxu0 %v3545
        %3577 = vmatpush1.bf16.xpose.msra.mxu0 %v3544
        %3578 = vmatprep.subr.bf16.mxu0 %v3547
        %3579 = vmatpush1.bf16.xpose.msra.mxu0 %v3546
        %3580 = vmatprep.mubr.bf16.mxu0 %v2792
        %3581 = vmatmul.mubr.bf16.gmra.mrb[0].mxu0 %v2791
        %v3582 = vpop.f32.mrb[0].mxu0
        %v3583 = vadd.f32 0.0, %v3582
        %v3584 = vpop.f32.mrb[0].mxu0
        %v3585 = vadd.f32 0.0, %v3584
        %v3586 = vpop.f32.mrb[0].mxu0
        %v3587 = vadd.f32 0.0, %v3586
        %v3588 = vpop.f32.mrb[0].mxu0
        %v3589 = vadd.f32 0.0, %v3588
        %3590 = vmatprep.mubr.bf16.mxu0 %v2794
        %3591 = vmatmul.mubr.bf16.gmra.mrb[0].mxu0 %v2793
        %v3592 = vpop.f32.mrb[0].mxu0
        %v3593 = vadd.f32 0.0, %v3592
        %v3594 = vpop.f32.mrb[0].mxu0
        %v3595 = vadd.f32 0.0, %v3594
        %v3596 = vpop.f32.mrb[0].mxu0
        %v3597 = vadd.f32 0.0, %v3596
        %v3598 = vpop.f32.mrb[0].mxu0
        %v3599 = vadd.f32 0.0, %v3598
        %3600 = vdwg.mxu0
        %v3601 = vpack.c.bf16 %v3587, %v3583
        %v3602 = vpack.c.bf16 %v3589, %v3585
        %v3603 = vpack.c.bf16 %v3597, %v3593
        %v3604 = vpack.c.bf16 %v3599, %v3595
        %3605 = vst [vmem:[#allocation3 + $0x40] sm:$0xff] %v3601
        %3606 = vst [vmem:[#allocation3 + $0x48] sm:$0xff] %v3602
        %3607 = vst [vmem:[#allocation3 + $0x50] sm:$0xff] %v3603
        %3608 = vst [vmem:[#allocation3 + $0x58] sm:$0xff] %v3604
        %3609 = vxpose.xlu0.b32.start [1/16] %v884, 128
        %3610 = vxpose.xlu0.b32.cont [2/16] %v888, 128
        %3611 = vxpose.xlu0.b32.cont [3/16] %v894, 128
        %3612 = vxpose.xlu0.b32.cont [4/16] %v898, 128
        %3613 = vxpose.xlu0.b32.cont [5/16] 0.0, 128
        %3614 = vxpose.xlu0.b32.cont [6/16] 0.0, 128
        %3615 = vxpose.xlu0.b32.cont [7/16] 0.0, 128
        %3616 = vxpose.xlu0.b32.cont [8/16] 0.0, 128
        %3617 = vxpose.xlu0.b32.cont [9/16] 0.0, 128
        %3618 = vxpose.xlu0.b32.cont [10/16] 0.0, 128
        %3619 = vxpose.xlu0.b32.cont [11/16] 0.0, 128
        %3620 = vxpose.xlu0.b32.cont [12/16] 0.0, 128
        %3621 = vxpose.xlu0.b32.cont [13/16] 0.0, 128
        %3622 = vxpose.xlu0.b32.cont [14/16] 0.0, 128
        %3623 = vxpose.xlu0.b32.cont [15/16] 0.0, 128
        %3624 = vxpose.xlu0.b32.end [16/16] 0.0, 128
        %v3625 = vpop.trf.xlu0
        %v3626 = vpop.trf.xlu0
        %v3627 = vpop.trf.xlu0
        %v3628 = vpop.trf.xlu0
        %v3629 = vpop.trf.xlu0
        %v3630 = vpop.trf.xlu0
        %v3631 = vpop.trf.xlu0
        %v3632 = vpop.trf.xlu0
        %v3633 = vpop.trf.xlu0
        %v3634 = vpop.trf.xlu0
        %v3635 = vpop.trf.xlu0
        %v3636 = vpop.trf.xlu0
        %v3637 = vpop.trf.xlu0
        %v3638 = vpop.trf.xlu0
        %v3639 = vpop.trf.xlu0
        %v3640 = vpop.trf.xlu0
        %3641 = vxpose.xlu0.b32.start [1/16] %v886, 128
        %3642 = vxpose.xlu0.b32.cont [2/16] %v890, 128
        %3643 = vxpose.xlu0.b32.cont [3/16] %v896, 128
        %3644 = vxpose.xlu0.b32.cont [4/16] %v900, 128
        %3645 = vxpose.xlu0.b32.cont [5/16] 0.0, 128
        %3646 = vxpose.xlu0.b32.cont [6/16] 0.0, 128
        %3647 = vxpose.xlu0.b32.cont [7/16] 0.0, 128
        %3648 = vxpose.xlu0.b32.cont [8/16] 0.0, 128
        %3649 = vxpose.xlu0.b32.cont [9/16] 0.0, 128
        %3650 = vxpose.xlu0.b32.cont [10/16] 0.0, 128
        %3651 = vxpose.xlu0.b32.cont [11/16] 0.0, 128
        %3652 = vxpose.xlu0.b32.cont [12/16] 0.0, 128
        %3653 = vxpose.xlu0.b32.cont [13/16] 0.0, 128
        %3654 = vxpose.xlu0.b32.cont [14/16] 0.0, 128
        %3655 = vxpose.xlu0.b32.cont [15/16] 0.0, 128
        %3656 = vxpose.xlu0.b32.end [16/16] 0.0, 128
        %v3657 = vpop.trf.xlu0
        %v3658 = vpop.trf.xlu0
        %v3659 = vpop.trf.xlu0
        %v3660 = vpop.trf.xlu0
        %v3661 = vpop.trf.xlu0
        %v3662 = vpop.trf.xlu0
        %v3663 = vpop.trf.xlu0
        %v3664 = vpop.trf.xlu0
        %v3665 = vpop.trf.xlu0
        %v3666 = vpop.trf.xlu0
        %v3667 = vpop.trf.xlu0
        %v3668 = vpop.trf.xlu0
        %v3669 = vpop.trf.xlu0
        %v3670 = vpop.trf.xlu0
        %v3671 = vpop.trf.xlu0
        %v3672 = vpop.trf.xlu0
        %v3673 = vpack.c.bf16 %v3626, %v3625
        %v3674 = vpack.c.bf16 %v3628, %v3627
        %v3675 = vpack.c.bf16 %v3630, %v3629
        %v3676 = vpack.c.bf16 %v3632, %v3631
        %v3677 = vpack.c.bf16 %v3634, %v3633
        %v3678 = vpack.c.bf16 %v3636, %v3635
        %v3679 = vpack.c.bf16 %v3638, %v3637
        %v3680 = vpack.c.bf16 %v3640, %v3639
        %v3681 = vpack.c.bf16 %v3658, %v3657
        %v3682 = vpack.c.bf16 %v3660, %v3659
        %v3683 = vpack.c.bf16 %v3662, %v3661
        %v3684 = vpack.c.bf16 %v3664, %v3663
        %v3685 = vpack.c.bf16 %v3666, %v3665
        %v3686 = vpack.c.bf16 %v3668, %v3667
        %v3687 = vpack.c.bf16 %v3670, %v3669
        %v3688 = vpack.c.bf16 %v3672, %v3671
        %v3689 = vld [vmem:[#allocation2 + $0x60] sm:$0xff]
        %v3690 = vld [vmem:[#allocation2 + $0x68] sm:$0xff]
        %v3691 = vld [vmem:[#allocation2 + $0x70] sm:$0xff]
        %v3692 = vld [vmem:[#allocation2 + $0x78] sm:$0xff]
        %v3693 = vld [vmem:[#allocation2 + $0xe0] sm:$0xff]
        %v3694 = vld [vmem:[#allocation2 + $0xe8] sm:$0xff]
        %v3695 = vld [vmem:[#allocation2 + $0xf0] sm:$0xff]
        %v3696 = vld [vmem:[#allocation2 + $0xf8] sm:$0xff]
        %v3698 = vsel %vm990, %v3673, 0
        %v3701 = vsel %vm990, %v3674, 0
        %v3704 = vsel %vm990, %v3675, 0
        %v3707 = vsel %vm990, %v3676, 0
        %v3710 = vsel %vm990, %v3677, 0
        %v3713 = vsel %vm990, %v3678, 0
        %v3716 = vsel %vm990, %v3679, 0
        %v3719 = vsel %vm990, %v3680, 0
        %v3722 = vsel %vm990, %v3681, 0
        %v3725 = vsel %vm990, %v3682, 0
        %v3728 = vsel %vm990, %v3683, 0
        %v3731 = vsel %vm990, %v3684, 0
        %v3734 = vsel %vm990, %v3685, 0
        %v3737 = vsel %vm990, %v3686, 0
        %v3740 = vsel %vm990, %v3687, 0
        %v3743 = vsel %vm990, %v3688, 0
        %3745 = vmatprep.subr.bf16.mxu0 %v3690
        %3746 = vmatpush1.bf16.msra.mxu0 %v3689
        %3747 = vmatprep.subr.bf16.mxu0 %v3692
        %3748 = vmatpush1.bf16.msra.mxu0 %v3691
        %3749 = vmatprep.subr.bf16.mxu0 0
        %3750 = vmatpush1.bf16.msra.mxu0 0
        %3751 = vmatprep.subr.bf16.mxu0 0
        %3752 = vmatpush1.bf16.msra.mxu0 0
        %3753 = vmatprep.subr.bf16.mxu0 0
        %3754 = vmatpush1.bf16.msra.mxu0 0
        %3755 = vmatprep.subr.bf16.mxu0 0
        %3756 = vmatpush1.bf16.msra.mxu0 0
        %3757 = vmatprep.subr.bf16.mxu0 0
        %3758 = vmatpush1.bf16.msra.mxu0 0
        %3759 = vmatprep.subr.bf16.mxu0 0
        %3760 = vmatpush1.bf16.msra.mxu0 0
        %3761 = vmatprep.subr.bf16.mxu0 0
        %3762 = vmatpush1.bf16.msra.mxu0 0
        %3763 = vmatprep.subr.bf16.mxu0 0
        %3764 = vmatpush1.bf16.msra.mxu0 0
        %3765 = vmatprep.subr.bf16.mxu0 0
        %3766 = vmatpush1.bf16.msra.mxu0 0
        %3767 = vmatprep.subr.bf16.mxu0 0
        %3768 = vmatpush1.bf16.msra.mxu0 0
        %3769 = vmatprep.subr.bf16.mxu0 0
        %3770 = vmatpush1.bf16.msra.mxu0 0
        %3771 = vmatprep.subr.bf16.mxu0 0
        %3772 = vmatpush1.bf16.msra.mxu0 0
        %3773 = vmatprep.subr.bf16.mxu0 0
        %3774 = vmatpush1.bf16.msra.mxu0 0
        %3775 = vmatprep.subr.bf16.mxu0 0
        %3776 = vmatpush1.bf16.msra.mxu0 0
        %3777 = vmatprep.mubr.bf16.mxu0 0
        %3778 = vmatmul.mubr.bf16.gmra.mrb[0].mxu0 %v3698
        %v3779 = vpop.f32.mrb[0].mxu0
        %v3780 = vadd.f32 0.0, %v3779
        %v3781 = vpop.f32.mrb[0].mxu0
        %v3782 = vadd.f32 0.0, %v3781
        %v3783 = vpop.f32.mrb[0].mxu0
        %v3784 = vadd.f32 0.0, %v3783
        %v3785 = vpop.f32.mrb[0].mxu0
        %v3786 = vadd.f32 0.0, %v3785
        %3787 = vmatprep.mubr.bf16.mxu0 0
        %3788 = vmatmul.mubr.bf16.gmra.mrb[0].mxu0 %v3701
        %v3789 = vpop.f32.mrb[0].mxu0
        %v3790 = vadd.f32 0.0, %v3789
        %v3791 = vpop.f32.mrb[0].mxu0
        %v3792 = vadd.f32 0.0, %v3791
        %v3793 = vpop.f32.mrb[0].mxu0
        %v3794 = vadd.f32 0.0, %v3793
        %v3795 = vpop.f32.mrb[0].mxu0
        %v3796 = vadd.f32 0.0, %v3795
        %3797 = vmatprep.mubr.bf16.mxu0 0
        %3798 = vmatmul.mubr.bf16.gmra.mrb[0].mxu0 %v3704
        %v3799 = vpop.f32.mrb[0].mxu0
        %v3800 = vadd.f32 0.0, %v3799
        %v3801 = vpop.f32.mrb[0].mxu0
        %v3802 = vadd.f32 0.0, %v3801
        %v3803 = vpop.f32.mrb[0].mxu0
        %v3804 = vadd.f32 0.0, %v3803
        %v3805 = vpop.f32.mrb[0].mxu0
        %v3806 = vadd.f32 0.0, %v3805
        %3807 = vmatprep.mubr.bf16.mxu0 0
        %3808 = vmatmul.mubr.bf16.gmra.mrb[0].mxu0 %v3707
        %v3809 = vpop.f32.mrb[0].mxu0
        %v3810 = vadd.f32 0.0, %v3809
        %v3811 = vpop.f32.mrb[0].mxu0
        %v3812 = vadd.f32 0.0, %v3811
        %v3813 = vpop.f32.mrb[0].mxu0
        %v3814 = vadd.f32 0.0, %v3813
        %v3815 = vpop.f32.mrb[0].mxu0
        %v3816 = vadd.f32 0.0, %v3815
        %3817 = vmatprep.mubr.bf16.mxu0 0
        %3818 = vmatmul.mubr.bf16.gmra.mrb[0].mxu0 %v3710
        %v3819 = vpop.f32.mrb[0].mxu0
        %v3820 = vadd.f32 0.0, %v3819
        %v3821 = vpop.f32.mrb[0].mxu0
        %v3822 = vadd.f32 0.0, %v3821
        %v3823 = vpop.f32.mrb[0].mxu0
        %v3824 = vadd.f32 0.0, %v3823
        %v3825 = vpop.f32.mrb[0].mxu0
        %v3826 = vadd.f32 0.0, %v3825
        %3827 = vmatprep.mubr.bf16.mxu0 0
        %3828 = vmatmul.mubr.bf16.gmra.mrb[0].mxu0 %v3713
        %v3829 = vpop.f32.mrb[0].mxu0
        %v3830 = vadd.f32 0.0, %v3829
        %v3831 = vpop.f32.mrb[0].mxu0
        %v3832 = vadd.f32 0.0, %v3831
        %v3833 = vpop.f32.mrb[0].mxu0
        %v3834 = vadd.f32 0.0, %v3833
        %v3835 = vpop.f32.mrb[0].mxu0
        %v3836 = vadd.f32 0.0, %v3835
        %3837 = vmatprep.mubr.bf16.mxu0 0
        %3838 = vmatmul.mubr.bf16.gmra.mrb[0].mxu0 %v3716
        %v3839 = vpop.f32.mrb[0].mxu0
        %v3840 = vadd.f32 0.0, %v3839
        %v3841 = vpop.f32.mrb[0].mxu0
        %v3842 = vadd.f32 0.0, %v3841
        %v3843 = vpop.f32.mrb[0].mxu0
        %v3844 = vadd.f32 0.0, %v3843
        %v3845 = vpop.f32.mrb[0].mxu0
        %v3846 = vadd.f32 0.0, %v3845
        %3847 = vmatprep.mubr.bf16.mxu0 0
        %3848 = vmatmul.mubr.bf16.gmra.mrb[0].mxu0 %v3719
        %v3849 = vpop.f32.mrb[0].mxu0
        %v3850 = vadd.f32 0.0, %v3849
        %v3851 = vpop.f32.mrb[0].mxu0
        %v3852 = vadd.f32 0.0, %v3851
        %v3853 = vpop.f32.mrb[0].mxu0
        %v3854 = vadd.f32 0.0, %v3853
        %v3855 = vpop.f32.mrb[0].mxu0
        %v3856 = vadd.f32 0.0, %v3855
        %3857 = vmatprep.mubr.bf16.mxu0 0
        %3858 = vmatmul.mubr.bf16.gmra.mrb[0].mxu0 %v3722
        %v3859 = vpop.f32.mrb[0].mxu0
        %v3860 = vadd.f32 0.0, %v3859
        %v3861 = vpop.f32.mrb[0].mxu0
        %v3862 = vadd.f32 0.0, %v3861
        %v3863 = vpop.f32.mrb[0].mxu0
        %v3864 = vadd.f32 0.0, %v3863
        %v3865 = vpop.f32.mrb[0].mxu0
        %v3866 = vadd.f32 0.0, %v3865
        %3867 = vmatprep.mubr.bf16.mxu0 0
        %3868 = vmatmul.mubr.bf16.gmra.mrb[0].mxu0 %v3725
        %v3869 = vpop.f32.mrb[0].mxu0
        %v3870 = vadd.f32 0.0, %v3869
        %v3871 = vpop.f32.mrb[0].mxu0
        %v3872 = vadd.f32 0.0, %v3871
        %v3873 = vpop.f32.mrb[0].mxu0
        %v3874 = vadd.f32 0.0, %v3873
        %v3875 = vpop.f32.mrb[0].mxu0
        %v3876 = vadd.f32 0.0, %v3875
        %3877 = vmatprep.mubr.bf16.mxu0 0
        %3878 = vmatmul.mubr.bf16.gmra.mrb[0].mxu0 %v3728
        %v3879 = vpop.f32.mrb[0].mxu0
        %v3880 = vadd.f32 0.0, %v3879
        %v3881 = vpop.f32.mrb[0].mxu0
        %v3882 = vadd.f32 0.0, %v3881
        %v3883 = vpop.f32.mrb[0].mxu0
        %v3884 = vadd.f32 0.0, %v3883
        %v3885 = vpop.f32.mrb[0].mxu0
        %v3886 = vadd.f32 0.0, %v3885
        %3887 = vmatprep.mubr.bf16.mxu0 0
        %3888 = vmatmul.mubr.bf16.gmra.mrb[0].mxu0 %v3731
        %v3889 = vpop.f32.mrb[0].mxu0
        %v3890 = vadd.f32 0.0, %v3889
        %v3891 = vpop.f32.mrb[0].mxu0
        %v3892 = vadd.f32 0.0, %v3891
        %v3893 = vpop.f32.mrb[0].mxu0
        %v3894 = vadd.f32 0.0, %v3893
        %v3895 = vpop.f32.mrb[0].mxu0
        %v3896 = vadd.f32 0.0, %v3895
        %3897 = vmatprep.mubr.bf16.mxu0 0
        %3898 = vmatmul.mubr.bf16.gmra.mrb[0].mxu0 %v3734
        %v3899 = vpop.f32.mrb[0].mxu0
        %v3900 = vadd.f32 0.0, %v3899
        %v3901 = vpop.f32.mrb[0].mxu0
        %v3902 = vadd.f32 0.0, %v3901
        %v3903 = vpop.f32.mrb[0].mxu0
        %v3904 = vadd.f32 0.0, %v3903
        %v3905 = vpop.f32.mrb[0].mxu0
        %v3906 = vadd.f32 0.0, %v3905
        %3907 = vmatprep.mubr.bf16.mxu0 0
        %3908 = vmatmul.mubr.bf16.gmra.mrb[0].mxu0 %v3737
        %v3909 = vpop.f32.mrb[0].mxu0
        %v3910 = vadd.f32 0.0, %v3909
        %v3911 = vpop.f32.mrb[0].mxu0
        %v3912 = vadd.f32 0.0, %v3911
        %v3913 = vpop.f32.mrb[0].mxu0
        %v3914 = vadd.f32 0.0, %v3913
        %v3915 = vpop.f32.mrb[0].mxu0
        %v3916 = vadd.f32 0.0, %v3915
        %3917 = vmatprep.mubr.bf16.mxu0 0
        %3918 = vmatmul.mubr.bf16.gmra.mrb[0].mxu0 %v3740
        %v3919 = vpop.f32.mrb[0].mxu0
        %v3920 = vadd.f32 0.0, %v3919
        %v3921 = vpop.f32.mrb[0].mxu0
        %v3922 = vadd.f32 0.0, %v3921
        %v3923 = vpop.f32.mrb[0].mxu0
        %v3924 = vadd.f32 0.0, %v3923
        %v3925 = vpop.f32.mrb[0].mxu0
        %v3926 = vadd.f32 0.0, %v3925
        %3927 = vmatprep.mubr.bf16.mxu0 0
        %3928 = vmatmul.mubr.bf16.gmra.mrb[0].mxu0 %v3743
        %v3929 = vpop.f32.mrb[0].mxu0
        %v3930 = vadd.f32 0.0, %v3929
        %v3931 = vpop.f32.mrb[0].mxu0
        %v3932 = vadd.f32 0.0, %v3931
        %v3933 = vpop.f32.mrb[0].mxu0
        %v3934 = vadd.f32 0.0, %v3933
        %v3935 = vpop.f32.mrb[0].mxu0
        %v3936 = vadd.f32 0.0, %v3935
        %3937 = vdwg.mxu0
        %v3938 = vmax.f32 %v3780, %v3782
        %3939 = vmax.xlane.f32.xlu0 %v3938
        %v3940 = vpop.xlane.xlu0 %3939
        %v3941 = vmax.f32 %v3784, %v3786
        %3942 = vmax.xlane.f32.xlu0 %v3941
        %v3943 = vpop.xlane.xlu0 %3942
        %v3944 = vmax.f32 %v3790, %v3792
        %3945 = vmax.xlane.f32.xlu0 %v3944
        %v3946 = vpop.xlane.xlu0 %3945
        %v3947 = vmax.f32 %v3794, %v3796
        %3948 = vmax.xlane.f32.xlu0 %v3947
        %v3949 = vpop.xlane.xlu0 %3948
        %v3950 = vmax.f32 %v3800, %v3802
        %3951 = vmax.xlane.f32.xlu0 %v3950
        %v3952 = vpop.xlane.xlu0 %3951
        %v3953 = vmax.f32 %v3804, %v3806
        %3954 = vmax.xlane.f32.xlu0 %v3953
        %v3955 = vpop.xlane.xlu0 %3954
        %v3956 = vmax.f32 %v3810, %v3812
        %3957 = vmax.xlane.f32.xlu0 %v3956
        %v3958 = vpop.xlane.xlu0 %3957
        %v3959 = vmax.f32 %v3814, %v3816
        %3960 = vmax.xlane.f32.xlu0 %v3959
        %v3961 = vpop.xlane.xlu0 %3960
        %v3962 = vmax.f32 %v3820, %v3822
        %3963 = vmax.xlane.f32.xlu0 %v3962
        %v3964 = vpop.xlane.xlu0 %3963
        %v3965 = vmax.f32 %v3824, %v3826
        %3966 = vmax.xlane.f32.xlu0 %v3965
        %v3967 = vpop.xlane.xlu0 %3966
        %v3968 = vmax.f32 %v3830, %v3832
        %3969 = vmax.xlane.f32.xlu0 %v3968
        %v3970 = vpop.xlane.xlu0 %3969
        %v3971 = vmax.f32 %v3834, %v3836
        %3972 = vmax.xlane.f32.xlu0 %v3971
        %v3973 = vpop.xlane.xlu0 %3972
        %v3974 = vmax.f32 %v3840, %v3842
        %3975 = vmax.xlane.f32.xlu0 %v3974
        %v3976 = vpop.xlane.xlu0 %3975
        %v3977 = vmax.f32 %v3844, %v3846
        %3978 = vmax.xlane.f32.xlu0 %v3977
        %v3979 = vpop.xlane.xlu0 %3978
        %v3980 = vmax.f32 %v3850, %v3852
        %3981 = vmax.xlane.f32.xlu0 %v3980
        %v3982 = vpop.xlane.xlu0 %3981
        %v3983 = vmax.f32 %v3854, %v3856
        %3984 = vmax.xlane.f32.xlu0 %v3983
        %v3985 = vpop.xlane.xlu0 %3984
        %v3986 = vmax.f32 %v3860, %v3862
        %3987 = vmax.xlane.f32.xlu0 %v3986
        %v3988 = vpop.xlane.xlu0 %3987
        %v3989 = vmax.f32 %v3864, %v3866
        %3990 = vmax.xlane.f32.xlu0 %v3989
        %v3991 = vpop.xlane.xlu0 %3990
        %v3992 = vmax.f32 %v3870, %v3872
        %3993 = vmax.xlane.f32.xlu0 %v3992
        %v3994 = vpop.xlane.xlu0 %3993
        %v3995 = vmax.f32 %v3874, %v3876
        %3996 = vmax.xlane.f32.xlu0 %v3995
        %v3997 = vpop.xlane.xlu0 %3996
        %v3998 = vmax.f32 %v3880, %v3882
        %3999 = vmax.xlane.f32.xlu0 %v3998
        %v4000 = vpop.xlane.xlu0 %3999
        %v4001 = vmax.f32 %v3884, %v3886
        %4002 = vmax.xlane.f32.xlu0 %v4001
        %v4003 = vpop.xlane.xlu0 %4002
        %v4004 = vmax.f32 %v3890, %v3892
        %4005 = vmax.xlane.f32.xlu0 %v4004
        %v4006 = vpop.xlane.xlu0 %4005
        %v4007 = vmax.f32 %v3894, %v3896
        %4008 = vmax.xlane.f32.xlu0 %v4007
        %v4009 = vpop.xlane.xlu0 %4008
        %v4010 = vmax.f32 %v3900, %v3902
        %4011 = vmax.xlane.f32.xlu0 %v4010
        %v4012 = vpop.xlane.xlu0 %4011
        %v4013 = vmax.f32 %v3904, %v3906
        %4014 = vmax.xlane.f32.xlu0 %v4013
        %v4015 = vpop.xlane.xlu0 %4014
        %v4016 = vmax.f32 %v3910, %v3912
        %4017 = vmax.xlane.f32.xlu0 %v4016
        %v4018 = vpop.xlane.xlu0 %4017
        %v4019 = vmax.f32 %v3914, %v3916
        %4020 = vmax.xlane.f32.xlu0 %v4019
        %v4021 = vpop.xlane.xlu0 %4020
        %v4022 = vmax.f32 %v3920, %v3922
        %4023 = vmax.xlane.f32.xlu0 %v4022
        %v4024 = vpop.xlane.xlu0 %4023
        %v4025 = vmax.f32 %v3924, %v3926
        %4026 = vmax.xlane.f32.xlu0 %v4025
        %v4027 = vpop.xlane.xlu0 %4026
        %v4028 = vmax.f32 %v3930, %v3932
        %4029 = vmax.xlane.f32.xlu0 %v4028
        %v4030 = vpop.xlane.xlu0 %4029
        %v4031 = vmax.f32 %v3934, %v3936
        %4032 = vmax.xlane.f32.xlu0 %v4031
        %v4033 = vpop.xlane.xlu0 %4032
        %v4034 = vsub.f32 %v3780, %v3940
        %v4035 = vsub.f32 %v3782, %v3940
        %v4036 = vsub.f32 %v3784, %v3943
        %v4037 = vsub.f32 %v3786, %v3943
        %v4038 = vsub.f32 %v3790, %v3946
        %v4039 = vsub.f32 %v3792, %v3946
        %v4040 = vsub.f32 %v3794, %v3949
        %v4041 = vsub.f32 %v3796, %v3949
        %v4042 = vsub.f32 %v3800, %v3952
        %v4043 = vsub.f32 %v3802, %v3952
        %v4044 = vsub.f32 %v3804, %v3955
        %v4045 = vsub.f32 %v3806, %v3955
        %v4046 = vsub.f32 %v3810, %v3958
        %v4047 = vsub.f32 %v3812, %v3958
        %v4048 = vsub.f32 %v3814, %v3961
        %v4049 = vsub.f32 %v3816, %v3961
        %v4050 = vsub.f32 %v3820, %v3964
        %v4051 = vsub.f32 %v3822, %v3964
        %v4052 = vsub.f32 %v3824, %v3967
        %v4053 = vsub.f32 %v3826, %v3967
        %v4054 = vsub.f32 %v3830, %v3970
        %v4055 = vsub.f32 %v3832, %v3970
        %v4056 = vsub.f32 %v3834, %v3973
        %v4057 = vsub.f32 %v3836, %v3973
        %v4058 = vsub.f32 %v3840, %v3976
        %v4059 = vsub.f32 %v3842, %v3976
        %v4060 = vsub.f32 %v3844, %v3979
        %v4061 = vsub.f32 %v3846, %v3979
        %v4062 = vsub.f32 %v3850, %v3982
        %v4063 = vsub.f32 %v3852, %v3982
        %v4064 = vsub.f32 %v3854, %v3985
        %v4065 = vsub.f32 %v3856, %v3985
        %v4066 = vsub.f32 %v3860, %v3988
        %v4067 = vsub.f32 %v3862, %v3988
        %v4068 = vsub.f32 %v3864, %v3991
        %v4069 = vsub.f32 %v3866, %v3991
        %v4070 = vsub.f32 %v3870, %v3994
        %v4071 = vsub.f32 %v3872, %v3994
        %v4072 = vsub.f32 %v3874, %v3997
        %v4073 = vsub.f32 %v3876, %v3997
        %v4074 = vsub.f32 %v3880, %v4000
        %v4075 = vsub.f32 %v3882, %v4000
        %v4076 = vsub.f32 %v3884, %v4003
        %v4077 = vsub.f32 %v3886, %v4003
        %v4078 = vsub.f32 %v3890, %v4006
        %v4079 = vsub.f32 %v3892, %v4006
        %v4080 = vsub.f32 %v3894, %v4009
        %v4081 = vsub.f32 %v3896, %v4009
        %v4082 = vsub.f32 %v3900, %v4012
        %v4083 = vsub.f32 %v3902, %v4012
        %v4084 = vsub.f32 %v3904, %v4015
        %v4085 = vsub.f32 %v3906, %v4015
        %v4086 = vsub.f32 %v3910, %v4018
        %v4087 = vsub.f32 %v3912, %v4018
        %v4088 = vsub.f32 %v3914, %v4021
        %v4089 = vsub.f32 %v3916, %v4021
        %v4090 = vsub.f32 %v3920, %v4024
        %v4091 = vsub.f32 %v3922, %v4024
        %v4092 = vsub.f32 %v3924, %v4027
        %v4093 = vsub.f32 %v3926, %v4027
        %v4094 = vsub.f32 %v3930, %v4030
        %v4095 = vsub.f32 %v3932, %v4030
        %v4096 = vsub.f32 %v3934, %v4033
        %v4097 = vsub.f32 %v3936, %v4033
        %v4098 = vmul.f32 %v4034, 1.442695
        %v4099 = vpow.pop %v4098
        %v4100 = vmul.f32 %v4035, 1.442695
        %v4101 = vpow.pop %v4100
        %v4102 = vmul.f32 %v4036, 1.442695
        %v4103 = vpow.pop %v4102
        %v4104 = vmul.f32 %v4037, 1.442695
        %v4105 = vpow.pop %v4104
        %v4106 = vmul.f32 %v4038, 1.442695
        %v4107 = vpow.pop %v4106
        %v4108 = vmul.f32 %v4039, 1.442695
        %v4109 = vpow.pop %v4108
        %v4110 = vmul.f32 %v4040, 1.442695
        %v4111 = vpow.pop %v4110
        %v4112 = vmul.f32 %v4041, 1.442695
        %v4113 = vpow.pop %v4112
        %v4114 = vmul.f32 %v4042, 1.442695
        %v4115 = vpow.pop %v4114
        %v4116 = vmul.f32 %v4043, 1.442695
        %v4117 = vpow.pop %v4116
        %v4118 = vmul.f32 %v4044, 1.442695
        %v4119 = vpow.pop %v4118
        %v4120 = vmul.f32 %v4045, 1.442695
        %v4121 = vpow.pop %v4120
        %v4122 = vmul.f32 %v4046, 1.442695
        %v4123 = vpow.pop %v4122
        %v4124 = vmul.f32 %v4047, 1.442695
        %v4125 = vpow.pop %v4124
        %v4126 = vmul.f32 %v4048, 1.442695
        %v4127 = vpow.pop %v4126
        %v4128 = vmul.f32 %v4049, 1.442695
        %v4129 = vpow.pop %v4128
        %v4130 = vmul.f32 %v4050, 1.442695
        %v4131 = vpow.pop %v4130
        %v4132 = vmul.f32 %v4051, 1.442695
        %v4133 = vpow.pop %v4132
        %v4134 = vmul.f32 %v4052, 1.442695
        %v4135 = vpow.pop %v4134
        %v4136 = vmul.f32 %v4053, 1.442695
        %v4137 = vpow.pop %v4136
        %v4138 = vmul.f32 %v4054, 1.442695
        %v4139 = vpow.pop %v4138
        %v4140 = vmul.f32 %v4055, 1.442695
        %v4141 = vpow.pop %v4140
        %v4142 = vmul.f32 %v4056, 1.442695
        %v4143 = vpow.pop %v4142
        %v4144 = vmul.f32 %v4057, 1.442695
        %v4145 = vpow.pop %v4144
        %v4146 = vmul.f32 %v4058, 1.442695
        %v4147 = vpow.pop %v4146
        %v4148 = vmul.f32 %v4059, 1.442695
        %v4149 = vpow.pop %v4148
        %v4150 = vmul.f32 %v4060, 1.442695
        %v4151 = vpow.pop %v4150
        %v4152 = vmul.f32 %v4061, 1.442695
        %v4153 = vpow.pop %v4152
        %v4154 = vmul.f32 %v4062, 1.442695
        %v4155 = vpow.pop %v4154
        %v4156 = vmul.f32 %v4063, 1.442695
        %v4157 = vpow.pop %v4156
        %v4158 = vmul.f32 %v4064, 1.442695
        %v4159 = vpow.pop %v4158
        %v4160 = vmul.f32 %v4065, 1.442695
        %v4161 = vpow.pop %v4160
        %v4162 = vmul.f32 %v4066, 1.442695
        %v4163 = vpow.pop %v4162
        %v4164 = vmul.f32 %v4067, 1.442695
        %v4165 = vpow.pop %v4164
        %v4166 = vmul.f32 %v4068, 1.442695
        %v4167 = vpow.pop %v4166
        %v4168 = vmul.f32 %v4069, 1.442695
        %v4169 = vpow.pop %v4168
        %v4170 = vmul.f32 %v4070, 1.442695
        %v4171 = vpow.pop %v4170
        %v4172 = vmul.f32 %v4071, 1.442695
        %v4173 = vpow.pop %v4172
        %v4174 = vmul.f32 %v4072, 1.442695
        %v4175 = vpow.pop %v4174
        %v4176 = vmul.f32 %v4073, 1.442695
        %v4177 = vpow.pop %v4176
        %v4178 = vmul.f32 %v4074, 1.442695
        %v4179 = vpow.pop %v4178
        %v4180 = vmul.f32 %v4075, 1.442695
        %v4181 = vpow.pop %v4180
        %v4182 = vmul.f32 %v4076, 1.442695
        %v4183 = vpow.pop %v4182
        %v4184 = vmul.f32 %v4077, 1.442695
        %v4185 = vpow.pop %v4184
        %v4186 = vmul.f32 %v4078, 1.442695
        %v4187 = vpow.pop %v4186
        %v4188 = vmul.f32 %v4079, 1.442695
        %v4189 = vpow.pop %v4188
        %v4190 = vmul.f32 %v4080, 1.442695
        %v4191 = vpow.pop %v4190
        %v4192 = vmul.f32 %v4081, 1.442695
        %v4193 = vpow.pop %v4192
        %v4194 = vmul.f32 %v4082, 1.442695
        %v4195 = vpow.pop %v4194
        %v4196 = vmul.f32 %v4083, 1.442695
        %v4197 = vpow.pop %v4196
        %v4198 = vmul.f32 %v4084, 1.442695
        %v4199 = vpow.pop %v4198
        %v4200 = vmul.f32 %v4085, 1.442695
        %v4201 = vpow.pop %v4200
        %v4202 = vmul.f32 %v4086, 1.442695
        %v4203 = vpow.pop %v4202
        %v4204 = vmul.f32 %v4087, 1.442695
        %v4205 = vpow.pop %v4204
        %v4206 = vmul.f32 %v4088, 1.442695
        %v4207 = vpow.pop %v4206
        %v4208 = vmul.f32 %v4089, 1.442695
        %v4209 = vpow.pop %v4208
        %v4210 = vmul.f32 %v4090, 1.442695
        %v4211 = vpow.pop %v4210
        %v4212 = vmul.f32 %v4091, 1.442695
        %v4213 = vpow.pop %v4212
        %v4214 = vmul.f32 %v4092, 1.442695
        %v4215 = vpow.pop %v4214
        %v4216 = vmul.f32 %v4093, 1.442695
        %v4217 = vpow.pop %v4216
        %v4218 = vmul.f32 %v4094, 1.442695
        %v4219 = vpow.pop %v4218
        %v4220 = vmul.f32 %v4095, 1.442695
        %v4221 = vpow.pop %v4220
        %v4222 = vmul.f32 %v4096, 1.442695
        %v4223 = vpow.pop %v4222
        %v4224 = vmul.f32 %v4097, 1.442695
        %v4225 = vpow.pop %v4224
        %v4226 = vadd.f32 %v4099, %v4101
        %4227 = vadd.xlane.f32.xlu0 %v4226
        %v4228 = vpop.xlane.xlu0 %4227
        %v4229 = vadd.f32 %v4103, %v4105
        %4230 = vadd.xlane.f32.xlu0 %v4229
        %v4231 = vpop.xlane.xlu0 %4230
        %v4232 = vadd.f32 %v4107, %v4109
        %4233 = vadd.xlane.f32.xlu0 %v4232
        %v4234 = vpop.xlane.xlu0 %4233
        %v4235 = vadd.f32 %v4111, %v4113
        %4236 = vadd.xlane.f32.xlu0 %v4235
        %v4237 = vpop.xlane.xlu0 %4236
        %v4238 = vadd.f32 %v4115, %v4117
        %4239 = vadd.xlane.f32.xlu0 %v4238
        %v4240 = vpop.xlane.xlu0 %4239
        %v4241 = vadd.f32 %v4119, %v4121
        %4242 = vadd.xlane.f32.xlu0 %v4241
        %v4243 = vpop.xlane.xlu0 %4242
        %v4244 = vadd.f32 %v4123, %v4125
        %4245 = vadd.xlane.f32.xlu0 %v4244
        %v4246 = vpop.xlane.xlu0 %4245
        %v4247 = vadd.f32 %v4127, %v4129
        %4248 = vadd.xlane.f32.xlu0 %v4247
        %v4249 = vpop.xlane.xlu0 %4248
        %v4250 = vadd.f32 %v4131, %v4133
        %4251 = vadd.xlane.f32.xlu0 %v4250
        %v4252 = vpop.xlane.xlu0 %4251
        %v4253 = vadd.f32 %v4135, %v4137
        %4254 = vadd.xlane.f32.xlu0 %v4253
        %v4255 = vpop.xlane.xlu0 %4254
        %v4256 = vadd.f32 %v4139, %v4141
        %4257 = vadd.xlane.f32.xlu0 %v4256
        %v4258 = vpop.xlane.xlu0 %4257
        %v4259 = vadd.f32 %v4143, %v4145
        %4260 = vadd.xlane.f32.xlu0 %v4259
        %v4261 = vpop.xlane.xlu0 %4260
        %v4262 = vadd.f32 %v4147, %v4149
        %4263 = vadd.xlane.f32.xlu0 %v4262
        %v4264 = vpop.xlane.xlu0 %4263
        %v4265 = vadd.f32 %v4151, %v4153
        %4266 = vadd.xlane.f32.xlu0 %v4265
        %v4267 = vpop.xlane.xlu0 %4266
        %v4268 = vadd.f32 %v4155, %v4157
        %4269 = vadd.xlane.f32.xlu0 %v4268
        %v4270 = vpop.xlane.xlu0 %4269
        %v4271 = vadd.f32 %v4159, %v4161
        %4272 = vadd.xlane.f32.xlu0 %v4271
        %v4273 = vpop.xlane.xlu0 %4272
        %v4274 = vadd.f32 %v4163, %v4165
        %4275 = vadd.xlane.f32.xlu0 %v4274
        %v4276 = vpop.xlane.xlu0 %4275
        %v4277 = vadd.f32 %v4167, %v4169
        %4278 = vadd.xlane.f32.xlu0 %v4277
        %v4279 = vpop.xlane.xlu0 %4278
        %v4280 = vadd.f32 %v4171, %v4173
        %4281 = vadd.xlane.f32.xlu0 %v4280
        %v4282 = vpop.xlane.xlu0 %4281
        %v4283 = vadd.f32 %v4175, %v4177
        %4284 = vadd.xlane.f32.xlu0 %v4283
        %v4285 = vpop.xlane.xlu0 %4284
        %v4286 = vadd.f32 %v4179, %v4181
        %4287 = vadd.xlane.f32.xlu0 %v4286
        %v4288 = vpop.xlane.xlu0 %4287
        %v4289 = vadd.f32 %v4183, %v4185
        %4290 = vadd.xlane.f32.xlu0 %v4289
        %v4291 = vpop.xlane.xlu0 %4290
        %v4292 = vadd.f32 %v4187, %v4189
        %4293 = vadd.xlane.f32.xlu0 %v4292
        %v4294 = vpop.xlane.xlu0 %4293
        %v4295 = vadd.f32 %v4191, %v4193
        %4296 = vadd.xlane.f32.xlu0 %v4295
        %v4297 = vpop.xlane.xlu0 %4296
        %v4298 = vadd.f32 %v4195, %v4197
        %4299 = vadd.xlane.f32.xlu0 %v4298
        %v4300 = vpop.xlane.xlu0 %4299
        %v4301 = vadd.f32 %v4199, %v4201
        %4302 = vadd.xlane.f32.xlu0 %v4301
        %v4303 = vpop.xlane.xlu0 %4302
        %v4304 = vadd.f32 %v4203, %v4205
        %4305 = vadd.xlane.f32.xlu0 %v4304
        %v4306 = vpop.xlane.xlu0 %4305
        %v4307 = vadd.f32 %v4207, %v4209
        %4308 = vadd.xlane.f32.xlu0 %v4307
        %v4309 = vpop.xlane.xlu0 %4308
        %v4310 = vadd.f32 %v4211, %v4213
        %4311 = vadd.xlane.f32.xlu0 %v4310
        %v4312 = vpop.xlane.xlu0 %4311
        %v4313 = vadd.f32 %v4215, %v4217
        %4314 = vadd.xlane.f32.xlu0 %v4313
        %v4315 = vpop.xlane.xlu0 %4314
        %v4316 = vadd.f32 %v4219, %v4221
        %4317 = vadd.xlane.f32.xlu0 %v4316
        %v4318 = vpop.xlane.xlu0 %4317
        %v4319 = vadd.f32 %v4223, %v4225
        %4320 = vadd.xlane.f32.xlu0 %v4319
        %v4321 = vpop.xlane.xlu0 %4320
        %v4322 = vrcp.pop %v4228
        %v4323 = vrcp.pop %v4231
        %v4324 = vrcp.pop %v4234
        %v4325 = vrcp.pop %v4237
        %v4326 = vrcp.pop %v4240
        %v4327 = vrcp.pop %v4243
        %v4328 = vrcp.pop %v4246
        %v4329 = vrcp.pop %v4249
        %v4330 = vrcp.pop %v4252
        %v4331 = vrcp.pop %v4255
        %v4332 = vrcp.pop %v4258
        %v4333 = vrcp.pop %v4261
        %v4334 = vrcp.pop %v4264
        %v4335 = vrcp.pop %v4267
        %v4336 = vrcp.pop %v4270
        %v4337 = vrcp.pop %v4273
        %v4338 = vrcp.pop %v4276
        %v4339 = vrcp.pop %v4279
        %v4340 = vrcp.pop %v4282
        %v4341 = vrcp.pop %v4285
        %v4342 = vrcp.pop %v4288
        %v4343 = vrcp.pop %v4291
        %v4344 = vrcp.pop %v4294
        %v4345 = vrcp.pop %v4297
        %v4346 = vrcp.pop %v4300
        %v4347 = vrcp.pop %v4303
        %v4348 = vrcp.pop %v4306
        %v4349 = vrcp.pop %v4309
        %v4350 = vrcp.pop %v4312
        %v4351 = vrcp.pop %v4315
        %v4352 = vrcp.pop %v4318
        %v4353 = vrcp.pop %v4321
        %v4354 = vmul.f32 %v4099, %v4322
        %v4355 = vmul.f32 %v4101, %v4322
        %v4356 = vmul.f32 %v4103, %v4323
        %v4357 = vmul.f32 %v4105, %v4323
        %v4358 = vmul.f32 %v4107, %v4324
        %v4359 = vmul.f32 %v4109, %v4324
        %v4360 = vmul.f32 %v4111, %v4325
        %v4361 = vmul.f32 %v4113, %v4325
        %v4362 = vmul.f32 %v4115, %v4326
        %v4363 = vmul.f32 %v4117, %v4326
        %v4364 = vmul.f32 %v4119, %v4327
        %v4365 = vmul.f32 %v4121, %v4327
        %v4366 = vmul.f32 %v4123, %v4328
        %v4367 = vmul.f32 %v4125, %v4328
        %v4368 = vmul.f32 %v4127, %v4329
        %v4369 = vmul.f32 %v4129, %v4329
        %v4370 = vmul.f32 %v4131, %v4330
        %v4371 = vmul.f32 %v4133, %v4330
        %v4372 = vmul.f32 %v4135, %v4331
        %v4373 = vmul.f32 %v4137, %v4331
        %v4374 = vmul.f32 %v4139, %v4332
        %v4375 = vmul.f32 %v4141, %v4332
        %v4376 = vmul.f32 %v4143, %v4333
        %v4377 = vmul.f32 %v4145, %v4333
        %v4378 = vmul.f32 %v4147, %v4334
        %v4379 = vmul.f32 %v4149, %v4334
        %v4380 = vmul.f32 %v4151, %v4335
        %v4381 = vmul.f32 %v4153, %v4335
        %v4382 = vmul.f32 %v4155, %v4336
        %v4383 = vmul.f32 %v4157, %v4336
        %v4384 = vmul.f32 %v4159, %v4337
        %v4385 = vmul.f32 %v4161, %v4337
        %v4386 = vmul.f32 %v4163, %v4338
        %v4387 = vmul.f32 %v4165, %v4338
        %v4388 = vmul.f32 %v4167, %v4339
        %v4389 = vmul.f32 %v4169, %v4339
        %v4390 = vmul.f32 %v4171, %v4340
        %v4391 = vmul.f32 %v4173, %v4340
        %v4392 = vmul.f32 %v4175, %v4341
        %v4393 = vmul.f32 %v4177, %v4341
        %v4394 = vmul.f32 %v4179, %v4342
        %v4395 = vmul.f32 %v4181, %v4342
        %v4396 = vmul.f32 %v4183, %v4343
        %v4397 = vmul.f32 %v4185, %v4343
        %v4398 = vmul.f32 %v4187, %v4344
        %v4399 = vmul.f32 %v4189, %v4344
        %v4400 = vmul.f32 %v4191, %v4345
        %v4401 = vmul.f32 %v4193, %v4345
        %v4402 = vmul.f32 %v4195, %v4346
        %v4403 = vmul.f32 %v4197, %v4346
        %v4404 = vmul.f32 %v4199, %v4347
        %v4405 = vmul.f32 %v4201, %v4347
        %v4406 = vmul.f32 %v4203, %v4348
        %v4407 = vmul.f32 %v4205, %v4348
        %v4408 = vmul.f32 %v4207, %v4349
        %v4409 = vmul.f32 %v4209, %v4349
        %v4410 = vmul.f32 %v4211, %v4350
        %v4411 = vmul.f32 %v4213, %v4350
        %v4412 = vmul.f32 %v4215, %v4351
        %v4413 = vmul.f32 %v4217, %v4351
        %v4414 = vmul.f32 %v4219, %v4352
        %v4415 = vmul.f32 %v4221, %v4352
        %v4416 = vmul.f32 %v4223, %v4353
        %v4417 = vmul.f32 %v4225, %v4353
        %v4418 = vpack.c.bf16 %v4356, %v4354
        %v4419 = vpack.c.bf16 %v4357, %v4355
        %v4420 = vpack.c.bf16 %v4360, %v4358
        %v4421 = vpack.c.bf16 %v4361, %v4359
        %v4422 = vpack.c.bf16 %v4364, %v4362
        %v4423 = vpack.c.bf16 %v4365, %v4363
        %v4424 = vpack.c.bf16 %v4368, %v4366
        %v4425 = vpack.c.bf16 %v4369, %v4367
        %v4426 = vpack.c.bf16 %v4372, %v4370
        %v4427 = vpack.c.bf16 %v4373, %v4371
        %v4428 = vpack.c.bf16 %v4376, %v4374
        %v4429 = vpack.c.bf16 %v4377, %v4375
        %v4430 = vpack.c.bf16 %v4380, %v4378
        %v4431 = vpack.c.bf16 %v4381, %v4379
        %v4432 = vpack.c.bf16 %v4384, %v4382
        %v4433 = vpack.c.bf16 %v4385, %v4383
        %v4434 = vpack.c.bf16 %v4388, %v4386
        %v4435 = vpack.c.bf16 %v4389, %v4387
        %v4436 = vpack.c.bf16 %v4392, %v4390
        %v4437 = vpack.c.bf16 %v4393, %v4391
        %v4438 = vpack.c.bf16 %v4396, %v4394
        %v4439 = vpack.c.bf16 %v4397, %v4395
        %v4440 = vpack.c.bf16 %v4400, %v4398
        %v4441 = vpack.c.bf16 %v4401, %v4399
        %v4442 = vpack.c.bf16 %v4404, %v4402
        %v4443 = vpack.c.bf16 %v4405, %v4403
        %v4444 = vpack.c.bf16 %v4408, %v4406
        %v4445 = vpack.c.bf16 %v4409, %v4407
        %v4446 = vpack.c.bf16 %v4412, %v4410
        %v4447 = vpack.c.bf16 %v4413, %v4411
        %v4448 = vpack.c.bf16 %v4416, %v4414
        %v4449 = vpack.c.bf16 %v4417, %v4415
        %4450 = vmatprep.subr.bf16.mxu0 %v4419
        %4451 = vmatpush1.bf16.xpose.msra.mxu0 %v4418
        %4452 = vmatprep.subr.bf16.mxu0 %v4421
        %4453 = vmatpush1.bf16.xpose.msra.mxu0 %v4420
        %4454 = vmatprep.subr.bf16.mxu0 %v4423
        %4455 = vmatpush1.bf16.xpose.msra.mxu0 %v4422
        %4456 = vmatprep.subr.bf16.mxu0 %v4425
        %4457 = vmatpush1.bf16.xpose.msra.mxu0 %v4424
        %4458 = vmatprep.subr.bf16.mxu0 %v4427
        %4459 = vmatpush1.bf16.xpose.msra.mxu0 %v4426
        %4460 = vmatprep.subr.bf16.mxu0 %v4429
        %4461 = vmatpush1.bf16.xpose.msra.mxu0 %v4428
        %4462 = vmatprep.subr.bf16.mxu0 %v4431
        %4463 = vmatpush1.bf16.xpose.msra.mxu0 %v4430
        %4464 = vmatprep.subr.bf16.mxu0 %v4433
        %4465 = vmatpush1.bf16.xpose.msra.mxu0 %v4432
        %4466 = vmatprep.subr.bf16.mxu0 %v4435
        %4467 = vmatpush1.bf16.xpose.msra.mxu0 %v4434
        %4468 = vmatprep.subr.bf16.mxu0 %v4437
        %4469 = vmatpush1.bf16.xpose.msra.mxu0 %v4436
        %4470 = vmatprep.subr.bf16.mxu0 %v4439
        %4471 = vmatpush1.bf16.xpose.msra.mxu0 %v4438
        %4472 = vmatprep.subr.bf16.mxu0 %v4441
        %4473 = vmatpush1.bf16.xpose.msra.mxu0 %v4440
        %4474 = vmatprep.subr.bf16.mxu0 %v4443
        %4475 = vmatpush1.bf16.xpose.msra.mxu0 %v4442
        %4476 = vmatprep.subr.bf16.mxu0 %v4445
        %4477 = vmatpush1.bf16.xpose.msra.mxu0 %v4444
        %4478 = vmatprep.subr.bf16.mxu0 %v4447
        %4479 = vmatpush1.bf16.xpose.msra.mxu0 %v4446
        %4480 = vmatprep.subr.bf16.mxu0 %v4449
        %4481 = vmatpush1.bf16.xpose.msra.mxu0 %v4448
        %4482 = vmatprep.mubr.bf16.mxu0 %v3694
        %4483 = vmatmul.mubr.bf16.gmra.mrb[0].mxu0 %v3693
        %v4484 = vpop.f32.mrb[0].mxu0
        %v4485 = vadd.f32 0.0, %v4484
        %v4486 = vpop.f32.mrb[0].mxu0
        %v4487 = vadd.f32 0.0, %v4486
        %v4488 = vpop.f32.mrb[0].mxu0
        %v4489 = vadd.f32 0.0, %v4488
        %v4490 = vpop.f32.mrb[0].mxu0
        %v4491 = vadd.f32 0.0, %v4490
        %4492 = vmatprep.mubr.bf16.mxu0 %v3696
        %4493 = vmatmul.mubr.bf16.gmra.mrb[0].mxu0 %v3695
        %v4494 = vpop.f32.mrb[0].mxu0
        %v4495 = vadd.f32 0.0, %v4494
        %v4496 = vpop.f32.mrb[0].mxu0
        %v4497 = vadd.f32 0.0, %v4496
        %v4498 = vpop.f32.mrb[0].mxu0
        %v4499 = vadd.f32 0.0, %v4498
        %v4500 = vpop.f32.mrb[0].mxu0
        %v4501 = vadd.f32 0.0, %v4500
        %4502 = vdwg.mxu0
        %v4503 = vpack.c.bf16 %v4489, %v4485
        %v4504 = vpack.c.bf16 %v4491, %v4487
        %v4505 = vpack.c.bf16 %v4499, %v4495
        %v4506 = vpack.c.bf16 %v4501, %v4497
        %4507 = vst [vmem:[#allocation3 + $0x60] sm:$0xff] %v4503
        %4508 = vst [vmem:[#allocation3 + $0x68] sm:$0xff] %v4504
        %4509 = vst [vmem:[#allocation3 + $0x70] sm:$0xff] %v4505
        %4510 = vst [vmem:[#allocation3 + $0x78] sm:$0xff] %v4506
        %v4511 = vld [vmem:[%s2] sm:$0xf]
        %v4512 = vld [vmem:[%s2 + $0x4] sm:$0xf]
        %v4513 = vld [vmem:[%s2 + $0x8] sm:$0xf]
        %v4514 = vld [vmem:[%s2 + $0xc] sm:$0xf]
        %v4515 = vld [vmem:[%s2 + $0x10] sm:$0xf]
        %v4516 = vld [vmem:[%s2 + $0x14] sm:$0xf]
        %v4517 = vld [vmem:[%s2 + $0x18] sm:$0xf]
        %v4518 = vld [vmem:[%s2 + $0x1c] sm:$0xf]
        %v4519 = vld [vmem:[#allocation3] sm:$0xff]
        %v4520 = vld [vmem:[#allocation3 + $0x8] sm:$0xff]
        %v4521 = vld [vmem:[#allocation3 + $0x10] sm:$0xff]
        %v4522 = vld [vmem:[#allocation3 + $0x18] sm:$0xff]
        %v4523 = vld [vmem:[#allocation3 + $0x20] sm:$0xff]
        %v4524 = vld [vmem:[#allocation3 + $0x28] sm:$0xff]
        %v4525 = vld [vmem:[#allocation3 + $0x30] sm:$0xff]
        %v4526 = vld [vmem:[#allocation3 + $0x38] sm:$0xff]
        %v4527 = vld [vmem:[#allocation3 + $0x40] sm:$0xff]
        %v4528 = vld [vmem:[#allocation3 + $0x48] sm:$0xff]
        %v4529 = vld [vmem:[#allocation3 + $0x50] sm:$0xff]
        %v4530 = vld [vmem:[#allocation3 + $0x58] sm:$0xff]
        %v4531 = vld [vmem:[#allocation3 + $0x60] sm:$0xff]
        %v4532 = vld [vmem:[#allocation3 + $0x68] sm:$0xff]
        %v4533 = vld [vmem:[#allocation3 + $0x70] sm:$0xff]
        %v4534 = vld [vmem:[#allocation3 + $0x78] sm:$0xff]
        %v4543 = vunpack.c.l.b16 %v4511
        %v4544 = vunpack.c.l.b16 %v4512
        %v4545 = vunpack.c.l.b16 %v4513
        %v4546 = vunpack.c.l.b16 %v4514
        %v4547 = vunpack.c.l.b16 %v4515
        %v4548 = vunpack.c.l.b16 %v4516
        %v4549 = vunpack.c.l.b16 %v4517
        %v4550 = vunpack.c.l.b16 %v4518
        %v4551 = vpack.c.b16 %v4544, %v4543
        %v4552 = vpack.c.b16 %v4546, %v4545
        %v4553 = vpack.c.b16 %v4548, %v4547
        %v4554 = vpack.c.b16 %v4550, %v4549
        %4559 = vmatprep.subr.bf16.mxu0 %v4520
        %4560 = vmatpush1.bf16.msra.mxu0 %v4519
        %4561 = vmatprep.subr.bf16.mxu0 %v4522
        %4562 = vmatpush1.bf16.msra.mxu0 %v4521
        %4563 = vmatprep.subr.bf16.mxu0 %v4524
        %4564 = vmatpush1.bf16.msra.mxu0 %v4523
        %4565 = vmatprep.subr.bf16.mxu0 %v4526
        %4566 = vmatpush1.bf16.msra.mxu0 %v4525
        %4567 = vmatprep.subr.bf16.mxu0 %v4528
        %4568 = vmatpush1.bf16.msra.mxu0 %v4527
        %4569 = vmatprep.subr.bf16.mxu0 %v4530
        %4570 = vmatpush1.bf16.msra.mxu0 %v4529
        %4571 = vmatprep.subr.bf16.mxu0 %v4532
        %4572 = vmatpush1.bf16.msra.mxu0 %v4531
        %4573 = vmatprep.subr.bf16.mxu0 %v4534
        %4574 = vmatpush1.bf16.msra.mxu0 %v4533
        %4575 = vmatprep.subr.bf16.mxu0 0
        %4576 = vmatpush1.bf16.msra.mxu0 0
        %4577 = vmatprep.subr.bf16.mxu0 0
        %4578 = vmatpush1.bf16.msra.mxu0 0
        %4579 = vmatprep.subr.bf16.mxu0 0
        %4580 = vmatpush1.bf16.msra.mxu0 0
        %4581 = vmatprep.subr.bf16.mxu0 0
        %4582 = vmatpush1.bf16.msra.mxu0 0
        %4583 = vmatprep.subr.bf16.mxu0 0
        %4584 = vmatpush1.bf16.msra.mxu0 0
        %4585 = vmatprep.subr.bf16.mxu0 0
        %4586 = vmatpush1.bf16.msra.mxu0 0
        %4587 = vmatprep.subr.bf16.mxu0 0
        %4588 = vmatpush1.bf16.msra.mxu0 0
        %4589 = vmatprep.subr.bf16.mxu0 0
        %4590 = vmatpush1.bf16.msra.mxu0 0
        %4591 = vmatprep.mubr.bf16.mxu0 0
        %4592 = vmatmul.mubr.bf16.gmra.mrb[0].mxu0 %v4551
        %v4593 = vpop.f32.mrb[0].mxu0
        %v4594 = vadd.f32 0.0, %v4593
        %v4595 = vpop.f32.mrb[0].mxu0
        %v4596 = vadd.f32 0.0, %v4595
        %v4597 = vpop.f32.mrb[0].mxu0
        %v4598 = vadd.f32 0.0, %v4597
        %v4599 = vpop.f32.mrb[0].mxu0
        %v4600 = vadd.f32 0.0, %v4599
        %4601 = vmatprep.mubr.bf16.mxu0 0
        %4602 = vmatmul.mubr.bf16.gmra.mrb[0].mxu0 %v4552
        %v4603 = vpop.f32.mrb[0].mxu0
        %v4604 = vadd.f32 0.0, %v4603
        %v4605 = vpop.f32.mrb[0].mxu0
        %v4606 = vadd.f32 0.0, %v4605
        %v4607 = vpop.f32.mrb[0].mxu0
        %v4608 = vadd.f32 0.0, %v4607
        %v4609 = vpop.f32.mrb[0].mxu0
        %v4610 = vadd.f32 0.0, %v4609
        %4611 = vmatprep.mubr.bf16.mxu0 0
        %4612 = vmatmul.mubr.bf16.gmra.mrb[0].mxu0 %v4553
        %v4613 = vpop.f32.mrb[0].mxu0
        %v4614 = vadd.f32 0.0, %v4613
        %v4615 = vpop.f32.mrb[0].mxu0
        %v4616 = vadd.f32 0.0, %v4615
        %v4617 = vpop.f32.mrb[0].mxu0
        %v4618 = vadd.f32 0.0, %v4617
        %v4619 = vpop.f32.mrb[0].mxu0
        %v4620 = vadd.f32 0.0, %v4619
        %4621 = vmatprep.mubr.bf16.mxu0 0
        %4622 = vmatmul.mubr.bf16.gmra.mrb[0].mxu0 %v4554
        %v4623 = vpop.f32.mrb[0].mxu0
        %v4624 = vadd.f32 0.0, %v4623
        %v4625 = vpop.f32.mrb[0].mxu0
        %v4626 = vadd.f32 0.0, %v4625
        %v4627 = vpop.f32.mrb[0].mxu0
        %v4628 = vadd.f32 0.0, %v4627
        %v4629 = vpop.f32.mrb[0].mxu0
        %v4630 = vadd.f32 0.0, %v4629
        %4631 = vdwg.mxu0
        %4632 = vst [vmem:[%s177] sm:$0xff] %v4594
        %4633 = vst [vmem:[%s177 + $0x8] sm:$0xff] %v4596
        %4634 = vst [vmem:[%s177 + $0x10] sm:$0xff] %v4598
        %4635 = vst [vmem:[%s177 + $0x18] sm:$0xff] %v4600
        %4636 = vst [vmem:[%s177 + $0x20] sm:$0xff] %v4604
        %4637 = vst [vmem:[%s177 + $0x28] sm:$0xff] %v4606
        %4638 = vst [vmem:[%s177 + $0x30] sm:$0xff] %v4608
        %4639 = vst [vmem:[%s177 + $0x38] sm:$0xff] %v4610
        %4640 = vst [vmem:[%s177 + $0x40] sm:$0xff] %v4614
        %4641 = vst [vmem:[%s177 + $0x48] sm:$0xff] %v4616
        %4642 = vst [vmem:[%s177 + $0x50] sm:$0xff] %v4618
        %4643 = vst [vmem:[%s177 + $0x58] sm:$0xff] %v4620
        %4644 = vst [vmem:[%s177 + $0x60] sm:$0xff] %v4624
        %4645 = vst [vmem:[%s177 + $0x68] sm:$0xff] %v4626
        %4646 = vst [vmem:[%s177 + $0x70] sm:$0xff] %v4628
        %4647 = vst [vmem:[%s177 + $0x78] sm:$0xff] %v4630
        %s4648 = sand.u32 %s107, 1
        %s4649 = scalar_lea.sflag [#allocation5], %s4648
        %s4650 = sand.u32 %s107, 1
        %s4651 = smul.addr %s4650, 128
        %s4652 = scalar_lea.vmem [#allocation4], %s4651
        // Predicated region
        $region37: #{tpu_custom_call.1} parent=31 // pred_check
          %p4653 = pneg %p117
        $region38: #{tpu_custom_call.1} parent=31 // pred_check_branch
          %4655 = sbr.rel (%p4653) target = $region40
        $region39: #{tpu_custom_call.1} parent=31 // pred_region
          %s4656 = smul.u32 2, %s22
          %s4658 = ssub.s32 2048, 2048
          %4659 = vsyncadd %s4649, %s4658
          %s4660 = smul.addr %s21, 16
          %s4661 = sadd.s32 %s4656, %s4660
          %s4662 = smul.addr %s4661, 128
          %s4663 = scalar_lea.hbm %s3, %s4662
          %s4664 = sshll.u32 %s4652, 4
          %s4665 = int_to_ptr.vmem [resolvable:$true] %s4664
          %4670 = dma.vmem_to_hbm [thread:$0]  %s4665, 2048, %s4663, %s4649, 256, 256, 16
        $region40: #{tpu_custom_call.1} parent=31 // pred_fallthru
          _
      $region32: #{tpu_custom_call.1} parent=5 // pred_fallthru
        _
      %p4671 = scmp.le.s32.totalorder 2, %s12
      // Predicated region
      $region41: #{tpu_custom_call.1} parent=5 // pred_check
        %p4672 = pneg %p4671
      $region42: #{tpu_custom_call.1} parent=5 // pred_check_branch
        %4674 = sbr.rel (%p4672) target = $region44
      $region43: #{tpu_custom_call.1} parent=5 // pred_region
        %s4675 = ssub.s32 %s12, 2
        // Predicated region
        $region45: #{tpu_custom_call.1} parent=43 // pred_check
          %p4676 = pneg %p123
        $region46: #{tpu_custom_call.1} parent=43 // pred_check_branch
          %4678 = sbr.rel (%p4676) target = $region48
        $region47: #{tpu_custom_call.1} parent=43 // pred_region
          %s4679 = sand.u32 %s108, 1
          %s4680 = scalar_lea.sflag [#allocation5], %s4679
          %s4681 = sand.u32 %s108, 1
          %s4682 = smul.addr %s4681, 128
          %s4683 = scalar_lea.vmem [#allocation4], %s4682
          %4684 = dma.done %s4680, 2048
        $region48: #{tpu_custom_call.1} parent=43 // pred_fallthru
          _
      $region44: #{tpu_custom_call.1} parent=5 // pred_fallthru
        _
    $region6: #{tpu_custom_call.1} parent=1 // loop_footer
      %s16 = sadd.s32 1, %s12
    $region7: #{tpu_custom_call.1} parent=1 // loop_footer_branch
      %11 = sbr.rel target = $region3
    $region8: #{tpu_custom_call.1} parent=1 // loop_exit
      _
    %4685 = vsyncpa [#allocation5], 1
    %s4686 = scalar_lea.sflag [#allocation5], 1
    %4687 = vsyncpa %s4686, 1

// kernel: tpu_custom_call.1
$region0: #{tpu_custom_call.1}
  #allocation0 [shape = 'u32[]', space=smem, size = 0x4, offset = 0x4, fixed_abs, tag = 'smem constant byte address 0x4 - core index']
  #allocation1 [shape = 'u32[144,128]{1,0:T(1,128)}', space=vmem, size = 0x12000, scoped, tag = 'internal scratch']
  #allocation2 [shape = 'bf16[256,256]{1,0:T(16,128)(2,1)}', space=vmem, size = 0x20000, scoped, tag = 'scratch operand']
  #allocation3 [shape = 'bf16[128,256]{1,0:T(16,128)(2,1)}', space=vmem, size = 0x10000, scoped, tag = 'scratch operand']
  %s0 = inlined_call_operand.vmem [shape: bf16[2,64,256], index: 0, kind: input, shape index: {}]
  %s1 = inlined_call_operand.vmem [shape: bf16[384,64], index: 1, kind: input, shape index: {}]
  %s2 = inlined_call_operand.vmem [shape: bf16[64,128], index: 2, kind: input, shape index: {}]
  %s3 = inlined_call_operand.hbm [shape: f32[2,64,256], index: 3, kind: output, shape index: {}]
  %s4 = sld [smem:[#allocation0]]
  $region49: #{tpu_custom_call.1} parent=0
    _
  %s6 = ssub.s32 1, %s4
  %s7 = scalar_select 0, %s6, %s4
  $region1: #{tpu_custom_call.1} parent=0
    #allocation4 [shape = 'u8[131072]{0}', space=vmem, size = 0x20000, scoped, tag = 'output window, operand 0']
    #allocation5 [shape = 's32[2]{0}', space=sflag, size = 0x8, scoped, tag = 'scoped memory for tpu_custom_call.1']
    %8 = vsyncpa [#allocation5], 0
    %s9 = scalar_lea.sflag [#allocation5], 1
    %10 = vsyncpa %s9, 0
    loop: start=0, step=1, limit=4
    $region2: #{tpu_custom_call.1} parent=1 // loop_pre_header
      _
    $region3: #{tpu_custom_call.1} parent=1 // loop_header
      %s12 = sphi 0, %s16
      %p13 = scmp.ge.s32.totalorder %s12, 4
      %s19 = sphi 0, %s31
      %s20 = sphi 0, %s27
      %s21 = sphi 0, %s19
      %s22 = sphi 0, %s20
      %s23 = sphi 0, %s21
      %s24 = sphi 0, %s22
      %s34 = sphi 0, %s36
      %s37 = sphi 0, %s34
      %s38 = sphi 0, %s37
      %s54 = sphi 0, %s38
      %s58 = sphi 0, %s58
      %s60 = sphi 0, %s58
      %s61 = sphi 0, %s60
      %s75 = sphi 0, %s61
      %s79 = sphi 0, %s79
      %s81 = sphi 0, %s79
      %s82 = sphi 0, %s81
      %s96 = sphi 0, %s82
      %s104 = sphi 0, %s106
      %s107 = sphi 0, %s104
      %s108 = sphi 0, %s107
      %s124 = sphi 0, %s108
    $region4: #{tpu_custom_call.1} parent=1 // loop_header_branch
      %15 = sbr.rel (%p13) target = $region8
    $region5: #{tpu_custom_call.1} parent=1 // loop_body
      %s17 = ssub.s32 %s12, 1
      %s18 = ssub.s32 %s12, 2
      %s25 = sadd.s32 1, %s20
      %p26 = scmp.ge.s32.totalorder %s25, 1
      %s27 = scalar_select %p26, 0, %s25
      %s28 = sadd.s32 1, %s19
      %s29 = scalar_select %p26, %s28, %s19
      %p30 = scmp.ge.s32.totalorder %s29, 2
      %s31 = scalar_select %p30, 0, %s29
      %s32 = ssub.s32 %s19, %s31
      %p33 = scmp.eq.s32.totalorder %s32, 0
      %s35 = sadd.s32 %s34, 1
      %s36 = scalar_select %p33, %s34, %s35
      %p39 = pneg %p33
      %p40 = scmp.eq.s32.totalorder %s12, 1
      %p41 = por %p39, %p40
      %p42 = scmp.ne.s32.totalorder %s34, %s37
      %p43 = scmp.eq.s32.totalorder %s12, 0
      %p44 = por %p42, %p43
      %p45 = scmp.ne.s32.totalorder %s34, %s37
      %p46 = scmp.eq.s32.totalorder %s17, 1
      %p47 = por %p45, %p46
      %p48 = scmp.ne.s32.totalorder %s37, %s38
      %p49 = scmp.eq.s32.totalorder %s17, 0
      %p50 = por %p48, %p49
      %p51 = scmp.ne.s32.totalorder %s37, %s38
      %p52 = scmp.eq.s32.totalorder %s18, 1
      %p53 = por %p51, %p52
      %p55 = scmp.ne.s32.totalorder %s38, %s54
      %p56 = scmp.eq.s32.totalorder %s18, 0
      %p57 = por %p55, %p56
      %s59 = sadd.s32 %s58, 1
      %p62 = scmp.eq.s32.totalorder %s12, 1
      %p63 = scmp.ne.s32.totalorder %s58, %s60
      %p64 = scmp.eq.s32.totalorder %s12, 0
      %p65 = por %p63, %p64
      %p66 = scmp.ne.s32.totalorder %s58, %s60
      %p67 = scmp.eq.s32.totalorder %s17, 1
      %p68 = por %p66, %p67
      %p69 = scmp.ne.s32.totalorder %s60, %s61
      %p70 = scmp.eq.s32.totalorder %s17, 0
      %p71 = por %p69, %p70
      %p72 = scmp.ne.s32.totalorder %s60, %s61
      %p73 = scmp.eq.s32.totalorder %s18, 1
      %p74 = por %p72, %p73
      %p76 = scmp.ne.s32.totalorder %s61, %s75
      %p77 = scmp.eq.s32.totalorder %s18, 0
      %p78 = por %p76, %p77
      %s80 = sadd.s32 %s79, 1
      %p83 = scmp.eq.s32.totalorder %s12, 1
      %p84 = scmp.ne.s32.totalorder %s79, %s81
      %p85 = scmp.eq.s32.totalorder %s12, 0
      %p86 = por %p84, %p85
      %p87 = scmp.ne.s32.totalorder %s79, %s81
      %p88 = scmp.eq.s32.totalorder %s17, 1
      %p89 = por %p87, %p88
      %p90 = scmp.ne.s32.totalorder %s81, %s82
      %p91 = scmp.eq.s32.totalorder %s17, 0
      %p92 = por %p90, %p91
      %p93 = scmp.ne.s32.totalorder %s81, %s82
      %p94 = scmp.eq.s32.totalorder %s18, 1
      %p95 = por %p93, %p94
      %p97 = scmp.ne.s32.totalorder %s82, %s96
      %p98 = scmp.eq.s32.totalorder %s18, 0
      %p99 = por %p97, %p98
      %s100 = ssub.s32 %s19, %s31
      %s101 = ssub.s32 %s20, %s27
      %s102 = sor.u32 %s100, %s101
      %p103 = scmp.eq.s32.totalorder %s102, 0
      %s105 = sadd.s32 %s104, 1
      %s106 = scalar_select %p103, %s104, %s105
      %p109 = pneg %p103
      %p110 = scmp.eq.s32.totalorder %s12, 1
      %p111 = por %p109, %p110
      %p112 = scmp.ne.s32.totalorder %s104, %s107
      %p113 = scmp.eq.s32.totalorder %s12, 0
      %p114 = por %p112, %p113
      %p115 = scmp.ne.s32.totalorder %s104, %s107
      %p116 = scmp.eq.s32.totalorder %s17, 1
      %p117 = por %p115, %p116
      %p118 = scmp.ne.s32.totalorder %s107, %s108
      %p119 = scmp.eq.s32.totalorder %s17, 0
      %p120 = por %p118, %p119
      %p121 = scmp.ne.s32.totalorder %s107, %s108
      %p122 = scmp.eq.s32.totalorder %s18, 1
      %p123 = por %p121, %p122
      %p125 = scmp.ne.s32.totalorder %s108, %s124
      %p126 = scmp.eq.s32.totalorder %s18, 0
      %p127 = por %p125, %p126
      %p128 = scmp.le.s32.totalorder 1, %s12
      %p129 = scmp.lt.s32.totalorder %s12, 3
      %p130 = pnand %p128, %p129
      %p131 = pneg %p130
      // Predicated region
      $region9: #{tpu_custom_call.1} parent=5 // pred_check
        _
      $region10: #{tpu_custom_call.1} parent=5 // pred_check_branch
        %133 = sbr.rel (%p130) target = $region12
      $region11: #{tpu_custom_call.1} parent=5 // pred_region
        %s134 = ssub.s32 %s12, 1
        // Predicated region
        $region13: #{tpu_custom_call.1} parent=11 // pred_check
          %p135 = pneg %p71
        $region14: #{tpu_custom_call.1} parent=11 // pred_check_branch
          %137 = sbr.rel (%p135) target = $region16
        $region15: #{tpu_custom_call.1} parent=11 // pred_region
          _
        $region16: #{tpu_custom_call.1} parent=11 // pred_fallthru
          _
        // Predicated region
        $region17: #{tpu_custom_call.1} parent=11 // pred_check
          %p138 = pneg %p92
        $region18: #{tpu_custom_call.1} parent=11 // pred_check_branch
          %140 = sbr.rel (%p138) target = $region20
        $region19: #{tpu_custom_call.1} parent=11 // pred_region
          _
        $region20: #{tpu_custom_call.1} parent=11 // pred_fallthru
          _
      $region12: #{tpu_custom_call.1} parent=5 // pred_fallthru
        _
      %p141 = scmp.lt.s32.totalorder %s12, 2
      // Predicated region
      $region21: #{tpu_custom_call.1} parent=5 // pred_check
        %p142 = pneg %p141
      $region22: #{tpu_custom_call.1} parent=5 // pred_check_branch
        %144 = sbr.rel (%p142) target = $region24
      $region23: #{tpu_custom_call.1} parent=5 // pred_region
        // Predicated region
        $region25: #{tpu_custom_call.1} parent=23 // pred_check
          %p145 = pneg %p44
        $region26: #{tpu_custom_call.1} parent=23 // pred_check_branch
          %147 = sbr.rel (%p145) target = $region28
        $region27: #{tpu_custom_call.1} parent=23 // pred_region
          %p148 = scmp.lt.s32.totalorder %s19, 1
          %s149 = scalar_select %p148, %s19, 1
          %s150 = smul.addr %s149, 16
          %s151 = smul.addr %s150, 4
          %s152 = scalar_lea.vmem %s0, %s151
        $region28: #{tpu_custom_call.1} parent=23 // pred_fallthru
          _
      $region24: #{tpu_custom_call.1} parent=5 // pred_fallthru
        _
      %p153 = scmp.le.s32.totalorder 1, %s12
      %p154 = scmp.lt.s32.totalorder %s12, 3
      %p155 = pnand %p153, %p154
      %p156 = pneg %p155
      // Predicated region
      $region29: #{tpu_custom_call.1} parent=5 // pred_check
        _
      $region30: #{tpu_custom_call.1} parent=5 // pred_check_branch
        %158 = sbr.rel (%p155) target = $region32
      $region31: #{tpu_custom_call.1} parent=5 // pred_region
        %s159 = ssub.s32 %s12, 1
        %p160 = scmp.lt.s32.totalorder %s21, 1
        %s161 = scalar_select %p160, %s21, 1
        %s162 = smul.addr %s161, 16
        %s163 = smul.addr %s162, 4
        %s164 = scalar_lea.vmem %s0, %s163
        %p165 = pneg %p50
        %p166 = pneg %p47
        %p167 = pneg %p71
        %p168 = pneg %p68
        %p169 = pneg %p92
        %p170 = pneg %p89
        %p171 = pneg %p120
        %p172 = pneg %p117
        %s173 = sand.u32 %s107, 1
        %s174 = scalar_lea.sflag [#allocation5], %s173
        %s175 = sand.u32 %s107, 1
        %s176 = smul.addr %s175, 128
        %s177 = scalar_lea.vmem [#allocation4], %s176
        %p178 = scmp.lt.s32.totalorder %s21, 1
        %s179 = scalar_select %p178, %s21, 1
        %s180 = smul.addr %s179, 16
        %s181 = smul.addr %s180, 4
        %s182 = scalar_lea.vmem %s0, %s181
        %s183 = smul.u32 2, %s22
        %p185 = scmp.eq.s32.totalorder %s22, 0
        // Predicated region
        $region33: #{tpu_custom_call.1} parent=31 // pred_check
          %p186 = pneg %p185
        $region34: #{tpu_custom_call.1} parent=31 // pred_check_branch
          %188 = sbr.rel (%p186) target = $region36
        $region35: #{tpu_custom_call.1} parent=31 // pred_region
          %v189 = vld [vmem:[%s1 + $0x40] sm:$0xf]
          %v190 = vld [vmem:[%s1 + $0x44] sm:$0xf]
          %v191 = vld [vmem:[%s1 + $0x48] sm:$0xf]
          %v192 = vld [vmem:[%s1 + $0x4c] sm:$0xf]
          %v193 = vld [vmem:[%s1 + $0x50] sm:$0xf]
          %v194 = vld [vmem:[%s1 + $0x54] sm:$0xf]
          %v195 = vld [vmem:[%s1 + $0x58] sm:$0xf]
          %v196 = vld [vmem:[%s1 + $0x5c] sm:$0xf]
          %v197 = vld [vmem:[%s1 + $0x60] sm:$0xf]
          %v198 = vld [vmem:[%s1 + $0x64] sm:$0xf]
          %v199 = vld [vmem:[%s1 + $0x68] sm:$0xf]
          %v200 = vld [vmem:[%s1 + $0x6c] sm:$0xf]
          %v201 = vld [vmem:[%s1 + $0x70] sm:$0xf]
          %v202 = vld [vmem:[%s1 + $0x74] sm:$0xf]
          %v203 = vld [vmem:[%s1 + $0x78] sm:$0xf]
          %v204 = vld [vmem:[%s1 + $0x7c] sm:$0xf]
          %v205 = vld [vmem:[%s1 + $0x80] sm:$0xf]
          %v206 = vld [vmem:[%s1 + $0x84] sm:$0xf]
          %v207 = vld [vmem:[%s1 + $0x88] sm:$0xf]
          %v208 = vld [vmem:[%s1 + $0x8c] sm:$0xf]
          %v209 = vld [vmem:[%s1 + $0x90] sm:$0xf]
          %v210 = vld [vmem:[%s1 + $0x94] sm:$0xf]
          %v211 = vld [vmem:[%s1 + $0x98] sm:$0xf]
          %v212 = vld [vmem:[%s1 + $0x9c] sm:$0xf]
          %v213 = vld [vmem:[%s1 + $0xa0] sm:$0xf]
          %v214 = vld [vmem:[%s1 + $0xa4] sm:$0xf]
          %v215 = vld [vmem:[%s1 + $0xa8] sm:$0xf]
          %v216 = vld [vmem:[%s1 + $0xac] sm:$0xf]
          %v217 = vld [vmem:[%s1 + $0xb0] sm:$0xf]
          %v218 = vld [vmem:[%s1 + $0xb4] sm:$0xf]
          %v219 = vld [vmem:[%s1 + $0xb8] sm:$0xf]
          %v220 = vld [vmem:[%s1 + $0xbc] sm:$0xf]
          %v221 = vld [vmem:[%s182] sm:$0xff]
          %v222 = vld [vmem:[%s182 + $0x8] sm:$0xff]
          %v223 = vld [vmem:[%s182 + $0x10] sm:$0xff]
          %v224 = vld [vmem:[%s182 + $0x18] sm:$0xff]
          %v225 = vld [vmem:[%s182 + $0x20] sm:$0xff]
          %v226 = vld [vmem:[%s182 + $0x28] sm:$0xff]
          %v227 = vld [vmem:[%s182 + $0x30] sm:$0xff]
          %v228 = vld [vmem:[%s182 + $0x38] sm:$0xff]
          %v261 = vunpack.c.l.b16 %v189
          %v262 = vunpack.c.l.b16 %v190
          %v263 = vunpack.c.l.b16 %v191
          %v264 = vunpack.c.l.b16 %v192
          %v265 = vunpack.c.l.b16 %v193
          %v266 = vunpack.c.l.b16 %v194
          %v267 = vunpack.c.l.b16 %v195
          %v268 = vunpack.c.l.b16 %v196
          %v269 = vunpack.c.l.b16 %v197
          %v270 = vunpack.c.l.b16 %v198
          %v271 = vunpack.c.l.b16 %v199
          %v272 = vunpack.c.l.b16 %v200
          %v273 = vunpack.c.l.b16 %v201
          %v274 = vunpack.c.l.b16 %v202
          %v275 = vunpack.c.l.b16 %v203
          %v276 = vunpack.c.l.b16 %v204
          %v277 = vunpack.c.l.b16 %v205
          %v278 = vunpack.c.l.b16 %v206
          %v279 = vunpack.c.l.b16 %v207
          %v280 = vunpack.c.l.b16 %v208
          %v281 = vunpack.c.l.b16 %v209
          %v282 = vunpack.c.l.b16 %v210
          %v283 = vunpack.c.l.b16 %v211
          %v284 = vunpack.c.l.b16 %v212
          %v285 = vunpack.c.l.b16 %v213
          %v286 = vunpack.c.l.b16 %v214
          %v287 = vunpack.c.l.b16 %v215
          %v288 = vunpack.c.l.b16 %v216
          %v289 = vunpack.c.l.b16 %v217
          %v290 = vunpack.c.l.b16 %v218
          %v291 = vunpack.c.l.b16 %v219
          %v292 = vunpack.c.l.b16 %v220
          %v293 = vpack.c.b16 %v262, %v261
          %v294 = vpack.c.b16 %v264, %v263
          %v295 = vpack.c.b16 %v266, %v265
          %v296 = vpack.c.b16 %v268, %v267
          %v297 = vpack.c.b16 %v270, %v269
          %v298 = vpack.c.b16 %v272, %v271
          %v299 = vpack.c.b16 %v274, %v273
          %v300 = vpack.c.b16 %v276, %v275
          %v301 = vpack.c.b16 %v278, %v277
          %v302 = vpack.c.b16 %v280, %v279
          %v303 = vpack.c.b16 %v282, %v281
          %v304 = vpack.c.b16 %v284, %v283
          %v305 = vpack.c.b16 %v286, %v285
          %v306 = vpack.c.b16 %v288, %v287
          %v307 = vpack.c.b16 %v290, %v289
          %v308 = vpack.c.b16 %v292, %v291
          %v317 = vunpack.c.l.b16 %v221
          %v318 = vunpack.c.h.b16 %v221
          %v319 = vunpack.c.l.b16 %v222
          %v320 = vunpack.c.h.b16 %v222
          %v321 = vunpack.c.l.b16 %v223
          %v322 = vunpack.c.h.b16 %v223
          %v323 = vunpack.c.l.b16 %v224
          %v324 = vunpack.c.h.b16 %v224
          %v325 = vunpack.c.l.b16 %v225
          %v326 = vunpack.c.h.b16 %v225
          %v327 = vunpack.c.l.b16 %v226
          %v328 = vunpack.c.h.b16 %v226
          %v329 = vunpack.c.l.b16 %v227
          %v330 = vunpack.c.h.b16 %v227
          %v331 = vunpack.c.l.b16 %v228
          %v332 = vunpack.c.h.b16 %v228
          %v333 = vpack.c.b16 %v319, %v317
          %v334 = vpack.c.b16 %v320, %v318
          %v335 = vpack.c.b16 %v323, %v321
          %v336 = vpack.c.b16 %v324, %v322
          %v337 = vpack.c.b16 %v327, %v325
          %v338 = vpack.c.b16 %v328, %v326
          %v339 = vpack.c.b16 %v331, %v329
          %v340 = vpack.c.b16 %v332, %v330
          %vm349 = vcmask 523264
          %v351 = vsel %vm349, %v293, 0
          %v354 = vsel %vm349, %v294, 0
          %v357 = vsel %vm349, %v295, 0
          %v360 = vsel %vm349, %v296, 0
          %v363 = vsel %vm349, %v297, 0
          %v366 = vsel %vm349, %v298, 0
          %v369 = vsel %vm349, %v299, 0
          %v372 = vsel %vm349, %v300, 0
          %v375 = vsel %vm349, %v301, 0
          %v378 = vsel %vm349, %v302, 0
          %v381 = vsel %vm349, %v303, 0
          %v384 = vsel %vm349, %v304, 0
          %v387 = vsel %vm349, %v305, 0
          %v390 = vsel %vm349, %v306, 0
          %v393 = vsel %vm349, %v307, 0
          %v396 = vsel %vm349, %v308, 0
          %398 = vmatprep.subr.bf16.mxu0 %v334
          %399 = vmatpush1.bf16.msra.mxu0 %v333
          %400 = vmatprep.subr.bf16.mxu0 %v336
          %401 = vmatpush1.bf16.msra.mxu0 %v335
          %402 = vmatprep.subr.bf16.mxu0 %v338
          %403 = vmatpush1.bf16.msra.mxu0 %v337
          %404 = vmatprep.subr.bf16.mxu0 %v340
          %405 = vmatpush1.bf16.msra.mxu0 %v339
          %406 = vmatprep.subr.bf16.mxu0 0
          %407 = vmatpush1.bf16.msra.mxu0 0
          %408 = vmatprep.subr.bf16.mxu0 0
          %409 = vmatpush1.bf16.msra.mxu0 0
          %410 = vmatprep.subr.bf16.mxu0 0
          %411 = vmatpush1.bf16.msra.mxu0 0
          %412 = vmatprep.subr.bf16.mxu0 0
          %413 = vmatpush1.bf16.msra.mxu0 0
          %414 = vmatprep.subr.bf16.mxu0 0
          %415 = vmatpush1.bf16.msra.mxu0 0
          %416 = vmatprep.subr.bf16.mxu0 0
          %417 = vmatpush1.bf16.msra.mxu0 0
          %418 = vmatprep.subr.bf16.mxu0 0
          %419 = vmatpush1.bf16.msra.mxu0 0
          %420 = vmatprep.subr.bf16.mxu0 0
          %421 = vmatpush1.bf16.msra.mxu0 0
          %422 = vmatprep.subr.bf16.mxu0 0
          %423 = vmatpush1.bf16.msra.mxu0 0
          %424 = vmatprep.subr.bf16.mxu0 0
          %425 = vmatpush1.bf16.msra.mxu0 0
          %426 = vmatprep.subr.bf16.mxu0 0
          %427 = vmatpush1.bf16.msra.mxu0 0
          %428 = vmatprep.subr.bf16.mxu0 0
          %429 = vmatpush1.bf16.msra.mxu0 0
          %430 = vmatprep.mubr.bf16.mxu0 0
          %431 = vmatmul.mubr.bf16.gmra.mrb[0].mxu0 %v351
          %v432 = vpop.f32.mrb[0].mxu0
          %v433 = vadd.f32 0.0, %v432
          %v434 = vpop.f32.mrb[0].mxu0
          %v435 = vadd.f32 0.0, %v434
          %v436 = vpop.f32.mrb[0].mxu0
          %v437 = vadd.f32 0.0, %v436
          %v438 = vpop.f32.mrb[0].mxu0
          %v439 = vadd.f32 0.0, %v438
          %440 = vmatprep.mubr.bf16.mxu0 0
          %441 = vmatmul.mubr.bf16.gmra.mrb[0].mxu0 %v354
          %v442 = vpop.f32.mrb[0].mxu0
          %v443 = vadd.f32 0.0, %v442
          %v444 = vpop.f32.mrb[0].mxu0
          %v445 = vadd.f32 0.0, %v444
          %v446 = vpop.f32.mrb[0].mxu0
          %v447 = vadd.f32 0.0, %v446
          %v448 = vpop.f32.mrb[0].mxu0
          %v449 = vadd.f32 0.0, %v448
          %450 = vmatprep.mubr.bf16.mxu0 0
          %451 = vmatmul.mubr.bf16.gmra.mrb[0].mxu0 %v357
          %v452 = vpop.f32.mrb[0].mxu0
          %v453 = vadd.f32 0.0, %v452
          %v454 = vpop.f32.mrb[0].mxu0
          %v455 = vadd.f32 0.0, %v454
          %v456 = vpop.f32.mrb[0].mxu0
          %v457 = vadd.f32 0.0, %v456
          %v458 = vpop.f32.mrb[0].mxu0
          %v459 = vadd.f32 0.0, %v458
          %460 = vmatprep.mubr.bf16.mxu0 0
          %461 = vmatmul.mubr.bf16.gmra.mrb[0].mxu0 %v360
          %v462 = vpop.f32.mrb[0].mxu0
          %v463 = vadd.f32 0.0, %v462
          %v464 = vpop.f32.mrb[0].mxu0
          %v465 = vadd.f32 0.0, %v464
          %v466 = vpop.f32.mrb[0].mxu0
          %v467 = vadd.f32 0.0, %v466
          %v468 = vpop.f32.mrb[0].mxu0
          %v469 = vadd.f32 0.0, %v468
          %470 = vmatprep.mubr.bf16.mxu0 0
          %471 = vmatmul.mubr.bf16.gmra.mrb[0].mxu0 %v363
          %v472 = vpop.f32.mrb[0].mxu0
          %v473 = vadd.f32 0.0, %v472
          %v474 = vpop.f32.mrb[0].mxu0
          %v475 = vadd.f32 0.0, %v474
          %v476 = vpop.f32.mrb[0].mxu0
          %v477 = vadd.f32 0.0, %v476
          %v478 = vpop.f32.mrb[0].mxu0
          %v479 = vadd.f32 0.0, %v478
          %480 = vmatprep.mubr.bf16.mxu0 0
          %481 = vmatmul.mubr.bf16.gmra.mrb[0].mxu0 %v366
          %v482 = vpop.f32.mrb[0].mxu0
          %v483 = vadd.f32 0.0, %v482
          %v484 = vpop.f32.mrb[0].mxu0
          %v485 = vadd.f32 0.0, %v484
          %v486 = vpop.f32.mrb[0].mxu0
          %v487 = vadd.f32 0.0, %v486
          %v488 = vpop.f32.mrb[0].mxu0
          %v489 = vadd.f32 0.0, %v488
          %490 = vmatprep.mubr.bf16.mxu0 0
          %491 = vmatmul.mubr.bf16.gmra.mrb[0].mxu0 %v369
          %v492 = vpop.f32.mrb[0].mxu0
          %v493 = vadd.f32 0.0, %v492
          %v494 = vpop.f32.mrb[0].mxu0
          %v495 = vadd.f32 0.0, %v494
          %v496 = vpop.f32.mrb[0].mxu0
          %v497 = vadd.f32 0.0, %v496
          %v498 = vpop.f32.mrb[0].mxu0
          %v499 = vadd.f32 0.0, %v498
          %500 = vmatprep.mubr.bf16.mxu0 0
          %501 = vmatmul.mubr.bf16.gmra.mrb[0].mxu0 %v372
          %v502 = vpop.f32.mrb[0].mxu0
          %v503 = vadd.f32 0.0, %v502
          %v504 = vpop.f32.mrb[0].mxu0
          %v505 = vadd.f32 0.0, %v504
          %v506 = vpop.f32.mrb[0].mxu0
          %v507 = vadd.f32 0.0, %v506
          %v508 = vpop.f32.mrb[0].mxu0
          %v509 = vadd.f32 0.0, %v508
          %510 = vmatprep.mubr.bf16.mxu0 0
          %511 = vmatmul.mubr.bf16.gmra.mrb[0].mxu0 %v375
          %v512 = vpop.f32.mrb[0].mxu0
          %v513 = vadd.f32 0.0, %v512
          %v514 = vpop.f32.mrb[0].mxu0
          %v515 = vadd.f32 0.0, %v514
          %v516 = vpop.f32.mrb[0].mxu0
          %v517 = vadd.f32 0.0, %v516
          %v518 = vpop.f32.mrb[0].mxu0
          %v519 = vadd.f32 0.0, %v518
          %520 = vmatprep.mubr.bf16.mxu0 0
          %521 = vmatmul.mubr.bf16.gmra.mrb[0].mxu0 %v378
          %v522 = vpop.f32.mrb[0].mxu0
          %v523 = vadd.f32 0.0, %v522
          %v524 = vpop.f32.mrb[0].mxu0
          %v525 = vadd.f32 0.0, %v524
          %v526 = vpop.f32.mrb[0].mxu0
          %v527 = vadd.f32 0.0, %v526
          %v528 = vpop.f32.mrb[0].mxu0
          %v529 = vadd.f32 0.0, %v528
          %530 = vmatprep.mubr.bf16.mxu0 0
          %531 = vmatmul.mubr.bf16.gmra.mrb[0].mxu0 %v381
          %v532 = vpop.f32.mrb[0].mxu0
          %v533 = vadd.f32 0.0, %v532
          %v534 = vpop.f32.mrb[0].mxu0
          %v535 = vadd.f32 0.0, %v534
          %v536 = vpop.f32.mrb[0].mxu0
          %v537 = vadd.f32 0.0, %v536
          %v538 = vpop.f32.mrb[0].mxu0
          %v539 = vadd.f32 0.0, %v538
          %540 = vmatprep.mubr.bf16.mxu0 0
          %541 = vmatmul.mubr.bf16.gmra.mrb[0].mxu0 %v384
          %v542 = vpop.f32.mrb[0].mxu0
          %v543 = vadd.f32 0.0, %v542
          %v544 = vpop.f32.mrb[0].mxu0
          %v545 = vadd.f32 0.0, %v544
          %v546 = vpop.f32.mrb[0].mxu0
          %v547 = vadd.f32 0.0, %v546
          %v548 = vpop.f32.mrb[0].mxu0
          %v549 = vadd.f32 0.0, %v548
          %550 = vmatprep.mubr.bf16.mxu0 0
          %551 = vmatmul.mubr.bf16.gmra.mrb[0].mxu0 %v387
          %v552 = vpop.f32.mrb[0].mxu0
          %v553 = vadd.f32 0.0, %v552
          %v554 = vpop.f32.mrb[0].mxu0
          %v555 = vadd.f32 0.0, %v554
          %v556 = vpop.f32.mrb[0].mxu0
          %v557 = vadd.f32 0.0, %v556
          %v558 = vpop.f32.mrb[0].mxu0
          %v559 = vadd.f32 0.0, %v558
          %560 = vmatprep.mubr.bf16.mxu0 0
          %561 = vmatmul.mubr.bf16.gmra.mrb[0].mxu0 %v390
          %v562 = vpop.f32.mrb[0].mxu0
          %v563 = vadd.f32 0.0, %v562
          %v564 = vpop.f32.mrb[0].mxu0
          %v565 = vadd.f32 0.0, %v564
          %v566 = vpop.f32.mrb[0].mxu0
          %v567 = vadd.f32 0.0, %v566
          %v568 = vpop.f32.mrb[0].mxu0
          %v569 = vadd.f32 0.0, %v568
          %570 = vmatprep.mubr.bf16.mxu0 0
          %571 = vmatmul.mubr.bf16.gmra.mrb[0].mxu0 %v393
          %v572 = vpop.f32.mrb[0].mxu0
          %v573 = vadd.f32 0.0, %v572
          %v574 = vpop.f32.mrb[0].mxu0
          %v575 = vadd.f32 0.0, %v574
          %v576 = vpop.f32.mrb[0].mxu0
          %v577 = vadd.f32 0.0, %v576
          %v578 = vpop.f32.mrb[0].mxu0
          %v579 = vadd.f32 0.0, %v578
          %580 = vmatprep.mubr.bf16.mxu0 0
          %581 = vmatmul.mubr.bf16.gmra.mrb[0].mxu0 %v396
          %v582 = vpop.f32.mrb[0].mxu0
          %v583 = vadd.f32 0.0, %v582
          %v584 = vpop.f32.mrb[0].mxu0
          %v585 = vadd.f32 0.0, %v584
          %v586 = vpop.f32.mrb[0].mxu0
          %v587 = vadd.f32 0.0, %v586
          %v588 = vpop.f32.mrb[0].mxu0
          %v589 = vadd.f32 0.0, %v588
          %590 = vdwg.mxu0
          %v591 = vpack.c.bf16 %v437, %v433
          %v592 = vpack.c.bf16 %v439, %v435
          %v593 = vpack.c.bf16 %v447, %v443
          %v594 = vpack.c.bf16 %v449, %v445
          %v595 = vpack.c.bf16 %v457, %v453
          %v596 = vpack.c.bf16 %v459, %v455
          %v597 = vpack.c.bf16 %v467, %v463
          %v598 = vpack.c.bf16 %v469, %v465
          %v599 = vpack.c.bf16 %v477, %v473
          %v600 = vpack.c.bf16 %v479, %v475
          %v601 = vpack.c.bf16 %v487, %v483
          %v602 = vpack.c.bf16 %v489, %v485
          %v603 = vpack.c.bf16 %v497, %v493
          %v604 = vpack.c.bf16 %v499, %v495
          %v605 = vpack.c.bf16 %v507, %v503
          %v606 = vpack.c.bf16 %v509, %v505
          %v607 = vpack.c.bf16 %v517, %v513
          %v608 = vpack.c.bf16 %v519, %v515
          %v609 = vpack.c.bf16 %v527, %v523
          %v610 = vpack.c.bf16 %v529, %v525
          %v611 = vpack.c.bf16 %v537, %v533
          %v612 = vpack.c.bf16 %v539, %v535
          %v613 = vpack.c.bf16 %v547, %v543
          %v614 = vpack.c.bf16 %v549, %v545
          %v615 = vpack.c.bf16 %v557, %v553
          %v616 = vpack.c.bf16 %v559, %v555
          %v617 = vpack.c.bf16 %v567, %v563
          %v618 = vpack.c.bf16 %v569, %v565
          %v619 = vpack.c.bf16 %v577, %v573
          %v620 = vpack.c.bf16 %v579, %v575
          %v621 = vpack.c.bf16 %v587, %v583
          %v622 = vpack.c.bf16 %v589, %v585
          %623 = vst [vmem:[#allocation2] sm:$0xff] %v591
          %624 = vst [vmem:[#allocation2 + $0x8] sm:$0xff] %v592
          %625 = vst [vmem:[#allocation2 + $0x10] sm:$0xff] %v593
          %626 = vst [vmem:[#allocation2 + $0x18] sm:$0xff] %v594
          %627 = vst [vmem:[#allocation2 + $0x20] sm:$0xff] %v595
          %628 = vst [vmem:[#allocation2 + $0x28] sm:$0xff] %v596
          %629 = vst [vmem:[#allocation2 + $0x30] sm:$0xff] %v597
          %630 = vst [vmem:[#allocation2 + $0x38] sm:$0xff] %v598
          %631 = vst [vmem:[#allocation2 + $0x40] sm:$0xff] %v599
          %632 = vst [vmem:[#allocation2 + $0x48] sm:$0xff] %v600
          %633 = vst [vmem:[#allocation2 + $0x50] sm:$0xff] %v601
          %634 = vst [vmem:[#allocation2 + $0x58] sm:$0xff] %v602
          %635 = vst [vmem:[#allocation2 + $0x60] sm:$0xff] %v603
          %636 = vst [vmem:[#allocation2 + $0x68] sm:$0xff] %v604
          %637 = vst [vmem:[#allocation2 + $0x70] sm:$0xff] %v605
          %638 = vst [vmem:[#allocation2 + $0x78] sm:$0xff] %v606
          %639 = vst [vmem:[#allocation2 + $0x80] sm:$0xff] %v607
          %640 = vst [vmem:[#allocation2 + $0x88] sm:$0xff] %v608
          %641 = vst [vmem:[#allocation2 + $0x90] sm:$0xff] %v609
          %642 = vst [vmem:[#allocation2 + $0x98] sm:$0xff] %v610
          %643 = vst [vmem:[#allocation2 + $0xa0] sm:$0xff] %v611
          %644 = vst [vmem:[#allocation2 + $0xa8] sm:$0xff] %v612
          %645 = vst [vmem:[#allocation2 + $0xb0] sm:$0xff] %v613
          %646 = vst [vmem:[#allocation2 + $0xb8] sm:$0xff] %v614
          %647 = vst [vmem:[#allocation2 + $0xc0] sm:$0xff] %v615
          %648 = vst [vmem:[#allocation2 + $0xc8] sm:$0xff] %v616
          %649 = vst [vmem:[#allocation2 + $0xd0] sm:$0xff] %v617
          %650 = vst [vmem:[#allocation2 + $0xd8] sm:$0xff] %v618
          %651 = vst [vmem:[#allocation2 + $0xe0] sm:$0xff] %v619
          %652 = vst [vmem:[#allocation2 + $0xe8] sm:$0xff] %v620
          %653 = vst [vmem:[#allocation2 + $0xf0] sm:$0xff] %v621
          %654 = vst [vmem:[#allocation2 + $0xf8] sm:$0xff] %v622
        $region36: #{tpu_custom_call.1} parent=31 // pred_fallthru
          _
        %s655 = smul.u32 %s22, 256
        %s656 = sshra.s32 %s655, 7
        %s657 = sand.u32 %s655, 127
        %s658 = smul.addr %s656, 4
        %s659 = scalar_lea.vmem %s182, %s658
        %v660 = vld [vmem:[%s659] sm:$0xff]
        %v661 = vld [vmem:[%s659 + $0x8] sm:$0xff]
        %v662 = vld [vmem:[%s659 + $0x10] sm:$0xff]
        %v663 = vld [vmem:[%s659 + $0x18] sm:$0xff]
        %v664 = vld [vmem:[%s659 + $0x20] sm:$0xff]
        %v665 = vld [vmem:[%s659 + $0x28] sm:$0xff]
        %v666 = vld [vmem:[%s659 + $0x30] sm:$0xff]
        %v667 = vld [vmem:[%s659 + $0x38] sm:$0xff]
        %v668 = vld [vmem:[%s1] sm:$0xf]
        %v669 = vld [vmem:[%s1 + $0x4] sm:$0xf]
        %v670 = vld [vmem:[%s1 + $0x8] sm:$0xf]
        %v671 = vld [vmem:[%s1 + $0xc] sm:$0xf]
        %v672 = vld [vmem:[%s1 + $0x10] sm:$0xf]
        %v673 = vld [vmem:[%s1 + $0x14] sm:$0xf]
        %v674 = vld [vmem:[%s1 + $0x18] sm:$0xf]
        %v675 = vld [vmem:[%s1 + $0x1c] sm:$0xf]
        %v676 = vld [vmem:[%s1 + $0x20] sm:$0xf]
        %v677 = vld [vmem:[%s1 + $0x24] sm:$0xf]
        %v678 = vld [vmem:[%s1 + $0x28] sm:$0xf]
        %v679 = vld [vmem:[%s1 + $0x2c] sm:$0xf]
        %v680 = vld [vmem:[%s1 + $0x30] sm:$0xf]
        %v681 = vld [vmem:[%s1 + $0x34] sm:$0xf]
        %v682 = vld [vmem:[%s1 + $0x38] sm:$0xf]
        %v683 = vld [vmem:[%s1 + $0x3c] sm:$0xf]
        %v700 = vunpack.c.l.b16 %v668
        %v701 = vunpack.c.l.b16 %v669
        %v702 = vunpack.c.l.b16 %v670
        %v703 = vunpack.c.l.b16 %v671
        %v704 = vunpack.c.l.b16 %v672
        %v705 = vunpack.c.l.b16 %v673
        %v706 = vunpack.c.l.b16 %v674
        %v707 = vunpack.c.l.b16 %v675
        %v708 = vunpack.c.l.b16 %v676
        %v709 = vunpack.c.l.b16 %v677
        %v710 = vunpack.c.l.b16 %v678
        %v711 = vunpack.c.l.b16 %v679
        %v712 = vunpack.c.l.b16 %v680
        %v713 = vunpack.c.l.b16 %v681
        %v714 = vunpack.c.l.b16 %v682
        %v715 = vunpack.c.l.b16 %v683
        %v716 = vpack.c.b16 %v701, %v700
        %v717 = vpack.c.b16 %v703, %v702
        %v718 = vpack.c.b16 %v705, %v704
        %v719 = vpack.c.b16 %v707, %v706
        %v720 = vpack.c.b16 %v709, %v708
        %v721 = vpack.c.b16 %v711, %v710
        %v722 = vpack.c.b16 %v713, %v712
        %v723 = vpack.c.b16 %v715, %v714
        %v732 = vunpack.c.l.b16 %v660
        %v733 = vunpack.c.h.b16 %v660
        %v734 = vunpack.c.l.b16 %v661
        %v735 = vunpack.c.h.b16 %v661
        %v736 = vunpack.c.l.b16 %v662
        %v737 = vunpack.c.h.b16 %v662
        %v738 = vunpack.c.l.b16 %v663
        %v739 = vunpack.c.h.b16 %v663
        %v740 = vunpack.c.l.b16 %v664
        %v741 = vunpack.c.h.b16 %v664
        %v742 = vunpack.c.l.b16 %v665
        %v743 = vunpack.c.h.b16 %v665
        %v744 = vunpack.c.l.b16 %v666
        %v745 = vunpack.c.h.b16 %v666
        %v746 = vunpack.c.l.b16 %v667
        %v747 = vunpack.c.h.b16 %v667
        %v748 = vpack.c.b16 %v734, %v732
        %v749 = vpack.c.b16 %v735, %v733
        %v750 = vpack.c.b16 %v738, %v736
        %v751 = vpack.c.b16 %v739, %v737
        %v752 = vpack.c.b16 %v742, %v740
        %v753 = vpack.c.b16 %v743, %v741
        %v754 = vpack.c.b16 %v746, %v744
        %v755 = vpack.c.b16 %v747, %v745
        %vm764 = vcmask 523264
        %v766 = vsel %vm764, %v716, 0
        %v769 = vsel %vm764, %v717, 0
        %v772 = vsel %vm764, %v718, 0
        %v775 = vsel %vm764, %v719, 0
        %v778 = vsel %vm764, %v720, 0
        %v781 = vsel %vm764, %v721, 0
        %v784 = vsel %vm764, %v722, 0
        %v787 = vsel %vm764, %v723, 0
        %789 = vmatprep.subr.bf16.mxu0 %v749
        %790 = vmatpush1.bf16.msra.mxu0 %v748
        %791 = vmatprep.subr.bf16.mxu0 %v751
        %792 = vmatpush1.bf16.msra.mxu0 %v750
        %793 = vmatprep.subr.bf16.mxu0 %v753
        %794 = vmatpush1.bf16.msra.mxu0 %v752
        %795 = vmatprep.subr.bf16.mxu0 %v755
        %796 = vmatpush1.bf16.msra.mxu0 %v754
        %797 = vmatprep.subr.bf16.mxu0 0
        %798 = vmatpush1.bf16.msra.mxu0 0
        %799 = vmatprep.subr.bf16.mxu0 0
        %800 = vmatpush1.bf16.msra.mxu0 0
        %801 = vmatprep.subr.bf16.mxu0 0
        %802 = vmatpush1.bf16.msra.mxu0 0
        %803 = vmatprep.subr.bf16.mxu0 0
        %804 = vmatpush1.bf16.msra.mxu0 0
        %805 = vmatprep.subr.bf16.mxu0 0
        %806 = vmatpush1.bf16.msra.mxu0 0
        %807 = vmatprep.subr.bf16.mxu0 0
        %808 = vmatpush1.bf16.msra.mxu0 0
        %809 = vmatprep.subr.bf16.mxu0 0
        %810 = vmatpush1.bf16.msra.mxu0 0
        %811 = vmatprep.subr.bf16.mxu0 0
        %812 = vmatpush1.bf16.msra.mxu0 0
        %813 = vmatprep.subr.bf16.mxu0 0
        %814 = vmatpush1.bf16.msra.mxu0 0
        %815 = vmatprep.subr.bf16.mxu0 0
        %816 = vmatpush1.bf16.msra.mxu0 0
        %817 = vmatprep.subr.bf16.mxu0 0
        %818 = vmatpush1.bf16.msra.mxu0 0
        %819 = vmatprep.subr.bf16.mxu0 0
        %820 = vmatpush1.bf16.msra.mxu0 0
        %821 = vmatprep.mubr.bf16.mxu0 0
        %822 = vmatmul.mubr.bf16.gmra.mrb[0].mxu0 %v766
        %v823 = vpop.f32.mrb[0].mxu0
        %v824 = vadd.f32 0.0, %v823
        %v825 = vpop.f32.mrb[0].mxu0
        %v826 = vadd.f32 0.0, %v825
        %v827 = vpop.f32.mrb[0].mxu0
        %v828 = vadd.f32 0.0, %v827
        %v829 = vpop.f32.mrb[0].mxu0
        %v830 = vadd.f32 0.0, %v829
        %831 = vmatprep.mubr.bf16.mxu0 0
        %832 = vmatmul.mubr.bf16.gmra.mrb[0].mxu0 %v769
        %v833 = vpop.f32.mrb[0].mxu0
        %v834 = vadd.f32 0.0, %v833
        %v835 = vpop.f32.mrb[0].mxu0
        %v836 = vadd.f32 0.0, %v835
        %v837 = vpop.f32.mrb[0].mxu0
        %v838 = vadd.f32 0.0, %v837
        %v839 = vpop.f32.mrb[0].mxu0
        %v840 = vadd.f32 0.0, %v839
        %841 = vmatprep.mubr.bf16.mxu0 0
        %842 = vmatmul.mubr.bf16.gmra.mrb[0].mxu0 %v772
        %v843 = vpop.f32.mrb[0].mxu0
        %v844 = vadd.f32 0.0, %v843
        %v845 = vpop.f32.mrb[0].mxu0
        %v846 = vadd.f32 0.0, %v845
        %v847 = vpop.f32.mrb[0].mxu0
        %v848 = vadd.f32 0.0, %v847
        %v849 = vpop.f32.mrb[0].mxu0
        %v850 = vadd.f32 0.0, %v849
        %851 = vmatprep.mubr.bf16.mxu0 0
        %852 = vmatmul.mubr.bf16.gmra.mrb[0].mxu0 %v775
        %v853 = vpop.f32.mrb[0].mxu0
        %v854 = vadd.f32 0.0, %v853
        %v855 = vpop.f32.mrb[0].mxu0
        %v856 = vadd.f32 0.0, %v855
        %v857 = vpop.f32.mrb[0].mxu0
        %v858 = vadd.f32 0.0, %v857
        %v859 = vpop.f32.mrb[0].mxu0
        %v860 = vadd.f32 0.0, %v859
        %861 = vmatprep.mubr.bf16.mxu0 0
        %862 = vmatmul.mubr.bf16.gmra.mrb[0].mxu0 %v778
        %v863 = vpop.f32.mrb[0].mxu0
        %v864 = vadd.f32 0.0, %v863
        %v865 = vpop.f32.mrb[0].mxu0
        %v866 = vadd.f32 0.0, %v865
        %v867 = vpop.f32.mrb[0].mxu0
        %v868 = vadd.f32 0.0, %v867
        %v869 = vpop.f32.mrb[0].mxu0
        %v870 = vadd.f32 0.0, %v869
        %871 = vmatprep.mubr.bf16.mxu0 0
        %872 = vmatmul.mubr.bf16.gmra.mrb[0].mxu0 %v781
        %v873 = vpop.f32.mrb[0].mxu0
        %v874 = vadd.f32 0.0, %v873
        %v875 = vpop.f32.mrb[0].mxu0
        %v876 = vadd.f32 0.0, %v875
        %v877 = vpop.f32.mrb[0].mxu0
        %v878 = vadd.f32 0.0, %v877
        %v879 = vpop.f32.mrb[0].mxu0
        %v880 = vadd.f32 0.0, %v879
        %881 = vmatprep.mubr.bf16.mxu0 0
        %882 = vmatmul.mubr.bf16.gmra.mrb[0].mxu0 %v784
        %v883 = vpop.f32.mrb[0].mxu0
        %v884 = vadd.f32 0.0, %v883
        %v885 = vpop.f32.mrb[0].mxu0
        %v886 = vadd.f32 0.0, %v885
        %v887 = vpop.f32.mrb[0].mxu0
        %v888 = vadd.f32 0.0, %v887
        %v889 = vpop.f32.mrb[0].mxu0
        %v890 = vadd.f32 0.0, %v889
        %891 = vmatprep.mubr.bf16.mxu0 0
        %892 = vmatmul.mubr.bf16.gmra.mrb[0].mxu0 %v787
        %v893 = vpop.f32.mrb[0].mxu0
        %v894 = vadd.f32 0.0, %v893
        %v895 = vpop.f32.mrb[0].mxu0
        %v896 = vadd.f32 0.0, %v895
        %v897 = vpop.f32.mrb[0].mxu0
        %v898 = vadd.f32 0.0, %v897
        %v899 = vpop.f32.mrb[0].mxu0
        %v900 = vadd.f32 0.0, %v899
        %901 = vdwg.mxu0
        %902 = vxpose.xlu0.b32.start [1/16] %v824, 128
        %903 = vxpose.xlu0.b32.cont [2/16] %v828, 128
        %904 = vxpose.xlu0.b32.cont [3/16] %v834, 128
        %905 = vxpose.xlu0.b32.cont [4/16] %v838, 128
        %906 = vxpose.xlu0.b32.cont [5/16] 0.0, 128
        %907 = vxpose.xlu0.b32.cont [6/16] 0.0, 128
        %908 = vxpose.xlu0.b32.cont [7/16] 0.0, 128
        %909 = vxpose.xlu0.b32.cont [8/16] 0.0, 128
        %910 = vxpose.xlu0.b32.cont [9/16] 0.0, 128
        %911 = vxpose.xlu0.b32.cont [10/16] 0.0, 128
        %912 = vxpose.xlu0.b32.cont [11/16] 0.0, 128
        %913 = vxpose.xlu0.b32.cont [12/16] 0.0, 128
        %914 = vxpose.xlu0.b32.cont [13/16] 0.0, 128
        %915 = vxpose.xlu0.b32.cont [14/16] 0.0, 128
        %916 = vxpose.xlu0.b32.cont [15/16] 0.0, 128
        %917 = vxpose.xlu0.b32.end [16/16] 0.0, 128
        %v918 = vpop.trf.xlu0
        %v919 = vpop.trf.xlu0
        %v920 = vpop.trf.xlu0
        %v921 = vpop.trf.xlu0
        %v922 = vpop.trf.xlu0
        %v923 = vpop.trf.xlu0
        %v924 = vpop.trf.xlu0
        %v925 = vpop.trf.xlu0
        %v926 = vpop.trf.xlu0
        %v927 = vpop.trf.xlu0
        %v928 = vpop.trf.xlu0
        %v929 = vpop.trf.xlu0
        %v930 = vpop.trf.xlu0
        %v931 = vpop.trf.xlu0
        %v932 = vpop.trf.xlu0
        %v933 = vpop.trf.xlu0
        %934 = vxpose.xlu0.b32.start [1/16] %v826, 128
        %935 = vxpose.xlu0.b32.cont [2/16] %v830, 128
        %936 = vxpose.xlu0.b32.cont [3/16] %v836, 128
        %937 = vxpose.xlu0.b32.cont [4/16] %v840, 128
        %938 = vxpose.xlu0.b32.cont [5/16] 0.0, 128
        %939 = vxpose.xlu0.b32.cont [6/16] 0.0, 128
        %940 = vxpose.xlu0.b32.cont [7/16] 0.0, 128
        %941 = vxpose.xlu0.b32.cont [8/16] 0.0, 128
        %942 = vxpose.xlu0.b32.cont [9/16] 0.0, 128
        %943 = vxpose.xlu0.b32.cont [10/16] 0.0, 128
        %944 = vxpose.xlu0.b32.cont [11/16] 0.0, 128
        %945 = vxpose.xlu0.b32.cont [12/16] 0.0, 128
        %946 = vxpose.xlu0.b32.cont [13/16] 0.0, 128
        %947 = vxpose.xlu0.b32.cont [14/16] 0.0, 128
        %948 = vxpose.xlu0.b32.cont [15/16] 0.0, 128
        %949 = vxpose.xlu0.b32.end [16/16] 0.0, 128
        %v950 = vpop.trf.xlu0
        %v951 = vpop.trf.xlu0
        %v952 = vpop.trf.xlu0
        %v953 = vpop.trf.xlu0
        %v954 = vpop.trf.xlu0
        %v955 = vpop.trf.xlu0
        %v956 = vpop.trf.xlu0
        %v957 = vpop.trf.xlu0
        %v958 = vpop.trf.xlu0
        %v959 = vpop.trf.xlu0
        %v960 = vpop.trf.xlu0
        %v961 = vpop.trf.xlu0
        %v962 = vpop.trf.xlu0
        %v963 = vpop.trf.xlu0
        %v964 = vpop.trf.xlu0
        %v965 = vpop.trf.xlu0
        %v966 = vpack.c.bf16 %v919, %v918
        %v967 = vpack.c.bf16 %v921, %v920
        %v968 = vpack.c.bf16 %v923, %v922
        %v969 = vpack.c.bf16 %v925, %v924
        %v970 = vpack.c.bf16 %v927, %v926
        %v971 = vpack.c.bf16 %v929, %v928
        %v972 = vpack.c.bf16 %v931, %v930
        %v973 = vpack.c.bf16 %v933, %v932
        %v974 = vpack.c.bf16 %v951, %v950
        %v975 = vpack.c.bf16 %v953, %v952
        %v976 = vpack.c.bf16 %v955, %v954
        %v977 = vpack.c.bf16 %v957, %v956
        %v978 = vpack.c.bf16 %v959, %v958
        %v979 = vpack.c.bf16 %v961, %v960
        %v980 = vpack.c.bf16 %v963, %v962
        %v981 = vpack.c.bf16 %v965, %v964
        %v982 = vld [vmem:[#allocation2] sm:$0xff]
        %v983 = vld [vmem:[#allocation2 + $0x8] sm:$0xff]
        %v984 = vld [vmem:[#allocation2 + $0x10] sm:$0xff]
        %v985 = vld [vmem:[#allocation2 + $0x18] sm:$0xff]
        %v986 = vld [vmem:[#allocation2 + $0x80] sm:$0xff]
        %v987 = vld [vmem:[#allocation2 + $0x88] sm:$0xff]
        %v988 = vld [vmem:[#allocation2 + $0x90] sm:$0xff]
        %v989 = vld [vmem:[#allocation2 + $0x98] sm:$0xff]
        %vm990 = vcmask 261120
        %v992 = vsel %vm990, %v966, 0
        %v995 = vsel %vm990, %v967, 0
        %v998 = vsel %vm990, %v968, 0
        %v1001 = vsel %vm990, %v969, 0
        %v1004 = vsel %vm990, %v970, 0
        %v1007 = vsel %vm990, %v971, 0
        %v1010 = vsel %vm990, %v972, 0
        %v1013 = vsel %vm990, %v973, 0
        %v1016 = vsel %vm990, %v974, 0
        %v1019 = vsel %vm990, %v975, 0
        %v1022 = vsel %vm990, %v976, 0
        %v1025 = vsel %vm990, %v977, 0
        %v1028 = vsel %vm990, %v978, 0
        %v1031 = vsel %vm990, %v979, 0
        %v1034 = vsel %vm990, %v980, 0
        %v1037 = vsel %vm990, %v981, 0
        %1039 = vmatprep.subr.bf16.mxu0 %v983
        %1040 = vmatpush1.bf16.msra.mxu0 %v982
        %1041 = vmatprep.subr.bf16.mxu0 %v985
        %1042 = vmatpush1.bf16.msra.mxu0 %v984
        %1043 = vmatprep.subr.bf16.mxu0 0
        %1044 = vmatpush1.bf16.msra.mxu0 0
        %1045 = vmatprep.subr.bf16.mxu0 0
        %1046 = vmatpush1.bf16.msra.mxu0 0
        %1047 = vmatprep.subr.bf16.mxu0 0
        %1048 = vmatpush1.bf16.msra.mxu0 0
        %1049 = vmatprep.subr.bf16.mxu0 0
        %1050 = vmatpush1.bf16.msra.mxu0 0
        %1051 = vmatprep.subr.bf16.mxu0 0
        %1052 = vmatpush1.bf16.msra.mxu0 0
        %1053 = vmatprep.subr.bf16.mxu0 0
        %1054 = vmatpush1.bf16.msra.mxu0 0
        %1055 = vmatprep.subr.bf16.mxu0 0
        %1056 = vmatpush1.bf16.msra.mxu0 0
        %1057 = vmatprep.subr.bf16.mxu0 0
        %1058 = vmatpush1.bf16.msra.mxu0 0
        %1059 = vmatprep.subr.bf16.mxu0 0
        %1060 = vmatpush1.bf16.msra.mxu0 0
        %1061 = vmatprep.subr.bf16.mxu0 0
        %1062 = vmatpush1.bf16.msra.mxu0 0
        %1063 = vmatprep.subr.bf16.mxu0 0
        %1064 = vmatpush1.bf16.msra.mxu0 0
        %1065 = vmatprep.subr.bf16.mxu0 0
        %1066 = vmatpush1.bf16.msra.mxu0 0
        %1067 = vmatprep.subr.bf16.mxu0 0
        %1068 = vmatpush1.bf16.msra.mxu0 0
        %1069 = vmatprep.subr.bf16.mxu0 0
        %1070 = vmatpush1.bf16.msra.mxu0 0
        %1071 = vmatprep.mubr.bf16.mxu0 0
        %1072 = vmatmul.mubr.bf16.gmra.mrb[0].mxu0 %v992
        %v1073 = vpop.f32.mrb[0].mxu0
        %v1074 = vadd.f32 0.0, %v1073
        %v1075 = vpop.f32.mrb[0].mxu0
        %v1076 = vadd.f32 0.0, %v1075
        %v1077 = vpop.f32.mrb[0].mxu0
        %v1078 = vadd.f32 0.0, %v1077
        %v1079 = vpop.f32.mrb[0].mxu0
        %v1080 = vadd.f32 0.0, %v1079
        %1081 = vmatprep.mubr.bf16.mxu0 0
        %1082 = vmatmul.mubr.bf16.gmra.mrb[0].mxu0 %v995
        %v1083 = vpop.f32.mrb[0].mxu0
        %v1084 = vadd.f32 0.0, %v1083
        %v1085 = vpop.f32.mrb[0].mxu0
        %v1086 = vadd.f32 0.0, %v1085
        %v1087 = vpop.f32.mrb[0].mxu0
        %v1088 = vadd.f32 0.0, %v1087
        %v1089 = vpop.f32.mrb[0].mxu0
        %v1090 = vadd.f32 0.0, %v1089
        %1091 = vmatprep.mubr.bf16.mxu0 0
        %1092 = vmatmul.mubr.bf16.gmra.mrb[0].mxu0 %v998
        %v1093 = vpop.f32.mrb[0].mxu0
        %v1094 = vadd.f32 0.0, %v1093
        %v1095 = vpop.f32.mrb[0].mxu0
        %v1096 = vadd.f32 0.0, %v1095
        %v1097 = vpop.f32.mrb[0].mxu0
        %v1098 = vadd.f32 0.0, %v1097
        %v1099 = vpop.f32.mrb[0].mxu0
        %v1100 = vadd.f32 0.0, %v1099
        %1101 = vmatprep.mubr.bf16.mxu0 0
        %1102 = vmatmul.mubr.bf16.gmra.mrb[0].mxu0 %v1001
        %v1103 = vpop.f32.mrb[0].mxu0
        %v1104 = vadd.f32 0.0, %v1103
        %v1105 = vpop.f32.mrb[0].mxu0
        %v1106 = vadd.f32 0.0, %v1105
        %v1107 = vpop.f32.mrb[0].mxu0
        %v1108 = vadd.f32 0.0, %v1107
        %v1109 = vpop.f32.mrb[0].mxu0
        %v1110 = vadd.f32 0.0, %v1109
        %1111 = vmatprep.mubr.bf16.mxu0 0
        %1112 = vmatmul.mubr.bf16.gmra.mrb[0].mxu0 %v1004
        %v1113 = vpop.f32.mrb[0].mxu0
        %v1114 = vadd.f32 0.0, %v1113
        %v1115 = vpop.f32.mrb[0].mxu0
        %v1116 = vadd.f32 0.0, %v1115
        %v1117 = vpop.f32.mrb[0].mxu0
        %v1118 = vadd.f32 0.0, %v1117
        %v1119 = vpop.f32.mrb[0].mxu0
        %v1120 = vadd.f32 0.0, %v1119
        %1121 = vmatprep.mubr.bf16.mxu0 0
        %1122 = vmatmul.mubr.bf16.gmra.mrb[0].mxu0 %v1007
        %v1123 = vpop.f32.mrb[0].mxu0
        %v1124 = vadd.f32 0.0, %v1123
        %v1125 = vpop.f32.mrb[0].mxu0
        %v1126 = vadd.f32 0.0, %v1125
        %v1127 = vpop.f32.mrb[0].mxu0
        %v1128 = vadd.f32 0.0, %v1127
        %v1129 = vpop.f32.mrb[0].mxu0
        %v1130 = vadd.f32 0.0, %v1129
        %1131 = vmatprep.mubr.bf16.mxu0 0
        %1132 = vmatmul.mubr.bf16.gmra.mrb[0].mxu0 %v1010
        %v1133 = vpop.f32.mrb[0].mxu0
        %v1134 = vadd.f32 0.0, %v1133
        %v1135 = vpop.f32.mrb[0].mxu0
        %v1136 = vadd.f32 0.0, %v1135
        %v1137 = vpop.f32.mrb[0].mxu0
        %v1138 = vadd.f32 0.0, %v1137
        %v1139 = vpop.f32.mrb[0].mxu0
        %v1140 = vadd.f32 0.0, %v1139
        %1141 = vmatprep.mubr.bf16.mxu0 0
        %1142 = vmatmul.mubr.bf16.gmra.mrb[0].mxu0 %v1013
        %v1143 = vpop.f32.mrb[0].mxu0
        %v1144 = vadd.f32 0.0, %v1143
        %v1145 = vpop.f32.mrb[0].mxu0
        %v1146 = vadd.f32 0.0, %v1145
        %v1147 = vpop.f32.mrb[0].mxu0
        %v1148 = vadd.f32 0.0, %v1147
        %v1149 = vpop.f32.mrb[0].mxu0
        %v1150 = vadd.f32 0.0, %v1149
        %1151 = vmatprep.mubr.bf16.mxu0 0
        %1152 = vmatmul.mubr.bf16.gmra.mrb[0].mxu0 %v1016
        %v1153 = vpop.f32.mrb[0].mxu0
        %v1154 = vadd.f32 0.0, %v1153
        %v1155 = vpop.f32.mrb[0].mxu0
        %v1156 = vadd.f32 0.0, %v1155
        %v1157 = vpop.f32.mrb[0].mxu0
        %v1158 = vadd.f32 0.0, %v1157
        %v1159 = vpop.f32.mrb[0].mxu0
        %v1160 = vadd.f32 0.0, %v1159
        %1161 = vmatprep.mubr.bf16.mxu0 0
        %1162 = vmatmul.mubr.bf16.gmra.mrb[0].mxu0 %v1019
        %v1163 = vpop.f32.mrb[0].mxu0
        %v1164 = vadd.f32 0.0, %v1163
        %v1165 = vpop.f32.mrb[0].mxu0
        %v1166 = vadd.f32 0.0, %v1165
        %v1167 = vpop.f32.mrb[0].mxu0
        %v1168 = vadd.f32 0.0, %v1167
        %v1169 = vpop.f32.mrb[0].mxu0
        %v1170 = vadd.f32 0.0, %v1169
        %1171 = vmatprep.mubr.bf16.mxu0 0
        %1172 = vmatmul.mubr.bf16.gmra.mrb[0].mxu0 %v1022
        %v1173 = vpop.f32.mrb[0].mxu0
        %v1174 = vadd.f32 0.0, %v1173
        %v1175 = vpop.f32.mrb[0].mxu0
        %v1176 = vadd.f32 0.0, %v1175
        %v1177 = vpop.f32.mrb[0].mxu0
        %v1178 = vadd.f32 0.0, %v1177
        %v1179 = vpop.f32.mrb[0].mxu0
        %v1180 = vadd.f32 0.0, %v1179
        %1181 = vmatprep.mubr.bf16.mxu0 0
        %1182 = vmatmul.mubr.bf16.gmra.mrb[0].mxu0 %v1025
        %v1183 = vpop.f32.mrb[0].mxu0
        %v1184 = vadd.f32 0.0, %v1183
        %v1185 = vpop.f32.mrb[0].mxu0
        %v1186 = vadd.f32 0.0, %v1185
        %v1187 = vpop.f32.mrb[0].mxu0
        %v1188 = vadd.f32 0.0, %v1187
        %v1189 = vpop.f32.mrb[0].mxu0
        %v1190 = vadd.f32 0.0, %v1189
        %1191 = vmatprep.mubr.bf16.mxu0 0
        %1192 = vmatmul.mubr.bf16.gmra.mrb[0].mxu0 %v1028
        %v1193 = vpop.f32.mrb[0].mxu0
        %v1194 = vadd.f32 0.0, %v1193
        %v1195 = vpop.f32.mrb[0].mxu0
        %v1196 = vadd.f32 0.0, %v1195
        %v1197 = vpop.f32.mrb[0].mxu0
        %v1198 = vadd.f32 0.0, %v1197
        %v1199 = vpop.f32.mrb[0].mxu0
        %v1200 = vadd.f32 0.0, %v1199
        %1201 = vmatprep.mubr.bf16.mxu0 0
        %1202 = vmatmul.mubr.bf16.gmra.mrb[0].mxu0 %v1031
        %v1203 = vpop.f32.mrb[0].mxu0
        %v1204 = vadd.f32 0.0, %v1203
        %v1205 = vpop.f32.mrb[0].mxu0
        %v1206 = vadd.f32 0.0, %v1205
        %v1207 = vpop.f32.mrb[0].mxu0
        %v1208 = vadd.f32 0.0, %v1207
        %v1209 = vpop.f32.mrb[0].mxu0
        %v1210 = vadd.f32 0.0, %v1209
        %1211 = vmatprep.mubr.bf16.mxu0 0
        %1212 = vmatmul.mubr.bf16.gmra.mrb[0].mxu0 %v1034
        %v1213 = vpop.f32.mrb[0].mxu0
        %v1214 = vadd.f32 0.0, %v1213
        %v1215 = vpop.f32.mrb[0].mxu0
        %v1216 = vadd.f32 0.0, %v1215
        %v1217 = vpop.f32.mrb[0].mxu0
        %v1218 = vadd.f32 0.0, %v1217
        %v1219 = vpop.f32.mrb[0].mxu0
        %v1220 = vadd.f32 0.0, %v1219
        %1221 = vmatprep.mubr.bf16.mxu0 0
        %1222 = vmatmul.mubr.bf16.gmra.mrb[0].mxu0 %v1037
        %v1223 = vpop.f32.mrb[0].mxu0
        %v1224 = vadd.f32 0.0, %v1223
        %v1225 = vpop.f32.mrb[0].mxu0
        %v1226 = vadd.f32 0.0, %v1225
        %v1227 = vpop.f32.mrb[0].mxu0
        %v1228 = vadd.f32 0.0, %v1227
        %v1229 = vpop.f32.mrb[0].mxu0
        %v1230 = vadd.f32 0.0, %v1229
        %1231 = vdwg.mxu0
        %v1232 = vmax.f32 %v1074, %v1076
        %1233 = vmax.xlane.f32.xlu0 %v1232
        %v1234 = vpop.xlane.xlu0 %1233
        %v1235 = vmax.f32 %v1078, %v1080
        %1236 = vmax.xlane.f32.xlu0 %v1235
        %v1237 = vpop.xlane.xlu0 %1236
        %v1238 = vmax.f32 %v1084, %v1086
        %1239 = vmax.xlane.f32.xlu0 %v1238
        %v1240 = vpop.xlane.xlu0 %1239
        %v1241 = vmax.f32 %v1088, %v1090
        %1242 = vmax.xlane.f32.xlu0 %v1241
        %v1243 = vpop.xlane.xlu0 %1242
        %v1244 = vmax.f32 %v1094, %v1096
        %1245 = vmax.xlane.f32.xlu0 %v1244
        %v1246 = vpop.xlane.xlu0 %1245
        %v1247 = vmax.f32 %v1098, %v1100
        %1248 = vmax.xlane.f32.xlu0 %v1247
        %v1249 = vpop.xlane.xlu0 %1248
        %v1250 = vmax.f32 %v1104, %v1106
        %1251 = vmax.xlane.f32.xlu0 %v1250
        %v1252 = vpop.xlane.xlu0 %1251
        %v1253 = vmax.f32 %v1108, %v1110
        %1254 = vmax.xlane.f32.xlu0 %v1253
        %v1255 = vpop.xlane.xlu0 %1254
        %v1256 = vmax.f32 %v1114, %v1116
        %1257 = vmax.xlane.f32.xlu0 %v1256
        %v1258 = vpop.xlane.xlu0 %1257
        %v1259 = vmax.f32 %v1118, %v1120
        %1260 = vmax.xlane.f32.xlu0 %v1259
        %v1261 = vpop.xlane.xlu0 %1260
        %v1262 = vmax.f32 %v1124, %v1126
        %1263 = vmax.xlane.f32.xlu0 %v1262
        %v1264 = vpop.xlane.xlu0 %1263
        %v1265 = vmax.f32 %v1128, %v1130
        %1266 = vmax.xlane.f32.xlu0 %v1265
        %v1267 = vpop.xlane.xlu0 %1266
        %v1268 = vmax.f32 %v1134, %v1136
        %1269 = vmax.xlane.f32.xlu0 %v1268
        %v1270 = vpop.xlane.xlu0 %1269
        %v1271 = vmax.f32 %v1138, %v1140
        %1272 = vmax.xlane.f32.xlu0 %v1271
        %v1273 = vpop.xlane.xlu0 %1272
        %v1274 = vmax.f32 %v1144, %v1146
        %1275 = vmax.xlane.f32.xlu0 %v1274
        %v1276 = vpop.xlane.xlu0 %1275
        %v1277 = vmax.f32 %v1148, %v1150
        %1278 = vmax.xlane.f32.xlu0 %v1277
        %v1279 = vpop.xlane.xlu0 %1278
        %v1280 = vmax.f32 %v1154, %v1156
        %1281 = vmax.xlane.f32.xlu0 %v1280
        %v1282 = vpop.xlane.xlu0 %1281
        %v1283 = vmax.f32 %v1158, %v1160
        %1284 = vmax.xlane.f32.xlu0 %v1283
        %v1285 = vpop.xlane.xlu0 %1284
        %v1286 = vmax.f32 %v1164, %v1166
        %1287 = vmax.xlane.f32.xlu0 %v1286
        %v1288 = vpop.xlane.xlu0 %1287
        %v1289 = vmax.f32 %v1168, %v1170
        %1290 = vmax.xlane.f32.xlu0 %v1289
        %v1291 = vpop.xlane.xlu0 %1290
        %v1292 = vmax.f32 %v1174, %v1176
        %1293 = vmax.xlane.f32.xlu0 %v1292
        %v1294 = vpop.xlane.xlu0 %1293
        %v1295 = vmax.f32 %v1178, %v1180
        %1296 = vmax.xlane.f32.xlu0 %v1295
        %v1297 = vpop.xlane.xlu0 %1296
        %v1298 = vmax.f32 %v1184, %v1186
        %1299 = vmax.xlane.f32.xlu0 %v1298
        %v1300 = vpop.xlane.xlu0 %1299
        %v1301 = vmax.f32 %v1188, %v1190
        %1302 = vmax.xlane.f32.xlu0 %v1301
        %v1303 = vpop.xlane.xlu0 %1302
        %v1304 = vmax.f32 %v1194, %v1196
        %1305 = vmax.xlane.f32.xlu0 %v1304
        %v1306 = vpop.xlane.xlu0 %1305
        %v1307 = vmax.f32 %v1198, %v1200
        %1308 = vmax.xlane.f32.xlu0 %v1307
        %v1309 = vpop.xlane.xlu0 %1308
        %v1310 = vmax.f32 %v1204, %v1206
        %1311 = vmax.xlane.f32.xlu0 %v1310
        %v1312 = vpop.xlane.xlu0 %1311
        %v1313 = vmax.f32 %v1208, %v1210
        %1314 = vmax.xlane.f32.xlu0 %v1313
        %v1315 = vpop.xlane.xlu0 %1314
        %v1316 = vmax.f32 %v1214, %v1216
        %1317 = vmax.xlane.f32.xlu0 %v1316
        %v1318 = vpop.xlane.xlu0 %1317
        %v1319 = vmax.f32 %v1218, %v1220
        %1320 = vmax.xlane.f32.xlu0 %v1319
        %v1321 = vpop.xlane.xlu0 %1320
        %v1322 = vmax.f32 %v1224, %v1226
        %1323 = vmax.xlane.f32.xlu0 %v1322
        %v1324 = vpop.xlane.xlu0 %1323
        %v1325 = vmax.f32 %v1228, %v1230
        %1326 = vmax.xlane.f32.xlu0 %v1325
        %v1327 = vpop.xlane.xlu0 %1326
        %v1328 = vsub.f32 %v1074, %v1234
        %v1329 = vsub.f32 %v1076, %v1234
        %v1330 = vsub.f32 %v1078, %v1237
        %v1331 = vsub.f32 %v1080, %v1237
        %v1332 = vsub.f32 %v1084, %v1240
        %v1333 = vsub.f32 %v1086, %v1240
        %v1334 = vsub.f32 %v1088, %v1243
        %v1335 = vsub.f32 %v1090, %v1243
        %v1336 = vsub.f32 %v1094, %v1246
        %v1337 = vsub.f32 %v1096, %v1246
        %v1338 = vsub.f32 %v1098, %v1249
        %v1339 = vsub.f32 %v1100, %v1249
        %v1340 = vsub.f32 %v1104, %v1252
        %v1341 = vsub.f32 %v1106, %v1252
        %v1342 = vsub.f32 %v1108, %v1255
        %v1343 = vsub.f32 %v1110, %v1255
        %v1344 = vsub.f32 %v1114, %v1258
        %v1345 = vsub.f32 %v1116, %v1258
        %v1346 = vsub.f32 %v1118, %v1261
        %v1347 = vsub.f32 %v1120, %v1261
        %v1348 = vsub.f32 %v1124, %v1264
        %v1349 = vsub.f32 %v1126, %v1264
        %v1350 = vsub.f32 %v1128, %v1267
        %v1351 = vsub.f32 %v1130, %v1267
        %v1352 = vsub.f32 %v1134, %v1270
        %v1353 = vsub.f32 %v1136, %v1270
        %v1354 = vsub.f32 %v1138, %v1273
        %v1355 = vsub.f32 %v1140, %v1273
        %v1356 = vsub.f32 %v1144, %v1276
        %v1357 = vsub.f32 %v1146, %v1276
        %v1358 = vsub.f32 %v1148, %v1279
        %v1359 = vsub.f32 %v1150, %v1279
        %v1360 = vsub.f32 %v1154, %v1282
        %v1361 = vsub.f32 %v1156, %v1282
        %v1362 = vsub.f32 %v1158, %v1285
        %v1363 = vsub.f32 %v1160, %v1285
        %v1364 = vsub.f32 %v1164, %v1288
        %v1365 = vsub.f32 %v1166, %v1288
        %v1366 = vsub.f32 %v1168, %v1291
        %v1367 = vsub.f32 %v1170, %v1291
        %v1368 = vsub.f32 %v1174, %v1294
        %v1369 = vsub.f32 %v1176, %v1294
        %v1370 = vsub.f32 %v1178, %v1297
        %v1371 = vsub.f32 %v1180, %v1297
        %v1372 = vsub.f32 %v1184, %v1300
        %v1373 = vsub.f32 %v1186, %v1300
        %v1374 = vsub.f32 %v1188, %v1303
        %v1375 = vsub.f32 %v1190, %v1303
        %v1376 = vsub.f32 %v1194, %v1306
        %v1377 = vsub.f32 %v1196, %v1306
        %v1378 = vsub.f32 %v1198, %v1309
        %v1379 = vsub.f32 %v1200, %v1309
        %v1380 = vsub.f32 %v1204, %v1312
        %v1381 = vsub.f32 %v1206, %v1312
        %v1382 = vsub.f32 %v1208, %v1315
        %v1383 = vsub.f32 %v1210, %v1315
        %v1384 = vsub.f32 %v1214, %v1318
        %v1385 = vsub.f32 %v1216, %v1318
        %v1386 = vsub.f32 %v1218, %v1321
        %v1387 = vsub.f32 %v1220, %v1321
        %v1388 = vsub.f32 %v1224, %v1324
        %v1389 = vsub.f32 %v1226, %v1324
        %v1390 = vsub.f32 %v1228, %v1327
        %v1391 = vsub.f32 %v1230, %v1327
        %v1392 = vmul.f32 %v1328, 1.442695
        %v1393 = vpow.pop %v1392
        %v1394 = vmul.f32 %v1329, 1.442695
        %v1395 = vpow.pop %v1394
        %v1396 = vmul.f32 %v1330, 1.442695
        %v1397 = vpow.pop %v1396
        %v1398 = vmul.f32 %v1331, 1.442695
        %v1399 = vpow.pop %v1398
        %v1400 = vmul.f32 %v1332, 1.442695
        %v1401 = vpow.pop %v1400
        %v1402 = vmul.f32 %v1333, 1.442695
        %v1403 = vpow.pop %v1402
        %v1404 = vmul.f32 %v1334, 1.442695
        %v1405 = vpow.pop %v1404
        %v1406 = vmul.f32 %v1335, 1.442695
        %v1407 = vpow.pop %v1406
        %v1408 = vmul.f32 %v1336, 1.442695
        %v1409 = vpow.pop %v1408
        %v1410 = vmul.f32 %v1337, 1.442695
        %v1411 = vpow.pop %v1410
        %v1412 = vmul.f32 %v1338, 1.442695
        %v1413 = vpow.pop %v1412
        %v1414 = vmul.f32 %v1339, 1.442695
        %v1415 = vpow.pop %v1414
        %v1416 = vmul.f32 %v1340, 1.442695
        %v1417 = vpow.pop %v1416
        %v1418 = vmul.f32 %v1341, 1.442695
        %v1419 = vpow.pop %v1418
        %v1420 = vmul.f32 %v1342, 1.442695
        %v1421 = vpow.pop %v1420
        %v1422 = vmul.f32 %v1343, 1.442695
        %v1423 = vpow.pop %v1422
        %v1424 = vmul.f32 %v1344, 1.442695
        %v1425 = vpow.pop %v1424
        %v1426 = vmul.f32 %v1345, 1.442695
        %v1427 = vpow.pop %v1426
        %v1428 = vmul.f32 %v1346, 1.442695
        %v1429 = vpow.pop %v1428
        %v1430 = vmul.f32 %v1347, 1.442695
        %v1431 = vpow.pop %v1430
        %v1432 = vmul.f32 %v1348, 1.442695
        %v1433 = vpow.pop %v1432
        %v1434 = vmul.f32 %v1349, 1.442695
        %v1435 = vpow.pop %v1434
        %v1436 = vmul.f32 %v1350, 1.442695
        %v1437 = vpow.pop %v1436
        %v1438 = vmul.f32 %v1351, 1.442695
        %v1439 = vpow.pop %v1438
        %v1440 = vmul.f32 %v1352, 1.442695
        %v1441 = vpow.pop %v1440
        %v1442 = vmul.f32 %v1353, 1.442695
        %v1443 = vpow.pop %v1442
        %v1444 = vmul.f32 %v1354, 1.442695
        %v1445 = vpow.pop %v1444
        %v1446 = vmul.f32 %v1355, 1.442695
        %v1447 = vpow.pop %v1446
        %v1448 = vmul.f32 %v1356, 1.442695
        %v1449 = vpow.pop %v1448
        %v1450 = vmul.f32 %v1357, 1.442695
        %v1451 = vpow.pop %v1450
        %v1452 = vmul.f32 %v1358, 1.442695
        %v1453 = vpow.pop %v1452
        %v1454 = vmul.f32 %v1359, 1.442695
        %v1455 = vpow.pop %v1454
        %v1456 = vmul.f32 %v1360, 1.442695
        %v1457 = vpow.pop %v1456
        %v1458 = vmul.f32 %v1361, 1.442695
        %v1459 = vpow.pop %v1458
        %v1460 = vmul.f32 %v1362, 1.442695
        %v1461 = vpow.pop %v1460
        %v1462 = vmul.f32 %v1363, 1.442695
        %v1463 = vpow.pop %v1462
        %v1464 = vmul.f32 %v1364, 1.442695
        %v1465 = vpow.pop %v1464
        %v1466 = vmul.f32 %v1365, 1.442695
        %v1467 = vpow.pop %v1466
        %v1468 = vmul.f32 %v1366, 1.442695
        %v1469 = vpow.pop %v1468
        %v1470 = vmul.f32 %v1367, 1.442695
        %v1471 = vpow.pop %v1470
        %v1472 = vmul.f32 %v1368, 1.442695
        %v1473 = vpow.pop %v1472
        %v1474 = vmul.f32 %v1369, 1.442695
        %v1475 = vpow.pop %v1474
        %v1476 = vmul.f32 %v1370, 1.442695
        %v1477 = vpow.pop %v1476
        %v1478 = vmul.f32 %v1371, 1.442695
        %v1479 = vpow.pop %v1478
        %v1480 = vmul.f32 %v1372, 1.442695
        %v1481 = vpow.pop %v1480
        %v1482 = vmul.f32 %v1373, 1.442695
        %v1483 = vpow.pop %v1482
        %v1484 = vmul.f32 %v1374, 1.442695
        %v1485 = vpow.pop %v1484
        %v1486 = vmul.f32 %v1375, 1.442695
        %v1487 = vpow.pop %v1486
        %v1488 = vmul.f32 %v1376, 1.442695
        %v1489 = vpow.pop %v1488
        %v1490 = vmul.f32 %v1377, 1.442695
        %v1491 = vpow.pop %v1490
        %v1492 = vmul.f32 %v1378, 1.442695
        %v1493 = vpow.pop %v1492
        %v1494 = vmul.f32 %v1379, 1.442695
        %v1495 = vpow.pop %v1494
        %v1496 = vmul.f32 %v1380, 1.442695
        %v1497 = vpow.pop %v1496
        %v1498 = vmul.f32 %v1381, 1.442695
        %v1499 = vpow.pop %v1498
        %v1500 = vmul.f32 %v1382, 1.442695
        %v1501 = vpow.pop %v1500
        %v1502 = vmul.f32 %v1383, 1.442695
        %v1503 = vpow.pop %v1502
        %v1504 = vmul.f32 %v1384, 1.442695
        %v1505 = vpow.pop %v1504
        %v1506 = vmul.f32 %v1385, 1.442695
        %v1507 = vpow.pop %v1506
        %v1508 = vmul.f32 %v1386, 1.442695
        %v1509 = vpow.pop %v1508
        %v1510 = vmul.f32 %v1387, 1.442695
        %v1511 = vpow.pop %v1510
        %v1512 = vmul.f32 %v1388, 1.442695
        %v1513 = vpow.pop %v1512
        %v1514 = vmul.f32 %v1389, 1.442695
        %v1515 = vpow.pop %v1514
        %v1516 = vmul.f32 %v1390, 1.442695
        %v1517 = vpow.pop %v1516
        %v1518 = vmul.f32 %v1391, 1.442695
        %v1519 = vpow.pop %v1518
        %v1520 = vadd.f32 %v1393, %v1395
        %1521 = vadd.xlane.f32.xlu0 %v1520
        %v1522 = vpop.xlane.xlu0 %1521
        %v1523 = vadd.f32 %v1397, %v1399
        %1524 = vadd.xlane.f32.xlu0 %v1523
        %v1525 = vpop.xlane.xlu0 %1524
        %v1526 = vadd.f32 %v1401, %v1403
        %1527 = vadd.xlane.f32.xlu0 %v1526
        %v1528 = vpop.xlane.xlu0 %1527
        %v1529 = vadd.f32 %v1405, %v1407
        %1530 = vadd.xlane.f32.xlu0 %v1529
        %v1531 = vpop.xlane.xlu0 %1530
        %v1532 = vadd.f32 %v1409, %v1411
        %1533 = vadd.xlane.f32.xlu0 %v1532
        %v1534 = vpop.xlane.xlu0 %1533
        %v1535 = vadd.f32 %v1413, %v1415
        %1536 = vadd.xlane.f32.xlu0 %v1535
        %v1537 = vpop.xlane.xlu0 %1536
        %v1538 = vadd.f32 %v1417, %v1419
        %1539 = vadd.xlane.f32.xlu0 %v1538
        %v1540 = vpop.xlane.xlu0 %1539
        %v1541 = vadd.f32 %v1421, %v1423
        %1542 = vadd.xlane.f32.xlu0 %v1541
        %v1543 = vpop.xlane.xlu0 %1542
        %v1544 = vadd.f32 %v1425, %v1427
        %1545 = vadd.xlane.f32.xlu0 %v1544
        %v1546 = vpop.xlane.xlu0 %1545
        %v1547 = vadd.f32 %v1429, %v1431
        %1548 = vadd.xlane.f32.xlu0 %v1547
        %v1549 = vpop.xlane.xlu0 %1548
        %v1550 = vadd.f32 %v1433, %v1435
        %1551 = vadd.xlane.f32.xlu0 %v1550
        %v1552 = vpop.xlane.xlu0 %1551
        %v1553 = vadd.f32 %v1437, %v1439
        %1554 = vadd.xlane.f32.xlu0 %v1553
        %v1555 = vpop.xlane.xlu0 %1554
        %v1556 = vadd.f32 %v1441, %v1443
        %1557 = vadd.xlane.f32.xlu0 %v1556
        %v1558 = vpop.xlane.xlu0 %1557
        %v1559 = vadd.f32 %v1445, %v1447
        %1560 = vadd.xlane.f32.xlu0 %v1559
        %v1561 = vpop.xlane.xlu0 %1560
        %v1562 = vadd.f32 %v1449, %v1451
        %1563 = vadd.xlane.f32.xlu0 %v1562
        %v1564 = vpop.xlane.xlu0 %1563
        %v1565 = vadd.f32 %v1453, %v1455
        %1566 = vadd.xlane.f32.xlu0 %v1565
        %v1567 = vpop.xlane.xlu0 %1566
        %v1568 = vadd.f32 %v1457, %v1459
        %1569 = vadd.xlane.f32.xlu0 %v1568
        %v1570 = vpop.xlane.xlu0 %1569
        %v1571 = vadd.f32 %v1461, %v1463
        %1572 = vadd.xlane.f32.xlu0 %v1571
        %v1573 = vpop.xlane.xlu0 %1572
        %v1574 = vadd.f32 %v1465, %v1467
        %1575 = vadd.xlane.f32.xlu0 %v1574
        %v1576 = vpop.xlane.xlu0 %1575
        %v1577 = vadd.f32 %v1469, %v1471
        %1578 = vadd.xlane.f32.xlu0 %v1577
        %v1579 = vpop.xlane.xlu0 %1578
        %v1580 = vadd.f32 %v1473, %v1475
        %1581 = vadd.xlane.f32.xlu0 %v1580
        %v1582 = vpop.xlane.xlu0 %1581
        %v1583 = vadd.f32 %v1477, %v1479
        %1584 = vadd.xlane.f32.xlu0 %v1583
        %v1585 = vpop.xlane.xlu0 %1584
        %v1586 = vadd.f32 %v1481, %v1483
        %1587 = vadd.xlane.f32.xlu0 %v1586
        %v1588 = vpop.xlane.xlu0 %1587
        %v1589 = vadd.f32 %v1485, %v1487
        %1590 = vadd.xlane.f32.xlu0 %v1589
        %v1591 = vpop.xlane.xlu0 %1590
        %v1592 = vadd.f32 %v1489, %v1491
        %1593 = vadd.xlane.f32.xlu0 %v1592
        %v1594 = vpop.xlane.xlu0 %1593
        %v1595 = vadd.f32 %v1493, %v1495
        %1596 = vadd.xlane.f32.xlu0 %v1595
        %v1597 = vpop.xlane.xlu0 %1596
        %v1598 = vadd.f32 %v1497, %v1499
        %1599 = vadd.xlane.f32.xlu0 %v1598
        %v1600 = vpop.xlane.xlu0 %1599
        %v1601 = vadd.f32 %v1501, %v1503
        %1602 = vadd.xlane.f32.xlu0 %v1601
        %v1603 = vpop.xlane.xlu0 %1602
        %v1604 = vadd.f32 %v1505, %v1507
        %1605 = vadd.xlane.f32.xlu0 %v1604
        %v1606 = vpop.xlane.xlu0 %1605
        %v1607 = vadd.f32 %v1509, %v1511
        %1608 = vadd.xlane.f32.xlu0 %v1607
        %v1609 = vpop.xlane.xlu0 %1608
        %v1610 = vadd.f32 %v1513, %v1515
        %1611 = vadd.xlane.f32.xlu0 %v1610
        %v1612 = vpop.xlane.xlu0 %1611
        %v1613 = vadd.f32 %v1517, %v1519
        %1614 = vadd.xlane.f32.xlu0 %v1613
        %v1615 = vpop.xlane.xlu0 %1614
        %v1616 = vrcp.pop %v1522
        %v1617 = vrcp.pop %v1525
        %v1618 = vrcp.pop %v1528
        %v1619 = vrcp.pop %v1531
        %v1620 = vrcp.pop %v1534
        %v1621 = vrcp.pop %v1537
        %v1622 = vrcp.pop %v1540
        %v1623 = vrcp.pop %v1543
        %v1624 = vrcp.pop %v1546
        %v1625 = vrcp.pop %v1549
        %v1626 = vrcp.pop %v1552
        %v1627 = vrcp.pop %v1555
        %v1628 = vrcp.pop %v1558
        %v1629 = vrcp.pop %v1561
        %v1630 = vrcp.pop %v1564
        %v1631 = vrcp.pop %v1567
        %v1632 = vrcp.pop %v1570
        %v1633 = vrcp.pop %v1573
        %v1634 = vrcp.pop %v1576
        %v1635 = vrcp.pop %v1579
        %v1636 = vrcp.pop %v1582
        %v1637 = vrcp.pop %v1585
        %v1638 = vrcp.pop %v1588
        %v1639 = vrcp.pop %v1591
        %v1640 = vrcp.pop %v1594
        %v1641 = vrcp.pop %v1597
        %v1642 = vrcp.pop %v1600
        %v1643 = vrcp.pop %v1603
        %v1644 = vrcp.pop %v1606
        %v1645 = vrcp.pop %v1609
        %v1646 = vrcp.pop %v1612
        %v1647 = vrcp.pop %v1615
        %v1648 = vmul.f32 %v1393, %v1616
        %v1649 = vmul.f32 %v1395, %v1616
        %v1650 = vmul.f32 %v1397, %v1617
        %v1651 = vmul.f32 %v1399, %v1617
        %v1652 = vmul.f32 %v1401, %v1618
        %v1653 = vmul.f32 %v1403, %v1618
        %v1654 = vmul.f32 %v1405, %v1619
        %v1655 = vmul.f32 %v1407, %v1619
        %v1656 = vmul.f32 %v1409, %v1620
        %v1657 = vmul.f32 %v1411, %v1620
        %v1658 = vmul.f32 %v1413, %v1621
        %v1659 = vmul.f32 %v1415, %v1621
        %v1660 = vmul.f32 %v1417, %v1622
        %v1661 = vmul.f32 %v1419, %v1622
        %v1662 = vmul.f32 %v1421, %v1623
        %v1663 = vmul.f32 %v1423, %v1623
        %v1664 = vmul.f32 %v1425, %v1624
        %v1665 = vmul.f32 %v1427, %v1624
        %v1666 = vmul.f32 %v1429, %v1625
        %v1667 = vmul.f32 %v1431, %v1625
        %v1668 = vmul.f32 %v1433, %v1626
        %v1669 = vmul.f32 %v1435, %v1626
        %v1670 = vmul.f32 %v1437, %v1627
        %v1671 = vmul.f32 %v1439, %v1627
        %v1672 = vmul.f32 %v1441, %v1628
        %v1673 = vmul.f32 %v1443, %v1628
        %v1674 = vmul.f32 %v1445, %v1629
        %v1675 = vmul.f32 %v1447, %v1629
        %v1676 = vmul.f32 %v1449, %v1630
        %v1677 = vmul.f32 %v1451, %v1630
        %v1678 = vmul.f32 %v1453, %v1631
        %v1679 = vmul.f32 %v1455, %v1631
        %v1680 = vmul.f32 %v1457, %v1632
        %v1681 = vmul.f32 %v1459, %v1632
        %v1682 = vmul.f32 %v1461, %v1633
        %v1683 = vmul.f32 %v1463, %v1633
        %v1684 = vmul.f32 %v1465, %v1634
        %v1685 = vmul.f32 %v1467, %v1634
        %v1686 = vmul.f32 %v1469, %v1635
        %v1687 = vmul.f32 %v1471, %v1635
        %v1688 = vmul.f32 %v1473, %v1636
        %v1689 = vmul.f32 %v1475, %v1636
        %v1690 = vmul.f32 %v1477, %v1637
        %v1691 = vmul.f32 %v1479, %v1637
        %v1692 = vmul.f32 %v1481, %v1638
        %v1693 = vmul.f32 %v1483, %v1638
        %v1694 = vmul.f32 %v1485, %v1639
        %v1695 = vmul.f32 %v1487, %v1639
        %v1696 = vmul.f32 %v1489, %v1640
        %v1697 = vmul.f32 %v1491, %v1640
        %v1698 = vmul.f32 %v1493, %v1641
        %v1699 = vmul.f32 %v1495, %v1641
        %v1700 = vmul.f32 %v1497, %v1642
        %v1701 = vmul.f32 %v1499, %v1642
        %v1702 = vmul.f32 %v1501, %v1643
        %v1703 = vmul.f32 %v1503, %v1643
        %v1704 = vmul.f32 %v1505, %v1644
        %v1705 = vmul.f32 %v1507, %v1644
        %v1706 = vmul.f32 %v1509, %v1645
        %v1707 = vmul.f32 %v1511, %v1645
        %v1708 = vmul.f32 %v1513, %v1646
        %v1709 = vmul.f32 %v1515, %v1646
        %v1710 = vmul.f32 %v1517, %v1647
        %v1711 = vmul.f32 %v1519, %v1647
        %v1712 = vpack.c.bf16 %v1650, %v1648
        %v1713 = vpack.c.bf16 %v1651, %v1649
        %v1714 = vpack.c.bf16 %v1654, %v1652
        %v1715 = vpack.c.bf16 %v1655, %v1653
        %v1716 = vpack.c.bf16 %v1658, %v1656
        %v1717 = vpack.c.bf16 %v1659, %v1657
        %v1718 = vpack.c.bf16 %v1662, %v1660
        %v1719 = vpack.c.bf16 %v1663, %v1661
        %v1720 = vpack.c.bf16 %v1666, %v1664
        %v1721 = vpack.c.bf16 %v1667, %v1665
        %v1722 = vpack.c.bf16 %v1670, %v1668
        %v1723 = vpack.c.bf16 %v1671, %v1669
        %v1724 = vpack.c.bf16 %v1674, %v1672
        %v1725 = vpack.c.bf16 %v1675, %v1673
        %v1726 = vpack.c.bf16 %v1678, %v1676
        %v1727 = vpack.c.bf16 %v1679, %v1677
        %v1728 = vpack.c.bf16 %v1682, %v1680
        %v1729 = vpack.c.bf16 %v1683, %v1681
        %v1730 = vpack.c.bf16 %v1686, %v1684
        %v1731 = vpack.c.bf16 %v1687, %v1685
        %v1732 = vpack.c.bf16 %v1690, %v1688
        %v1733 = vpack.c.bf16 %v1691, %v1689
        %v1734 = vpack.c.bf16 %v1694, %v1692
        %v1735 = vpack.c.bf16 %v1695, %v1693
        %v1736 = vpack.c.bf16 %v1698, %v1696
        %v1737 = vpack.c.bf16 %v1699, %v1697
        %v1738 = vpack.c.bf16 %v1702, %v1700
        %v1739 = vpack.c.bf16 %v1703, %v1701
        %v1740 = vpack.c.bf16 %v1706, %v1704
        %v1741 = vpack.c.bf16 %v1707, %v1705
        %v1742 = vpack.c.bf16 %v1710, %v1708
        %v1743 = vpack.c.bf16 %v1711, %v1709
        %1744 = vmatprep.subr.bf16.mxu0 %v1713
        %1745 = vmatpush1.bf16.xpose.msra.mxu0 %v1712
        %1746 = vmatprep.subr.bf16.mxu0 %v1715
        %1747 = vmatpush1.bf16.xpose.msra.mxu0 %v1714
        %1748 = vmatprep.subr.bf16.mxu0 %v1717
        %1749 = vmatpush1.bf16.xpose.msra.mxu0 %v1716
        %1750 = vmatprep.subr.bf16.mxu0 %v1719
        %1751 = vmatpush1.bf16.xpose.msra.mxu0 %v1718
        %1752 = vmatprep.subr.bf16.mxu0 %v1721
        %1753 = vmatpush1.bf16.xpose.msra.mxu0 %v1720
        %1754 = vmatprep.subr.bf16.mxu0 %v1723
        %1755 = vmatpush1.bf16.xpose.msra.mxu0 %v1722
        %1756 = vmatprep.subr.bf16.mxu0 %v1725
        %1757 = vmatpush1.bf16.xpose.msra.mxu0 %v1724
        %1758 = vmatprep.subr.bf16.mxu0 %v1727
        %1759 = vmatpush1.bf16.xpose.msra.mxu0 %v1726
        %1760 = vmatprep.subr.bf16.mxu0 %v1729
        %1761 = vmatpush1.bf16.xpose.msra.mxu0 %v1728
        %1762 = vmatprep.subr.bf16.mxu0 %v1731
        %1763 = vmatpush1.bf16.xpose.msra.mxu0 %v1730
        %1764 = vmatprep.subr.bf16.mxu0 %v1733
        %1765 = vmatpush1.bf16.xpose.msra.mxu0 %v1732
        %1766 = vmatprep.subr.bf16.mxu0 %v1735
        %1767 = vmatpush1.bf16.xpose.msra.mxu0 %v1734
        %1768 = vmatprep.subr.bf16.mxu0 %v1737
        %1769 = vmatpush1.bf16.xpose.msra.mxu0 %v1736
        %1770 = vmatprep.subr.bf16.mxu0 %v1739
        %1771 = vmatpush1.bf16.xpose.msra.mxu0 %v1738
        %1772 = vmatprep.subr.bf16.mxu0 %v1741
        %1773 = vmatpush1.bf16.xpose.msra.mxu0 %v1740
        %1774 = vmatprep.subr.bf16.mxu0 %v1743
        %1775 = vmatpush1.bf16.xpose.msra.mxu0 %v1742
        %1776 = vmatprep.mubr.bf16.mxu0 %v987
        %1777 = vmatmul.mubr.bf16.gmra.mrb[0].mxu0 %v986
        %v1778 = vpop.f32.mrb[0].mxu0
        %v1779 = vadd.f32 0.0, %v1778
        %v1780 = vpop.f32.mrb[0].mxu0
        %v1781 = vadd.f32 0.0, %v1780
        %v1782 = vpop.f32.mrb[0].mxu0
        %v1783 = vadd.f32 0.0, %v1782
        %v1784 = vpop.f32.mrb[0].mxu0
        %v1785 = vadd.f32 0.0, %v1784
        %1786 = vmatprep.mubr.bf16.mxu0 %v989
        %1787 = vmatmul.mubr.bf16.gmra.mrb[0].mxu0 %v988
        %v1788 = vpop.f32.mrb[0].mxu0
        %v1789 = vadd.f32 0.0, %v1788
        %v1790 = vpop.f32.mrb[0].mxu0
        %v1791 = vadd.f32 0.0, %v1790
        %v1792 = vpop.f32.mrb[0].mxu0
        %v1793 = vadd.f32 0.0, %v1792
        %v1794 = vpop.f32.mrb[0].mxu0
        %v1795 = vadd.f32 0.0, %v1794
        %1796 = vdwg.mxu0
        %v1797 = vpack.c.bf16 %v1783, %v1779
        %v1798 = vpack.c.bf16 %v1785, %v1781
        %v1799 = vpack.c.bf16 %v1793, %v1789
        %v1800 = vpack.c.bf16 %v1795, %v1791
        %1801 = vst [vmem:[#allocation3] sm:$0xff] %v1797
        %1802 = vst [vmem:[#allocation3 + $0x8] sm:$0xff] %v1798
        %1803 = vst [vmem:[#allocation3 + $0x10] sm:$0xff] %v1799
        %1804 = vst [vmem:[#allocation3 + $0x18] sm:$0xff] %v1800
        %1805 = vxpose.xlu0.b32.start [1/16] %v844, 128
        %1806 = vxpose.xlu0.b32.cont [2/16] %v848, 128
        %1807 = vxpose.xlu0.b32.cont [3/16] %v854, 128
        %1808 = vxpose.xlu0.b32.cont [4/16] %v858, 128
        %1809 = vxpose.xlu0.b32.cont [5/16] 0.0, 128
        %1810 = vxpose.xlu0.b32.cont [6/16] 0.0, 128
        %1811 = vxpose.xlu0.b32.cont [7/16] 0.0, 128
        %1812 = vxpose.xlu0.b32.cont [8/16] 0.0, 128
        %1813 = vxpose.xlu0.b32.cont [9/16] 0.0, 128
        %1814 = vxpose.xlu0.b32.cont [10/16] 0.0, 128
        %1815 = vxpose.xlu0.b32.cont [11/16] 0.0, 128
        %1816 = vxpose.xlu0.b32.cont [12/16] 0.0, 128
        %1817 = vxpose.xlu0.b32.cont [13/16] 0.0, 128
        %1818 = vxpose.xlu0.b32.cont [14/16] 0.0, 128
        %1819 = vxpose.xlu0.b32.cont [15/16] 0.0, 128
        %1820 = vxpose.xlu0.b32.end [16/16] 0.0, 128
        %v1821 = vpop.trf.xlu0
        %v1822 = vpop.trf.xlu0
        %v1823 = vpop.trf.xlu0
        %v1824 = vpop.trf.xlu0
        %v1825 = vpop.trf.xlu0
        %v1826 = vpop.trf.xlu0
        %v1827 = vpop.trf.xlu0
        %v1828 = vpop.trf.xlu0
        %v1829 = vpop.trf.xlu0
        %v1830 = vpop.trf.xlu0
        %v1831 = vpop.trf.xlu0
        %v1832 = vpop.trf.xlu0
        %v1833 = vpop.trf.xlu0
        %v1834 = vpop.trf.xlu0
        %v1835 = vpop.trf.xlu0
        %v1836 = vpop.trf.xlu0
        %1837 = vxpose.xlu0.b32.start [1/16] %v846, 128
        %1838 = vxpose.xlu0.b32.cont [2/16] %v850, 128
        %1839 = vxpose.xlu0.b32.cont [3/16] %v856, 128
        %1840 = vxpose.xlu0.b32.cont [4/16] %v860, 128
        %1841 = vxpose.xlu0.b32.cont [5/16] 0.0, 128
        %1842 = vxpose.xlu0.b32.cont [6/16] 0.0, 128
        %1843 = vxpose.xlu0.b32.cont [7/16] 0.0, 128
        %1844 = vxpose.xlu0.b32.cont [8/16] 0.0, 128
        %1845 = vxpose.xlu0.b32.cont [9/16] 0.0, 128
        %1846 = vxpose.xlu0.b32.cont [10/16] 0.0, 128
        %1847 = vxpose.xlu0.b32.cont [11/16] 0.0, 128
        %1848 = vxpose.xlu0.b32.cont [12/16] 0.0, 128
        %1849 = vxpose.xlu0.b32.cont [13/16] 0.0, 128
        %1850 = vxpose.xlu0.b32.cont [14/16] 0.0, 128
        %1851 = vxpose.xlu0.b32.cont [15/16] 0.0, 128
        %1852 = vxpose.xlu0.b32.end [16/16] 0.0, 128
        %v1853 = vpop.trf.xlu0
        %v1854 = vpop.trf.xlu0
        %v1855 = vpop.trf.xlu0
        %v1856 = vpop.trf.xlu0
        %v1857 = vpop.trf.xlu0
        %v1858 = vpop.trf.xlu0
        %v1859 = vpop.trf.xlu0
        %v1860 = vpop.trf.xlu0
        %v1861 = vpop.trf.xlu0
        %v1862 = vpop.trf.xlu0
        %v1863 = vpop.trf.xlu0
        %v1864 = vpop.trf.xlu0
        %v1865 = vpop.trf.xlu0
        %v1866 = vpop.trf.xlu0
        %v1867 = vpop.trf.xlu0
        %v1868 = vpop.trf.xlu0
        %v1869 = vpack.c.bf16 %v1822, %v1821
        %v1870 = vpack.c.bf16 %v1824, %v1823
        %v1871 = vpack.c.bf16 %v1826, %v1825
        %v1872 = vpack.c.bf16 %v1828, %v1827
        %v1873 = vpack.c.bf16 %v1830, %v1829
        %v1874 = vpack.c.bf16 %v1832, %v1831
        %v1875 = vpack.c.bf16 %v1834, %v1833
        %v1876 = vpack.c.bf16 %v1836, %v1835
        %v1877 = vpack.c.bf16 %v1854, %v1853
        %v1878 = vpack.c.bf16 %v1856, %v1855
        %v1879 = vpack.c.bf16 %v1858, %v1857
        %v1880 = vpack.c.bf16 %v1860, %v1859
        %v1881 = vpack.c.bf16 %v1862, %v1861
        %v1882 = vpack.c.bf16 %v1864, %v1863
        %v1883 = vpack.c.bf16 %v1866, %v1865
        %v1884 = vpack.c.bf16 %v1868, %v1867
        %v1885 = vld [vmem:[#allocation2 + $0x20] sm:$0xff]
        %v1886 = vld [vmem:[#allocation2 + $0x28] sm:$0xff]
        %v1887 = vld [vmem:[#allocation2 + $0x30] sm:$0xff]
        %v1888 = vld [vmem:[#allocation2 + $0x38] sm:$0xff]
        %v1889 = vld [vmem:[#allocation2 + $0xa0] sm:$0xff]
        %v1890 = vld [vmem:[#allocation2 + $0xa8] sm:$0xff]
        %v1891 = vld [vmem:[#allocation2 + $0xb0] sm:$0xff]
        %v1892 = vld [vmem:[#allocation2 + $0xb8] sm:$0xff]
        %v1894 = vsel %vm990, %v1869, 0
        %v1897 = vsel %vm990, %v1870, 0
        %v1900 = vsel %vm990, %v1871, 0
        %v1903 = vsel %vm990, %v1872, 0
        %v1906 = vsel %vm990, %v1873, 0
        %v1909 = vsel %vm990, %v1874, 0
        %v1912 = vsel %vm990, %v1875, 0
        %v1915 = vsel %vm990, %v1876, 0
        %v1918 = vsel %vm990, %v1877, 0
        %v1921 = vsel %vm990, %v1878, 0
        %v1924 = vsel %vm990, %v1879, 0
        %v1927 = vsel %vm990, %v1880, 0
        %v1930 = vsel %vm990, %v1881, 0
        %v1933 = vsel %vm990, %v1882, 0
        %v1936 = vsel %vm990, %v1883, 0
        %v1939 = vsel %vm990, %v1884, 0
        %1941 = vmatprep.subr.bf16.mxu0 %v1886
        %1942 = vmatpush1.bf16.msra.mxu0 %v1885
        %1943 = vmatprep.subr.bf16.mxu0 %v1888
        %1944 = vmatpush1.bf16.msra.mxu0 %v1887
        %1945 = vmatprep.subr.bf16.mxu0 0
        %1946 = vmatpush1.bf16.msra.mxu0 0
        %1947 = vmatprep.subr.bf16.mxu0 0
        %1948 = vmatpush1.bf16.msra.mxu0 0
        %1949 = vmatprep.subr.bf16.mxu0 0
        %1950 = vmatpush1.bf16.msra.mxu0 0
        %1951 = vmatprep.subr.bf16.mxu0 0
        %1952 = vmatpush1.bf16.msra.mxu0 0
        %1953 = vmatprep.subr.bf16.mxu0 0
        %1954 = vmatpush1.bf16.msra.mxu0 0
        %1955 = vmatprep.subr.bf16.mxu0 0
        %1956 = vmatpush1.bf16.msra.mxu0 0
        %1957 = vmatprep.subr.bf16.mxu0 0
        %1958 = vmatpush1.bf16.msra.mxu0 0
        %1959 = vmatprep.subr.bf16.mxu0 0
        %1960 = vmatpush1.bf16.msra.mxu0 0
        %1961 = vmatprep.subr.bf16.mxu0 0
        %1962 = vmatpush1.bf16.msra.mxu0 0
        %1963 = vmatprep.subr.bf16.mxu0 0
        %1964 = vmatpush1.bf16.msra.mxu0 0
        %1965 = vmatprep.subr.bf16.mxu0 0
        %1966 = vmatpush1.bf16.msra.mxu0 0
        %1967 = vmatprep.subr.bf16.mxu0 0
        %1968 = vmatpush1.bf16.msra.mxu0 0
        %1969 = vmatprep.subr.bf16.mxu0 0
        %1970 = vmatpush1.bf16.msra.mxu0 0
        %1971 = vmatprep.subr.bf16.mxu0 0
        %1972 = vmatpush1.bf16.msra.mxu0 0
        %1973 = vmatprep.mubr.bf16.mxu0 0
        %1974 = vmatmul.mubr.bf16.gmra.mrb[0].mxu0 %v1894
        %v1975 = vpop.f32.mrb[0].mxu0
        %v1976 = vadd.f32 0.0, %v1975
        %v1977 = vpop.f32.mrb[0].mxu0
        %v1978 = vadd.f32 0.0, %v1977
        %v1979 = vpop.f32.mrb[0].mxu0
        %v1980 = vadd.f32 0.0, %v1979
        %v1981 = vpop.f32.mrb[0].mxu0
        %v1982 = vadd.f32 0.0, %v1981
        %1983 = vmatprep.mubr.bf16.mxu0 0
        %1984 = vmatmul.mubr.bf16.gmra.mrb[0].mxu0 %v1897
        %v1985 = vpop.f32.mrb[0].mxu0
        %v1986 = vadd.f32 0.0, %v1985
        %v1987 = vpop.f32.mrb[0].mxu0
        %v1988 = vadd.f32 0.0, %v1987
        %v1989 = vpop.f32.mrb[0].mxu0
        %v1990 = vadd.f32 0.0, %v1989
        %v1991 = vpop.f32.mrb[0].mxu0
        %v1992 = vadd.f32 0.0, %v1991
        %1993 = vmatprep.mubr.bf16.mxu0 0
        %1994 = vmatmul.mubr.bf16.gmra.mrb[0].mxu0 %v1900
        %v1995 = vpop.f32.mrb[0].mxu0
        %v1996 = vadd.f32 0.0, %v1995
        %v1997 = vpop.f32.mrb[0].mxu0
        %v1998 = vadd.f32 0.0, %v1997
        %v1999 = vpop.f32.mrb[0].mxu0
        %v2000 = vadd.f32 0.0, %v1999
        %v2001 = vpop.f32.mrb[0].mxu0
        %v2002 = vadd.f32 0.0, %v2001
        %2003 = vmatprep.mubr.bf16.mxu0 0
        %2004 = vmatmul.mubr.bf16.gmra.mrb[0].mxu0 %v1903
        %v2005 = vpop.f32.mrb[0].mxu0
        %v2006 = vadd.f32 0.0, %v2005
        %v2007 = vpop.f32.mrb[0].mxu0
        %v2008 = vadd.f32 0.0, %v2007
        %v2009 = vpop.f32.mrb[0].mxu0
        %v2010 = vadd.f32 0.0, %v2009
        %v2011 = vpop.f32.mrb[0].mxu0
        %v2012 = vadd.f32 0.0, %v2011
        %2013 = vmatprep.mubr.bf16.mxu0 0
        %2014 = vmatmul.mubr.bf16.gmra.mrb[0].mxu0 %v1906
        %v2015 = vpop.f32.mrb[0].mxu0
        %v2016 = vadd.f32 0.0, %v2015
        %v2017 = vpop.f32.mrb[0].mxu0
        %v2018 = vadd.f32 0.0, %v2017
        %v2019 = vpop.f32.mrb[0].mxu0
        %v2020 = vadd.f32 0.0, %v2019
        %v2021 = vpop.f32.mrb[0].mxu0
        %v2022 = vadd.f32 0.0, %v2021
        %2023 = vmatprep.mubr.bf16.mxu0 0
        %2024 = vmatmul.mubr.bf16.gmra.mrb[0].mxu0 %v1909
        %v2025 = vpop.f32.mrb[0].mxu0
        %v2026 = vadd.f32 0.0, %v2025
        %v2027 = vpop.f32.mrb[0].mxu0
        %v2028 = vadd.f32 0.0, %v2027
        %v2029 = vpop.f32.mrb[0].mxu0
        %v2030 = vadd.f32 0.0, %v2029
        %v2031 = vpop.f32.mrb[0].mxu0
        %v2032 = vadd.f32 0.0, %v2031
        %2033 = vmatprep.mubr.bf16.mxu0 0
        %2034 = vmatmul.mubr.bf16.gmra.mrb[0].mxu0 %v1912
        %v2035 = vpop.f32.mrb[0].mxu0
        %v2036 = vadd.f32 0.0, %v2035
        %v2037 = vpop.f32.mrb[0].mxu0
        %v2038 = vadd.f32 0.0, %v2037
        %v2039 = vpop.f32.mrb[0].mxu0
        %v2040 = vadd.f32 0.0, %v2039
        %v2041 = vpop.f32.mrb[0].mxu0
        %v2042 = vadd.f32 0.0, %v2041
        %2043 = vmatprep.mubr.bf16.mxu0 0
        %2044 = vmatmul.mubr.bf16.gmra.mrb[0].mxu0 %v1915
        %v2045 = vpop.f32.mrb[0].mxu0
        %v2046 = vadd.f32 0.0, %v2045
        %v2047 = vpop.f32.mrb[0].mxu0
        %v2048 = vadd.f32 0.0, %v2047
        %v2049 = vpop.f32.mrb[0].mxu0
        %v2050 = vadd.f32 0.0, %v2049
        %v2051 = vpop.f32.mrb[0].mxu0
        %v2052 = vadd.f32 0.0, %v2051
        %2053 = vmatprep.mubr.bf16.mxu0 0
        %2054 = vmatmul.mubr.bf16.gmra.mrb[0].mxu0 %v1918
        %v2055 = vpop.f32.mrb[0].mxu0
        %v2056 = vadd.f32 0.0, %v2055
        %v2057 = vpop.f32.mrb[0].mxu0
        %v2058 = vadd.f32 0.0, %v2057
        %v2059 = vpop.f32.mrb[0].mxu0
        %v2060 = vadd.f32 0.0, %v2059
        %v2061 = vpop.f32.mrb[0].mxu0
        %v2062 = vadd.f32 0.0, %v2061
        %2063 = vmatprep.mubr.bf16.mxu0 0
        %2064 = vmatmul.mubr.bf16.gmra.mrb[0].mxu0 %v1921
        %v2065 = vpop.f32.mrb[0].mxu0
        %v2066 = vadd.f32 0.0, %v2065
        %v2067 = vpop.f32.mrb[0].mxu0
        %v2068 = vadd.f32 0.0, %v2067
        %v2069 = vpop.f32.mrb[0].mxu0
        %v2070 = vadd.f32 0.0, %v2069
        %v2071 = vpop.f32.mrb[0].mxu0
        %v2072 = vadd.f32 0.0, %v2071
        %2073 = vmatprep.mubr.bf16.mxu0 0
        %2074 = vmatmul.mubr.bf16.gmra.mrb[0].mxu0 %v1924
        %v2075 = vpop.f32.mrb[0].mxu0
        %v2076 = vadd.f32 0.0, %v2075
        %v2077 = vpop.f32.mrb[0].mxu0
        %v2078 = vadd.f32 0.0, %v2077
        %v2079 = vpop.f32.mrb[0].mxu0
        %v2080 = vadd.f32 0.0, %v2079
        %v2081 = vpop.f32.mrb[0].mxu0
        %v2082 = vadd.f32 0.0, %v2081
        %2083 = vmatprep.mubr.bf16.mxu0 0
        %2084 = vmatmul.mubr.bf16.gmra.mrb[0].mxu0 %v1927
        %v2085 = vpop.f32.mrb[0].mxu0
        %v2086 = vadd.f32 0.0, %v2085
        %v2087 = vpop.f32.mrb[0].mxu0
        %v2088 = vadd.f32 0.0, %v2087
        %v2089 = vpop.f32.mrb[0].mxu0
        %v2090 = vadd.f32 0.0, %v2089
        %v2091 = vpop.f32.mrb[0].mxu0
        %v2092 = vadd.f32 0.0, %v2091
        %2093 = vmatprep.mubr.bf16.mxu0 0
        %2094 = vmatmul.mubr.bf16.gmra.mrb[0].mxu0 %v1930
        %v2095 = vpop.f32.mrb[0].mxu0
        %v2096 = vadd.f32 0.0, %v2095
        %v2097 = vpop.f32.mrb[0].mxu0
        %v2098 = vadd.f32 0.0, %v2097
        %v2099 = vpop.f32.mrb[0].mxu0
        %v2100 = vadd.f32 0.0, %v2099
        %v2101 = vpop.f32.mrb[0].mxu0
        %v2102 = vadd.f32 0.0, %v2101
        %2103 = vmatprep.mubr.bf16.mxu0 0
        %2104 = vmatmul.mubr.bf16.gmra.mrb[0].mxu0 %v1933
        %v2105 = vpop.f32.mrb[0].mxu0
        %v2106 = vadd.f32 0.0, %v2105
        %v2107 = vpop.f32.mrb[0].mxu0
        %v2108 = vadd.f32 0.0, %v2107
        %v2109 = vpop.f32.mrb[0].mxu0
        %v2110 = vadd.f32 0.0, %v2109
        %v2111 = vpop.f32.mrb[0].mxu0
        %v2112 = vadd.f32 0.0, %v2111
        %2113 = vmatprep.mubr.bf16.mxu0 0
        %2114 = vmatmul.mubr.bf16.gmra.mrb[0].mxu0 %v1936
        %v2115 = vpop.f32.mrb[0].mxu0
        %v2116 = vadd.f32 0.0, %v2115
        %v2117 = vpop.f32.mrb[0].mxu0
        %v2118 = vadd.f32 0.0, %v2117
        %v2119 = vpop.f32.mrb[0].mxu0
        %v2120 = vadd.f32 0.0, %v2119
        %v2121 = vpop.f32.mrb[0].mxu0
        %v2122 = vadd.f32 0.0, %v2121
        %2123 = vmatprep.mubr.bf16.mxu0 0
        %2124 = vmatmul.mubr.bf16.gmra.mrb[0].mxu0 %v1939
        %v2125 = vpop.f32.mrb[0].mxu0
        %v2126 = vadd.f32 0.0, %v2125
        %v2127 = vpop.f32.mrb[0].mxu0
        %v2128 = vadd.f32 0.0, %v2127
        %v2129 = vpop.f32.mrb[0].mxu0
        %v2130 = vadd.f32 0.0, %v2129
        %v2131 = vpop.f32.mrb[0].mxu0
        %v2132 = vadd.f32 0.0, %v2131
        %2133 = vdwg.mxu0
        %v2134 = vmax.f32 %v1976, %v1978
        %2135 = vmax.xlane.f32.xlu0 %v2134
        %v2136 = vpop.xlane.xlu0 %2135
        %v2137 = vmax.f32 %v1980, %v1982
        %2138 = vmax.xlane.f32.xlu0 %v2137
        %v2139 = vpop.xlane.xlu0 %2138
        %v2140 = vmax.f32 %v1986, %v1988
        %2141 = vmax.xlane.f32.xlu0 %v2140
        %v2142 = vpop.xlane.xlu0 %2141
        %v2143 = vmax.f32 %v1990, %v1992
        %2144 = vmax.xlane.f32.xlu0 %v2143
        %v2145 = vpop.xlane.xlu0 %2144
        %v2146 = vmax.f32 %v1996, %v1998
        %2147 = vmax.xlane.f32.xlu0 %v2146
        %v2148 = vpop.xlane.xlu0 %2147
        %v2149 = vmax.f32 %v2000, %v2002
        %2150 = vmax.xlane.f32.xlu0 %v2149
        %v2151 = vpop.xlane.xlu0 %2150
        %v2152 = vmax.f32 %v2006, %v2008
        %2153 = vmax.xlane.f32.xlu0 %v2152
        %v2154 = vpop.xlane.xlu0 %2153
        %v2155 = vmax.f32 %v2010, %v2012
        %2156 = vmax.xlane.f32.xlu0 %v2155
        %v2157 = vpop.xlane.xlu0 %2156
        %v2158 = vmax.f32 %v2016, %v2018
        %2159 = vmax.xlane.f32.xlu0 %v2158
        %v2160 = vpop.xlane.xlu0 %2159
        %v2161 = vmax.f32 %v2020, %v2022
        %2162 = vmax.xlane.f32.xlu0 %v2161
        %v2163 = vpop.xlane.xlu0 %2162
        %v2164 = vmax.f32 %v2026, %v2028
        %2165 = vmax.xlane.f32.xlu0 %v2164
        %v2166 = vpop.xlane.xlu0 %2165
        %v2167 = vmax.f32 %v2030, %v2032
        %2168 = vmax.xlane.f32.xlu0 %v2167
        %v2169 = vpop.xlane.xlu0 %2168
        %v2170 = vmax.f32 %v2036, %v2038
        %2171 = vmax.xlane.f32.xlu0 %v2170
        %v2172 = vpop.xlane.xlu0 %2171
        %v2173 = vmax.f32 %v2040, %v2042
        %2174 = vmax.xlane.f32.xlu0 %v2173
        %v2175 = vpop.xlane.xlu0 %2174
        %v2176 = vmax.f32 %v2046, %v2048
        %2177 = vmax.xlane.f32.xlu0 %v2176
        %v2178 = vpop.xlane.xlu0 %2177
        %v2179 = vmax.f32 %v2050, %v2052
        %2180 = vmax.xlane.f32.xlu0 %v2179
        %v2181 = vpop.xlane.xlu0 %2180
        %v2182 = vmax.f32 %v2056, %v2058
        %2183 = vmax.xlane.f32.xlu0 %v2182
        %v2184 = vpop.xlane.xlu0 %2183
        %v2185 = vmax.f32 %v2060, %v2062
        %2186 = vmax.xlane.f32.xlu0 %v2185
        %v2187 = vpop.xlane.xlu0 %2186
        %v2188 = vmax.f32 %v2066, %v2068
        %2189 = vmax.xlane.f32.xlu0 %v2188
        %v2190 = vpop.xlane.xlu0 %2189
        %v2191 = vmax.f32 %v2070, %v2072
        %2192 = vmax.xlane.f32.xlu0 %v2191
        %v2193 = vpop.xlane.xlu0 %2192
        %v2194 = vmax.f32 %v2076, %v2078
        %2195 = vmax.xlane.f32.xlu0 %v2194
        %v2196 = vpop.xlane.xlu0 %2195
        %v2197 = vmax.f32 %v2080, %v2082
        %2198 = vmax.xlane.f32.xlu0 %v2197
        %v2199 = vpop.xlane.xlu0 %2198
        %v2200 = vmax.f32 %v2086, %v2088
        %2201 = vmax.xlane.f32.xlu0 %v2200
        %v2202 = vpop.xlane.xlu0 %2201
        %v2203 = vmax.f32 %v2090, %v2092
        %2204 = vmax.xlane.f32.xlu0 %v2203
        %v2205 = vpop.xlane.xlu0 %2204
        %v2206 = vmax.f32 %v2096, %v2098
        %2207 = vmax.xlane.f32.xlu0 %v2206
        %v2208 = vpop.xlane.xlu0 %2207
        %v2209 = vmax.f32 %v2100, %v2102
        %2210 = vmax.xlane.f32.xlu0 %v2209
        %v2211 = vpop.xlane.xlu0 %2210
        %v2212 = vmax.f32 %v2106, %v2108
        %2213 = vmax.xlane.f32.xlu0 %v2212
        %v2214 = vpop.xlane.xlu0 %2213
        %v2215 = vmax.f32 %v2110, %v2112
        %2216 = vmax.xlane.f32.xlu0 %v2215
        %v2217 = vpop.xlane.xlu0 %2216
        %v2218 = vmax.f32 %v2116, %v2118
        %2219 = vmax.xlane.f32.xlu0 %v2218
        %v2220 = vpop.xlane.xlu0 %2219
        %v2221 = vmax.f32 %v2120, %v2122
        %2222 = vmax.xlane.f32.xlu0 %v2221
        %v2223 = vpop.xlane.xlu0 %2222
        %v2224 = vmax.f32 %v2126, %v2128
        %2225 = vmax.xlane.f32.xlu0 %v2224
        %v2226 = vpop.xlane.xlu0 %2225
        %v2227 = vmax.f32 %v2130, %v2132
        %2228 = vmax.xlane.f32.xlu0 %v2227
        %v2229 = vpop.xlane.xlu0 %2228
        %v2230 = vsub.f32 %v1976, %v2136
        %v2231 = vsub.f32 %v1978, %v2136
        %v2232 = vsub.f32 %v1980, %v2139
        %v2233 = vsub.f32 %v1982, %v2139
        %v2234 = vsub.f32 %v1986, %v2142
        %v2235 = vsub.f32 %v1988, %v2142
        %v2236 = vsub.f32 %v1990, %v2145
        %v2237 = vsub.f32 %v1992, %v2145
        %v2238 = vsub.f32 %v1996, %v2148
        %v2239 = vsub.f32 %v1998, %v2148
        %v2240 = vsub.f32 %v2000, %v2151
        %v2241 = vsub.f32 %v2002, %v2151
        %v2242 = vsub.f32 %v2006, %v2154
        %v2243 = vsub.f32 %v2008, %v2154
        %v2244 = vsub.f32 %v2010, %v2157
        %v2245 = vsub.f32 %v2012, %v2157
        %v2246 = vsub.f32 %v2016, %v2160
        %v2247 = vsub.f32 %v2018, %v2160
        %v2248 = vsub.f32 %v2020, %v2163
        %v2249 = vsub.f32 %v2022, %v2163
        %v2250 = vsub.f32 %v2026, %v2166
        %v2251 = vsub.f32 %v2028, %v2166
        %v2252 = vsub.f32 %v2030, %v2169
        %v2253 = vsub.f32 %v2032, %v2169
        %v2254 = vsub.f32 %v2036, %v2172
        %v2255 = vsub.f32 %v2038, %v2172
        %v2256 = vsub.f32 %v2040, %v2175
        %v2257 = vsub.f32 %v2042, %v2175
        %v2258 = vsub.f32 %v2046, %v2178
        %v2259 = vsub.f32 %v2048, %v2178
        %v2260 = vsub.f32 %v2050, %v2181
        %v2261 = vsub.f32 %v2052, %v2181
        %v2262 = vsub.f32 %v2056, %v2184
        %v2263 = vsub.f32 %v2058, %v2184
        %v2264 = vsub.f32 %v2060, %v2187
        %v2265 = vsub.f32 %v2062, %v2187
        %v2266 = vsub.f32 %v2066, %v2190
        %v2267 = vsub.f32 %v2068, %v2190
        %v2268 = vsub.f32 %v2070, %v2193
        %v2269 = vsub.f32 %v2072, %v2193
        %v2270 = vsub.f32 %v2076, %v2196
        %v2271 = vsub.f32 %v2078, %v2196
        %v2272 = vsub.f32 %v2080, %v2199
        %v2273 = vsub.f32 %v2082, %v2199
        %v2274 = vsub.f32 %v2086, %v2202
        %v2275 = vsub.f32 %v2088, %v2202
        %v2276 = vsub.f32 %v2090, %v2205
        %v2277 = vsub.f32 %v2092, %v2205
        %v2278 = vsub.f32 %v2096, %v2208
        %v2279 = vsub.f32 %v2098, %v2208
        %v2280 = vsub.f32 %v2100, %v2211
        %v2281 = vsub.f32 %v2102, %v2211
        %v2282 = vsub.f32 %v2106, %v2214
        %v2283 = vsub.f32 %v2108, %v2214
        %v2284 = vsub.f32 %v2110, %v2217
        %v2285 = vsub.f32 %v2112, %v2217
        %v2286 = vsub.f32 %v2116, %v2220
        %v2287 = vsub.f32 %v2118, %v2220
        %v2288 = vsub.f32 %v2120, %v2223
        %v2289 = vsub.f32 %v2122, %v2223
        %v2290 = vsub.f32 %v2126, %v2226
        %v2291 = vsub.f32 %v2128, %v2226
        %v2292 = vsub.f32 %v2130, %v2229
        %v2293 = vsub.f32 %v2132, %v2229
        %v2294 = vmul.f32 %v2230, 1.442695
        %v2295 = vpow.pop %v2294
        %v2296 = vmul.f32 %v2231, 1.442695
        %v2297 = vpow.pop %v2296
        %v2298 = vmul.f32 %v2232, 1.442695
        %v2299 = vpow.pop %v2298
        %v2300 = vmul.f32 %v2233, 1.442695
        %v2301 = vpow.pop %v2300
        %v2302 = vmul.f32 %v2234, 1.442695
        %v2303 = vpow.pop %v2302
        %v2304 = vmul.f32 %v2235, 1.442695
        %v2305 = vpow.pop %v2304
        %v2306 = vmul.f32 %v2236, 1.442695
        %v2307 = vpow.pop %v2306
        %v2308 = vmul.f32 %v2237, 1.442695
        %v2309 = vpow.pop %v2308
        %v2310 = vmul.f32 %v2238, 1.442695
        %v2311 = vpow.pop %v2310
        %v2312 = vmul.f32 %v2239, 1.442695
        %v2313 = vpow.pop %v2312
        %v2314 = vmul.f32 %v2240, 1.442695
        %v2315 = vpow.pop %v2314
        %v2316 = vmul.f32 %v2241, 1.442695
        %v2317 = vpow.pop %v2316
        %v2318 = vmul.f32 %v2242, 1.442695
        %v2319 = vpow.pop %v2318
        %v2320 = vmul.f32 %v2243, 1.442695
        %v2321 = vpow.pop %v2320
        %v2322 = vmul.f32 %v2244, 1.442695
        %v2323 = vpow.pop %v2322
        %v2324 = vmul.f32 %v2245, 1.442695
        %v2325 = vpow.pop %v2324
        %v2326 = vmul.f32 %v2246, 1.442695
        %v2327 = vpow.pop %v2326
        %v2328 = vmul.f32 %v2247, 1.442695
        %v2329 = vpow.pop %v2328
        %v2330 = vmul.f32 %v2248, 1.442695
        %v2331 = vpow.pop %v2330
        %v2332 = vmul.f32 %v2249, 1.442695
        %v2333 = vpow.pop %v2332
        %v2334 = vmul.f32 %v2250, 1.442695
        %v2335 = vpow.pop %v2334
        %v2336 = vmul.f32 %v2251, 1.442695
        %v2337 = vpow.pop %v2336
        %v2338 = vmul.f32 %v2252, 1.442695
        %v2339 = vpow.pop %v2338
        %v2340 = vmul.f32 %v2253, 1.442695
        %v2341 = vpow.pop %v2340
        %v2342 = vmul.f32 %v2254, 1.442695
        %v2343 = vpow.pop %v2342
        %v2344 = vmul.f32 %v2255, 1.442695
        %v2345 = vpow.pop %v2344
        %v2346 = vmul.f32 %v2256, 1.442695
        %v2347 = vpow.pop %v2346
        %v2348 = vmul.f32 %v2257, 1.442695
        %v2349 = vpow.pop %v2348
        %v2350 = vmul.f32 %v2258, 1.442695
        %v2351 = vpow.pop %v2350
        %v2352 = vmul.f32 %v2259, 1.442695
        %v2353 = vpow.pop %v2352
        %v2354 = vmul.f32 %v2260, 1.442695
        %v2355 = vpow.pop %v2354
        %v2356 = vmul.f32 %v2261, 1.442695
        %v2357 = vpow.pop %v2356
        %v2358 = vmul.f32 %v2262, 1.442695
        %v2359 = vpow.pop %v2358
        %v2360 = vmul.f32 %v2263, 1.442695
        %v2361 = vpow.pop %v2360
        %v2362 = vmul.f32 %v2264, 1.442695
        %v2363 = vpow.pop %v2362
        %v2364 = vmul.f32 %v2265, 1.442695
        %v2365 = vpow.pop %v2364
        %v2366 = vmul.f32 %v2266, 1.442695
        %v2367 = vpow.pop %v2366
        %v2368 = vmul.f32 %v2267, 1.442695
        %v2369 = vpow.pop %v2368
        %v2370 = vmul.f32 %v2268, 1.442695
        %v2371 = vpow.pop %v2370
        %v2372 = vmul.f32 %v2269, 1.442695
        %v2373 = vpow.pop %v2372
        %v2374 = vmul.f32 %v2270, 1.442695
        %v2375 = vpow.pop %v2374
        %v2376 = vmul.f32 %v2271, 1.442695
        %v2377 = vpow.pop %v2376
        %v2378 = vmul.f32 %v2272, 1.442695
        %v2379 = vpow.pop %v2378
        %v2380 = vmul.f32 %v2273, 1.442695
        %v2381 = vpow.pop %v2380
        %v2382 = vmul.f32 %v2274, 1.442695
        %v2383 = vpow.pop %v2382
        %v2384 = vmul.f32 %v2275, 1.442695
        %v2385 = vpow.pop %v2384
        %v2386 = vmul.f32 %v2276, 1.442695
        %v2387 = vpow.pop %v2386
        %v2388 = vmul.f32 %v2277, 1.442695
        %v2389 = vpow.pop %v2388
        %v2390 = vmul.f32 %v2278, 1.442695
        %v2391 = vpow.pop %v2390
        %v2392 = vmul.f32 %v2279, 1.442695
        %v2393 = vpow.pop %v2392
        %v2394 = vmul.f32 %v2280, 1.442695
        %v2395 = vpow.pop %v2394
        %v2396 = vmul.f32 %v2281, 1.442695
        %v2397 = vpow.pop %v2396
        %v2398 = vmul.f32 %v2282, 1.442695
        %v2399 = vpow.pop %v2398
        %v2400 = vmul.f32 %v2283, 1.442695
        %v2401 = vpow.pop %v2400
        %v2402 = vmul.f32 %v2284, 1.442695
        %v2403 = vpow.pop %v2402
        %v2404 = vmul.f32 %v2285, 1.442695
        %v2405 = vpow.pop %v2404
        %v2406 = vmul.f32 %v2286, 1.442695
        %v2407 = vpow.pop %v2406
        %v2408 = vmul.f32 %v2287, 1.442695
        %v2409 = vpow.pop %v2408
        %v2410 = vmul.f32 %v2288, 1.442695
        %v2411 = vpow.pop %v2410
        %v2412 = vmul.f32 %v2289, 1.442695
        %v2413 = vpow.pop %v2412
        %v2414 = vmul.f32 %v2290, 1.442695
        %v2415 = vpow.pop %v2414
        %v2416 = vmul.f32 %v2291, 1.442695
        %v2417 = vpow.pop %v2416
        %v2418 = vmul.f32 %v2292, 1.442695
        %v2419 = vpow.pop %v2418
        %v2420 = vmul.f32 %v2293, 1.442695
        %v2421 = vpow.pop %v2420
        %v2422 = vadd.f32 %v2295, %v2297
        %2423 = vadd.xlane.f32.xlu0 %v2422
        %v2424 = vpop.xlane.xlu0 %2423
        %v2425 = vadd.f32 %v2299, %v2301
        %2426 = vadd.xlane.f32.xlu0 %v2425
        %v2427 = vpop.xlane.xlu0 %2426
        %v2428 = vadd.f32 %v2303, %v2305
        %2429 = vadd.xlane.f32.xlu0 %v2428
        %v2430 = vpop.xlane.xlu0 %2429
        %v2431 = vadd.f32 %v2307, %v2309
        %2432 = vadd.xlane.f32.xlu0 %v2431
        %v2433 = vpop.xlane.xlu0 %2432
        %v2434 = vadd.f32 %v2311, %v2313
        %2435 = vadd.xlane.f32.xlu0 %v2434
        %v2436 = vpop.xlane.xlu0 %2435
        %v2437 = vadd.f32 %v2315, %v2317
        %2438 = vadd.xlane.f32.xlu0 %v2437
        %v2439 = vpop.xlane.xlu0 %2438
        %v2440 = vadd.f32 %v2319, %v2321
        %2441 = vadd.xlane.f32.xlu0 %v2440
        %v2442 = vpop.xlane.xlu0 %2441
        %v2443 = vadd.f32 %v2323, %v2325
        %2444 = vadd.xlane.f32.xlu0 %v2443
        %v2445 = vpop.xlane.xlu0 %2444
        %v2446 = vadd.f32 %v2327, %v2329
        %2447 = vadd.xlane.f32.xlu0 %v2446
        %v2448 = vpop.xlane.xlu0 %2447
        %v2449 = vadd.f32 %v2331, %v2333
        %2450 = vadd.xlane.f32.xlu0 %v2449
        %v2451 = vpop.xlane.xlu0 %2450
        %v2452 = vadd.f32 %v2335, %v2337
        %2453 = vadd.xlane.f32.xlu0 %v2452
        %v2454 = vpop.xlane.xlu0 %2453
        %v2455 = vadd.f32 %v2339, %v2341
        %2456 = vadd.xlane.f32.xlu0 %v2455
        %v2457 = vpop.xlane.xlu0 %2456
        %v2458 = vadd.f32 %v2343, %v2345
        %2459 = vadd.xlane.f32.xlu0 %v2458
        %v2460 = vpop.xlane.xlu0 %2459
        %v2461 = vadd.f32 %v2347, %v2349
        %2462 = vadd.xlane.f32.xlu0 %v2461
        %v2463 = vpop.xlane.xlu0 %2462
        %v2464 = vadd.f32 %v2351, %v2353
        %2465 = vadd.xlane.f32.xlu0 %v2464
        %v2466 = vpop.xlane.xlu0 %2465
        %v2467 = vadd.f32 %v2355, %v2357
        %2468 = vadd.xlane.f32.xlu0 %v2467
        %v2469 = vpop.xlane.xlu0 %2468
        %v2470 = vadd.f32 %v2359, %v2361
        %2471 = vadd.xlane.f32.xlu0 %v2470
        %v2472 = vpop.xlane.xlu0 %2471
        %v2473 = vadd.f32 %v2363, %v2365
        %2474 = vadd.xlane.f32.xlu0 %v2473
        %v2475 = vpop.xlane.xlu0 %2474
        %v2476 = vadd.f32 %v2367, %v2369
        %2477 = vadd.xlane.f32.xlu0 %v2476
        %v2478 = vpop.xlane.xlu0 %2477
        %v2479 = vadd.f32 %v2371, %v2373
        %2480 = vadd.xlane.f32.xlu0 %v2479
        %v2481 = vpop.xlane.xlu0 %2480
        %v2482 = vadd.f32 %v2375, %v2377
        %2483 = vadd.xlane.f32.xlu0 %v2482
        %v2484 = vpop.xlane.xlu0 %2483
        %v2485 = vadd.f32 %v2379, %v2381
        %2486 = vadd.xlane.f32.xlu0 %v2485
        %v2487 = vpop.xlane.xlu0 %2486
        %v2488 = vadd.f32 %v2383, %v2385
        %2489 = vadd.xlane.f32.xlu0 %v2488
        %v2490 = vpop.xlane.xlu0 %2489
        %v2491 = vadd.f32 %v2387, %v2389
        %2492 = vadd.xlane.f32.xlu0 %v2491
        %v2493 = vpop.xlane.xlu0 %2492
        %v2494 = vadd.f32 %v2391, %v2393
        %2495 = vadd.xlane.f32.xlu0 %v2494
        %v2496 = vpop.xlane.xlu0 %2495
        %v2497 = vadd.f32 %v2395, %v2397
        %2498 = vadd.xlane.f32.xlu0 %v2497
        %v2499 = vpop.xlane.xlu0 %2498
        %v2500 = vadd.f32 %v2399, %v2401
        %2501 = vadd.xlane.f32.xlu0 %v2500
        %v2502 = vpop.xlane.xlu0 %2501
        %v2503 = vadd.f32 %v2403, %v2405
        %2504 = vadd.xlane.f32.xlu0 %v2503
        %v2505 = vpop.xlane.xlu0 %2504
        %v2506 = vadd.f32 %v2407, %v2409
        %2507 = vadd.xlane.f32.xlu0 %v2506
        %v2508 = vpop.xlane.xlu0 %2507
        %v2509 = vadd.f32 %v2411, %v2413
        %2510 = vadd.xlane.f32.xlu0 %v2509
        %v2511 = vpop.xlane.xlu0 %2510
        %v2512 = vadd.f32 %v2415, %v2417
        %2513 = vadd.xlane.f32.xlu0 %v2512
        %v2514 = vpop.xlane.xlu0 %2513
        %v2515 = vadd.f32 %v2419, %v2421
        %2516 = vadd.xlane.f32.xlu0 %v2515
        %v2517 = vpop.xlane.xlu0 %2516
        %v2518 = vrcp.pop %v2424
        %v2519 = vrcp.pop %v2427
        %v2520 = vrcp.pop %v2430
        %v2521 = vrcp.pop %v2433
        %v2522 = vrcp.pop %v2436
        %v2523 = vrcp.pop %v2439
        %v2524 = vrcp.pop %v2442
        %v2525 = vrcp.pop %v2445
        %v2526 = vrcp.pop %v2448
        %v2527 = vrcp.pop %v2451
        %v2528 = vrcp.pop %v2454
        %v2529 = vrcp.pop %v2457
        %v2530 = vrcp.pop %v2460
        %v2531 = vrcp.pop %v2463
        %v2532 = vrcp.pop %v2466
        %v2533 = vrcp.pop %v2469
        %v2534 = vrcp.pop %v2472
        %v2535 = vrcp.pop %v2475
        %v2536 = vrcp.pop %v2478
        %v2537 = vrcp.pop %v2481
        %v2538 = vrcp.pop %v2484
        %v2539 = vrcp.pop %v2487
        %v2540 = vrcp.pop %v2490
        %v2541 = vrcp.pop %v2493
        %v2542 = vrcp.pop %v2496
        %v2543 = vrcp.pop %v2499
        %v2544 = vrcp.pop %v2502
        %v2545 = vrcp.pop %v2505
        %v2546 = vrcp.pop %v2508
        %v2547 = vrcp.pop %v2511
        %v2548 = vrcp.pop %v2514
        %v2549 = vrcp.pop %v2517
        %v2550 = vmul.f32 %v2295, %v2518
        %v2551 = vmul.f32 %v2297, %v2518
        %v2552 = vmul.f32 %v2299, %v2519
        %v2553 = vmul.f32 %v2301, %v2519
        %v2554 = vmul.f32 %v2303, %v2520
        %v2555 = vmul.f32 %v2305, %v2520
        %v2556 = vmul.f32 %v2307, %v2521
        %v2557 = vmul.f32 %v2309, %v2521
        %v2558 = vmul.f32 %v2311, %v2522
        %v2559 = vmul.f32 %v2313, %v2522
        %v2560 = vmul.f32 %v2315, %v2523
        %v2561 = vmul.f32 %v2317, %v2523
        %v2562 = vmul.f32 %v2319, %v2524
        %v2563 = vmul.f32 %v2321, %v2524
        %v2564 = vmul.f32 %v2323, %v2525
        %v2565 = vmul.f32 %v2325, %v2525
        %v2566 = vmul.f32 %v2327, %v2526
        %v2567 = vmul.f32 %v2329, %v2526
        %v2568 = vmul.f32 %v2331, %v2527
        %v2569 = vmul.f32 %v2333, %v2527
        %v2570 = vmul.f32 %v2335, %v2528
        %v2571 = vmul.f32 %v2337, %v2528
        %v2572 = vmul.f32 %v2339, %v2529
        %v2573 = vmul.f32 %v2341, %v2529
        %v2574 = vmul.f32 %v2343, %v2530
        %v2575 = vmul.f32 %v2345, %v2530
        %v2576 = vmul.f32 %v2347, %v2531
        %v2577 = vmul.f32 %v2349, %v2531
        %v2578 = vmul.f32 %v2351, %v2532
        %v2579 = vmul.f32 %v2353, %v2532
        %v2580 = vmul.f32 %v2355, %v2533
        %v2581 = vmul.f32 %v2357, %v2533
        %v2582 = vmul.f32 %v2359, %v2534
        %v2583 = vmul.f32 %v2361, %v2534
        %v2584 = vmul.f32 %v2363, %v2535
        %v2585 = vmul.f32 %v2365, %v2535
        %v2586 = vmul.f32 %v2367, %v2536
        %v2587 = vmul.f32 %v2369, %v2536
        %v2588 = vmul.f32 %v2371, %v2537
        %v2589 = vmul.f32 %v2373, %v2537
        %v2590 = vmul.f32 %v2375, %v2538
        %v2591 = vmul.f32 %v2377, %v2538
        %v2592 = vmul.f32 %v2379, %v2539
        %v2593 = vmul.f32 %v2381, %v2539
        %v2594 = vmul.f32 %v2383, %v2540
        %v2595 = vmul.f32 %v2385, %v2540
        %v2596 = vmul.f32 %v2387, %v2541
        %v2597 = vmul.f32 %v2389, %v2541
        %v2598 = vmul.f32 %v2391, %v2542
        %v2599 = vmul.f32 %v2393, %v2542
        %v2600 = vmul.f32 %v2395, %v2543
        %v2601 = vmul.f32 %v2397, %v2543
        %v2602 = vmul.f32 %v2399, %v2544
        %v2603 = vmul.f32 %v2401, %v2544
        %v2604 = vmul.f32 %v2403, %v2545
        %v2605 = vmul.f32 %v2405, %v2545
        %v2606 = vmul.f32 %v2407, %v2546
        %v2607 = vmul.f32 %v2409, %v2546
        %v2608 = vmul.f32 %v2411, %v2547
        %v2609 = vmul.f32 %v2413, %v2547
        %v2610 = vmul.f32 %v2415, %v2548
        %v2611 = vmul.f32 %v2417, %v2548
        %v2612 = vmul.f32 %v2419, %v2549
        %v2613 = vmul.f32 %v2421, %v2549
        %v2614 = vpack.c.bf16 %v2552, %v2550
        %v2615 = vpack.c.bf16 %v2553, %v2551
        %v2616 = vpack.c.bf16 %v2556, %v2554
        %v2617 = vpack.c.bf16 %v2557, %v2555
        %v2618 = vpack.c.bf16 %v2560, %v2558
        %v2619 = vpack.c.bf16 %v2561, %v2559
        %v2620 = vpack.c.bf16 %v2564, %v2562
        %v2621 = vpack.c.bf16 %v2565, %v2563
        %v2622 = vpack.c.bf16 %v2568, %v2566
        %v2623 = vpack.c.bf16 %v2569, %v2567
        %v2624 = vpack.c.bf16 %v2572, %v2570
        %v2625 = vpack.c.bf16 %v2573, %v2571
        %v2626 = vpack.c.bf16 %v2576, %v2574
        %v2627 = vpack.c.bf16 %v2577, %v2575
        %v2628 = vpack.c.bf16 %v2580, %v2578
        %v2629 = vpack.c.bf16 %v2581, %v2579
        %v2630 = vpack.c.bf16 %v2584, %v2582
        %v2631 = vpack.c.bf16 %v2585, %v2583
        %v2632 = vpack.c.bf16 %v2588, %v2586
        %v2633 = vpack.c.bf16 %v2589, %v2587
        %v2634 = vpack.c.bf16 %v2592, %v2590
        %v2635 = vpack.c.bf16 %v2593, %v2591
        %v2636 = vpack.c.bf16 %v2596, %v2594
        %v2637 = vpack.c.bf16 %v2597, %v2595
        %v2638 = vpack.c.bf16 %v2600, %v2598
        %v2639 = vpack.c.bf16 %v2601, %v2599
        %v2640 = vpack.c.bf16 %v2604, %v2602
        %v2641 = vpack.c.bf16 %v2605, %v2603
        %v2642 = vpack.c.bf16 %v2608, %v2606
        %v2643 = vpack.c.bf16 %v2609, %v2607
        %v2644 = vpack.c.bf16 %v2612, %v2610
        %v2645 = vpack.c.bf16 %v2613, %v2611
        %2646 = vmatprep.subr.bf16.mxu0 %v2615
        %2647 = vmatpush1.bf16.xpose.msra.mxu0 %v2614
        %2648 = vmatprep.subr.bf16.mxu0 %v2617
        %2649 = vmatpush1.bf16.xpose.msra.mxu0 %v2616
        %2650 = vmatprep.subr.bf16.mxu0 %v2619
        %2651 = vmatpush1.bf16.xpose.msra.mxu0 %v2618
        %2652 = vmatprep.subr.bf16.mxu0 %v2621
        %2653 = vmatpush1.bf16.xpose.msra.mxu0 %v2620
        %2654 = vmatprep.subr.bf16.mxu0 %v2623
        %2655 = vmatpush1.bf16.xpose.msra.mxu0 %v2622
        %2656 = vmatprep.subr.bf16.mxu0 %v2625
        %2657 = vmatpush1.bf16.xpose.msra.mxu0 %v2624
        %2658 = vmatprep.subr.bf16.mxu0 %v2627
        %2659 = vmatpush1.bf16.xpose.msra.mxu0 %v2626
        %2660 = vmatprep.subr.bf16.mxu0 %v2629
        %2661 = vmatpush1.bf16.xpose.msra.mxu0 %v2628
        %2662 = vmatprep.subr.bf16.mxu0 %v2631
        %2663 = vmatpush1.bf16.xpose.msra.mxu0 %v2630
        %2664 = vmatprep.subr.bf16.mxu0 %v2633
        %2665 = vmatpush1.bf16.xpose.msra.mxu0 %v2632
        %2666 = vmatprep.subr.bf16.mxu0 %v2635
        %2667 = vmatpush1.bf16.xpose.msra.mxu0 %v2634
        %2668 = vmatprep.subr.bf16.mxu0 %v2637
        %2669 = vmatpush1.bf16.xpose.msra.mxu0 %v2636
        %2670 = vmatprep.subr.bf16.mxu0 %v2639
        %2671 = vmatpush1.bf16.xpose.msra.mxu0 %v2638
        %2672 = vmatprep.subr.bf16.mxu0 %v2641
        %2673 = vmatpush1.bf16.xpose.msra.mxu0 %v2640
        %2674 = vmatprep.subr.bf16.mxu0 %v2643
        %2675 = vmatpush1.bf16.xpose.msra.mxu0 %v2642
        %2676 = vmatprep.subr.bf16.mxu0 %v2645
        %2677 = vmatpush1.bf16.xpose.msra.mxu0 %v2644
        %2678 = vmatprep.mubr.bf16.mxu0 %v1890
        %2679 = vmatmul.mubr.bf16.gmra.mrb[0].mxu0 %v1889
        %v2680 = vpop.f32.mrb[0].mxu0
        %v2681 = vadd.f32 0.0, %v2680
        %v2682 = vpop.f32.mrb[0].mxu0
        %v2683 = vadd.f32 0.0, %v2682
        %v2684 = vpop.f32.mrb[0].mxu0
        %v2685 = vadd.f32 0.0, %v2684
        %v2686 = vpop.f32.mrb[0].mxu0
        %v2687 = vadd.f32 0.0, %v2686
        %2688 = vmatprep.mubr.bf16.mxu0 %v1892
        %2689 = vmatmul.mubr.bf16.gmra.mrb[0].mxu0 %v1891
        %v2690 = vpop.f32.mrb[0].mxu0
        %v2691 = vadd.f32 0.0, %v2690
        %v2692 = vpop.f32.mrb[0].mxu0
        %v2693 = vadd.f32 0.0, %v2692
        %v2694 = vpop.f32.mrb[0].mxu0
        %v2695 = vadd.f32 0.0, %v2694
        %v2696 = vpop.f32.mrb[0].mxu0
        %v2697 = vadd.f32 0.0, %v2696
        %2698 = vdwg.mxu0
        %v2699 = vpack.c.bf16 %v2685, %v2681
        %v2700 = vpack.c.bf16 %v2687, %v2683
        %v2701 = vpack.c.bf16 %v2695, %v2691
        %v2702 = vpack.c.bf16 %v2697, %v2693
        %2703 = vst [vmem:[#allocation3 + $0x20] sm:$0xff] %v2699
        %2704 = vst [vmem:[#allocation3 + $0x28] sm:$0xff] %v2700
        %2705 = vst [vmem:[#allocation3 + $0x30] sm:$0xff] %v2701
        %2706 = vst [vmem:[#allocation3 + $0x38] sm:$0xff] %v2702
        %2707 = vxpose.xlu0.b32.start [1/16] %v864, 128
        %2708 = vxpose.xlu0.b32.cont [2/16] %v868, 128
        %2709 = vxpose.xlu0.b32.cont [3/16] %v874, 128
        %2710 = vxpose.xlu0.b32.cont [4/16] %v878, 128
        %2711 = vxpose.xlu0.b32.cont [5/16] 0.0, 128
        %2712 = vxpose.xlu0.b32.cont [6/16] 0.0, 128
        %2713 = vxpose.xlu0.b32.cont [7/16] 0.0, 128
        %2714 = vxpose.xlu0.b32.cont [8/16] 0.0, 128
        %2715 = vxpose.xlu0.b32.cont [9/16] 0.0, 128
        %2716 = vxpose.xlu0.b32.cont [10/16] 0.0, 128
        %2717 = vxpose.xlu0.b32.cont [11/16] 0.0, 128
        %2718 = vxpose.xlu0.b32.cont [12/16] 0.0, 128
        %2719 = vxpose.xlu0.b32.cont [13/16] 0.0, 128
        %2720 = vxpose.xlu0.b32.cont [14/16] 0.0, 128
        %2721 = vxpose.xlu0.b32.cont [15/16] 0.0, 128
        %2722 = vxpose.xlu0.b32.end [16/16] 0.0, 128
        %v2723 = vpop.trf.xlu0
        %v2724 = vpop.trf.xlu0
        %v2725 = vpop.trf.xlu0
        %v2726 = vpop.trf.xlu0
        %v2727 = vpop.trf.xlu0
        %v2728 = vpop.trf.xlu0
        %v2729 = vpop.trf.xlu0
        %v2730 = vpop.trf.xlu0
        %v2731 = vpop.trf.xlu0
        %v2732 = vpop.trf.xlu0
        %v2733 = vpop.trf.xlu0
        %v2734 = vpop.trf.xlu0
        %v2735 = vpop.trf.xlu0
        %v2736 = vpop.trf.xlu0
        %v2737 = vpop.trf.xlu0
        %v2738 = vpop.trf.xlu0
        %2739 = vxpose.xlu0.b32.start [1/16] %v866, 128
        %2740 = vxpose.xlu0.b32.cont [2/16] %v870, 128
        %2741 = vxpose.xlu0.b32.cont [3/16] %v876, 128
        %2742 = vxpose.xlu0.b32.cont [4/16] %v880, 128
        %2743 = vxpose.xlu0.b32.cont [5/16] 0.0, 128
        %2744 = vxpose.xlu0.b32.cont [6/16] 0.0, 128
        %2745 = vxpose.xlu0.b32.cont [7/16] 0.0, 128
        %2746 = vxpose.xlu0.b32.cont [8/16] 0.0, 128
        %2747 = vxpose.xlu0.b32.cont [9/16] 0.0, 128
        %2748 = vxpose.xlu0.b32.cont [10/16] 0.0, 128
        %2749 = vxpose.xlu0.b32.cont [11/16] 0.0, 128
        %2750 = vxpose.xlu0.b32.cont [12/16] 0.0, 128
        %2751 = vxpose.xlu0.b32.cont [13/16] 0.0, 128
        %2752 = vxpose.xlu0.b32.cont [14/16] 0.0, 128
        %2753 = vxpose.xlu0.b32.cont [15/16] 0.0, 128
        %2754 = vxpose.xlu0.b32.end [16/16] 0.0, 128
        %v2755 = vpop.trf.xlu0
        %v2756 = vpop.trf.xlu0
        %v2757 = vpop.trf.xlu0
        %v2758 = vpop.trf.xlu0
        %v2759 = vpop.trf.xlu0
        %v2760 = vpop.trf.xlu0
        %v2761 = vpop.trf.xlu0
        %v2762 = vpop.trf.xlu0
        %v2763 = vpop.trf.xlu0
        %v2764 = vpop.trf.xlu0
        %v2765 = vpop.trf.xlu0
        %v2766 = vpop.trf.xlu0
        %v2767 = vpop.trf.xlu0
        %v2768 = vpop.trf.xlu0
        %v2769 = vpop.trf.xlu0
        %v2770 = vpop.trf.xlu0
        %v2771 = vpack.c.bf16 %v2724, %v2723
        %v2772 = vpack.c.bf16 %v2726, %v2725
        %v2773 = vpack.c.bf16 %v2728, %v2727
        %v2774 = vpack.c.bf16 %v2730, %v2729
        %v2775 = vpack.c.bf16 %v2732, %v2731
        %v2776 = vpack.c.bf16 %v2734, %v2733
        %v2777 = vpack.c.bf16 %v2736, %v2735
        %v2778 = vpack.c.bf16 %v2738, %v2737
        %v2779 = vpack.c.bf16 %v2756, %v2755
        %v2780 = vpack.c.bf16 %v2758, %v2757
        %v2781 = vpack.c.bf16 %v2760, %v2759
        %v2782 = vpack.c.bf16 %v2762, %v2761
        %v2783 = vpack.c.bf16 %v2764, %v2763
        %v2784 = vpack.c.bf16 %v2766, %v2765
        %v2785 = vpack.c.bf16 %v2768, %v2767
        %v2786 = vpack.c.bf16 %v2770, %v2769
        %v2787 = vld [vmem:[#allocation2 + $0x40] sm:$0xff]
        %v2788 = vld [vmem:[#allocation2 + $0x48] sm:$0xff]
        %v2789 = vld [vmem:[#allocation2 + $0x50] sm:$0xff]
        %v2790 = vld [vmem:[#allocation2 + $0x58] sm:$0xff]
        %v2791 = vld [vmem:[#allocation2 + $0xc0] sm:$0xff]
        %v2792 = vld [vmem:[#allocation2 + $0xc8] sm:$0xff]
        %v2793 = vld [vmem:[#allocation2 + $0xd0] sm:$0xff]
        %v2794 = vld [vmem:[#allocation2 + $0xd8] sm:$0xff]
        %v2796 = vsel %vm990, %v2771, 0
        %v2799 = vsel %vm990, %v2772, 0
        %v2802 = vsel %vm990, %v2773, 0
        %v2805 = vsel %vm990, %v2774, 0
        %v2808 = vsel %vm990, %v2775, 0
        %v2811 = vsel %vm990, %v2776, 0
        %v2814 = vsel %vm990, %v2777, 0
        %v2817 = vsel %vm990, %v2778, 0
        %v2820 = vsel %vm990, %v2779, 0
        %v2823 = vsel %vm990, %v2780, 0
        %v2826 = vsel %vm990, %v2781, 0
        %v2829 = vsel %vm990, %v2782, 0
        %v2832 = vsel %vm990, %v2783, 0
        %v2835 = vsel %vm990, %v2784, 0
        %v2838 = vsel %vm990, %v2785, 0
        %v2841 = vsel %vm990, %v2786, 0
        %2843 = vmatprep.subr.bf16.mxu0 %v2788
        %2844 = vmatpush1.bf16.msra.mxu0 %v2787
        %2845 = vmatprep.subr.bf16.mxu0 %v2790
        %2846 = vmatpush1.bf16.msra.mxu0 %v2789
        %2847 = vmatprep.subr.bf16.mxu0 0
        %2848 = vmatpush1.bf16.msra.mxu0 0
        %2849 = vmatprep.subr.bf16.mxu0 0
        %2850 = vmatpush1.bf16.msra.mxu0 0
        %2851 = vmatprep.subr.bf16.mxu0 0
        %2852 = vmatpush1.bf16.msra.mxu0 0
        %2853 = vmatprep.subr.bf16.mxu0 0
        %2854 = vmatpush1.bf16.msra.mxu0 0
        %2855 = vmatprep.subr.bf16.mxu0 0
        %2856 = vmatpush1.bf16.msra.mxu0 0
        %2857 = vmatprep.subr.bf16.mxu0 0
        %2858 = vmatpush1.bf16.msra.mxu0 0
        %2859 = vmatprep.subr.bf16.mxu0 0
        %2860 = vmatpush1.bf16.msra.mxu0 0
        %2861 = vmatprep.subr.bf16.mxu0 0
        %2862 = vmatpush1.bf16.msra.mxu0 0
        %2863 = vmatprep.subr.bf16.mxu0 0
        %2864 = vmatpush1.bf16.msra.mxu0 0
        %2865 = vmatprep.subr.bf16.mxu0 0
        %2866 = vmatpush1.bf16.msra.mxu0 0
        %2867 = vmatprep.subr.bf16.mxu0 0
        %2868 = vmatpush1.bf16.msra.mxu0 0
        %2869 = vmatprep.subr.bf16.mxu0 0
        %2870 = vmatpush1.bf16.msra.mxu0 0
        %2871 = vmatprep.subr.bf16.mxu0 0
        %2872 = vmatpush1.bf16.msra.mxu0 0
        %2873 = vmatprep.subr.bf16.mxu0 0
        %2874 = vmatpush1.bf16.msra.mxu0 0
        %2875 = vmatprep.mubr.bf16.mxu0 0
        %2876 = vmatmul.mubr.bf16.gmra.mrb[0].mxu0 %v2796
        %v2877 = vpop.f32.mrb[0].mxu0
        %v2878 = vadd.f32 0.0, %v2877
        %v2879 = vpop.f32.mrb[0].mxu0
        %v2880 = vadd.f32 0.0, %v2879
        %v2881 = vpop.f32.mrb[0].mxu0
        %v2882 = vadd.f32 0.0, %v2881
        %v2883 = vpop.f32.mrb[0].mxu0
        %v2884 = vadd.f32 0.0, %v2883
        %2885 = vmatprep.mubr.bf16.mxu0 0
        %2886 = vmatmul.mubr.bf16.gmra.mrb[0].mxu0 %v2799
        %v2887 = vpop.f32.mrb[0].mxu0
        %v2888 = vadd.f32 0.0, %v2887
        %v2889 = vpop.f32.mrb[0].mxu0
        %v2890 = vadd.f32 0.0, %v2889
        %v2891 = vpop.f32.mrb[0].mxu0
        %v2892 = vadd.f32 0.0, %v2891
        %v2893 = vpop.f32.mrb[0].mxu0
        %v2894 = vadd.f32 0.0, %v2893
        %2895 = vmatprep.mubr.bf16.mxu0 0
        %2896 = vmatmul.mubr.bf16.gmra.mrb[0].mxu0 %v2802
        %v2897 = vpop.f32.mrb[0].mxu0
        %v2898 = vadd.f32 0.0, %v2897
        %v2899 = vpop.f32.mrb[0].mxu0
        %v2900 = vadd.f32 0.0, %v2899
        %v2901 = vpop.f32.mrb[0].mxu0
        %v2902 = vadd.f32 0.0, %v2901
        %v2903 = vpop.f32.mrb[0].mxu0
        %v2904 = vadd.f32 0.0, %v2903
        %2905 = vmatprep.mubr.bf16.mxu0 0
        %2906 = vmatmul.mubr.bf16.gmra.mrb[0].mxu0 %v2805
        %v2907 = vpop.f32.mrb[0].mxu0
        %v2908 = vadd.f32 0.0, %v2907
        %v2909 = vpop.f32.mrb[0].mxu0
        %v2910 = vadd.f32 0.0, %v2909
        %v2911 = vpop.f32.mrb[0].mxu0
        %v2912 = vadd.f32 0.0, %v2911
        %v2913 = vpop.f32.mrb[0].mxu0
        %v2914 = vadd.f32 0.0, %v2913
        %2915 = vmatprep.mubr.bf16.mxu0 0
        %2916 = vmatmul.mubr.bf16.gmra.mrb[0].mxu0 %v2808
        %v2917 = vpop.f32.mrb[0].mxu0
        %v2918 = vadd.f32 0.0, %v2917
        %v2919 = vpop.f32.mrb[0].mxu0
        %v2920 = vadd.f32 0.0, %v2919
        %v2921 = vpop.f32.mrb[0].mxu0
        %v2922 = vadd.f32 0.0, %v2921
        %v2923 = vpop.f32.mrb[0].mxu0
        %v2924 = vadd.f32 0.0, %v2923
        %2925 = vmatprep.mubr.bf16.mxu0 0
        %2926 = vmatmul.mubr.bf16.gmra.mrb[0].mxu0 %v2811
        %v2927 = vpop.f32.mrb[0].mxu0
        %v2928 = vadd.f32 0.0, %v2927
        %v2929 = vpop.f32.mrb[0].mxu0
        %v2930 = vadd.f32 0.0, %v2929
        %v2931 = vpop.f32.mrb[0].mxu0
        %v2932 = vadd.f32 0.0, %v2931
        %v2933 = vpop.f32.mrb[0].mxu0
        %v2934 = vadd.f32 0.0, %v2933
        %2935 = vmatprep.mubr.bf16.mxu0 0
        %2936 = vmatmul.mubr.bf16.gmra.mrb[0].mxu0 %v2814
        %v2937 = vpop.f32.mrb[0].mxu0
        %v2938 = vadd.f32 0.0, %v2937
        %v2939 = vpop.f32.mrb[0].mxu0
        %v2940 = vadd.f32 0.0, %v2939
        %v2941 = vpop.f32.mrb[0].mxu0
        %v2942 = vadd.f32 0.0, %v2941
        %v2943 = vpop.f32.mrb[0].mxu0
        %v2944 = vadd.f32 0.0, %v2943
        %2945 = vmatprep.mubr.bf16.mxu0 0
        %2946 = vmatmul.mubr.bf16.gmra.mrb[0].mxu0 %v2817
        %v2947 = vpop.f32.mrb[0].mxu0
        %v2948 = vadd.f32 0.0, %v2947
        %v2949 = vpop.f32.mrb[0].mxu0
        %v2950 = vadd.f32 0.0, %v2949
        %v2951 = vpop.f32.mrb[0].mxu0
        %v2952 = vadd.f32 0.0, %v2951
        %v2953 = vpop.f32.mrb[0].mxu0
        %v2954 = vadd.f32 0.0, %v2953
        %2955 = vmatprep.mubr.bf16.mxu0 0
        %2956 = vmatmul.mubr.bf16.gmra.mrb[0].mxu0 %v2820
        %v2957 = vpop.f32.mrb[0].mxu0
        %v2958 = vadd.f32 0.0, %v2957
        %v2959 = vpop.f32.mrb[0].mxu0
        %v2960 = vadd.f32 0.0, %v2959
        %v2961 = vpop.f32.mrb[0].mxu0
        %v2962 = vadd.f32 0.0, %v2961
        %v2963 = vpop.f32.mrb[0].mxu0
        %v2964 = vadd.f32 0.0, %v2963
        %2965 = vmatprep.mubr.bf16.mxu0 0
        %2966 = vmatmul.mubr.bf16.gmra.mrb[0].mxu0 %v2823
        %v2967 = vpop.f32.mrb[0].mxu0
        %v2968 = vadd.f32 0.0, %v2967
        %v2969 = vpop.f32.mrb[0].mxu0
        %v2970 = vadd.f32 0.0, %v2969
        %v2971 = vpop.f32.mrb[0].mxu0
        %v2972 = vadd.f32 0.0, %v2971
        %v2973 = vpop.f32.mrb[0].mxu0
        %v2974 = vadd.f32 0.0, %v2973
        %2975 = vmatprep.mubr.bf16.mxu0 0
        %2976 = vmatmul.mubr.bf16.gmra.mrb[0].mxu0 %v2826
        %v2977 = vpop.f32.mrb[0].mxu0
        %v2978 = vadd.f32 0.0, %v2977
        %v2979 = vpop.f32.mrb[0].mxu0
        %v2980 = vadd.f32 0.0, %v2979
        %v2981 = vpop.f32.mrb[0].mxu0
        %v2982 = vadd.f32 0.0, %v2981
        %v2983 = vpop.f32.mrb[0].mxu0
        %v2984 = vadd.f32 0.0, %v2983
        %2985 = vmatprep.mubr.bf16.mxu0 0
        %2986 = vmatmul.mubr.bf16.gmra.mrb[0].mxu0 %v2829
        %v2987 = vpop.f32.mrb[0].mxu0
        %v2988 = vadd.f32 0.0, %v2987
        %v2989 = vpop.f32.mrb[0].mxu0
        %v2990 = vadd.f32 0.0, %v2989
        %v2991 = vpop.f32.mrb[0].mxu0
        %v2992 = vadd.f32 0.0, %v2991
        %v2993 = vpop.f32.mrb[0].mxu0
        %v2994 = vadd.f32 0.0, %v2993
        %2995 = vmatprep.mubr.bf16.mxu0 0
        %2996 = vmatmul.mubr.bf16.gmra.mrb[0].mxu0 %v2832
        %v2997 = vpop.f32.mrb[0].mxu0
        %v2998 = vadd.f32 0.0, %v2997
        %v2999 = vpop.f32.mrb[0].mxu0
        %v3000 = vadd.f32 0.0, %v2999
        %v3001 = vpop.f32.mrb[0].mxu0
        %v3002 = vadd.f32 0.0, %v3001
        %v3003 = vpop.f32.mrb[0].mxu0
        %v3004 = vadd.f32 0.0, %v3003
        %3005 = vmatprep.mubr.bf16.mxu0 0
        %3006 = vmatmul.mubr.bf16.gmra.mrb[0].mxu0 %v2835
        %v3007 = vpop.f32.mrb[0].mxu0
        %v3008 = vadd.f32 0.0, %v3007
        %v3009 = vpop.f32.mrb[0].mxu0
        %v3010 = vadd.f32 0.0, %v3009
        %v3011 = vpop.f32.mrb[0].mxu0
        %v3012 = vadd.f32 0.0, %v3011
        %v3013 = vpop.f32.mrb[0].mxu0
        %v3014 = vadd.f32 0.0, %v3013
        %3015 = vmatprep.mubr.bf16.mxu0 0
        %3016 = vmatmul.mubr.bf16.gmra.mrb[0].mxu0 %v2838
        %v3017 = vpop.f32.mrb[0].mxu0
        %v3018 = vadd.f32 0.0, %v3017
        %v3019 = vpop.f32.mrb[0].mxu0
        %v3020 = vadd.f32 0.0, %v3019
        %v3021 = vpop.f32.mrb[0].mxu0
        %v3022 = vadd.f32 0.0, %v3021
        %v3023 = vpop.f32.mrb[0].mxu0
        %v3024 = vadd.f32 0.0, %v3023
        %3025 = vmatprep.mubr.bf16.mxu0 0
        %3026 = vmatmul.mubr.bf16.gmra.mrb[0].mxu0 %v2841
        %v3027 = vpop.f32.mrb[0].mxu0
        %v3028 = vadd.f32 0.0, %v3027
        %v3029 = vpop.f32.mrb[0].mxu0
        %v3030 = vadd.f32 0.0, %v3029
        %v3031 = vpop.f32.mrb[0].mxu0
        %v3032 = vadd.f32 0.0, %v3031
        %v3033 = vpop.f32.mrb[0].mxu0
        %v3034 = vadd.f32 0.0, %v3033
        %3035 = vdwg.mxu0
        %v3036 = vmax.f32 %v2878, %v2880
        %3037 = vmax.xlane.f32.xlu0 %v3036
        %v3038 = vpop.xlane.xlu0 %3037
        %v3039 = vmax.f32 %v2882, %v2884
        %3040 = vmax.xlane.f32.xlu0 %v3039
        %v3041 = vpop.xlane.xlu0 %3040
        %v3042 = vmax.f32 %v2888, %v2890
        %3043 = vmax.xlane.f32.xlu0 %v3042
        %v3044 = vpop.xlane.xlu0 %3043
        %v3045 = vmax.f32 %v2892, %v2894
        %3046 = vmax.xlane.f32.xlu0 %v3045
        %v3047 = vpop.xlane.xlu0 %3046
        %v3048 = vmax.f32 %v2898, %v2900
        %3049 = vmax.xlane.f32.xlu0 %v3048
        %v3050 = vpop.xlane.xlu0 %3049
        %v3051 = vmax.f32 %v2902, %v2904
        %3052 = vmax.xlane.f32.xlu0 %v3051
        %v3053 = vpop.xlane.xlu0 %3052
        %v3054 = vmax.f32 %v2908, %v2910
        %3055 = vmax.xlane.f32.xlu0 %v3054
        %v3056 = vpop.xlane.xlu0 %3055
        %v3057 = vmax.f32 %v2912, %v2914
        %3058 = vmax.xlane.f32.xlu0 %v3057
        %v3059 = vpop.xlane.xlu0 %3058
        %v3060 = vmax.f32 %v2918, %v2920
        %3061 = vmax.xlane.f32.xlu0 %v3060
        %v3062 = vpop.xlane.xlu0 %3061
        %v3063 = vmax.f32 %v2922, %v2924
        %3064 = vmax.xlane.f32.xlu0 %v3063
        %v3065 = vpop.xlane.xlu0 %3064
        %v3066 = vmax.f32 %v2928, %v2930
        %3067 = vmax.xlane.f32.xlu0 %v3066
        %v3068 = vpop.xlane.xlu0 %3067
        %v3069 = vmax.f32 %v2932, %v2934
        %3070 = vmax.xlane.f32.xlu0 %v3069
        %v3071 = vpop.xlane.xlu0 %3070
        %v3072 = vmax.f32 %v2938, %v2940
        %3073 = vmax.xlane.f32.xlu0 %v3072
        %v3074 = vpop.xlane.xlu0 %3073
        %v3075 = vmax.f32 %v2942, %v2944
        %3076 = vmax.xlane.f32.xlu0 %v3075
        %v3077 = vpop.xlane.xlu0 %3076
        %v3078 = vmax.f32 %v2948, %v2950
        %3079 = vmax.xlane.f32.xlu0 %v3078
        %v3080 = vpop.xlane.xlu0 %3079
        %v3081 = vmax.f32 %v2952, %v2954
        %3082 = vmax.xlane.f32.xlu0 %v3081
        %v3083 = vpop.xlane.xlu0 %3082
        %v3084 = vmax.f32 %v2958, %v2960
        %3085 = vmax.xlane.f32.xlu0 %v3084
        %v3086 = vpop.xlane.xlu0 %3085
        %v3087 = vmax.f32 %v2962, %v2964
        %3088 = vmax.xlane.f32.xlu0 %v3087
        %v3089 = vpop.xlane.xlu0 %3088
        %v3090 = vmax.f32 %v2968, %v2970
        %3091 = vmax.xlane.f32.xlu0 %v3090
        %v3092 = vpop.xlane.xlu0 %3091
        %v3093 = vmax.f32 %v2972, %v2974
        %3094 = vmax.xlane.f32.xlu0 %v3093
        %v3095 = vpop.xlane.xlu0 %3094
        %v3096 = vmax.f32 %v2978, %v2980
        %3097 = vmax.xlane.f32.xlu0 %v3096
        %v3098 = vpop.xlane.xlu0 %3097
        %v3099 = vmax.f32 %v2982, %v2984
        %3100 = vmax.xlane.f32.xlu0 %v3099
        %v3101 = vpop.xlane.xlu0 %3100
        %v3102 = vmax.f32 %v2988, %v2990
        %3103 = vmax.xlane.f32.xlu0 %v3102
        %v3104 = vpop.xlane.xlu0 %3103
        %v3105 = vmax.f32 %v2992, %v2994
        %3106 = vmax.xlane.f32.xlu0 %v3105
        %v3107 = vpop.xlane.xlu0 %3106
        %v3108 = vmax.f32 %v2998, %v3000
        %3109 = vmax.xlane.f32.xlu0 %v3108
        %v3110 = vpop.xlane.xlu0 %3109
        %v3111 = vmax.f32 %v3002, %v3004
        %3112 = vmax.xlane.f32.xlu0 %v3111
        %v3113 = vpop.xlane.xlu0 %3112
        %v3114 = vmax.f32 %v3008, %v3010
        %3115 = vmax.xlane.f32.xlu0 %v3114
        %v3116 = vpop.xlane.xlu0 %3115
        %v3117 = vmax.f32 %v3012, %v3014
        %3118 = vmax.xlane.f32.xlu0 %v3117
        %v3119 = vpop.xlane.xlu0 %3118
        %v3120 = vmax.f32 %v3018, %v3020
        %3121 = vmax.xlane.f32.xlu0 %v3120
        %v3122 = vpop.xlane.xlu0 %3121
        %v3123 = vmax.f32 %v3022, %v3024
        %3124 = vmax.xlane.f32.xlu0 %v3123
        %v3125 = vpop.xlane.xlu0 %3124
        %v3126 = vmax.f32 %v3028, %v3030
        %3127 = vmax.xlane.f32.xlu0 %v3126
        %v3128 = vpop.xlane.xlu0 %3127
        %v3129 = vmax.f32 %v3032, %v3034
        %3130 = vmax.xlane.f32.xlu0 %v3129
        %v3131 = vpop.xlane.xlu0 %3130
        %v3132 = vsub.f32 %v2878, %v3038
        %v3133 = vsub.f32 %v2880, %v3038
        %v3134 = vsub.f32 %v2882, %v3041
        %v3135 = vsub.f32 %v2884, %v3041
        %v3136 = vsub.f32 %v2888, %v3044
        %v3137 = vsub.f32 %v2890, %v3044
        %v3138 = vsub.f32 %v2892, %v3047
        %v3139 = vsub.f32 %v2894, %v3047
        %v3140 = vsub.f32 %v2898, %v3050
        %v3141 = vsub.f32 %v2900, %v3050
        %v3142 = vsub.f32 %v2902, %v3053
        %v3143 = vsub.f32 %v2904, %v3053
        %v3144 = vsub.f32 %v2908, %v3056
        %v3145 = vsub.f32 %v2910, %v3056
        %v3146 = vsub.f32 %v2912, %v3059
        %v3147 = vsub.f32 %v2914, %v3059
        %v3148 = vsub.f32 %v2918, %v3062
        %v3149 = vsub.f32 %v2920, %v3062
        %v3150 = vsub.f32 %v2922, %v3065
        %v3151 = vsub.f32 %v2924, %v3065
        %v3152 = vsub.f32 %v2928, %v3068
        %v3153 = vsub.f32 %v2930, %v3068
        %v3154 = vsub.f32 %v2932, %v3071
        %v3155 = vsub.f32 %v2934, %v3071
        %v3156 = vsub.f32 %v2938, %v3074
        %v3157 = vsub.f32 %v2940, %v3074
        %v3158 = vsub.f32 %v2942, %v3077
        %v3159 = vsub.f32 %v2944, %v3077
        %v3160 = vsub.f32 %v2948, %v3080
        %v3161 = vsub.f32 %v2950, %v3080
        %v3162 = vsub.f32 %v2952, %v3083
        %v3163 = vsub.f32 %v2954, %v3083
        %v3164 = vsub.f32 %v2958, %v3086
        %v3165 = vsub.f32 %v2960, %v3086
        %v3166 = vsub.f32 %v2962, %v3089
        %v3167 = vsub.f32 %v2964, %v3089
        %v3168 = vsub.f32 %v2968, %v3092
        %v3169 = vsub.f32 %v2970, %v3092
        %v3170 = vsub.f32 %v2972, %v3095
        %v3171 = vsub.f32 %v2974, %v3095
        %v3172 = vsub.f32 %v2978, %v3098
        %v3173 = vsub.f32 %v2980, %v3098
        %v3174 = vsub.f32 %v2982, %v3101
        %v3175 = vsub.f32 %v2984, %v3101
        %v3176 = vsub.f32 %v2988, %v3104
        %v3177 = vsub.f32 %v2990, %v3104
        %v3178 = vsub.f32 %v2992, %v3107
        %v3179 = vsub.f32 %v2994, %v3107
        %v3180 = vsub.f32 %v2998, %v3110
        %v3181 = vsub.f32 %v3000, %v3110
        %v3182 = vsub.f32 %v3002, %v3113
        %v3183 = vsub.f32 %v3004, %v3113
        %v3184 = vsub.f32 %v3008, %v3116
        %v3185 = vsub.f32 %v3010, %v3116
        %v3186 = vsub.f32 %v3012, %v3119
        %v3187 = vsub.f32 %v3014, %v3119
        %v3188 = vsub.f32 %v3018, %v3122
        %v3189 = vsub.f32 %v3020, %v3122
        %v3190 = vsub.f32 %v3022, %v3125
        %v3191 = vsub.f32 %v3024, %v3125
        %v3192 = vsub.f32 %v3028, %v3128
        %v3193 = vsub.f32 %v3030, %v3128
        %v3194 = vsub.f32 %v3032, %v3131
        %v3195 = vsub.f32 %v3034, %v3131
        %v3196 = vmul.f32 %v3132, 1.442695
        %v3197 = vpow.pop %v3196
        %v3198 = vmul.f32 %v3133, 1.442695
        %v3199 = vpow.pop %v3198
        %v3200 = vmul.f32 %v3134, 1.442695
        %v3201 = vpow.pop %v3200
        %v3202 = vmul.f32 %v3135, 1.442695
        %v3203 = vpow.pop %v3202
        %v3204 = vmul.f32 %v3136, 1.442695
        %v3205 = vpow.pop %v3204
        %v3206 = vmul.f32 %v3137, 1.442695
        %v3207 = vpow.pop %v3206
        %v3208 = vmul.f32 %v3138, 1.442695
        %v3209 = vpow.pop %v3208
        %v3210 = vmul.f32 %v3139, 1.442695
        %v3211 = vpow.pop %v3210
        %v3212 = vmul.f32 %v3140, 1.442695
        %v3213 = vpow.pop %v3212
        %v3214 = vmul.f32 %v3141, 1.442695
        %v3215 = vpow.pop %v3214
        %v3216 = vmul.f32 %v3142, 1.442695
        %v3217 = vpow.pop %v3216
        %v3218 = vmul.f32 %v3143, 1.442695
        %v3219 = vpow.pop %v3218
        %v3220 = vmul.f32 %v3144, 1.442695
        %v3221 = vpow.pop %v3220
        %v3222 = vmul.f32 %v3145, 1.442695
        %v3223 = vpow.pop %v3222
        %v3224 = vmul.f32 %v3146, 1.442695
        %v3225 = vpow.pop %v3224
        %v3226 = vmul.f32 %v3147, 1.442695
        %v3227 = vpow.pop %v3226
        %v3228 = vmul.f32 %v3148, 1.442695
        %v3229 = vpow.pop %v3228
        %v3230 = vmul.f32 %v3149, 1.442695
        %v3231 = vpow.pop %v3230
        %v3232 = vmul.f32 %v3150, 1.442695
        %v3233 = vpow.pop %v3232
        %v3234 = vmul.f32 %v3151, 1.442695
        %v3235 = vpow.pop %v3234
        %v3236 = vmul.f32 %v3152, 1.442695
        %v3237 = vpow.pop %v3236
        %v3238 = vmul.f32 %v3153, 1.442695
        %v3239 = vpow.pop %v3238
        %v3240 = vmul.f32 %v3154, 1.442695
        %v3241 = vpow.pop %v3240
        %v3242 = vmul.f32 %v3155, 1.442695
        %v3243 = vpow.pop %v3242
        %v3244 = vmul.f32 %v3156, 1.442695
        %v3245 = vpow.pop %v3244
        %v3246 = vmul.f32 %v3157, 1.442695
        %v3247 = vpow.pop %v3246
        %v3248 = vmul.f32 %v3158, 1.442695
        %v3249 = vpow.pop %v3248
        %v3250 = vmul.f32 %v3159, 1.442695
        %v3251 = vpow.pop %v3250
        %v3252 = vmul.f32 %v3160, 1.442695
        %v3253 = vpow.pop %v3252
        %v3254 = vmul.f32 %v3161, 1.442695
        %v3255 = vpow.pop %v3254
        %v3256 = vmul.f32 %v3162, 1.442695
        %v3257 = vpow.pop %v3256
        %v3258 = vmul.f32 %v3163, 1.442695
        %v3259 = vpow.pop %v3258
        %v3260 = vmul.f32 %v3164, 1.442695
        %v3261 = vpow.pop %v3260
        %v3262 = vmul.f32 %v3165, 1.442695
        %v3263 = vpow.pop %v3262
        %v3264 = vmul.f32 %v3166, 1.442695
        %v3265 = vpow.pop %v3264
        %v3266 = vmul.f32 %v3167, 1.442695
        %v3267 = vpow.pop %v3266
        %v3268 = vmul.f32 %v3168, 1.442695
        %v3269 = vpow.pop %v3268
        %v3270 = vmul.f32 %v3169, 1.442695
        %v3271 = vpow.pop %v3270
        %v3272 = vmul.f32 %v3170, 1.442695
        %v3273 = vpow.pop %v3272
        %v3274 = vmul.f32 %v3171, 1.442695
        %v3275 = vpow.pop %v3274
        %v3276 = vmul.f32 %v3172, 1.442695
        %v3277 = vpow.pop %v3276
        %v3278 = vmul.f32 %v3173, 1.442695
        %v3279 = vpow.pop %v3278
        %v3280 = vmul.f32 %v3174, 1.442695
        %v3281 = vpow.pop %v3280
        %v3282 = vmul.f32 %v3175, 1.442695
        %v3283 = vpow.pop %v3282
        %v3284 = vmul.f32 %v3176, 1.442695
        %v3285 = vpow.pop %v3284
        %v3286 = vmul.f32 %v3177, 1.442695
        %v3287 = vpow.pop %v3286
        %v3288 = vmul.f32 %v3178, 1.442695
        %v3289 = vpow.pop %v3288
        %v3290 = vmul.f32 %v3179, 1.442695
        %v3291 = vpow.pop %v3290
        %v3292 = vmul.f32 %v3180, 1.442695
        %v3293 = vpow.pop %v3292
        %v3294 = vmul.f32 %v3181, 1.442695
        %v3295 = vpow.pop %v3294
        %v3296 = vmul.f32 %v3182, 1.442695
        %v3297 = vpow.pop %v3296
        %v3298 = vmul.f32 %v3183, 1.442695
        %v3299 = vpow.pop %v3298
        %v3300 = vmul.f32 %v3184, 1.442695
        %v3301 = vpow.pop %v3300
        %v3302 = vmul.f32 %v3185, 1.442695
        %v3303 = vpow.pop %v3302
        %v3304 = vmul.f32 %v3186, 1.442695
        %v3305 = vpow.pop %v3304
        %v3306 = vmul.f32 %v3187, 1.442695
        %v3307 = vpow.pop %v3306
        %v3308 = vmul.f32 %v3188, 1.442695
        %v3309 = vpow.pop %v3308
        %v3310 = vmul.f32 %v3189, 1.442695
        %v3311 = vpow.pop %v3310
        %v3312 = vmul.f32 %v3190, 1.442695
        %v3313 = vpow.pop %v3312
        %v3314 = vmul.f32 %v3191, 1.442695
        %v3315 = vpow.pop %v3314
        %v3316 = vmul.f32 %v3192, 1.442695
        %v3317 = vpow.pop %v3316
        %v3318 = vmul.f32 %v3193, 1.442695
        %v3319 = vpow.pop %v3318
        %v3320 = vmul.f32 %v3194, 1.442695
        %v3321 = vpow.pop %v3320
        %v3322 = vmul.f32 %v3195, 1.442695
        %v3323 = vpow.pop %v3322
        %v3324 = vadd.f32 %v3197, %v3199
        %3325 = vadd.xlane.f32.xlu0 %v3324
        %v3326 = vpop.xlane.xlu0 %3325
        %v3327 = vadd.f32 %v3201, %v3203
        %3328 = vadd.xlane.f32.xlu0 %v3327
        %v3329 = vpop.xlane.xlu0 %3328
        %v3330 = vadd.f32 %v3205, %v3207
        %3331 = vadd.xlane.f32.xlu0 %v3330
        %v3332 = vpop.xlane.xlu0 %3331
        %v3333 = vadd.f32 %v3209, %v3211
        %3334 = vadd.xlane.f32.xlu0 %v3333
        %v3335 = vpop.xlane.xlu0 %3334
        %v3336 = vadd.f32 %v3213, %v3215
        %3337 = vadd.xlane.f32.xlu0 %v3336
        %v3338 = vpop.xlane.xlu0 %3337
        %v3339 = vadd.f32 %v3217, %v3219
        %3340 = vadd.xlane.f32.xlu0 %v3339
        %v3341 = vpop.xlane.xlu0 %3340
        %v3342 = vadd.f32 %v3221, %v3223
        %3343 = vadd.xlane.f32.xlu0 %v3342
        %v3344 = vpop.xlane.xlu0 %3343
        %v3345 = vadd.f32 %v3225, %v3227
        %3346 = vadd.xlane.f32.xlu0 %v3345
        %v3347 = vpop.xlane.xlu0 %3346
        %v3348 = vadd.f32 %v3229, %v3231
        %3349 = vadd.xlane.f32.xlu0 %v3348
        %v3350 = vpop.xlane.xlu0 %3349
        %v3351 = vadd.f32 %v3233, %v3235
        %3352 = vadd.xlane.f32.xlu0 %v3351
        %v3353 = vpop.xlane.xlu0 %3352
        %v3354 = vadd.f32 %v3237, %v3239
        %3355 = vadd.xlane.f32.xlu0 %v3354
        %v3356 = vpop.xlane.xlu0 %3355
        %v3357 = vadd.f32 %v3241, %v3243
        %3358 = vadd.xlane.f32.xlu0 %v3357
        %v3359 = vpop.xlane.xlu0 %3358
        %v3360 = vadd.f32 %v3245, %v3247
        %3361 = vadd.xlane.f32.xlu0 %v3360
        %v3362 = vpop.xlane.xlu0 %3361
        %v3363 = vadd.f32 %v3249, %v3251
        %3364 = vadd.xlane.f32.xlu0 %v3363
        %v3365 = vpop.xlane.xlu0 %3364
        %v3366 = vadd.f32 %v3253, %v3255
        %3367 = vadd.xlane.f32.xlu0 %v3366
        %v3368 = vpop.xlane.xlu0 %3367
        %v3369 = vadd.f32 %v3257, %v3259
        %3370 = vadd.xlane.f32.xlu0 %v3369
        %v3371 = vpop.xlane.xlu0 %3370
        %v3372 = vadd.f32 %v3261, %v3263
        %3373 = vadd.xlane.f32.xlu0 %v3372
        %v3374 = vpop.xlane.xlu0 %3373
        %v3375 = vadd.f32 %v3265, %v3267
        %3376 = vadd.xlane.f32.xlu0 %v3375
        %v3377 = vpop.xlane.xlu0 %3376
        %v3378 = vadd.f32 %v3269, %v3271
        %3379 = vadd.xlane.f32.xlu0 %v3378
        %v3380 = vpop.xlane.xlu0 %3379
        %v3381 = vadd.f32 %v3273, %v3275
        %3382 = vadd.xlane.f32.xlu0 %v3381
        %v3383 = vpop.xlane.xlu0 %3382
        %v3384 = vadd.f32 %v3277, %v3279
        %3385 = vadd.xlane.f32.xlu0 %v3384
        %v3386 = vpop.xlane.xlu0 %3385
        %v3387 = vadd.f32 %v3281, %v3283
        %3388 = vadd.xlane.f32.xlu0 %v3387
        %v3389 = vpop.xlane.xlu0 %3388
        %v3390 = vadd.f32 %v3285, %v3287
        %3391 = vadd.xlane.f32.xlu0 %v3390
        %v3392 = vpop.xlane.xlu0 %3391
        %v3393 = vadd.f32 %v3289, %v3291
        %3394 = vadd.xlane.f32.xlu0 %v3393
        %v3395 = vpop.xlane.xlu0 %3394
        %v3396 = vadd.f32 %v3293, %v3295
        %3397 = vadd.xlane.f32.xlu0 %v3396
        %v3398 = vpop.xlane.xlu0 %3397
        %v3399 = vadd.f32 %v3297, %v3299
        %3400 = vadd.xlane.f32.xlu0 %v3399
        %v3401 = vpop.xlane.xlu0 %3400
        %v3402 = vadd.f32 %v3301, %v3303
        %3403 = vadd.xlane.f32.xlu0 %v3402
        %v3404 = vpop.xlane.xlu0 %3403
        %v3405 = vadd.f32 %v3305, %v3307
        %3406 = vadd.xlane.f32.xlu0 %v3405
        %v3407 = vpop.xlane.xlu0 %3406
        %v3408 = vadd.f32 %v3309, %v3311
        %3409 = vadd.xlane.f32.xlu0 %v3408
        %v3410 = vpop.xlane.xlu0 %3409
        %v3411 = vadd.f32 %v3313, %v3315
        %3412 = vadd.xlane.f32.xlu0 %v3411
        %v3413 = vpop.xlane.xlu0 %3412
        %v3414 = vadd.f32 %v3317, %v3319
        %3415 = vadd.xlane.f32.xlu0 %v3414
        %v3416 = vpop.xlane.xlu0 %3415
        %v3417 = vadd.f32 %v3321, %v3323
        %3418 = vadd.xlane.f32.xlu0 %v3417
        %v3419 = vpop.xlane.xlu0 %3418
        %v3420 = vrcp.pop %v3326
        %v3421 = vrcp.pop %v3329
        %v3422 = vrcp.pop %v3332
        %v3423 = vrcp.pop %v3335
        %v3424 = vrcp.pop %v3338
        %v3425 = vrcp.pop %v3341
        %v3426 = vrcp.pop %v3344
        %v3427 = vrcp.pop %v3347
        %v3428 = vrcp.pop %v3350
        %v3429 = vrcp.pop %v3353
        %v3430 = vrcp.pop %v3356
        %v3431 = vrcp.pop %v3359
        %v3432 = vrcp.pop %v3362
        %v3433 = vrcp.pop %v3365
        %v3434 = vrcp.pop %v3368
        %v3435 = vrcp.pop %v3371
        %v3436 = vrcp.pop %v3374
        %v3437 = vrcp.pop %v3377
        %v3438 = vrcp.pop %v3380
        %v3439 = vrcp.pop %v3383
        %v3440 = vrcp.pop %v3386
        %v3441 = vrcp.pop %v3389
        %v3442 = vrcp.pop %v3392
        %v3443 = vrcp.pop %v3395
        %v3444 = vrcp.pop %v3398
        %v3445 = vrcp.pop %v3401
        %v3446 = vrcp.pop %v3404
        %v3447 = vrcp.pop %v3407
        %v3448 = vrcp.pop %v3410
        %v3449 = vrcp.pop %v3413
        %v3450 = vrcp.pop %v3416
        %v3451 = vrcp.pop %v3419
        %v3452 = vmul.f32 %v3197, %v3420
        %v3453 = vmul.f32 %v3199, %v3420
        %v3454 = vmul.f32 %v3201, %v3421
        %v3455 = vmul.f32 %v3203, %v3421
        %v3456 = vmul.f32 %v3205, %v3422
        %v3457 = vmul.f32 %v3207, %v3422
        %v3458 = vmul.f32 %v3209, %v3423
        %v3459 = vmul.f32 %v3211, %v3423
        %v3460 = vmul.f32 %v3213, %v3424
        %v3461 = vmul.f32 %v3215, %v3424
        %v3462 = vmul.f32 %v3217, %v3425
        %v3463 = vmul.f32 %v3219, %v3425
        %v3464 = vmul.f32 %v3221, %v3426
        %v3465 = vmul.f32 %v3223, %v3426
        %v3466 = vmul.f32 %v3225, %v3427
        %v3467 = vmul.f32 %v3227, %v3427
        %v3468 = vmul.f32 %v3229, %v3428
        %v3469 = vmul.f32 %v3231, %v3428
        %v3470 = vmul.f32 %v3233, %v3429
        %v3471 = vmul.f32 %v3235, %v3429
        %v3472 = vmul.f32 %v3237, %v3430
        %v3473 = vmul.f32 %v3239, %v3430
        %v3474 = vmul.f32 %v3241, %v3431
        %v3475 = vmul.f32 %v3243, %v3431
        %v3476 = vmul.f32 %v3245, %v3432
        %v3477 = vmul.f32 %v3247, %v3432
        %v3478 = vmul.f32 %v3249, %v3433
        %v3479 = vmul.f32 %v3251, %v3433
        %v3480 = vmul.f32 %v3253, %v3434
        %v3481 = vmul.f32 %v3255, %v3434
        %v3482 = vmul.f32 %v3257, %v3435
        %v3483 = vmul.f32 %v3259, %v3435
        %v3484 = vmul.f32 %v3261, %v3436
        %v3485 = vmul.f32 %v3263, %v3436
        %v3486 = vmul.f32 %v3265, %v3437
        %v3487 = vmul.f32 %v3267, %v3437
        %v3488 = vmul.f32 %v3269, %v3438
        %v3489 = vmul.f32 %v3271, %v3438
        %v3490 = vmul.f32 %v3273, %v3439
        %v3491 = vmul.f32 %v3275, %v3439
        %v3492 = vmul.f32 %v3277, %v3440
        %v3493 = vmul.f32 %v3279, %v3440
        %v3494 = vmul.f32 %v3281, %v3441
        %v3495 = vmul.f32 %v3283, %v3441
        %v3496 = vmul.f32 %v3285, %v3442
        %v3497 = vmul.f32 %v3287, %v3442
        %v3498 = vmul.f32 %v3289, %v3443
        %v3499 = vmul.f32 %v3291, %v3443
        %v3500 = vmul.f32 %v3293, %v3444
        %v3501 = vmul.f32 %v3295, %v3444
        %v3502 = vmul.f32 %v3297, %v3445
        %v3503 = vmul.f32 %v3299, %v3445
        %v3504 = vmul.f32 %v3301, %v3446
        %v3505 = vmul.f32 %v3303, %v3446
        %v3506 = vmul.f32 %v3305, %v3447
        %v3507 = vmul.f32 %v3307, %v3447
        %v3508 = vmul.f32 %v3309, %v3448
        %v3509 = vmul.f32 %v3311, %v3448
        %v3510 = vmul.f32 %v3313, %v3449
        %v3511 = vmul.f32 %v3315, %v3449
        %v3512 = vmul.f32 %v3317, %v3450
        %v3513 = vmul.f32 %v3319, %v3450
        %v3514 = vmul.f32 %v3321, %v3451
        %v3515 = vmul.f32 %v3323, %v3451
        %v3516 = vpack.c.bf16 %v3454, %v3452
        %v3517 = vpack.c.bf16 %v3455, %v3453
        %v3518 = vpack.c.bf16 %v3458, %v3456
        %v3519 = vpack.c.bf16 %v3459, %v3457
        %v3520 = vpack.c.bf16 %v3462, %v3460
        %v3521 = vpack.c.bf16 %v3463, %v3461
        %v3522 = vpack.c.bf16 %v3466, %v3464
        %v3523 = vpack.c.bf16 %v3467, %v3465
        %v3524 = vpack.c.bf16 %v3470, %v3468
        %v3525 = vpack.c.bf16 %v3471, %v3469
        %v3526 = vpack.c.bf16 %v3474, %v3472
        %v3527 = vpack.c.bf16 %v3475, %v3473
        %v3528 = vpack.c.bf16 %v3478, %v3476
        %v3529 = vpack.c.bf16 %v3479, %v3477
        %v3530 = vpack.c.bf16 %v3482, %v3480
        %v3531 = vpack.c.bf16 %v3483, %v3481
        %v3532 = vpack.c.bf16 %v3486, %v3484
        %v3533 = vpack.c.bf16 %v3487, %v3485
        %v3534 = vpack.c.bf16 %v3490, %v3488
        %v3535 = vpack.c.bf16 %v3491, %v3489
        %v3536 = vpack.c.bf16 %v3494, %v3492
        %v3537 = vpack.c.bf16 %v3495, %v3493
        %v3538 = vpack.c.bf16 %v3498, %v3496
        %v3539 = vpack.c.bf16 %v3499, %v3497
        %v3540 = vpack.c.bf16 %v3502, %v3500
        %v3541 = vpack.c.bf16 %v3503, %v3501
        %v3542 = vpack.c.bf16 %v3506, %v3504
        %v3543 = vpack.c.bf16 %v3507, %v3505
        %v3544 = vpack.c.bf16 %v3510, %v3508
        %v3545 = vpack.c.bf16 %v3511, %v3509
        %v3546 = vpack.c.bf16 %v3514, %v3512
        %v3547 = vpack.c.bf16 %v3515, %v3513
        %3548 = vmatprep.subr.bf16.mxu0 %v3517
        %3549 = vmatpush1.bf16.xpose.msra.mxu0 %v3516
        %3550 = vmatprep.subr.bf16.mxu0 %v3519
        %3551 = vmatpush1.bf16.xpose.msra.mxu0 %v3518
        %3552 = vmatprep.subr.bf16.mxu0 %v3521
        %3553 = vmatpush1.bf16.xpose.msra.mxu0 %v3520
        %3554 = vmatprep.subr.bf16.mxu0 %v3523
        %3555 = vmatpush1.bf16.xpose.msra.mxu0 %v3522
        %3556 = vmatprep.subr.bf16.mxu0 %v3525
        %3557 = vmatpush1.bf16.xpose.msra.mxu0 %v3524
        %3558 = vmatprep.subr.bf16.mxu0 %v3527
        %3559 = vmatpush1.bf16.xpose.msra.mxu0 %v3526
        %3560 = vmatprep.subr.bf16.mxu0 %v3529
        %3561 = vmatpush1.bf16.xpose.msra.mxu0 %v3528
        %3562 = vmatprep.subr.bf16.mxu0 %v3531
        %3563 = vmatpush1.bf16.xpose.msra.mxu0 %v3530
        %3564 = vmatprep.subr.bf16.mxu0 %v3533
        %3565 = vmatpush1.bf16.xpose.msra.mxu0 %v3532
        %3566 = vmatprep.subr.bf16.mxu0 %v3535
        %3567 = vmatpush1.bf16.xpose.msra.mxu0 %v3534
        %3568 = vmatprep.subr.bf16.mxu0 %v3537
        %3569 = vmatpush1.bf16.xpose.msra.mxu0 %v3536
        %3570 = vmatprep.subr.bf16.mxu0 %v3539
        %3571 = vmatpush1.bf16.xpose.msra.mxu0 %v3538
        %3572 = vmatprep.subr.bf16.mxu0 %v3541
        %3573 = vmatpush1.bf16.xpose.msra.mxu0 %v3540
        %3574 = vmatprep.subr.bf16.mxu0 %v3543
        %3575 = vmatpush1.bf16.xpose.msra.mxu0 %v3542
        %3576 = vmatprep.subr.bf16.mxu0 %v3545
        %3577 = vmatpush1.bf16.xpose.msra.mxu0 %v3544
        %3578 = vmatprep.subr.bf16.mxu0 %v3547
        %3579 = vmatpush1.bf16.xpose.msra.mxu0 %v3546
        %3580 = vmatprep.mubr.bf16.mxu0 %v2792
        %3581 = vmatmul.mubr.bf16.gmra.mrb[0].mxu0 %v2791
        %v3582 = vpop.f32.mrb[0].mxu0
        %v3583 = vadd.f32 0.0, %v3582
        %v3584 = vpop.f32.mrb[0].mxu0
        %v3585 = vadd.f32 0.0, %v3584
        %v3586 = vpop.f32.mrb[0].mxu0
        %v3587 = vadd.f32 0.0, %v3586
        %v3588 = vpop.f32.mrb[0].mxu0
        %v3589 = vadd.f32 0.0, %v3588
        %3590 = vmatprep.mubr.bf16.mxu0 %v2794
        %3591 = vmatmul.mubr.bf16.gmra.mrb[0].mxu0 %v2793
        %v3592 = vpop.f32.mrb[0].mxu0
        %v3593 = vadd.f32 0.0, %v3592
        %v3594 = vpop.f32.mrb[0].mxu0
        %v3595 = vadd.f32 0.0, %v3594
        %v3596 = vpop.f32.mrb[0].mxu0
        %v3597 = vadd.f32 0.0, %v3596
        %v3598 = vpop.f32.mrb[0].mxu0
        %v3599 = vadd.f32 0.0, %v3598
        %3600 = vdwg.mxu0
        %v3601 = vpack.c.bf16 %v3587, %v3583
        %v3602 = vpack.c.bf16 %v3589, %v3585
        %v3603 = vpack.c.bf16 %v3597, %v3593
        %v3604 = vpack.c.bf16 %v3599, %v3595
        %3605 = vst [vmem:[#allocation3 + $0x40] sm:$0xff] %v3601
        %3606 = vst [vmem:[#allocation3 + $0x48] sm:$0xff] %v3602
        %3607 = vst [vmem:[#allocation3 + $0x50] sm:$0xff] %v3603
        %3608 = vst [vmem:[#allocation3 + $0x58] sm:$0xff] %v3604
        %3609 = vxpose.xlu0.b32.start [1/16] %v884, 128
        %3610 = vxpose.xlu0.b32.cont [2/16] %v888, 128
        %3611 = vxpose.xlu0.b32.cont [3/16] %v894, 128
        %3612 = vxpose.xlu0.b32.cont [4/16] %v898, 128
        %3613 = vxpose.xlu0.b32.cont [5/16] 0.0, 128
        %3614 = vxpose.xlu0.b32.cont [6/16] 0.0, 128
        %3615 = vxpose.xlu0.b32.cont [7/16] 0.0, 128
        %3616 = vxpose.xlu0.b32.cont [8/16] 0.0, 128
        %3617 = vxpose.xlu0.b32.cont [9/16] 0.0, 128
        %3618 = vxpose.xlu0.b32.cont [10/16] 0.0, 128
        %3619 = vxpose.xlu0.b32.cont [11/16] 0.0, 128
        %3620 = vxpose.xlu0.b32.cont [12/16] 0.0, 128
        %3621 = vxpose.xlu0.b32.cont [13/16] 0.0, 128
        %3622 = vxpose.xlu0.b32.cont [14/16] 0.0, 128
        %3623 = vxpose.xlu0.b32.cont [15/16] 0.0, 128
        %3624 = vxpose.xlu0.b32.end [16/16] 0.0, 128
        %v3625 = vpop.trf.xlu0
        %v3626 = vpop.trf.xlu0
        %v3627 = vpop.trf.xlu0
        %v3628 = vpop.trf.xlu0
        %v3629 = vpop.trf.xlu0
        %v3630 = vpop.trf.xlu0
        %v3631 = vpop.trf.xlu0
        %v3632 = vpop.trf.xlu0
        %v3633 = vpop.trf.xlu0
        %v3634 = vpop.trf.xlu0
        %v3635 = vpop.trf.xlu0
        %v3636 = vpop.trf.xlu0
        %v3637 = vpop.trf.xlu0
        %v3638 = vpop.trf.xlu0
        %v3639 = vpop.trf.xlu0
        %v3640 = vpop.trf.xlu0
        %3641 = vxpose.xlu0.b32.start [1/16] %v886, 128
        %3642 = vxpose.xlu0.b32.cont [2/16] %v890, 128
        %3643 = vxpose.xlu0.b32.cont [3/16] %v896, 128
        %3644 = vxpose.xlu0.b32.cont [4/16] %v900, 128
        %3645 = vxpose.xlu0.b32.cont [5/16] 0.0, 128
        %3646 = vxpose.xlu0.b32.cont [6/16] 0.0, 128
        %3647 = vxpose.xlu0.b32.cont [7/16] 0.0, 128
        %3648 = vxpose.xlu0.b32.cont [8/16] 0.0, 128
        %3649 = vxpose.xlu0.b32.cont [9/16] 0.0, 128
        %3650 = vxpose.xlu0.b32.cont [10/16] 0.0, 128
        %3651 = vxpose.xlu0.b32.cont [11/16] 0.0, 128
        %3652 = vxpose.xlu0.b32.cont [12/16] 0.0, 128
        %3653 = vxpose.xlu0.b32.cont [13/16] 0.0, 128
        %3654 = vxpose.xlu0.b32.cont [14/16] 0.0, 128
        %3655 = vxpose.xlu0.b32.cont [15/16] 0.0, 128
        %3656 = vxpose.xlu0.b32.end [16/16] 0.0, 128
        %v3657 = vpop.trf.xlu0
        %v3658 = vpop.trf.xlu0
        %v3659 = vpop.trf.xlu0
        %v3660 = vpop.trf.xlu0
        %v3661 = vpop.trf.xlu0
        %v3662 = vpop.trf.xlu0
        %v3663 = vpop.trf.xlu0
        %v3664 = vpop.trf.xlu0
        %v3665 = vpop.trf.xlu0
        %v3666 = vpop.trf.xlu0
        %v3667 = vpop.trf.xlu0
        %v3668 = vpop.trf.xlu0
        %v3669 = vpop.trf.xlu0
        %v3670 = vpop.trf.xlu0
        %v3671 = vpop.trf.xlu0
        %v3672 = vpop.trf.xlu0
        %v3673 = vpack.c.bf16 %v3626, %v3625
        %v3674 = vpack.c.bf16 %v3628, %v3627
        %v3675 = vpack.c.bf16 %v3630, %v3629
        %v3676 = vpack.c.bf16 %v3632, %v3631
        %v3677 = vpack.c.bf16 %v3634, %v3633
        %v3678 = vpack.c.bf16 %v3636, %v3635
        %v3679 = vpack.c.bf16 %v3638, %v3637
        %v3680 = vpack.c.bf16 %v3640, %v3639
        %v3681 = vpack.c.bf16 %v3658, %v3657
        %v3682 = vpack.c.bf16 %v3660, %v3659
        %v3683 = vpack.c.bf16 %v3662, %v3661
        %v3684 = vpack.c.bf16 %v3664, %v3663
        %v3685 = vpack.c.bf16 %v3666, %v3665
        %v3686 = vpack.c.bf16 %v3668, %v3667
        %v3687 = vpack.c.bf16 %v3670, %v3669
        %v3688 = vpack.c.bf16 %v3672, %v3671
        %v3689 = vld [vmem:[#allocation2 + $0x60] sm:$0xff]
        %v3690 = vld [vmem:[#allocation2 + $0x68] sm:$0xff]
        %v3691 = vld [vmem:[#allocation2 + $0x70] sm:$0xff]
        %v3692 = vld [vmem:[#allocation2 + $0x78] sm:$0xff]
        %v3693 = vld [vmem:[#allocation2 + $0xe0] sm:$0xff]
        %v3694 = vld [vmem:[#allocation2 + $0xe8] sm:$0xff]
        %v3695 = vld [vmem:[#allocation2 + $0xf0] sm:$0xff]
        %v3696 = vld [vmem:[#allocation2 + $0xf8] sm:$0xff]
        %v3698 = vsel %vm990, %v3673, 0
        %v3701 = vsel %vm990, %v3674, 0
        %v3704 = vsel %vm990, %v3675, 0
        %v3707 = vsel %vm990, %v3676, 0
        %v3710 = vsel %vm990, %v3677, 0
        %v3713 = vsel %vm990, %v3678, 0
        %v3716 = vsel %vm990, %v3679, 0
        %v3719 = vsel %vm990, %v3680, 0
        %v3722 = vsel %vm990, %v3681, 0
        %v3725 = vsel %vm990, %v3682, 0
        %v3728 = vsel %vm990, %v3683, 0
        %v3731 = vsel %vm990, %v3684, 0
        %v3734 = vsel %vm990, %v3685, 0
        %v3737 = vsel %vm990, %v3686, 0
        %v3740 = vsel %vm990, %v3687, 0
        %v3743 = vsel %vm990, %v3688, 0
        %3745 = vmatprep.subr.bf16.mxu0 %v3690
        %3746 = vmatpush1.bf16.msra.mxu0 %v3689
        %3747 = vmatprep.subr.bf16.mxu0 %v3692
        %3748 = vmatpush1.bf16.msra.mxu0 %v3691
        %3749 = vmatprep.subr.bf16.mxu0 0
        %3750 = vmatpush1.bf16.msra.mxu0 0
        %3751 = vmatprep.subr.bf16.mxu0 0
        %3752 = vmatpush1.bf16.msra.mxu0 0
        %3753 = vmatprep.subr.bf16.mxu0 0
        %3754 = vmatpush1.bf16.msra.mxu0 0
        %3755 = vmatprep.subr.bf16.mxu0 0
        %3756 = vmatpush1.bf16.msra.mxu0 0
        %3757 = vmatprep.subr.bf16.mxu0 0
        %3758 = vmatpush1.bf16.msra.mxu0 0
        %3759 = vmatprep.subr.bf16.mxu0 0
        %3760 = vmatpush1.bf16.msra.mxu0 0
        %3761 = vmatprep.subr.bf16.mxu0 0
        %3762 = vmatpush1.bf16.msra.mxu0 0
        %3763 = vmatprep.subr.bf16.mxu0 0
        %3764 = vmatpush1.bf16.msra.mxu0 0
        %3765 = vmatprep.subr.bf16.mxu0 0
        %3766 = vmatpush1.bf16.msra.mxu0 0
        %3767 = vmatprep.subr.bf16.mxu0 0
        %3768 = vmatpush1.bf16.msra.mxu0 0
        %3769 = vmatprep.subr.bf16.mxu0 0
        %3770 = vmatpush1.bf16.msra.mxu0 0
        %3771 = vmatprep.subr.bf16.mxu0 0
        %3772 = vmatpush1.bf16.msra.mxu0 0
        %3773 = vmatprep.subr.bf16.mxu0 0
        %3774 = vmatpush1.bf16.msra.mxu0 0
        %3775 = vmatprep.subr.bf16.mxu0 0
        %3776 = vmatpush1.bf16.msra.mxu0 0
        %3777 = vmatprep.mubr.bf16.mxu0 0
        %3778 = vmatmul.mubr.bf16.gmra.mrb[0].mxu0 %v3698
        %v3779 = vpop.f32.mrb[0].mxu0
        %v3780 = vadd.f32 0.0, %v3779
        %v3781 = vpop.f32.mrb[0].mxu0
        %v3782 = vadd.f32 0.0, %v3781
        %v3783 = vpop.f32.mrb[0].mxu0
        %v3784 = vadd.f32 0.0, %v3783
        %v3785 = vpop.f32.mrb[0].mxu0
        %v3786 = vadd.f32 0.0, %v3785
        %3787 = vmatprep.mubr.bf16.mxu0 0
        %3788 = vmatmul.mubr.bf16.gmra.mrb[0].mxu0 %v3701
        %v3789 = vpop.f32.mrb[0].mxu0
        %v3790 = vadd.f32 0.0, %v3789
        %v3791 = vpop.f32.mrb[0].mxu0
        %v3792 = vadd.f32 0.0, %v3791
        %v3793 = vpop.f32.mrb[0].mxu0
        %v3794 = vadd.f32 0.0, %v3793
        %v3795 = vpop.f32.mrb[0].mxu0
        %v3796 = vadd.f32 0.0, %v3795
        %3797 = vmatprep.mubr.bf16.mxu0 0
        %3798 = vmatmul.mubr.bf16.gmra.mrb[0].mxu0 %v3704
        %v3799 = vpop.f32.mrb[0].mxu0
        %v3800 = vadd.f32 0.0, %v3799
        %v3801 = vpop.f32.mrb[0].mxu0
        %v3802 = vadd.f32 0.0, %v3801
        %v3803 = vpop.f32.mrb[0].mxu0
        %v3804 = vadd.f32 0.0, %v3803
        %v3805 = vpop.f32.mrb[0].mxu0
        %v3806 = vadd.f32 0.0, %v3805
        %3807 = vmatprep.mubr.bf16.mxu0 0
        %3808 = vmatmul.mubr.bf16.gmra.mrb[0].mxu0 %v3707
        %v3809 = vpop.f32.mrb[0].mxu0
        %v3810 = vadd.f32 0.0, %v3809
        %v3811 = vpop.f32.mrb[0].mxu0
        %v3812 = vadd.f32 0.0, %v3811
        %v3813 = vpop.f32.mrb[0].mxu0
        %v3814 = vadd.f32 0.0, %v3813
        %v3815 = vpop.f32.mrb[0].mxu0
        %v3816 = vadd.f32 0.0, %v3815
        %3817 = vmatprep.mubr.bf16.mxu0 0
        %3818 = vmatmul.mubr.bf16.gmra.mrb[0].mxu0 %v3710
        %v3819 = vpop.f32.mrb[0].mxu0
        %v3820 = vadd.f32 0.0, %v3819
        %v3821 = vpop.f32.mrb[0].mxu0
        %v3822 = vadd.f32 0.0, %v3821
        %v3823 = vpop.f32.mrb[0].mxu0
        %v3824 = vadd.f32 0.0, %v3823
        %v3825 = vpop.f32.mrb[0].mxu0
        %v3826 = vadd.f32 0.0, %v3825
        %3827 = vmatprep.mubr.bf16.mxu0 0
        %3828 = vmatmul.mubr.bf16.gmra.mrb[0].mxu0 %v3713
        %v3829 = vpop.f32.mrb[0].mxu0
        %v3830 = vadd.f32 0.0, %v3829
        %v3831 = vpop.f32.mrb[0].mxu0
        %v3832 = vadd.f32 0.0, %v3831
        %v3833 = vpop.f32.mrb[0].mxu0
        %v3834 = vadd.f32 0.0, %v3833
        %v3835 = vpop.f32.mrb[0].mxu0
        %v3836 = vadd.f32 0.0, %v3835
        %3837 = vmatprep.mubr.bf16.mxu0 0
        %3838 = vmatmul.mubr.bf16.gmra.mrb[0].mxu0 %v3716
        %v3839 = vpop.f32.mrb[0].mxu0
        %v3840 = vadd.f32 0.0, %v3839
        %v3841 = vpop.f32.mrb[0].mxu0
        %v3842 = vadd.f32 0.0, %v3841
        %v3843 = vpop.f32.mrb[0].mxu0
        %v3844 = vadd.f32 0.0, %v3843
        %v3845 = vpop.f32.mrb[0].mxu0
        %v3846 = vadd.f32 0.0, %v3845
        %3847 = vmatprep.mubr.bf16.mxu0 0
        %3848 = vmatmul.mubr.bf16.gmra.mrb[0].mxu0 %v3719
        %v3849 = vpop.f32.mrb[0].mxu0
        %v3850 = vadd.f32 0.0, %v3849
        %v3851 = vpop.f32.mrb[0].mxu0
        %v3852 = vadd.f32 0.0, %v3851
        %v3853 = vpop.f32.mrb[0].mxu0
        %v3854 = vadd.f32 0.0, %v3853
        %v3855 = vpop.f32.mrb[0].mxu0
        %v3856 = vadd.f32 0.0, %v3855
        %3857 = vmatprep.mubr.bf16.mxu0 0
        %3858 = vmatmul.mubr.bf16.gmra.mrb[0].mxu0 %v3722
        %v3859 = vpop.f32.mrb[0].mxu0
        %v3860 = vadd.f32 0.0, %v3859
        %v3861 = vpop.f32.mrb[0].mxu0
        %v3862 = vadd.f32 0.0, %v3861
        %v3863 = vpop.f32.mrb[0].mxu0
        %v3864 = vadd.f32 0.0, %v3863
        %v3865 = vpop.f32.mrb[0].mxu0
        %v3866 = vadd.f32 0.0, %v3865
        %3867 = vmatprep.mubr.bf16.mxu0 0
        %3868 = vmatmul.mubr.bf16.gmra.mrb[0].mxu0 %v3725
        %v3869 = vpop.f32.mrb[0].mxu0
        %v3870 = vadd.f32 0.0, %v3869
        %v3871 = vpop.f32.mrb[0].mxu0
        %v3872 = vadd.f32 0.0, %v3871
        %v3873 = vpop.f32.mrb[0].mxu0
        %v3874 = vadd.f32 0.0, %v3873
        %v3875 = vpop.f32.mrb[0].mxu0
        %v3876 = vadd.f32 0.0, %v3875
        %3877 = vmatprep.mubr.bf16.mxu0 0
        %3878 = vmatmul.mubr.bf16.gmra.mrb[0].mxu0 %v3728
        %v3879 = vpop.f32.mrb[0].mxu0
        %v3880 = vadd.f32 0.0, %v3879
        %v3881 = vpop.f32.mrb[0].mxu0
        %v3882 = vadd.f32 0.0, %v3881
        %v3883 = vpop.f32.mrb[0].mxu0
        %v3884 = vadd.f32 0.0, %v3883
        %v3885 = vpop.f32.mrb[0].mxu0
        %v3886 = vadd.f32 0.0, %v3885
        %3887 = vmatprep.mubr.bf16.mxu0 0
        %3888 = vmatmul.mubr.bf16.gmra.mrb[0].mxu0 %v3731
        %v3889 = vpop.f32.mrb[0].mxu0
        %v3890 = vadd.f32 0.0, %v3889
        %v3891 = vpop.f32.mrb[0].mxu0
        %v3892 = vadd.f32 0.0, %v3891
        %v3893 = vpop.f32.mrb[0].mxu0
        %v3894 = vadd.f32 0.0, %v3893
        %v3895 = vpop.f32.mrb[0].mxu0
        %v3896 = vadd.f32 0.0, %v3895
        %3897 = vmatprep.mubr.bf16.mxu0 0
        %3898 = vmatmul.mubr.bf16.gmra.mrb[0].mxu0 %v3734
        %v3899 = vpop.f32.mrb[0].mxu0
        %v3900 = vadd.f32 0.0, %v3899
        %v3901 = vpop.f32.mrb[0].mxu0
        %v3902 = vadd.f32 0.0, %v3901
        %v3903 = vpop.f32.mrb[0].mxu0
        %v3904 = vadd.f32 0.0, %v3903
        %v3905 = vpop.f32.mrb[0].mxu0
        %v3906 = vadd.f32 0.0, %v3905
        %3907 = vmatprep.mubr.bf16.mxu0 0
        %3908 = vmatmul.mubr.bf16.gmra.mrb[0].mxu0 %v3737
        %v3909 = vpop.f32.mrb[0].mxu0
        %v3910 = vadd.f32 0.0, %v3909
        %v3911 = vpop.f32.mrb[0].mxu0
        %v3912 = vadd.f32 0.0, %v3911
        %v3913 = vpop.f32.mrb[0].mxu0
        %v3914 = vadd.f32 0.0, %v3913
        %v3915 = vpop.f32.mrb[0].mxu0
        %v3916 = vadd.f32 0.0, %v3915
        %3917 = vmatprep.mubr.bf16.mxu0 0
        %3918 = vmatmul.mubr.bf16.gmra.mrb[0].mxu0 %v3740
        %v3919 = vpop.f32.mrb[0].mxu0
        %v3920 = vadd.f32 0.0, %v3919
        %v3921 = vpop.f32.mrb[0].mxu0
        %v3922 = vadd.f32 0.0, %v3921
        %v3923 = vpop.f32.mrb[0].mxu0
        %v3924 = vadd.f32 0.0, %v3923
        %v3925 = vpop.f32.mrb[0].mxu0
        %v3926 = vadd.f32 0.0, %v3925
        %3927 = vmatprep.mubr.bf16.mxu0 0
        %3928 = vmatmul.mubr.bf16.gmra.mrb[0].mxu0 %v3743
        %v3929 = vpop.f32.mrb[0].mxu0
        %v3930 = vadd.f32 0.0, %v3929
        %v3931 = vpop.f32.mrb[0].mxu0
        %v3932 = vadd.f32 0.0, %v3931
        %v3933 = vpop.f32.mrb[0].mxu0
        %v3934 = vadd.f32 0.0, %v3933
        %v3935 = vpop.f32.mrb[0].mxu0
        %v3936 = vadd.f32 0.0, %v3935
        %3937 = vdwg.mxu0
        %v3938 = vmax.f32 %v3780, %v3782
        %3939 = vmax.xlane.f32.xlu0 %v3938
        %v3940 = vpop.xlane.xlu0 %3939
        %v3941 = vmax.f32 %v3784, %v3786
        %3942 = vmax.xlane.f32.xlu0 %v3941
        %v3943 = vpop.xlane.xlu0 %3942
        %v3944 = vmax.f32 %v3790, %v3792
        %3945 = vmax.xlane.f32.xlu0 %v3944
        %v3946 = vpop.xlane.xlu0 %3945
        %v3947 = vmax.f32 %v3794, %v3796
        %3948 = vmax.xlane.f32.xlu0 %v3947
        %v3949 = vpop.xlane.xlu0 %3948
        %v3950 = vmax.f32 %v3800, %v3802
        %3951 = vmax.xlane.f32.xlu0 %v3950
        %v3952 = vpop.xlane.xlu0 %3951
        %v3953 = vmax.f32 %v3804, %v3806
        %3954 = vmax.xlane.f32.xlu0 %v3953
        %v3955 = vpop.xlane.xlu0 %3954
        %v3956 = vmax.f32 %v3810, %v3812
        %3957 = vmax.xlane.f32.xlu0 %v3956
        %v3958 = vpop.xlane.xlu0 %3957
        %v3959 = vmax.f32 %v3814, %v3816
        %3960 = vmax.xlane.f32.xlu0 %v3959
        %v3961 = vpop.xlane.xlu0 %3960
        %v3962 = vmax.f32 %v3820, %v3822
        %3963 = vmax.xlane.f32.xlu0 %v3962
        %v3964 = vpop.xlane.xlu0 %3963
        %v3965 = vmax.f32 %v3824, %v3826
        %3966 = vmax.xlane.f32.xlu0 %v3965
        %v3967 = vpop.xlane.xlu0 %3966
        %v3968 = vmax.f32 %v3830, %v3832
        %3969 = vmax.xlane.f32.xlu0 %v3968
        %v3970 = vpop.xlane.xlu0 %3969
        %v3971 = vmax.f32 %v3834, %v3836
        %3972 = vmax.xlane.f32.xlu0 %v3971
        %v3973 = vpop.xlane.xlu0 %3972
        %v3974 = vmax.f32 %v3840, %v3842
        %3975 = vmax.xlane.f32.xlu0 %v3974
        %v3976 = vpop.xlane.xlu0 %3975
        %v3977 = vmax.f32 %v3844, %v3846
        %3978 = vmax.xlane.f32.xlu0 %v3977
        %v3979 = vpop.xlane.xlu0 %3978
        %v3980 = vmax.f32 %v3850, %v3852
        %3981 = vmax.xlane.f32.xlu0 %v3980
        %v3982 = vpop.xlane.xlu0 %3981
        %v3983 = vmax.f32 %v3854, %v3856
        %3984 = vmax.xlane.f32.xlu0 %v3983
        %v3985 = vpop.xlane.xlu0 %3984
        %v3986 = vmax.f32 %v3860, %v3862
        %3987 = vmax.xlane.f32.xlu0 %v3986
        %v3988 = vpop.xlane.xlu0 %3987
        %v3989 = vmax.f32 %v3864, %v3866
        %3990 = vmax.xlane.f32.xlu0 %v3989
        %v3991 = vpop.xlane.xlu0 %3990
        %v3992 = vmax.f32 %v3870, %v3872
        %3993 = vmax.xlane.f32.xlu0 %v3992
        %v3994 = vpop.xlane.xlu0 %3993
        %v3995 = vmax.f32 %v3874, %v3876
        %3996 = vmax.xlane.f32.xlu0 %v3995
        %v3997 = vpop.xlane.xlu0 %3996
        %v3998 = vmax.f32 %v3880, %v3882
        %3999 = vmax.xlane.f32.xlu0 %v3998
        %v4000 = vpop.xlane.xlu0 %3999
        %v4001 = vmax.f32 %v3884, %v3886
        %4002 = vmax.xlane.f32.xlu0 %v4001
        %v4003 = vpop.xlane.xlu0 %4002
        %v4004 = vmax.f32 %v3890, %v3892
        %4005 = vmax.xlane.f32.xlu0 %v4004
        %v4006 = vpop.xlane.xlu0 %4005
        %v4007 = vmax.f32 %v3894, %v3896
        %4008 = vmax.xlane.f32.xlu0 %v4007
        %v4009 = vpop.xlane.xlu0 %4008
        %v4010 = vmax.f32 %v3900, %v3902
        %4011 = vmax.xlane.f32.xlu0 %v4010
        %v4012 = vpop.xlane.xlu0 %4011
        %v4013 = vmax.f32 %v3904, %v3906
        %4014 = vmax.xlane.f32.xlu0 %v4013
        %v4015 = vpop.xlane.xlu0 %4014
        %v4016 = vmax.f32 %v3910, %v3912
        %4017 = vmax.xlane.f32.xlu0 %v4016
        %v4018 = vpop.xlane.xlu0 %4017
        %v4019 = vmax.f32 %v3914, %v3916
        %4020 = vmax.xlane.f32.xlu0 %v4019
        %v4021 = vpop.xlane.xlu0 %4020
        %v4022 = vmax.f32 %v3920, %v3922
        %4023 = vmax.xlane.f32.xlu0 %v4022
        %v4024 = vpop.xlane.xlu0 %4023
        %v4025 = vmax.f32 %v3924, %v3926
        %4026 = vmax.xlane.f32.xlu0 %v4025
        %v4027 = vpop.xlane.xlu0 %4026
        %v4028 = vmax.f32 %v3930, %v3932
        %4029 = vmax.xlane.f32.xlu0 %v4028
        %v4030 = vpop.xlane.xlu0 %4029
        %v4031 = vmax.f32 %v3934, %v3936
        %4032 = vmax.xlane.f32.xlu0 %v4031
        %v4033 = vpop.xlane.xlu0 %4032
        %v4034 = vsub.f32 %v3780, %v3940
        %v4035 = vsub.f32 %v3782, %v3940
        %v4036 = vsub.f32 %v3784, %v3943
        %v4037 = vsub.f32 %v3786, %v3943
        %v4038 = vsub.f32 %v3790, %v3946
        %v4039 = vsub.f32 %v3792, %v3946
        %v4040 = vsub.f32 %v3794, %v3949
        %v4041 = vsub.f32 %v3796, %v3949
        %v4042 = vsub.f32 %v3800, %v3952
        %v4043 = vsub.f32 %v3802, %v3952
        %v4044 = vsub.f32 %v3804, %v3955
        %v4045 = vsub.f32 %v3806, %v3955
        %v4046 = vsub.f32 %v3810, %v3958
        %v4047 = vsub.f32 %v3812, %v3958
        %v4048 = vsub.f32 %v3814, %v3961
        %v4049 = vsub.f32 %v3816, %v3961
        %v4050 = vsub.f32 %v3820, %v3964
        %v4051 = vsub.f32 %v3822, %v3964
        %v4052 = vsub.f32 %v3824, %v3967
        %v4053 = vsub.f32 %v3826, %v3967
        %v4054 = vsub.f32 %v3830, %v3970
        %v4055 = vsub.f32 %v3832, %v3970
        %v4056 = vsub.f32 %v3834, %v3973
        %v4057 = vsub.f32 %v3836, %v3973
        %v4058 = vsub.f32 %v3840, %v3976
        %v4059 = vsub.f32 %v3842, %v3976
        %v4060 = vsub.f32 %v3844, %v3979
        %v4061 = vsub.f32 %v3846, %v3979
        %v4062 = vsub.f32 %v3850, %v3982
        %v4063 = vsub.f32 %v3852, %v3982
        %v4064 = vsub.f32 %v3854, %v3985
        %v4065 = vsub.f32 %v3856, %v3985
        %v4066 = vsub.f32 %v3860, %v3988
        %v4067 = vsub.f32 %v3862, %v3988
        %v4068 = vsub.f32 %v3864, %v3991
        %v4069 = vsub.f32 %v3866, %v3991
        %v4070 = vsub.f32 %v3870, %v3994
        %v4071 = vsub.f32 %v3872, %v3994
        %v4072 = vsub.f32 %v3874, %v3997
        %v4073 = vsub.f32 %v3876, %v3997
        %v4074 = vsub.f32 %v3880, %v4000
        %v4075 = vsub.f32 %v3882, %v4000
        %v4076 = vsub.f32 %v3884, %v4003
        %v4077 = vsub.f32 %v3886, %v4003
        %v4078 = vsub.f32 %v3890, %v4006
        %v4079 = vsub.f32 %v3892, %v4006
        %v4080 = vsub.f32 %v3894, %v4009
        %v4081 = vsub.f32 %v3896, %v4009
        %v4082 = vsub.f32 %v3900, %v4012
        %v4083 = vsub.f32 %v3902, %v4012
        %v4084 = vsub.f32 %v3904, %v4015
        %v4085 = vsub.f32 %v3906, %v4015
        %v4086 = vsub.f32 %v3910, %v4018
        %v4087 = vsub.f32 %v3912, %v4018
        %v4088 = vsub.f32 %v3914, %v4021
        %v4089 = vsub.f32 %v3916, %v4021
        %v4090 = vsub.f32 %v3920, %v4024
        %v4091 = vsub.f32 %v3922, %v4024
        %v4092 = vsub.f32 %v3924, %v4027
        %v4093 = vsub.f32 %v3926, %v4027
        %v4094 = vsub.f32 %v3930, %v4030
        %v4095 = vsub.f32 %v3932, %v4030
        %v4096 = vsub.f32 %v3934, %v4033
        %v4097 = vsub.f32 %v3936, %v4033
        %v4098 = vmul.f32 %v4034, 1.442695
        %v4099 = vpow.pop %v4098
        %v4100 = vmul.f32 %v4035, 1.442695
        %v4101 = vpow.pop %v4100
        %v4102 = vmul.f32 %v4036, 1.442695
        %v4103 = vpow.pop %v4102
        %v4104 = vmul.f32 %v4037, 1.442695
        %v4105 = vpow.pop %v4104
        %v4106 = vmul.f32 %v4038, 1.442695
        %v4107 = vpow.pop %v4106
        %v4108 = vmul.f32 %v4039, 1.442695
        %v4109 = vpow.pop %v4108
        %v4110 = vmul.f32 %v4040, 1.442695
        %v4111 = vpow.pop %v4110
        %v4112 = vmul.f32 %v4041, 1.442695
        %v4113 = vpow.pop %v4112
        %v4114 = vmul.f32 %v4042, 1.442695
        %v4115 = vpow.pop %v4114
        %v4116 = vmul.f32 %v4043, 1.442695
        %v4117 = vpow.pop %v4116
        %v4118 = vmul.f32 %v4044, 1.442695
        %v4119 = vpow.pop %v4118
        %v4120 = vmul.f32 %v4045, 1.442695
        %v4121 = vpow.pop %v4120
        %v4122 = vmul.f32 %v4046, 1.442695
        %v4123 = vpow.pop %v4122
        %v4124 = vmul.f32 %v4047, 1.442695
        %v4125 = vpow.pop %v4124
        %v4126 = vmul.f32 %v4048, 1.442695
        %v4127 = vpow.pop %v4126
        %v4128 = vmul.f32 %v4049, 1.442695
        %v4129 = vpow.pop %v4128
        %v4130 = vmul.f32 %v4050, 1.442695
        %v4131 = vpow.pop %v4130
        %v4132 = vmul.f32 %v4051, 1.442695
        %v4133 = vpow.pop %v4132
        %v4134 = vmul.f32 %v4052, 1.442695
        %v4135 = vpow.pop %v4134
        %v4136 = vmul.f32 %v4053, 1.442695
        %v4137 = vpow.pop %v4136
        %v4138 = vmul.f32 %v4054, 1.442695
        %v4139 = vpow.pop %v4138
        %v4140 = vmul.f32 %v4055, 1.442695
        %v4141 = vpow.pop %v4140
        %v4142 = vmul.f32 %v4056, 1.442695
        %v4143 = vpow.pop %v4142
        %v4144 = vmul.f32 %v4057, 1.442695
        %v4145 = vpow.pop %v4144
        %v4146 = vmul.f32 %v4058, 1.442695
        %v4147 = vpow.pop %v4146
        %v4148 = vmul.f32 %v4059, 1.442695
        %v4149 = vpow.pop %v4148
        %v4150 = vmul.f32 %v4060, 1.442695
        %v4151 = vpow.pop %v4150
        %v4152 = vmul.f32 %v4061, 1.442695
        %v4153 = vpow.pop %v4152
        %v4154 = vmul.f32 %v4062, 1.442695
        %v4155 = vpow.pop %v4154
        %v4156 = vmul.f32 %v4063, 1.442695
        %v4157 = vpow.pop %v4156
        %v4158 = vmul.f32 %v4064, 1.442695
        %v4159 = vpow.pop %v4158
        %v4160 = vmul.f32 %v4065, 1.442695
        %v4161 = vpow.pop %v4160
        %v4162 = vmul.f32 %v4066, 1.442695
        %v4163 = vpow.pop %v4162
        %v4164 = vmul.f32 %v4067, 1.442695
        %v4165 = vpow.pop %v4164
        %v4166 = vmul.f32 %v4068, 1.442695
        %v4167 = vpow.pop %v4166
        %v4168 = vmul.f32 %v4069, 1.442695
        %v4169 = vpow.pop %v4168
        %v4170 = vmul.f32 %v4070, 1.442695
        %v4171 = vpow.pop %v4170
        %v4172 = vmul.f32 %v4071, 1.442695
        %v4173 = vpow.pop %v4172
        %v4174 = vmul.f32 %v4072, 1.442695
        %v4175 = vpow.pop %v4174
        %v4176 = vmul.f32 %v4073, 1.442695
        %v4177 = vpow.pop %v4176
        %v4178 = vmul.f32 %v4074, 1.442695
        %v4179 = vpow.pop %v4178
        %v4180 = vmul.f32 %v4075, 1.442695
        %v4181 = vpow.pop %v4180
        %v4182 = vmul.f32 %v4076, 1.442695
        %v4183 = vpow.pop %v4182
        %v4184 = vmul.f32 %v4077, 1.442695
        %v4185 = vpow.pop %v4184
        %v4186 = vmul.f32 %v4078, 1.442695
        %v4187 = vpow.pop %v4186
        %v4188 = vmul.f32 %v4079, 1.442695
        %v4189 = vpow.pop %v4188
        %v4190 = vmul.f32 %v4080, 1.442695
        %v4191 = vpow.pop %v4190
        %v4192 = vmul.f32 %v4081, 1.442695
        %v4193 = vpow.pop %v4192
        %v4194 = vmul.f32 %v4082, 1.442695
        %v4195 = vpow.pop %v4194
        %v4196 = vmul.f32 %v4083, 1.442695
        %v4197 = vpow.pop %v4196
        %v4198 = vmul.f32 %v4084, 1.442695
        %v4199 = vpow.pop %v4198
        %v4200 = vmul.f32 %v4085, 1.442695
        %v4201 = vpow.pop %v4200
        %v4202 = vmul.f32 %v4086, 1.442695
        %v4203 = vpow.pop %v4202
        %v4204 = vmul.f32 %v4087, 1.442695
        %v4205 = vpow.pop %v4204
        %v4206 = vmul.f32 %v4088, 1.442695
        %v4207 = vpow.pop %v4206
        %v4208 = vmul.f32 %v4089, 1.442695
        %v4209 = vpow.pop %v4208
        %v4210 = vmul.f32 %v4090, 1.442695
        %v4211 = vpow.pop %v4210
        %v4212 = vmul.f32 %v4091, 1.442695
        %v4213 = vpow.pop %v4212
        %v4214 = vmul.f32 %v4092, 1.442695
        %v4215 = vpow.pop %v4214
        %v4216 = vmul.f32 %v4093, 1.442695
        %v4217 = vpow.pop %v4216
        %v4218 = vmul.f32 %v4094, 1.442695
        %v4219 = vpow.pop %v4218
        %v4220 = vmul.f32 %v4095, 1.442695
        %v4221 = vpow.pop %v4220
        %v4222 = vmul.f32 %v4096, 1.442695
        %v4223 = vpow.pop %v4222
        %v4224 = vmul.f32 %v4097, 1.442695
        %v4225 = vpow.pop %v4224
        %v4226 = vadd.f32 %v4099, %v4101
        %4227 = vadd.xlane.f32.xlu0 %v4226
        %v4228 = vpop.xlane.xlu0 %4227
        %v4229 = vadd.f32 %v4103, %v4105
        %4230 = vadd.xlane.f32.xlu0 %v4229
        %v4231 = vpop.xlane.xlu0 %4230
        %v4232 = vadd.f32 %v4107, %v4109
        %4233 = vadd.xlane.f32.xlu0 %v4232
        %v4234 = vpop.xlane.xlu0 %4233
        %v4235 = vadd.f32 %v4111, %v4113
        %4236 = vadd.xlane.f32.xlu0 %v4235
        %v4237 = vpop.xlane.xlu0 %4236
        %v4238 = vadd.f32 %v4115, %v4117
        %4239 = vadd.xlane.f32.xlu0 %v4238
        %v4240 = vpop.xlane.xlu0 %4239
        %v4241 = vadd.f32 %v4119, %v4121
        %4242 = vadd.xlane.f32.xlu0 %v4241
        %v4243 = vpop.xlane.xlu0 %4242
        %v4244 = vadd.f32 %v4123, %v4125
        %4245 = vadd.xlane.f32.xlu0 %v4244
        %v4246 = vpop.xlane.xlu0 %4245
        %v4247 = vadd.f32 %v4127, %v4129
        %4248 = vadd.xlane.f32.xlu0 %v4247
        %v4249 = vpop.xlane.xlu0 %4248
        %v4250 = vadd.f32 %v4131, %v4133
        %4251 = vadd.xlane.f32.xlu0 %v4250
        %v4252 = vpop.xlane.xlu0 %4251
        %v4253 = vadd.f32 %v4135, %v4137
        %4254 = vadd.xlane.f32.xlu0 %v4253
        %v4255 = vpop.xlane.xlu0 %4254
        %v4256 = vadd.f32 %v4139, %v4141
        %4257 = vadd.xlane.f32.xlu0 %v4256
        %v4258 = vpop.xlane.xlu0 %4257
        %v4259 = vadd.f32 %v4143, %v4145
        %4260 = vadd.xlane.f32.xlu0 %v4259
        %v4261 = vpop.xlane.xlu0 %4260
        %v4262 = vadd.f32 %v4147, %v4149
        %4263 = vadd.xlane.f32.xlu0 %v4262
        %v4264 = vpop.xlane.xlu0 %4263
        %v4265 = vadd.f32 %v4151, %v4153
        %4266 = vadd.xlane.f32.xlu0 %v4265
        %v4267 = vpop.xlane.xlu0 %4266
        %v4268 = vadd.f32 %v4155, %v4157
        %4269 = vadd.xlane.f32.xlu0 %v4268
        %v4270 = vpop.xlane.xlu0 %4269
        %v4271 = vadd.f32 %v4159, %v4161
        %4272 = vadd.xlane.f32.xlu0 %v4271
        %v4273 = vpop.xlane.xlu0 %4272
        %v4274 = vadd.f32 %v4163, %v4165
        %4275 = vadd.xlane.f32.xlu0 %v4274
        %v4276 = vpop.xlane.xlu0 %4275
        %v4277 = vadd.f32 %v4167, %v4169
        %4278 = vadd.xlane.f32.xlu0 %v4277
        %v4279 = vpop.xlane.xlu0 %4278
        %v4280 = vadd.f32 %v4171, %v4173
        %4281 = vadd.xlane.f32.xlu0 %v4280
        %v4282 = vpop.xlane.xlu0 %4281
        %v4283 = vadd.f32 %v4175, %v4177
        %4284 = vadd.xlane.f32.xlu0 %v4283
        %v4285 = vpop.xlane.xlu0 %4284
        %v4286 = vadd.f32 %v4179, %v4181
        %4287 = vadd.xlane.f32.xlu0 %v4286
        %v4288 = vpop.xlane.xlu0 %4287
        %v4289 = vadd.f32 %v4183, %v4185
        %4290 = vadd.xlane.f32.xlu0 %v4289
        %v4291 = vpop.xlane.xlu0 %4290
        %v4292 = vadd.f32 %v4187, %v4189
        %4293 = vadd.xlane.f32.xlu0 %v4292
        %v4294 = vpop.xlane.xlu0 %4293
        %v4295 = vadd.f32 %v4191, %v4193
        %4296 = vadd.xlane.f32.xlu0 %v4295
        %v4297 = vpop.xlane.xlu0 %4296
        %v4298 = vadd.f32 %v4195, %v4197
        %4299 = vadd.xlane.f32.xlu0 %v4298
        %v4300 = vpop.xlane.xlu0 %4299
        %v4301 = vadd.f32 %v4199, %v4201
        %4302 = vadd.xlane.f32.xlu0 %v4301
        %v4303 = vpop.xlane.xlu0 %4302
        %v4304 = vadd.f32 %v4203, %v4205
        %4305 = vadd.xlane.f32.xlu0 %v4304
        %v4306 = vpop.xlane.xlu0 %4305
        %v4307 = vadd.f32 %v4207, %v4209
        %4308 = vadd.xlane.f32.xlu0 %v4307
        %v4309 = vpop.xlane.xlu0 %4308
        %v4310 = vadd.f32 %v4211, %v4213
        %4311 = vadd.xlane.f32.xlu0 %v4310
        %v4312 = vpop.xlane.xlu0 %4311
        %v4313 = vadd.f32 %v4215, %v4217
        %4314 = vadd.xlane.f32.xlu0 %v4313
        %v4315 = vpop.xlane.xlu0 %4314
        %v4316 = vadd.f32 %v4219, %v4221
        %4317 = vadd.xlane.f32.xlu0 %v4316
        %v4318 = vpop.xlane.xlu0 %4317
        %v4319 = vadd.f32 %v4223, %v4225
        %4320 = vadd.xlane.f32.xlu0 %v4319
        %v4321 = vpop.xlane.xlu0 %4320
        %v4322 = vrcp.pop %v4228
        %v4323 = vrcp.pop %v4231
        %v4324 = vrcp.pop %v4234
        %v4325 = vrcp.pop %v4237
        %v4326 = vrcp.pop %v4240
        %v4327 = vrcp.pop %v4243
        %v4328 = vrcp.pop %v4246
        %v4329 = vrcp.pop %v4249
        %v4330 = vrcp.pop %v4252
        %v4331 = vrcp.pop %v4255
        %v4332 = vrcp.pop %v4258
        %v4333 = vrcp.pop %v4261
        %v4334 = vrcp.pop %v4264
        %v4335 = vrcp.pop %v4267
        %v4336 = vrcp.pop %v4270
        %v4337 = vrcp.pop %v4273
        %v4338 = vrcp.pop %v4276
        %v4339 = vrcp.pop %v4279
        %v4340 = vrcp.pop %v4282
        %v4341 = vrcp.pop %v4285
        %v4342 = vrcp.pop %v4288
        %v4343 = vrcp.pop %v4291
        %v4344 = vrcp.pop %v4294
        %v4345 = vrcp.pop %v4297
        %v4346 = vrcp.pop %v4300
        %v4347 = vrcp.pop %v4303
        %v4348 = vrcp.pop %v4306
        %v4349 = vrcp.pop %v4309
        %v4350 = vrcp.pop %v4312
        %v4351 = vrcp.pop %v4315
        %v4352 = vrcp.pop %v4318
        %v4353 = vrcp.pop %v4321
        %v4354 = vmul.f32 %v4099, %v4322
        %v4355 = vmul.f32 %v4101, %v4322
        %v4356 = vmul.f32 %v4103, %v4323
        %v4357 = vmul.f32 %v4105, %v4323
        %v4358 = vmul.f32 %v4107, %v4324
        %v4359 = vmul.f32 %v4109, %v4324
        %v4360 = vmul.f32 %v4111, %v4325
        %v4361 = vmul.f32 %v4113, %v4325
        %v4362 = vmul.f32 %v4115, %v4326
        %v4363 = vmul.f32 %v4117, %v4326
        %v4364 = vmul.f32 %v4119, %v4327
        %v4365 = vmul.f32 %v4121, %v4327
        %v4366 = vmul.f32 %v4123, %v4328
        %v4367 = vmul.f32 %v4125, %v4328
        %v4368 = vmul.f32 %v4127, %v4329
        %v4369 = vmul.f32 %v4129, %v4329
        %v4370 = vmul.f32 %v4131, %v4330
        %v4371 = vmul.f32 %v4133, %v4330
        %v4372 = vmul.f32 %v4135, %v4331
        %v4373 = vmul.f32 %v4137, %v4331
        %v4374 = vmul.f32 %v4139, %v4332
        %v4375 = vmul.f32 %v4141, %v4332
        %v4376 = vmul.f32 %v4143, %v4333
        %v4377 = vmul.f32 %v4145, %v4333
        %v4378 = vmul.f32 %v4147, %v4334
        %v4379 = vmul.f32 %v4149, %v4334
        %v4380 = vmul.f32 %v4151, %v4335
        %v4381 = vmul.f32 %v4153, %v4335
        %v4382 = vmul.f32 %v4155, %v4336
        %v4383 = vmul.f32 %v4157, %v4336
        %v4384 = vmul.f32 %v4159, %v4337
        %v4385 = vmul.f32 %v4161, %v4337
        %v4386 = vmul.f32 %v4163, %v4338
        %v4387 = vmul.f32 %v4165, %v4338
        %v4388 = vmul.f32 %v4167, %v4339
        %v4389 = vmul.f32 %v4169, %v4339
        %v4390 = vmul.f32 %v4171, %v4340
        %v4391 = vmul.f32 %v4173, %v4340
        %v4392 = vmul.f32 %v4175, %v4341
        %v4393 = vmul.f32 %v4177, %v4341
        %v4394 = vmul.f32 %v4179, %v4342
        %v4395 = vmul.f32 %v4181, %v4342
        %v4396 = vmul.f32 %v4183, %v4343
        %v4397 = vmul.f32 %v4185, %v4343
        %v4398 = vmul.f32 %v4187, %v4344
        %v4399 = vmul.f32 %v4189, %v4344
        %v4400 = vmul.f32 %v4191, %v4345
        %v4401 = vmul.f32 %v4193, %v4345
        %v4402 = vmul.f32 %v4195, %v4346
        %v4403 = vmul.f32 %v4197, %v4346
        %v4404 = vmul.f32 %v4199, %v4347
        %v4405 = vmul.f32 %v4201, %v4347
        %v4406 = vmul.f32 %v4203, %v4348
        %v4407 = vmul.f32 %v4205, %v4348
        %v4408 = vmul.f32 %v4207, %v4349
        %v4409 = vmul.f32 %v4209, %v4349
        %v4410 = vmul.f32 %v4211, %v4350
        %v4411 = vmul.f32 %v4213, %v4350
        %v4412 = vmul.f32 %v4215, %v4351
        %v4413 = vmul.f32 %v4217, %v4351
        %v4414 = vmul.f32 %v4219, %v4352
        %v4415 = vmul.f32 %v4221, %v4352
        %v4416 = vmul.f32 %v4223, %v4353
        %v4417 = vmul.f32 %v4225, %v4353
        %v4418 = vpack.c.bf16 %v4356, %v4354
        %v4419 = vpack.c.bf16 %v4357, %v4355
        %v4420 = vpack.c.bf16 %v4360, %v4358
        %v4421 = vpack.c.bf16 %v4361, %v4359
        %v4422 = vpack.c.bf16 %v4364, %v4362
        %v4423 = vpack.c.bf16 %v4365, %v4363
        %v4424 = vpack.c.bf16 %v4368, %v4366
        %v4425 = vpack.c.bf16 %v4369, %v4367
        %v4426 = vpack.c.bf16 %v4372, %v4370
        %v4427 = vpack.c.bf16 %v4373, %v4371
        %v4428 = vpack.c.bf16 %v4376, %v4374
        %v4429 = vpack.c.bf16 %v4377, %v4375
        %v4430 = vpack.c.bf16 %v4380, %v4378
        %v4431 = vpack.c.bf16 %v4381, %v4379
        %v4432 = vpack.c.bf16 %v4384, %v4382
        %v4433 = vpack.c.bf16 %v4385, %v4383
        %v4434 = vpack.c.bf16 %v4388, %v4386
        %v4435 = vpack.c.bf16 %v4389, %v4387
        %v4436 = vpack.c.bf16 %v4392, %v4390
        %v4437 = vpack.c.bf16 %v4393, %v4391
        %v4438 = vpack.c.bf16 %v4396, %v4394
        %v4439 = vpack.c.bf16 %v4397, %v4395
        %v4440 = vpack.c.bf16 %v4400, %v4398
        %v4441 = vpack.c.bf16 %v4401, %v4399
        %v4442 = vpack.c.bf16 %v4404, %v4402
        %v4443 = vpack.c.bf16 %v4405, %v4403
        %v4444 = vpack.c.bf16 %v4408, %v4406
        %v4445 = vpack.c.bf16 %v4409, %v4407
        %v4446 = vpack.c.bf16 %v4412, %v4410
        %v4447 = vpack.c.bf16 %v4413, %v4411
        %v4448 = vpack.c.bf16 %v4416, %v4414
        %v4449 = vpack.c.bf16 %v4417, %v4415
        %4450 = vmatprep.subr.bf16.mxu0 %v4419
        %4451 = vmatpush1.bf16.xpose.msra.mxu0 %v4418
        %4452 = vmatprep.subr.bf16.mxu0 %v4421
        %4453 = vmatpush1.bf16.xpose.msra.mxu0 %v4420
        %4454 = vmatprep.subr.bf16.mxu0 %v4423
        %4455 = vmatpush1.bf16.xpose.msra.mxu0 %v4422
        %4456 = vmatprep.subr.bf16.mxu0 %v4425
        %4457 = vmatpush1.bf16.xpose.msra.mxu0 %v4424
        %4458 = vmatprep.subr.bf16.mxu0 %v4427
        %4459 = vmatpush1.bf16.xpose.msra.mxu0 %v4426
        %4460 = vmatprep.subr.bf16.mxu0 %v4429
        %4461 = vmatpush1.bf16.xpose.msra.mxu0 %v4428
        %4462 = vmatprep.subr.bf16.mxu0 %v4431
        %4463 = vmatpush1.bf16.xpose.msra.mxu0 %v4430
        %4464 = vmatprep.subr.bf16.mxu0 %v4433
        %4465 = vmatpush1.bf16.xpose.msra.mxu0 %v4432
        %4466 = vmatprep.subr.bf16.mxu0 %v4435
        %4467 = vmatpush1.bf16.xpose.msra.mxu0 %v4434
        %4468 = vmatprep.subr.bf16.mxu0 %v4437
        %4469 = vmatpush1.bf16.xpose.msra.mxu0 %v4436
        %4470 = vmatprep.subr.bf16.mxu0 %v4439
        %4471 = vmatpush1.bf16.xpose.msra.mxu0 %v4438
        %4472 = vmatprep.subr.bf16.mxu0 %v4441
        %4473 = vmatpush1.bf16.xpose.msra.mxu0 %v4440
        %4474 = vmatprep.subr.bf16.mxu0 %v4443
        %4475 = vmatpush1.bf16.xpose.msra.mxu0 %v4442
        %4476 = vmatprep.subr.bf16.mxu0 %v4445
        %4477 = vmatpush1.bf16.xpose.msra.mxu0 %v4444
        %4478 = vmatprep.subr.bf16.mxu0 %v4447
        %4479 = vmatpush1.bf16.xpose.msra.mxu0 %v4446
        %4480 = vmatprep.subr.bf16.mxu0 %v4449
        %4481 = vmatpush1.bf16.xpose.msra.mxu0 %v4448
        %4482 = vmatprep.mubr.bf16.mxu0 %v3694
        %4483 = vmatmul.mubr.bf16.gmra.mrb[0].mxu0 %v3693
        %v4484 = vpop.f32.mrb[0].mxu0
        %v4485 = vadd.f32 0.0, %v4484
        %v4486 = vpop.f32.mrb[0].mxu0
        %v4487 = vadd.f32 0.0, %v4486
        %v4488 = vpop.f32.mrb[0].mxu0
        %v4489 = vadd.f32 0.0, %v4488
        %v4490 = vpop.f32.mrb[0].mxu0
        %v4491 = vadd.f32 0.0, %v4490
        %4492 = vmatprep.mubr.bf16.mxu0 %v3696
        %4493 = vmatmul.mubr.bf16.gmra.mrb[0].mxu0 %v3695
        %v4494 = vpop.f32.mrb[0].mxu0
        %v4495 = vadd.f32 0.0, %v4494
        %v4496 = vpop.f32.mrb[0].mxu0
        %v4497 = vadd.f32 0.0, %v4496
        %v4498 = vpop.f32.mrb[0].mxu0
        %v4499 = vadd.f32 0.0, %v4498
        %v4500 = vpop.f32.mrb[0].mxu0
        %v4501 = vadd.f32 0.0, %v4500
        %4502 = vdwg.mxu0
        %v4503 = vpack.c.bf16 %v4489, %v4485
        %v4504 = vpack.c.bf16 %v4491, %v4487
        %v4505 = vpack.c.bf16 %v4499, %v4495
        %v4506 = vpack.c.bf16 %v4501, %v4497
        %4507 = vst [vmem:[#allocation3 + $0x60] sm:$0xff] %v4503
        %4508 = vst [vmem:[#allocation3 + $0x68] sm:$0xff] %v4504
        %4509 = vst [vmem:[#allocation3 + $0x70] sm:$0xff] %v4505
        %4510 = vst [vmem:[#allocation3 + $0x78] sm:$0xff] %v4506
        %v4511 = vld [vmem:[%s2] sm:$0xf]
        %v4512 = vld [vmem:[%s2 + $0x4] sm:$0xf]
        %v4513 = vld [vmem:[%s2 + $0x8] sm:$0xf]
        %v4514 = vld [vmem:[%s2 + $0xc] sm:$0xf]
        %v4515 = vld [vmem:[%s2 + $0x10] sm:$0xf]
        %v4516 = vld [vmem:[%s2 + $0x14] sm:$0xf]
        %v4517 = vld [vmem:[%s2 + $0x18] sm:$0xf]
        %v4518 = vld [vmem:[%s2 + $0x1c] sm:$0xf]
        %v4519 = vld [vmem:[#allocation3] sm:$0xff]
        %v4520 = vld [vmem:[#allocation3 + $0x8] sm:$0xff]
        %v4521 = vld [vmem:[#allocation3 + $0x10] sm:$0xff]
        %v4522 = vld [vmem:[#allocation3 + $0x18] sm:$0xff]
        %v4523 = vld [vmem:[#allocation3 + $0x20] sm:$0xff]
        %v4524 = vld [vmem:[#allocation3 + $0x28] sm:$0xff]
        %v4525 = vld [vmem:[#allocation3 + $0x30] sm:$0xff]
        %v4526 = vld [vmem:[#allocation3 + $0x38] sm:$0xff]
        %v4527 = vld [vmem:[#allocation3 + $0x40] sm:$0xff]
        %v4528 = vld [vmem:[#allocation3 + $0x48] sm:$0xff]
        %v4529 = vld [vmem:[#allocation3 + $0x50] sm:$0xff]
        %v4530 = vld [vmem:[#allocation3 + $0x58] sm:$0xff]
        %v4531 = vld [vmem:[#allocation3 + $0x60] sm:$0xff]
        %v4532 = vld [vmem:[#allocation3 + $0x68] sm:$0xff]
        %v4533 = vld [vmem:[#allocation3 + $0x70] sm:$0xff]
        %v4534 = vld [vmem:[#allocation3 + $0x78] sm:$0xff]
        %v4543 = vunpack.c.l.b16 %v4511
        %v4544 = vunpack.c.l.b16 %v4512
        %v4545 = vunpack.c.l.b16 %v4513
        %v4546 = vunpack.c.l.b16 %v4514
        %v4547 = vunpack.c.l.b16 %v4515
        %v4548 = vunpack.c.l.b16 %v4516
        %v4549 = vunpack.c.l.b16 %v4517
        %v4550 = vunpack.c.l.b16 %v4518
        %v4551 = vpack.c.b16 %v4544, %v4543
        %v4552 = vpack.c.b16 %v4546, %v4545
        %v4553 = vpack.c.b16 %v4548, %v4547
        %v4554 = vpack.c.b16 %v4550, %v4549
        %4559 = vmatprep.subr.bf16.mxu0 %v4520
        %4560 = vmatpush1.bf16.msra.mxu0 %v4519
        %4561 = vmatprep.subr.bf16.mxu0 %v4522
        %4562 = vmatpush1.bf16.msra.mxu0 %v4521
        %4563 = vmatprep.subr.bf16.mxu0 %v4524
        %4564 = vmatpush1.bf16.msra.mxu0 %v4523
        %4565 = vmatprep.subr.bf16.mxu0 %v4526
        %4566 = vmatpush1.bf16.msra.mxu0 %v4525
        %4567 = vmatprep.subr.bf16.mxu0 %v4528
        %4568 = vmatpush1.bf16.msra.mxu0 %v4527
        %4569 = vmatprep.subr.bf16.mxu0 %v4530
        %4570 = vmatpush1.bf16.msra.mxu0 %v4529
        %4571 = vmatprep.subr.bf16.mxu0 %v4532
        %4572 = vmatpush1.bf16.msra.mxu0 %v4531
        %4573 = vmatprep.subr.bf16.mxu0 %v4534
        %4574 = vmatpush1.bf16.msra.mxu0 %v4533
        %4575 = vmatprep.subr.bf16.mxu0 0
        %4576 = vmatpush1.bf16.msra.mxu0 0
        %4577 = vmatprep.subr.bf16.mxu0 0
        %4578 = vmatpush1.bf16.msra.mxu0 0
        %4579 = vmatprep.subr.bf16.mxu0 0
        %4580 = vmatpush1.bf16.msra.mxu0 0
        %4581 = vmatprep.subr.bf16.mxu0 0
        %4582 = vmatpush1.bf16.msra.mxu0 0
        %4583 = vmatprep.subr.bf16.mxu0 0
        %4584 = vmatpush1.bf16.msra.mxu0 0
        %4585 = vmatprep.subr.bf16.mxu0 0
        %4586 = vmatpush1.bf16.msra.mxu0 0
        %4587 = vmatprep.subr.bf16.mxu0 0
        %4588 = vmatpush1.bf16.msra.mxu0 0
        %4589 = vmatprep.subr.bf16.mxu0 0
        %4590 = vmatpush1.bf16.msra.mxu0 0
        %4591 = vmatprep.mubr.bf16.mxu0 0
        %4592 = vmatmul.mubr.bf16.gmra.mrb[0].mxu0 %v4551
        %v4593 = vpop.f32.mrb[0].mxu0
        %v4594 = vadd.f32 0.0, %v4593
        %v4595 = vpop.f32.mrb[0].mxu0
        %v4596 = vadd.f32 0.0, %v4595
        %v4597 = vpop.f32.mrb[0].mxu0
        %v4598 = vadd.f32 0.0, %v4597
        %v4599 = vpop.f32.mrb[0].mxu0
        %v4600 = vadd.f32 0.0, %v4599
        %4601 = vmatprep.mubr.bf16.mxu0 0
        %4602 = vmatmul.mubr.bf16.gmra.mrb[0].mxu0 %v4552
        %v4603 = vpop.f32.mrb[0].mxu0
        %v4604 = vadd.f32 0.0, %v4603
        %v4605 = vpop.f32.mrb[0].mxu0
        %v4606 = vadd.f32 0.0, %v4605
        %v4607 = vpop.f32.mrb[0].mxu0
        %v4608 = vadd.f32 0.0, %v4607
        %v4609 = vpop.f32.mrb[0].mxu0
        %v4610 = vadd.f32 0.0, %v4609
        %4611 = vmatprep.mubr.bf16.mxu0 0
        %4612 = vmatmul.mubr.bf16.gmra.mrb[0].mxu0 %v4553
        %v4613 = vpop.f32.mrb[0].mxu0
        %v4614 = vadd.f32 0.0, %v4613
        %v4615 = vpop.f32.mrb[0].mxu0
        %v4616 = vadd.f32 0.0, %v4615
        %v4617 = vpop.f32.mrb[0].mxu0
        %v4618 = vadd.f32 0.0, %v4617
        %v4619 = vpop.f32.mrb[0].mxu0
        %v4620 = vadd.f32 0.0, %v4619
        %4621 = vmatprep.mubr.bf16.mxu0 0
        %4622 = vmatmul.mubr.bf16.gmra.mrb[0].mxu0 %v4554
        %v4623 = vpop.f32.mrb[0].mxu0
        %v4624 = vadd.f32 0.0, %v4623
        %v4625 = vpop.f32.mrb[0].mxu0
        %v4626 = vadd.f32 0.0, %v4625
        %v4627 = vpop.f32.mrb[0].mxu0
        %v4628 = vadd.f32 0.0, %v4627
        %v4629 = vpop.f32.mrb[0].mxu0
        %v4630 = vadd.f32 0.0, %v4629
        %4631 = vdwg.mxu0
        %4632 = vst [vmem:[%s177] sm:$0xff] %v4594
        %4633 = vst [vmem:[%s177 + $0x8] sm:$0xff] %v4596
        %4634 = vst [vmem:[%s177 + $0x10] sm:$0xff] %v4598
        %4635 = vst [vmem:[%s177 + $0x18] sm:$0xff] %v4600
        %4636 = vst [vmem:[%s177 + $0x20] sm:$0xff] %v4604
        %4637 = vst [vmem:[%s177 + $0x28] sm:$0xff] %v4606
        %4638 = vst [vmem:[%s177 + $0x30] sm:$0xff] %v4608
        %4639 = vst [vmem:[%s177 + $0x38] sm:$0xff] %v4610
        %4640 = vst [vmem:[%s177 + $0x40] sm:$0xff] %v4614
        %4641 = vst [vmem:[%s177 + $0x48] sm:$0xff] %v4616
        %4642 = vst [vmem:[%s177 + $0x50] sm:$0xff] %v4618
        %4643 = vst [vmem:[%s177 + $0x58] sm:$0xff] %v4620
        %4644 = vst [vmem:[%s177 + $0x60] sm:$0xff] %v4624
        %4645 = vst [vmem:[%s177 + $0x68] sm:$0xff] %v4626
        %4646 = vst [vmem:[%s177 + $0x70] sm:$0xff] %v4628
        %4647 = vst [vmem:[%s177 + $0x78] sm:$0xff] %v4630
        %s4648 = sand.u32 %s107, 1
        %s4649 = scalar_lea.sflag [#allocation5], %s4648
        %s4650 = sand.u32 %s107, 1
        %s4651 = smul.addr %s4650, 128
        %s4652 = scalar_lea.vmem [#allocation4], %s4651
        // Predicated region
        $region37: #{tpu_custom_call.1} parent=31 // pred_check
          %p4653 = pneg %p117
        $region38: #{tpu_custom_call.1} parent=31 // pred_check_branch
          %4655 = sbr.rel (%p4653) target = $region40
        $region39: #{tpu_custom_call.1} parent=31 // pred_region
          %s4656 = smul.u32 2, %s22
          %s4658 = ssub.s32 2048, 2048
          %4659 = vsyncadd %s4649, %s4658
          %s4660 = smul.addr %s21, 16
          %s4661 = sadd.s32 %s4656, %s4660
          %s4662 = smul.addr %s4661, 128
          %s4663 = scalar_lea.hbm %s3, %s4662
          %s4664 = sshll.u32 %s4652, 4
          %s4665 = int_to_ptr.vmem [resolvable:$true] %s4664
          %4670 = dma.vmem_to_hbm [thread:$0]  %s4665, 2048, %s4663, %s4649, 256, 256, 16
        $region40: #{tpu_custom_call.1} parent=31 // pred_fallthru
          _
      $region32: #{tpu_custom_call.1} parent=5 // pred_fallthru
        _
      %p4671 = scmp.le.s32.totalorder 2, %s12
      // Predicated region
      $region41: #{tpu_custom_call.1} parent=5 // pred_check
        %p4672 = pneg %p4671
      $region42: #{tpu_custom_call.1} parent=5 // pred_check_branch
        %4674 = sbr.rel (%p4672) target = $region44
      $region43: #{tpu_custom_call.1} parent=5 // pred_region
        %s4675 = ssub.s32 %s12, 2
        // Predicated region
        $region45: #{tpu_custom_call.1} parent=43 // pred_check
          %p4676 = pneg %p123
        $region46: #{tpu_custom_call.1} parent=43 // pred_check_branch
          %4678 = sbr.rel (%p4676) target = $region48
        $region47: #{tpu_custom_call.1} parent=43 // pred_region
          %s4679 = sand.u32 %s108, 1
          %s4680 = scalar_lea.sflag [#allocation5], %s4679
          %s4681 = sand.u32 %s108, 1
          %s4682 = smul.addr %s4681, 128
          %s4683 = scalar_lea.vmem [#allocation4], %s4682
          %4684 = dma.done %s4680, 2048
        $region48: #{tpu_custom_call.1} parent=43 // pred_fallthru
          _
      $region44: #{tpu_custom_call.1} parent=5 // pred_fallthru
        _
    $region6: #{tpu_custom_call.1} parent=1 // loop_footer
      %s16 = sadd.s32 1, %s12
    $region7: #{tpu_custom_call.1} parent=1 // loop_footer_branch
      %11 = sbr.rel target = $region3
    $region8: #{tpu_custom_call.1} parent=1 // loop_exit
      _
    %4685 = vsyncpa [#allocation5], 1
    %s4686 = scalar_lea.sflag [#allocation5], 1
    %4687 = vsyncpa %s4686, 1

</llo_original>
